<compile_context>
chip_gen: v7x
topology: tpu7x:2x2x1
jax: 0.10.0
libtpu: 0.0.40
codegen_flags: <defaults>
</compile_context>

<pallas_src>
import jax
import jax.numpy as jnp
from jax.experimental import pallas as pl
from jax.experimental.pallas import tpu as pltpu

LANE = 128


# ---------------------------------------------------------------------------
# Fused ResBlock kernel:
#   conv1(3x3) -> InstanceNorm -> ReLU -> conv2(3x3) -> InstanceNorm -> + residual
# One grid step processes one batch element; all intermediates stay in VMEM.
# ---------------------------------------------------------------------------
def _make_resblock_kernel(H, W, Cp, eps=1e-5):
    Hp, Wp = H + 2, W + 2
    HW = H * W
    inv_hw = 1.0 / float(HW)
    offsets = [(dy, dx) for dy in range(3) for dx in range(3)]

    def conv3x3(src_ref, w_ref):
        """3x3 conv as 9 accumulated (HW, Cp) @ (Cp, Cp) MXU dots (bf16 in, f32 acc).

        src_ref: (Hp, Wp, Cp) bf16 zero-padded image (VMEM ref)
        w_ref:   (9*Cp, Cp)  bf16 weights, tap-major
        No im2col materialization: each tap's LHS is a shifted window load of
        src_ref, so nothing extra is stored to VMEM (vst slot stays free).
        """
        acc = None
        for k, (dy, dx) in enumerate(offsets):
            lhs = src_ref[pl.ds(dy, H), pl.ds(dx, W), :].reshape(HW, Cp)
            part = jnp.dot(lhs, w_ref[pl.ds(k * Cp, Cp), :],
                           preferred_element_type=jnp.float32)
            acc = part if acc is None else acc + part
        return acc                                           # (HW, Cp) f32

    def instance_norm(y, relu):
        """InstanceNorm2d(affine=False); one-pass stats in f32, variance clamped."""
        s = jnp.sum(y, axis=0, keepdims=True)
        ss = jnp.sum(y * y, axis=0, keepdims=True)
        mean = s * inv_hw
        var = jnp.maximum(ss * inv_hw - mean * mean, 0.0)    # cancellation safety
        y = (y - mean) * jax.lax.rsqrt(var + eps)
        if relu:
            y = jnp.maximum(y, 0.0)
        return y

    def zero_border(ref):
        """Zero only the 1-pixel border strips (interior is fully overwritten)."""
        zrow = jnp.zeros((1, Wp, Cp), ref.dtype)
        zcol = jnp.zeros((Hp, 1, Cp), ref.dtype)
        ref[pl.ds(0, 1), :, :] = zrow
        ref[pl.ds(Hp - 1, 1), :, :] = zrow
        ref[:, pl.ds(0, 1), :] = zcol
        ref[:, pl.ds(Wp - 1, 1), :] = zcol

    def kernel(xp_ref, w1_ref, w2_ref, o_ref, hpad_ref):
        # conv1 + InstanceNorm + ReLU  (conv bias omitted: affine-free InstanceNorm
        # mean subtraction cancels a per-channel bias exactly)
        h = instance_norm(conv3x3(xp_ref, w1_ref), relu=True)

        # Zero-padded intermediate stays in VMEM (bf16); it never goes to HBM.
        zero_border(hpad_ref)
        hpad_ref[pl.ds(1, H), pl.ds(1, W), :] = (
            h.reshape(H, W, Cp).astype(hpad_ref.dtype))

        # conv2 + InstanceNorm, residual add in (H, W, C) layout from the resident
        # input block (no separate residual operand, no (HW,C) relayout).
        y2 = instance_norm(conv3x3(hpad_ref, w2_ref), relu=False)
        res = xp_ref[pl.ds(1, H), pl.ds(1, W), :].astype(jnp.float32)
        out = y2.reshape(H, W, Cp) + res

        # Emit the next ResBlock's zero-padded input directly: border strips + interior.
        zero_border(o_ref)
        o_ref[pl.ds(1, H), pl.ds(1, W), :] = out.astype(o_ref.dtype)

    return kernel


# ---------------------------------------------------------------------------
# Wrapper for one fused ResBlock (padded bf16 NHWC in -> padded bf16 NHWC out)
# ---------------------------------------------------------------------------
def _res_block_fused(xp, w1p, w2p, *, H, W):
    """xp: (N, Hp, Wp, Cp) bf16, zero-padded NHWC, channels lane-padded.
    w*p: (9*Cp, Cp) bf16, tap-major."""
    N, Hp, Wp, Cp = xp.shape

    kernel = _make_resblock_kernel(H, W, Cp)

    # Advisory cost (two 3x3 convs on the padded channel count).
    flops = 2 * 2 * 9 * N * H * W * Cp * Cp
    bytes_accessed = 2 * N * Hp * Wp * Cp * 2 + 2 * 9 * Cp * Cp * 2

    # Explicit VMEM budget: double-buffered in/out blocks + hpad scratch + weights
    # + headroom for the f32 conv accumulators / relayouts.  Cap at 48 MiB so the
    # same kernel fits v7x's 64 MiB/TC; also overrides v5e's 16 MiB scoped default.
    act = Hp * Wp * Cp * 2                       # one bf16 padded image block
    acc = H * W * Cp * 4                         # one f32 conv accumulator
    need = 4 * act + act + 2 * 9 * Cp * Cp * 2 + 3 * acc
    vmem_limit = int(min(max(need * 5 // 4, 32 << 20), 48 << 20))

    return pl.pallas_call(
        kernel,
        out_shape=jax.ShapeDtypeStruct((N, Hp, Wp, Cp), xp.dtype),
        grid=(N,),
        in_specs=[
            pl.BlockSpec((None, Hp, Wp, Cp), lambda n: (n, 0, 0, 0)),  # padded image
            pl.BlockSpec((9 * Cp, Cp), lambda n: (0, 0)),              # w1 (bf16)
            pl.BlockSpec((9 * Cp, Cp), lambda n: (0, 0)),              # w2 (bf16)
        ],
        out_specs=pl.BlockSpec((None, Hp, Wp, Cp), lambda n: (n, 0, 0, 0)),
        scratch_shapes=[
            pltpu.VMEM((Hp, Wp, Cp), jnp.bfloat16),    # zero-padded intermediate h
        ],
        compiler_params=pltpu.CompilerParams(
            dimension_semantics=("parallel",),
            vmem_limit_bytes=vmem_limit),
        cost_estimate=pl.CostEstimate(flops=flops, transcendentals=4 * N * Cp,
                                      bytes_accessed=bytes_accessed),
    )(xp, w1p, w2p)


def _pack_weight(w, C, Cp):
    """HWIO (3,3,C,C) -> lane-padded, tap-major (9*Cp, Cp) bf16."""
    wp = jnp.pad(w, ((0, 0), (0, 0), (0, Cp - C), (0, Cp - C)))
    return wp.reshape(9 * Cp, Cp).astype(jnp.bfloat16)


# ---------------------------------------------------------------------------
# ResBlocks forward (public wrapper takes NCHW, like PyTorch)
# ---------------------------------------------------------------------------
def res_blocks_forward(x_nchw, params):
    """params: list of (w1, b1, w2, b2); weights in HWIO (3,3,C,C).  Biases are
    accepted for interface parity with nn.Conv2d but are a provable no-op in front
    of InstanceNorm(affine=False), so the kernel never touches them."""
    N, C, H, W = x_nchw.shape
    Cp = -(-C // LANE) * LANE                       # lane-pad channels to mult. of 128

    x = jnp.transpose(x_nchw, (0, 2, 3, 1))                          # NCHW -> NHWC
    xp = jnp.pad(x, ((0, 0), (1, 1), (1, 1), (0, Cp - C)))           # spatial+channel pad
    xp = xp.astype(jnp.bfloat16)                                     # bf16 activations

    # Padded channels stay exactly zero through every block (zero weights, no bias,
    # IN(0)=0, residual 0), so blocks chain kernel->kernel on the padded layout.
    for (w1, _b1, w2, _b2) in params:
        xp = _res_block_fused(xp, _pack_weight(w1, C, Cp), _pack_weight(w2, C, Cp),
                              H=H, W=W)

    out = xp[:, 1:-1, 1:-1, :C].astype(x_nchw.dtype)                 # strip padding
    return jnp.transpose(out, (0, 3, 1, 2))                          # NHWC -> NCHW


# ---------------------------------------------------------------------------
# Deterministic parameter init (synthetic; PyTorch Conv2d-like uniform init),
# weights stored directly in HWIO layout (3, 3, Cin, Cout)
# ---------------------------------------------------------------------------
def init_params(key, num_blocks, dim):
    params = []
    scale = 1.0 / jnp.sqrt(jnp.float32(dim * 9))
    for _ in range(num_blocks):
        key, k1, k2, k3, k4 = jax.random.split(key, 5)
        w1 = jax.random.uniform(k1, (3, 3, dim, dim), jnp.float32, -scale, scale)
        b1 = jax.random.uniform(k2, (dim,), jnp.float32, -scale, scale)
        w2 = jax.random.uniform(k3, (3, 3, dim, dim), jnp.float32, -scale, scale)
        b2 = jax.random.uniform(k4, (dim,), jnp.float32, -scale, scale)
        params.append((w1, b1, w2, b2))
    return params


# ---------------------------------------------------------------------------
# Pure-JAX reference mirroring the PyTorch forward with the kernel's numerics:
# bf16 conv inputs / f32 accumulation (MXU-native), f32 norm math, and bf16 storage
# of the activations between ResBlocks.  The conv bias IS applied here (the kernel
# omits it because affine-free InstanceNorm cancels it), validating that choice.
# ---------------------------------------------------------------------------
def _reference(x_nchw, params, eps=1e-5):
    def conv(x, w, b):
        w_oihw = jnp.transpose(w, (3, 2, 0, 1))
        y = jax.lax.conv_general_dilated(
            x.astype(jnp.bfloat16), w_oihw.astype(jnp.bfloat16),
            window_strides=(1, 1), padding=((1, 1), (1, 1)),
            dimension_numbers=("NCHW", "OIHW", "NCHW"),
            preferred_element_type=jnp.float32)
        return y + b[None, :, None, None]

    def inorm(x):
        m = jnp.mean(x, axis=(2, 3), keepdims=True)
        v = jnp.mean((x - m) ** 2, axis=(2, 3), keepdims=True)
        return (x - m) * jax.lax.rsqrt(v + eps)

    x = x_nchw.astype(jnp.bfloat16).astype(jnp.float32)    # kernel stores x in bf16
    for (w1, b1, w2, b2) in params:
        h = jnp.maximum(inorm(conv(x, w1, b1)), 0.0)
        y = inorm(conv(h, w2, b2)) + x
        x = y.astype(jnp.bfloat16).astype(jnp.float32)     # bf16 between blocks
    return x


if __name__ == "__main__":
    num_blocks, dim = 2, 4
    N, H, W = 2, 16, 16

    key = jax.random.PRNGKey(0)
    k_x, k_p = jax.random.split(key)
    x = jax.random.normal(k_x, (N, dim, H, W), jnp.float32)     # NCHW, like PyTorch
    params = init_params(k_p, num_blocks, dim)

    fwd = jax.jit(res_blocks_forward)
    out = jax.block_until_ready(fwd(x, params))

    ref = jax.block_until_ready(_reference(x, params))
    assert out.shape == (N, dim, H, W)
    max_err = jnp.max(jnp.abs(out - ref))
    assert jnp.allclose(out, ref, rtol=5e-3, atol=5e-3), (
        f"mismatch vs reference (max abs err {max_err})")

    print("KERNEL_OK")
</pallas_src>

<mosaic_0001>
module attributes {stable_mosaic.version = 11 : i64} {
  func.func @kernel(%arg0: i32, %arg1: memref<1x18x18x128xbf16, #tpu.memory_space<vmem>>, %arg2: memref<1152x128xbf16, #tpu.memory_space<vmem>>, %arg3: memref<1152x128xbf16, #tpu.memory_space<vmem>>, %arg4: memref<1x18x18x128xbf16, #tpu.memory_space<vmem>>, %arg5: memref<18x18x128xbf16, #tpu.memory_space<vmem>>) attributes {dimension_semantics = [#tpu.dimension_semantics<parallel>], iteration_bounds = array<i64: 2>, scalar_prefetch = 0 : i64, scratch_operands = 1 : i64, tpu.core_type = #tpu.core_type<tc>, window_params = [{transform_indices = @transform_0, window_bounds = array<i64: 1, 18, 18, 128>}, {pipeline_mode = #tpu.pipeline_mode<synchronous>, transform_indices = @transform_1, window_bounds = array<i64: 1152, 128>}, {pipeline_mode = #tpu.pipeline_mode<synchronous>, transform_indices = @transform_2, window_bounds = array<i64: 1152, 128>}, {transform_indices = @transform_3, window_bounds = array<i64: 1, 18, 18, 128>}]} {
    %c0 = arith.constant 0 : index
    %c0_0 = arith.constant 0 : index
    %c0_1 = arith.constant 0 : index
    %c0_2 = arith.constant 0 : index
    %0 = vector.load %arg1[%c0, %c0_0, %c0_1, %c0_2] : memref<1x18x18x128xbf16, #tpu.memory_space<vmem>>, vector<1x16x16x128xbf16>
    %1 = vector.shape_cast %0 : vector<1x16x16x128xbf16> to vector<16x16x128xbf16>
    %2 = vector.shape_cast %1 : vector<16x16x128xbf16> to vector<256x128xbf16>
    %c0_3 = arith.constant 0 : index
    %c0_4 = arith.constant 0 : index
    %3 = vector.load %arg2[%c0_3, %c0_4] : memref<1152x128xbf16, #tpu.memory_space<vmem>>, vector<128x128xbf16>
    %cst = arith.constant dense<0.000000e+00> : vector<256x128xf32>
    %4 = tpu.matmul %2, %3, %cst {dimension_numbers = #tpu.dot_dimension_numbers<[1], [0], [0], [1], [0, 0, 1, 1], [], []>} : vector<256x128xbf16>, vector<128x128xbf16>, vector<256x128xf32> -> vector<256x128xf32>
    %c0_5 = arith.constant 0 : index
    %c0_6 = arith.constant 0 : index
    %c1 = arith.constant 1 : index
    %c0_7 = arith.constant 0 : index
    %5 = vector.load %arg1[%c0_5, %c0_6, %c1, %c0_7] : memref<1x18x18x128xbf16, #tpu.memory_space<vmem>>, vector<1x16x16x128xbf16>
    %6 = vector.shape_cast %5 : vector<1x16x16x128xbf16> to vector<16x16x128xbf16>
    %7 = vector.shape_cast %6 : vector<16x16x128xbf16> to vector<256x128xbf16>
    %c128 = arith.constant 128 : index
    %c0_8 = arith.constant 0 : index
    %8 = vector.load %arg2[%c128, %c0_8] : memref<1152x128xbf16, #tpu.memory_space<vmem>>, vector<128x128xbf16>
    %cst_9 = arith.constant dense<0.000000e+00> : vector<256x128xf32>
    %9 = tpu.matmul %7, %8, %cst_9 {dimension_numbers = #tpu.dot_dimension_numbers<[1], [0], [0], [1], [0, 0, 1, 1], [], []>} : vector<256x128xbf16>, vector<128x128xbf16>, vector<256x128xf32> -> vector<256x128xf32>
    %10 = arith.addf %4, %9 : vector<256x128xf32>
    %c0_10 = arith.constant 0 : index
    %c0_11 = arith.constant 0 : index
    %c2 = arith.constant 2 : index
    %c0_12 = arith.constant 0 : index
    %11 = vector.load %arg1[%c0_10, %c0_11, %c2, %c0_12] : memref<1x18x18x128xbf16, #tpu.memory_space<vmem>>, vector<1x16x16x128xbf16>
    %12 = vector.shape_cast %11 : vector<1x16x16x128xbf16> to vector<16x16x128xbf16>
    %13 = vector.shape_cast %12 : vector<16x16x128xbf16> to vector<256x128xbf16>
    %c256 = arith.constant 256 : index
    %c0_13 = arith.constant 0 : index
    %14 = vector.load %arg2[%c256, %c0_13] : memref<1152x128xbf16, #tpu.memory_space<vmem>>, vector<128x128xbf16>
    %cst_14 = arith.constant dense<0.000000e+00> : vector<256x128xf32>
    %15 = tpu.matmul %13, %14, %cst_14 {dimension_numbers = #tpu.dot_dimension_numbers<[1], [0], [0], [1], [0, 0, 1, 1], [], []>} : vector<256x128xbf16>, vector<128x128xbf16>, vector<256x128xf32> -> vector<256x128xf32>
    %16 = arith.addf %10, %15 : vector<256x128xf32>
    %c0_15 = arith.constant 0 : index
    %c1_16 = arith.constant 1 : index
    %c0_17 = arith.constant 0 : index
    %c0_18 = arith.constant 0 : index
    %17 = vector.load %arg1[%c0_15, %c1_16, %c0_17, %c0_18] : memref<1x18x18x128xbf16, #tpu.memory_space<vmem>>, vector<1x16x16x128xbf16>
    %18 = vector.shape_cast %17 : vector<1x16x16x128xbf16> to vector<16x16x128xbf16>
    %19 = vector.shape_cast %18 : vector<16x16x128xbf16> to vector<256x128xbf16>
    %c384 = arith.constant 384 : index
    %c0_19 = arith.constant 0 : index
    %20 = vector.load %arg2[%c384, %c0_19] : memref<1152x128xbf16, #tpu.memory_space<vmem>>, vector<128x128xbf16>
    %cst_20 = arith.constant dense<0.000000e+00> : vector<256x128xf32>
    %21 = tpu.matmul %19, %20, %cst_20 {dimension_numbers = #tpu.dot_dimension_numbers<[1], [0], [0], [1], [0, 0, 1, 1], [], []>} : vector<256x128xbf16>, vector<128x128xbf16>, vector<256x128xf32> -> vector<256x128xf32>
    %22 = arith.addf %16, %21 : vector<256x128xf32>
    %c0_21 = arith.constant 0 : index
    %c1_22 = arith.constant 1 : index
    %c1_23 = arith.constant 1 : index
    %c0_24 = arith.constant 0 : index
    %23 = vector.load %arg1[%c0_21, %c1_22, %c1_23, %c0_24] : memref<1x18x18x128xbf16, #tpu.memory_space<vmem>>, vector<1x16x16x128xbf16>
    %24 = vector.shape_cast %23 : vector<1x16x16x128xbf16> to vector<16x16x128xbf16>
    %25 = vector.shape_cast %24 : vector<16x16x128xbf16> to vector<256x128xbf16>
    %c512 = arith.constant 512 : index
    %c0_25 = arith.constant 0 : index
    %26 = vector.load %arg2[%c512, %c0_25] : memref<1152x128xbf16, #tpu.memory_space<vmem>>, vector<128x128xbf16>
    %cst_26 = arith.constant dense<0.000000e+00> : vector<256x128xf32>
    %27 = tpu.matmul %25, %26, %cst_26 {dimension_numbers = #tpu.dot_dimension_numbers<[1], [0], [0], [1], [0, 0, 1, 1], [], []>} : vector<256x128xbf16>, vector<128x128xbf16>, vector<256x128xf32> -> vector<256x128xf32>
    %28 = arith.addf %22, %27 : vector<256x128xf32>
    %c0_27 = arith.constant 0 : index
    %c1_28 = arith.constant 1 : index
    %c2_29 = arith.constant 2 : index
    %c0_30 = arith.constant 0 : index
    %29 = vector.load %arg1[%c0_27, %c1_28, %c2_29, %c0_30] : memref<1x18x18x128xbf16, #tpu.memory_space<vmem>>, vector<1x16x16x128xbf16>
    %30 = vector.shape_cast %29 : vector<1x16x16x128xbf16> to vector<16x16x128xbf16>
    %31 = vector.shape_cast %30 : vector<16x16x128xbf16> to vector<256x128xbf16>
    %c640 = arith.constant 640 : index
    %c0_31 = arith.constant 0 : index
    %32 = vector.load %arg2[%c640, %c0_31] : memref<1152x128xbf16, #tpu.memory_space<vmem>>, vector<128x128xbf16>
    %cst_32 = arith.constant dense<0.000000e+00> : vector<256x128xf32>
    %33 = tpu.matmul %31, %32, %cst_32 {dimension_numbers = #tpu.dot_dimension_numbers<[1], [0], [0], [1], [0, 0, 1, 1], [], []>} : vector<256x128xbf16>, vector<128x128xbf16>, vector<256x128xf32> -> vector<256x128xf32>
    %34 = arith.addf %28, %33 : vector<256x128xf32>
    %c0_33 = arith.constant 0 : index
    %c2_34 = arith.constant 2 : index
    %c0_35 = arith.constant 0 : index
    %c0_36 = arith.constant 0 : index
    %35 = vector.load %arg1[%c0_33, %c2_34, %c0_35, %c0_36] : memref<1x18x18x128xbf16, #tpu.memory_space<vmem>>, vector<1x16x16x128xbf16>
    %36 = vector.shape_cast %35 : vector<1x16x16x128xbf16> to vector<16x16x128xbf16>
    %37 = vector.shape_cast %36 : vector<16x16x128xbf16> to vector<256x128xbf16>
    %c768 = arith.constant 768 : index
    %c0_37 = arith.constant 0 : index
    %38 = vector.load %arg2[%c768, %c0_37] : memref<1152x128xbf16, #tpu.memory_space<vmem>>, vector<128x128xbf16>
    %cst_38 = arith.constant dense<0.000000e+00> : vector<256x128xf32>
    %39 = tpu.matmul %37, %38, %cst_38 {dimension_numbers = #tpu.dot_dimension_numbers<[1], [0], [0], [1], [0, 0, 1, 1], [], []>} : vector<256x128xbf16>, vector<128x128xbf16>, vector<256x128xf32> -> vector<256x128xf32>
    %40 = arith.addf %34, %39 : vector<256x128xf32>
    %c0_39 = arith.constant 0 : index
    %c2_40 = arith.constant 2 : index
    %c1_41 = arith.constant 1 : index
    %c0_42 = arith.constant 0 : index
    %41 = vector.load %arg1[%c0_39, %c2_40, %c1_41, %c0_42] : memref<1x18x18x128xbf16, #tpu.memory_space<vmem>>, vector<1x16x16x128xbf16>
    %42 = vector.shape_cast %41 : vector<1x16x16x128xbf16> to vector<16x16x128xbf16>
    %43 = vector.shape_cast %42 : vector<16x16x128xbf16> to vector<256x128xbf16>
    %c896 = arith.constant 896 : index
    %c0_43 = arith.constant 0 : index
    %44 = vector.load %arg2[%c896, %c0_43] : memref<1152x128xbf16, #tpu.memory_space<vmem>>, vector<128x128xbf16>
    %cst_44 = arith.constant dense<0.000000e+00> : vector<256x128xf32>
    %45 = tpu.matmul %43, %44, %cst_44 {dimension_numbers = #tpu.dot_dimension_numbers<[1], [0], [0], [1], [0, 0, 1, 1], [], []>} : vector<256x128xbf16>, vector<128x128xbf16>, vector<256x128xf32> -> vector<256x128xf32>
    %46 = arith.addf %40, %45 : vector<256x128xf32>
    %c0_45 = arith.constant 0 : index
    %c2_46 = arith.constant 2 : index
    %c2_47 = arith.constant 2 : index
    %c0_48 = arith.constant 0 : index
    %47 = vector.load %arg1[%c0_45, %c2_46, %c2_47, %c0_48] : memref<1x18x18x128xbf16, #tpu.memory_space<vmem>>, vector<1x16x16x128xbf16>
    %48 = vector.shape_cast %47 : vector<1x16x16x128xbf16> to vector<16x16x128xbf16>
    %49 = vector.shape_cast %48 : vector<16x16x128xbf16> to vector<256x128xbf16>
    %c1024 = arith.constant 1024 : index
    %c0_49 = arith.constant 0 : index
    %50 = vector.load %arg2[%c1024, %c0_49] : memref<1152x128xbf16, #tpu.memory_space<vmem>>, vector<128x128xbf16>
    %cst_50 = arith.constant dense<0.000000e+00> : vector<256x128xf32>
    %51 = tpu.matmul %49, %50, %cst_50 {dimension_numbers = #tpu.dot_dimension_numbers<[1], [0], [0], [1], [0, 0, 1, 1], [], []>} : vector<256x128xbf16>, vector<128x128xbf16>, vector<256x128xf32> -> vector<256x128xf32>
    %52 = arith.addf %46, %51 : vector<256x128xf32>
    %cst_51 = arith.constant dense<0.000000e+00> : vector<128xf32>
    %53 = vector.multi_reduction <add>, %52, %cst_51 [0] : vector<256x128xf32> to vector<128xf32>
    %54 = vector.shape_cast %53 : vector<128xf32> to vector<1x128xf32>
    %55 = arith.mulf %52, %52 : vector<256x128xf32>
    %cst_52 = arith.constant dense<0.000000e+00> : vector<128xf32>
    %56 = vector.multi_reduction <add>, %55, %cst_52 [0] : vector<256x128xf32> to vector<128xf32>
    %57 = vector.shape_cast %56 : vector<128xf32> to vector<1x128xf32>
    %cst_53 = arith.constant 3.906250e-03 : f32
    %58 = vector.broadcast %cst_53 : f32 to vector<1x128xf32>
    %59 = arith.mulf %54, %58 : vector<1x128xf32>
    %cst_54 = arith.constant 3.906250e-03 : f32
    %60 = vector.broadcast %cst_54 : f32 to vector<1x128xf32>
    %61 = arith.mulf %57, %60 : vector<1x128xf32>
    %62 = arith.mulf %59, %59 : vector<1x128xf32>
    %63 = arith.subf %61, %62 : vector<1x128xf32>
    %cst_55 = arith.constant 0.000000e+00 : f32
    %64 = vector.broadcast %cst_55 : f32 to vector<1x128xf32>
    %65 = arith.maximumf %63, %64 : vector<1x128xf32>
    %66 = vector.broadcast %59 : vector<1x128xf32> to vector<256x128xf32>
    %67 = arith.subf %52, %66 : vector<256x128xf32>
    %cst_56 = arith.constant 9.99999974E-6 : f32
    %68 = vector.broadcast %cst_56 : f32 to vector<1x128xf32>
    %69 = arith.addf %65, %68 : vector<1x128xf32>
    %70 = math.rsqrt %69 : vector<1x128xf32>
    %71 = vector.broadcast %70 : vector<1x128xf32> to vector<256x128xf32>
    %72 = arith.mulf %67, %71 : vector<256x128xf32>
    %cst_57 = arith.constant 0.000000e+00 : f32
    %73 = vector.broadcast %cst_57 : f32 to vector<256x128xf32>
    %74 = arith.maximumf %72, %73 : vector<256x128xf32>
    %cst_58 = arith.constant 0.000000e+00 : bf16
    %75 = vector.broadcast %cst_58 : bf16 to vector<1x18x128xbf16>
    %cst_59 = arith.constant 0.000000e+00 : bf16
    %76 = vector.broadcast %cst_59 : bf16 to vector<18x1x128xbf16>
    %c0_60 = arith.constant 0 : index
    %c0_61 = arith.constant 0 : index
    %c0_62 = arith.constant 0 : index
    %77 = vector.load %arg5[%c0_60, %c0_61, %c0_62] : memref<18x18x128xbf16, #tpu.memory_space<vmem>>, vector<1x18x128xbf16>
    tpu.vector_store %arg5[%c0_60, %c0_61, %c0_62], %75 {strides = array<i32>} : memref<18x18x128xbf16, #tpu.memory_space<vmem>>, vector<1x18x128xbf16>,
    %c17 = arith.constant 17 : index
    %c0_63 = arith.constant 0 : index
    %c0_64 = arith.constant 0 : index
    %78 = vector.load %arg5[%c17, %c0_63, %c0_64] : memref<18x18x128xbf16, #tpu.memory_space<vmem>>, vector<1x18x128xbf16>
    tpu.vector_store %arg5[%c17, %c0_63, %c0_64], %75 {strides = array<i32>} : memref<18x18x128xbf16, #tpu.memory_space<vmem>>, vector<1x18x128xbf16>,
    %c0_65 = arith.constant 0 : index
    %c0_66 = arith.constant 0 : index
    %c0_67 = arith.constant 0 : index
    %79 = vector.load %arg5[%c0_65, %c0_66, %c0_67] : memref<18x18x128xbf16, #tpu.memory_space<vmem>>, vector<18x1x128xbf16>
    tpu.vector_store %arg5[%c0_65, %c0_66, %c0_67], %76 {strides = array<i32>} : memref<18x18x128xbf16, #tpu.memory_space<vmem>>, vector<18x1x128xbf16>,
    %c0_68 = arith.constant 0 : index
    %c17_69 = arith.constant 17 : index
    %c0_70 = arith.constant 0 : index
    %80 = vector.load %arg5[%c0_68, %c17_69, %c0_70] : memref<18x18x128xbf16, #tpu.memory_space<vmem>>, vector<18x1x128xbf16>
    tpu.vector_store %arg5[%c0_68, %c17_69, %c0_70], %76 {strides = array<i32>} : memref<18x18x128xbf16, #tpu.memory_space<vmem>>, vector<18x1x128xbf16>,
    %81 = vector.shape_cast %74 : vector<256x128xf32> to vector<16x16x128xf32>
    %82 = arith.truncf %81 : vector<16x16x128xf32> to vector<16x16x128xbf16>
    %c1_71 = arith.constant 1 : index
    %c1_72 = arith.constant 1 : index
    %c0_73 = arith.constant 0 : index
    %83 = vector.load %arg5[%c1_71, %c1_72, %c0_73] : memref<18x18x128xbf16, #tpu.memory_space<vmem>>, vector<16x16x128xbf16>
    tpu.vector_store %arg5[%c1_71, %c1_72, %c0_73], %82 {strides = array<i32>} : memref<18x18x128xbf16, #tpu.memory_space<vmem>>, vector<16x16x128xbf16>,
    %c0_74 = arith.constant 0 : index
    %c0_75 = arith.constant 0 : index
    %c0_76 = arith.constant 0 : index
    %84 = vector.load %arg5[%c0_74, %c0_75, %c0_76] : memref<18x18x128xbf16, #tpu.memory_space<vmem>>, vector<16x16x128xbf16>
    %85 = vector.shape_cast %84 : vector<16x16x128xbf16> to vector<256x128xbf16>
    %c0_77 = arith.constant 0 : index
    %c0_78 = arith.constant 0 : index
    %86 = vector.load %arg3[%c0_77, %c0_78] : memref<1152x128xbf16, #tpu.memory_space<vmem>>, vector<128x128xbf16>
    %cst_79 = arith.constant dense<0.000000e+00> : vector<256x128xf32>
    %87 = tpu.matmul %85, %86, %cst_79 {dimension_numbers = #tpu.dot_dimension_numbers<[1], [0], [0], [1], [0, 0, 1, 1], [], []>} : vector<256x128xbf16>, vector<128x128xbf16>, vector<256x128xf32> -> vector<256x128xf32>
    %c0_80 = arith.constant 0 : index
    %c1_81 = arith.constant 1 : index
    %c0_82 = arith.constant 0 : index
    %88 = vector.load %arg5[%c0_80, %c1_81, %c0_82] : memref<18x18x128xbf16, #tpu.memory_space<vmem>>, vector<16x16x128xbf16>
    %89 = vector.shape_cast %88 : vector<16x16x128xbf16> to vector<256x128xbf16>
    %c128_83 = arith.constant 128 : index
    %c0_84 = arith.constant 0 : index
    %90 = vector.load %arg3[%c128_83, %c0_84] : memref<1152x128xbf16, #tpu.memory_space<vmem>>, vector<128x128xbf16>
    %cst_85 = arith.constant dense<0.000000e+00> : vector<256x128xf32>
    %91 = tpu.matmul %89, %90, %cst_85 {dimension_numbers = #tpu.dot_dimension_numbers<[1], [0], [0], [1], [0, 0, 1, 1], [], []>} : vector<256x128xbf16>, vector<128x128xbf16>, vector<256x128xf32> -> vector<256x128xf32>
    %92 = arith.addf %87, %91 : vector<256x128xf32>
    %c0_86 = arith.constant 0 : index
    %c2_87 = arith.constant 2 : index
    %c0_88 = arith.constant 0 : index
    %93 = vector.load %arg5[%c0_86, %c2_87, %c0_88] : memref<18x18x128xbf16, #tpu.memory_space<vmem>>, vector<16x16x128xbf16>
    %94 = vector.shape_cast %93 : vector<16x16x128xbf16> to vector<256x128xbf16>
    %c256_89 = arith.constant 256 : index
    %c0_90 = arith.constant 0 : index
    %95 = vector.load %arg3[%c256_89, %c0_90] : memref<1152x128xbf16, #tpu.memory_space<vmem>>, vector<128x128xbf16>
    %cst_91 = arith.constant dense<0.000000e+00> : vector<256x128xf32>
    %96 = tpu.matmul %94, %95, %cst_91 {dimension_numbers = #tpu.dot_dimension_numbers<[1], [0], [0], [1], [0, 0, 1, 1], [], []>} : vector<256x128xbf16>, vector<128x128xbf16>, vector<256x128xf32> -> vector<256x128xf32>
    %97 = arith.addf %92, %96 : vector<256x128xf32>
    %c1_92 = arith.constant 1 : index
    %c0_93 = arith.constant 0 : index
    %c0_94 = arith.constant 0 : index
    %98 = vector.load %arg5[%c1_92, %c0_93, %c0_94] : memref<18x18x128xbf16, #tpu.memory_space<vmem>>, vector<16x16x128xbf16>
    %99 = vector.shape_cast %98 : vector<16x16x128xbf16> to vector<256x128xbf16>
    %c384_95 = arith.constant 384 : index
    %c0_96 = arith.constant 0 : index
    %100 = vector.load %arg3[%c384_95, %c0_96] : memref<1152x128xbf16, #tpu.memory_space<vmem>>, vector<128x128xbf16>
    %cst_97 = arith.constant dense<0.000000e+00> : vector<256x128xf32>
    %101 = tpu.matmul %99, %100, %cst_97 {dimension_numbers = #tpu.dot_dimension_numbers<[1], [0], [0], [1], [0, 0, 1, 1], [], []>} : vector<256x128xbf16>, vector<128x128xbf16>, vector<256x128xf32> -> vector<256x128xf32>
    %102 = arith.addf %97, %101 : vector<256x128xf32>
    %c1_98 = arith.constant 1 : index
    %c1_99 = arith.constant 1 : index
    %c0_100 = arith.constant 0 : index
    %103 = vector.load %arg5[%c1_98, %c1_99, %c0_100] : memref<18x18x128xbf16, #tpu.memory_space<vmem>>, vector<16x16x128xbf16>
    %104 = vector.shape_cast %103 : vector<16x16x128xbf16> to vector<256x128xbf16>
    %c512_101 = arith.constant 512 : index
    %c0_102 = arith.constant 0 : index
    %105 = vector.load %arg3[%c512_101, %c0_102] : memref<1152x128xbf16, #tpu.memory_space<vmem>>, vector<128x128xbf16>
    %cst_103 = arith.constant dense<0.000000e+00> : vector<256x128xf32>
    %106 = tpu.matmul %104, %105, %cst_103 {dimension_numbers = #tpu.dot_dimension_numbers<[1], [0], [0], [1], [0, 0, 1, 1], [], []>} : vector<256x128xbf16>, vector<128x128xbf16>, vector<256x128xf32> -> vector<256x128xf32>
    %107 = arith.addf %102, %106 : vector<256x128xf32>
    %c1_104 = arith.constant 1 : index
    %c2_105 = arith.constant 2 : index
    %c0_106 = arith.constant 0 : index
    %108 = vector.load %arg5[%c1_104, %c2_105, %c0_106] : memref<18x18x128xbf16, #tpu.memory_space<vmem>>, vector<16x16x128xbf16>
    %109 = vector.shape_cast %108 : vector<16x16x128xbf16> to vector<256x128xbf16>
    %c640_107 = arith.constant 640 : index
    %c0_108 = arith.constant 0 : index
    %110 = vector.load %arg3[%c640_107, %c0_108] : memref<1152x128xbf16, #tpu.memory_space<vmem>>, vector<128x128xbf16>
    %cst_109 = arith.constant dense<0.000000e+00> : vector<256x128xf32>
    %111 = tpu.matmul %109, %110, %cst_109 {dimension_numbers = #tpu.dot_dimension_numbers<[1], [0], [0], [1], [0, 0, 1, 1], [], []>} : vector<256x128xbf16>, vector<128x128xbf16>, vector<256x128xf32> -> vector<256x128xf32>
    %112 = arith.addf %107, %111 : vector<256x128xf32>
    %c2_110 = arith.constant 2 : index
    %c0_111 = arith.constant 0 : index
    %c0_112 = arith.constant 0 : index
    %113 = vector.load %arg5[%c2_110, %c0_111, %c0_112] : memref<18x18x128xbf16, #tpu.memory_space<vmem>>, vector<16x16x128xbf16>
    %114 = vector.shape_cast %113 : vector<16x16x128xbf16> to vector<256x128xbf16>
    %c768_113 = arith.constant 768 : index
    %c0_114 = arith.constant 0 : index
    %115 = vector.load %arg3[%c768_113, %c0_114] : memref<1152x128xbf16, #tpu.memory_space<vmem>>, vector<128x128xbf16>
    %cst_115 = arith.constant dense<0.000000e+00> : vector<256x128xf32>
    %116 = tpu.matmul %114, %115, %cst_115 {dimension_numbers = #tpu.dot_dimension_numbers<[1], [0], [0], [1], [0, 0, 1, 1], [], []>} : vector<256x128xbf16>, vector<128x128xbf16>, vector<256x128xf32> -> vector<256x128xf32>
    %117 = arith.addf %112, %116 : vector<256x128xf32>
    %c2_116 = arith.constant 2 : index
    %c1_117 = arith.constant 1 : index
    %c0_118 = arith.constant 0 : index
    %118 = vector.load %arg5[%c2_116, %c1_117, %c0_118] : memref<18x18x128xbf16, #tpu.memory_space<vmem>>, vector<16x16x128xbf16>
    %119 = vector.shape_cast %118 : vector<16x16x128xbf16> to vector<256x128xbf16>
    %c896_119 = arith.constant 896 : index
    %c0_120 = arith.constant 0 : index
    %120 = vector.load %arg3[%c896_119, %c0_120] : memref<1152x128xbf16, #tpu.memory_space<vmem>>, vector<128x128xbf16>
    %cst_121 = arith.constant dense<0.000000e+00> : vector<256x128xf32>
    %121 = tpu.matmul %119, %120, %cst_121 {dimension_numbers = #tpu.dot_dimension_numbers<[1], [0], [0], [1], [0, 0, 1, 1], [], []>} : vector<256x128xbf16>, vector<128x128xbf16>, vector<256x128xf32> -> vector<256x128xf32>
    %122 = arith.addf %117, %121 : vector<256x128xf32>
    %c2_122 = arith.constant 2 : index
    %c2_123 = arith.constant 2 : index
    %c0_124 = arith.constant 0 : index
    %123 = vector.load %arg5[%c2_122, %c2_123, %c0_124] : memref<18x18x128xbf16, #tpu.memory_space<vmem>>, vector<16x16x128xbf16>
    %124 = vector.shape_cast %123 : vector<16x16x128xbf16> to vector<256x128xbf16>
    %c1024_125 = arith.constant 1024 : index
    %c0_126 = arith.constant 0 : index
    %125 = vector.load %arg3[%c1024_125, %c0_126] : memref<1152x128xbf16, #tpu.memory_space<vmem>>, vector<128x128xbf16>
    %cst_127 = arith.constant dense<0.000000e+00> : vector<256x128xf32>
    %126 = tpu.matmul %124, %125, %cst_127 {dimension_numbers = #tpu.dot_dimension_numbers<[1], [0], [0], [1], [0, 0, 1, 1], [], []>} : vector<256x128xbf16>, vector<128x128xbf16>, vector<256x128xf32> -> vector<256x128xf32>
    %127 = arith.addf %122, %126 : vector<256x128xf32>
    %cst_128 = arith.constant dense<0.000000e+00> : vector<128xf32>
    %128 = vector.multi_reduction <add>, %127, %cst_128 [0] : vector<256x128xf32> to vector<128xf32>
    %129 = vector.shape_cast %128 : vector<128xf32> to vector<1x128xf32>
    %130 = arith.mulf %127, %127 : vector<256x128xf32>
    %cst_129 = arith.constant dense<0.000000e+00> : vector<128xf32>
    %131 = vector.multi_reduction <add>, %130, %cst_129 [0] : vector<256x128xf32> to vector<128xf32>
    %132 = vector.shape_cast %131 : vector<128xf32> to vector<1x128xf32>
    %cst_130 = arith.constant 3.906250e-03 : f32
    %133 = vector.broadcast %cst_130 : f32 to vector<1x128xf32>
    %134 = arith.mulf %129, %133 : vector<1x128xf32>
    %cst_131 = arith.constant 3.906250e-03 : f32
    %135 = vector.broadcast %cst_131 : f32 to vector<1x128xf32>
    %136 = arith.mulf %132, %135 : vector<1x128xf32>
    %137 = arith.mulf %134, %134 : vector<1x128xf32>
    %138 = arith.subf %136, %137 : vector<1x128xf32>
    %cst_132 = arith.constant 0.000000e+00 : f32
    %139 = vector.broadcast %cst_132 : f32 to vector<1x128xf32>
    %140 = arith.maximumf %138, %139 : vector<1x128xf32>
    %141 = vector.broadcast %134 : vector<1x128xf32> to vector<256x128xf32>
    %142 = arith.subf %127, %141 : vector<256x128xf32>
    %cst_133 = arith.constant 9.99999974E-6 : f32
    %143 = vector.broadcast %cst_133 : f32 to vector<1x128xf32>
    %144 = arith.addf %140, %143 : vector<1x128xf32>
    %145 = math.rsqrt %144 : vector<1x128xf32>
    %146 = vector.broadcast %145 : vector<1x128xf32> to vector<256x128xf32>
    %147 = arith.mulf %142, %146 : vector<256x128xf32>
    %c0_134 = arith.constant 0 : index
    %c1_135 = arith.constant 1 : index
    %c1_136 = arith.constant 1 : index
    %c0_137 = arith.constant 0 : index
    %148 = vector.load %arg1[%c0_134, %c1_135, %c1_136, %c0_137] : memref<1x18x18x128xbf16, #tpu.memory_space<vmem>>, vector<1x16x16x128xbf16>
    %149 = vector.shape_cast %148 : vector<1x16x16x128xbf16> to vector<16x16x128xbf16>
    %150 = arith.extf %149 : vector<16x16x128xbf16> to vector<16x16x128xf32>
    %151 = vector.shape_cast %147 : vector<256x128xf32> to vector<16x16x128xf32>
    %152 = arith.addf %151, %150 : vector<16x16x128xf32>
    %cst_138 = arith.constant 0.000000e+00 : bf16
    %153 = vector.broadcast %cst_138 : bf16 to vector<1x18x128xbf16>
    %cst_139 = arith.constant 0.000000e+00 : bf16
    %154 = vector.broadcast %cst_139 : bf16 to vector<18x1x128xbf16>
    %c0_140 = arith.constant 0 : index
    %c0_141 = arith.constant 0 : index
    %c0_142 = arith.constant 0 : index
    %c0_143 = arith.constant 0 : index
    %155 = vector.load %arg4[%c0_140, %c0_141, %c0_142, %c0_143] : memref<1x18x18x128xbf16, #tpu.memory_space<vmem>>, vector<1x1x18x128xbf16>
    %156 = vector.shape_cast %155 : vector<1x1x18x128xbf16> to vector<1x18x128xbf16>
    %157 = vector.shape_cast %153 : vector<1x18x128xbf16> to vector<1x1x18x128xbf16>
    tpu.vector_store %arg4[%c0_140, %c0_141, %c0_142, %c0_143], %157 {strides = array<i32>} : memref<1x18x18x128xbf16, #tpu.memory_space<vmem>>, vector<1x1x18x128xbf16>,
    %c0_144 = arith.constant 0 : index
    %c17_145 = arith.constant 17 : index
    %c0_146 = arith.constant 0 : index
    %c0_147 = arith.constant 0 : index
    %158 = vector.load %arg4[%c0_144, %c17_145, %c0_146, %c0_147] : memref<1x18x18x128xbf16, #tpu.memory_space<vmem>>, vector<1x1x18x128xbf16>
    %159 = vector.shape_cast %158 : vector<1x1x18x128xbf16> to vector<1x18x128xbf16>
    %160 = vector.shape_cast %153 : vector<1x18x128xbf16> to vector<1x1x18x128xbf16>
    tpu.vector_store %arg4[%c0_144, %c17_145, %c0_146, %c0_147], %160 {strides = array<i32>} : memref<1x18x18x128xbf16, #tpu.memory_space<vmem>>, vector<1x1x18x128xbf16>,
    %c0_148 = arith.constant 0 : index
    %c0_149 = arith.constant 0 : index
    %c0_150 = arith.constant 0 : index
    %c0_151 = arith.constant 0 : index
    %161 = vector.load %arg4[%c0_148, %c0_149, %c0_150, %c0_151] : memref<1x18x18x128xbf16, #tpu.memory_space<vmem>>, vector<1x18x1x128xbf16>
    %162 = vector.shape_cast %161 : vector<1x18x1x128xbf16> to vector<18x1x128xbf16>
    %163 = vector.shape_cast %154 : vector<18x1x128xbf16> to vector<1x18x1x128xbf16>
    tpu.vector_store %arg4[%c0_148, %c0_149, %c0_150, %c0_151], %163 {strides = array<i32>} : memref<1x18x18x128xbf16, #tpu.memory_space<vmem>>, vector<1x18x1x128xbf16>,
    %c0_152 = arith.constant 0 : index
    %c0_153 = arith.constant 0 : index
    %c17_154 = arith.constant 17 : index
    %c0_155 = arith.constant 0 : index
    %164 = vector.load %arg4[%c0_152, %c0_153, %c17_154, %c0_155] : memref<1x18x18x128xbf16, #tpu.memory_space<vmem>>, vector<1x18x1x128xbf16>
    %165 = vector.shape_cast %164 : vector<1x18x1x128xbf16> to vector<18x1x128xbf16>
    %166 = vector.shape_cast %154 : vector<18x1x128xbf16> to vector<1x18x1x128xbf16>
    tpu.vector_store %arg4[%c0_152, %c0_153, %c17_154, %c0_155], %166 {strides = array<i32>} : memref<1x18x18x128xbf16, #tpu.memory_space<vmem>>, vector<1x18x1x128xbf16>,
    %167 = arith.truncf %152 : vector<16x16x128xf32> to vector<16x16x128xbf16>
    %c0_156 = arith.constant 0 : index
    %c1_157 = arith.constant 1 : index
    %c1_158 = arith.constant 1 : index
    %c0_159 = arith.constant 0 : index
    %168 = vector.load %arg4[%c0_156, %c1_157, %c1_158, %c0_159] : memref<1x18x18x128xbf16, #tpu.memory_space<vmem>>, vector<1x16x16x128xbf16>
    %169 = vector.shape_cast %168 : vector<1x16x16x128xbf16> to vector<16x16x128xbf16>
    %170 = vector.shape_cast %167 : vector<16x16x128xbf16> to vector<1x16x16x128xbf16>
    tpu.vector_store %arg4[%c0_156, %c1_157, %c1_158, %c0_159], %170 {strides = array<i32>} : memref<1x18x18x128xbf16, #tpu.memory_space<vmem>>, vector<1x16x16x128xbf16>,
    return
  }
  func.func @transform_0(%arg0: i32) -> (i32, i32, i32, i32) {
    %c0_i32 = arith.constant 0 : i32
    %c0_i32_0 = arith.constant 0 : i32
    %c0_i32_1 = arith.constant 0 : i32
    %c0_i32_2 = arith.constant 0 : i32
    return %arg0, %c0_i32, %c0_i32_0, %c0_i32_1 : i32, i32, i32, i32
  }
  func.func @transform_1(%arg0: i32) -> (i32, i32) {
    %c0_i32 = arith.constant 0 : i32
    %c0_i32_0 = arith.constant 0 : i32
    %c0_i32_1 = arith.constant 0 : i32
    return %c0_i32, %c0_i32_0 : i32, i32
  }
  func.func @transform_2(%arg0: i32) -> (i32, i32) {
    %c0_i32 = arith.constant 0 : i32
    %c0_i32_0 = arith.constant 0 : i32
    %c0_i32_1 = arith.constant 0 : i32
    return %c0_i32, %c0_i32_0 : i32, i32
  }
  func.func @transform_3(%arg0: i32) -> (i32, i32, i32, i32) {
    %c0_i32 = arith.constant 0 : i32
    %c0_i32_0 = arith.constant 0 : i32
    %c0_i32_1 = arith.constant 0 : i32
    %c0_i32_2 = arith.constant 0 : i32
    return %arg0, %c0_i32, %c0_i32_0, %c0_i32_1 : i32, i32, i32, i32
  }
}

</mosaic_0001>

<llo_original>
// kernel: res_blocks_forward.2
$region0: #{res_blocks_forward.2}
  #allocation0 [shape = 'u32[]', space=smem, size = 0x4, offset = 0x4, fixed_abs, tag = 'smem constant byte address 0x4 - core index']
  #allocation1 [shape = 'u32[144,128]{1,0:T(1,128)}', space=vmem, size = 0x12000, scoped, tag = 'internal scratch']
  #allocation2 [shape = 'bf16[18,18,128]{2,1,0:T(8,128)(2,1)}', space=vmem, size = 0x1b000, scoped, tag = 'scratch operand']
  %s0 = inlined_call_operand.vmem [shape: bf16[2,18,18,128], index: 0, kind: input, shape index: {}]
  %s1 = inlined_call_operand.vmem [shape: bf16[1152,128], index: 1, kind: input, shape index: {}]
  %s2 = inlined_call_operand.vmem [shape: bf16[1152,128], index: 2, kind: input, shape index: {}]
  %s3 = inlined_call_operand.vmem [shape: bf16[2,18,18,128], index: 3, kind: output, shape index: {}]
  %s4 = sld [smem:[#allocation0]]
  $region45: #{res_blocks_forward.2} parent=0
    _
  %s6 = ssub.s32 1, %s4
  %s7 = scalar_select 0, %s6, %s4
  loop: start=0, step=1, limit=4
  $region2: #{res_blocks_forward.2} parent=0 // loop_pre_header
    _
  $region3: #{res_blocks_forward.2} parent=0 // loop_header
    %s9 = sphi 0, %s13
    %p10 = scmp.ge.s32.totalorder %s9, 4
    %s19 = sphi 0, %s21
    %s22 = sphi 0, %s19
    %s23 = sphi 0, %s22
    %s39 = sphi 0, %s23
    %s43 = sphi 0, %s43
    %s45 = sphi 0, %s43
    %s46 = sphi 0, %s45
    %s60 = sphi 0, %s46
    %s64 = sphi 0, %s64
    %s66 = sphi 0, %s64
    %s67 = sphi 0, %s66
    %s81 = sphi 0, %s67
    %s87 = sphi 0, %s89
    %s90 = sphi 0, %s87
    %s91 = sphi 0, %s90
    %s107 = sphi 0, %s91
  $region4: #{res_blocks_forward.2} parent=0 // loop_header_branch
    %12 = sbr.rel (%p10) target = $region8
  $region5: #{res_blocks_forward.2} parent=0 // loop_body
    %s14 = ssub.s32 %s9, 1
    %s15 = ssub.s32 %s9, 2
    %s16 = sadd.s32 %s9, 1
    %s17 = ssub.s32 %s9, %s16
    %p18 = scmp.eq.s32.totalorder %s17, 0
    %s20 = sadd.s32 %s19, 1
    %s21 = scalar_select %p18, %s19, %s20
    %p24 = pneg %p18
    %p25 = scmp.eq.s32.totalorder %s9, 1
    %p26 = por %p24, %p25
    %p27 = scmp.ne.s32.totalorder %s19, %s22
    %p28 = scmp.eq.s32.totalorder %s9, 0
    %p29 = por %p27, %p28
    %p30 = scmp.ne.s32.totalorder %s19, %s22
    %p31 = scmp.eq.s32.totalorder %s14, 1
    %p32 = por %p30, %p31
    %p33 = scmp.ne.s32.totalorder %s22, %s23
    %p34 = scmp.eq.s32.totalorder %s14, 0
    %p35 = por %p33, %p34
    %p36 = scmp.ne.s32.totalorder %s22, %s23
    %p37 = scmp.eq.s32.totalorder %s15, 1
    %p38 = por %p36, %p37
    %p40 = scmp.ne.s32.totalorder %s23, %s39
    %p41 = scmp.eq.s32.totalorder %s15, 0
    %p42 = por %p40, %p41
    %s44 = sadd.s32 %s43, 1
    %p47 = scmp.eq.s32.totalorder %s9, 1
    %p48 = scmp.ne.s32.totalorder %s43, %s45
    %p49 = scmp.eq.s32.totalorder %s9, 0
    %p50 = por %p48, %p49
    %p51 = scmp.ne.s32.totalorder %s43, %s45
    %p52 = scmp.eq.s32.totalorder %s14, 1
    %p53 = por %p51, %p52
    %p54 = scmp.ne.s32.totalorder %s45, %s46
    %p55 = scmp.eq.s32.totalorder %s14, 0
    %p56 = por %p54, %p55
    %p57 = scmp.ne.s32.totalorder %s45, %s46
    %p58 = scmp.eq.s32.totalorder %s15, 1
    %p59 = por %p57, %p58
    %p61 = scmp.ne.s32.totalorder %s46, %s60
    %p62 = scmp.eq.s32.totalorder %s15, 0
    %p63 = por %p61, %p62
    %s65 = sadd.s32 %s64, 1
    %p68 = scmp.eq.s32.totalorder %s9, 1
    %p69 = scmp.ne.s32.totalorder %s64, %s66
    %p70 = scmp.eq.s32.totalorder %s9, 0
    %p71 = por %p69, %p70
    %p72 = scmp.ne.s32.totalorder %s64, %s66
    %p73 = scmp.eq.s32.totalorder %s14, 1
    %p74 = por %p72, %p73
    %p75 = scmp.ne.s32.totalorder %s66, %s67
    %p76 = scmp.eq.s32.totalorder %s14, 0
    %p77 = por %p75, %p76
    %p78 = scmp.ne.s32.totalorder %s66, %s67
    %p79 = scmp.eq.s32.totalorder %s15, 1
    %p80 = por %p78, %p79
    %p82 = scmp.ne.s32.totalorder %s67, %s81
    %p83 = scmp.eq.s32.totalorder %s15, 0
    %p84 = por %p82, %p83
    %s85 = ssub.s32 %s9, %s16
    %p86 = scmp.eq.s32.totalorder %s85, 0
    %s88 = sadd.s32 %s87, 1
    %s89 = scalar_select %p86, %s87, %s88
    %p92 = pneg %p86
    %p93 = scmp.eq.s32.totalorder %s9, 1
    %p94 = por %p92, %p93
    %p95 = scmp.ne.s32.totalorder %s87, %s90
    %p96 = scmp.eq.s32.totalorder %s9, 0
    %p97 = por %p95, %p96
    %p98 = scmp.ne.s32.totalorder %s87, %s90
    %p99 = scmp.eq.s32.totalorder %s14, 1
    %p100 = por %p98, %p99
    %p101 = scmp.ne.s32.totalorder %s90, %s91
    %p102 = scmp.eq.s32.totalorder %s14, 0
    %p103 = por %p101, %p102
    %p104 = scmp.ne.s32.totalorder %s90, %s91
    %p105 = scmp.eq.s32.totalorder %s15, 1
    %p106 = por %p104, %p105
    %p108 = scmp.ne.s32.totalorder %s91, %s107
    %p109 = scmp.eq.s32.totalorder %s15, 0
    %p110 = por %p108, %p109
    %p111 = scmp.le.s32.totalorder 1, %s9
    %p112 = scmp.lt.s32.totalorder %s9, 3
    %p113 = pnand %p111, %p112
    %p114 = pneg %p113
    // Predicated region
    $region9: #{res_blocks_forward.2} parent=5 // pred_check
      _
    $region10: #{res_blocks_forward.2} parent=5 // pred_check_branch
      %116 = sbr.rel (%p113) target = $region12
    $region11: #{res_blocks_forward.2} parent=5 // pred_region
      %s117 = ssub.s32 %s9, 1
      // Predicated region
      $region13: #{res_blocks_forward.2} parent=11 // pred_check
        %p118 = pneg %p56
      $region14: #{res_blocks_forward.2} parent=11 // pred_check_branch
        %120 = sbr.rel (%p118) target = $region16
      $region15: #{res_blocks_forward.2} parent=11 // pred_region
        _
      $region16: #{res_blocks_forward.2} parent=11 // pred_fallthru
        _
      // Predicated region
      $region17: #{res_blocks_forward.2} parent=11 // pred_check
        %p121 = pneg %p77
      $region18: #{res_blocks_forward.2} parent=11 // pred_check_branch
        %123 = sbr.rel (%p121) target = $region20
      $region19: #{res_blocks_forward.2} parent=11 // pred_region
        _
      $region20: #{res_blocks_forward.2} parent=11 // pred_fallthru
        _
    $region12: #{res_blocks_forward.2} parent=5 // pred_fallthru
      _
    %p124 = scmp.lt.s32.totalorder %s9, 2
    // Predicated region
    $region21: #{res_blocks_forward.2} parent=5 // pred_check
      %p125 = pneg %p124
    $region22: #{res_blocks_forward.2} parent=5 // pred_check_branch
      %127 = sbr.rel (%p125) target = $region24
    $region23: #{res_blocks_forward.2} parent=5 // pred_region
      // Predicated region
      $region25: #{res_blocks_forward.2} parent=23 // pred_check
        %p128 = pneg %p29
      $region26: #{res_blocks_forward.2} parent=23 // pred_check_branch
        %130 = sbr.rel (%p128) target = $region28
      $region27: #{res_blocks_forward.2} parent=23 // pred_region
        %p131 = scmp.lt.s32.totalorder %s9, 1
        %s132 = scalar_select %p131, %s9, 1
        %s133 = smul.addr %s132, 54
        %s134 = smul.addr %s133, 4
        %s135 = scalar_lea.vmem %s0, %s134
      $region28: #{res_blocks_forward.2} parent=23 // pred_fallthru
        _
    $region24: #{res_blocks_forward.2} parent=5 // pred_fallthru
      _
    %p136 = scmp.le.s32.totalorder 1, %s9
    %p137 = scmp.lt.s32.totalorder %s9, 3
    %p138 = pnand %p136, %p137
    %p139 = pneg %p138
    // Predicated region
    $region29: #{res_blocks_forward.2} parent=5 // pred_check
      _
    $region30: #{res_blocks_forward.2} parent=5 // pred_check_branch
      %141 = sbr.rel (%p138) target = $region32
    $region31: #{res_blocks_forward.2} parent=5 // pred_region
      %s142 = ssub.s32 %s9, 1
      %p143 = scmp.lt.s32.totalorder %s14, 1
      %s144 = scalar_select %p143, %s14, 1
      %s145 = smul.addr %s144, 54
      %s146 = smul.addr %s145, 4
      %s147 = scalar_lea.vmem %s0, %s146
      %p148 = pneg %p35
      %p149 = pneg %p32
      %p150 = pneg %p56
      %p151 = pneg %p53
      %p152 = pneg %p77
      %p153 = pneg %p74
      %p154 = pneg %p103
      %p155 = pneg %p100
      %p156 = scmp.lt.s32.totalorder %s14, 1
      %s157 = scalar_select %p156, %s14, 1
      %s158 = smul.addr %s157, 54
      %s159 = smul.addr %s158, 4
      %s160 = scalar_lea.vmem %s3, %s159
      %p161 = scmp.lt.s32.totalorder %s14, 1
      %s162 = scalar_select %p161, %s14, 1
      %s163 = smul.addr %s162, 54
      %s164 = smul.addr %s163, 4
      %s165 = scalar_lea.vmem %s0, %s164
      %p166 = scmp.lt.s32.totalorder %s14, 1
      %s167 = scalar_select %p166, %s14, 1
      %s168 = smul.addr %s167, 54
      %s169 = smul.addr %s168, 4
      %s170 = scalar_lea.vmem %s3, %s169
      %v172 = vld [vmem:[%s165] sm:$0xf]
      %v173 = vld [vmem:[%s165 + $0x4] sm:$0xf]
      %v174 = vld [vmem:[%s165 + $0xc] sm:$0xf]
      %v175 = vld [vmem:[%s165 + $0x10] sm:$0xf]
      %v176 = vld [vmem:[%s165 + $0x18] sm:$0xf]
      %v177 = vld [vmem:[%s165 + $0x1c] sm:$0xf]
      %v178 = vld [vmem:[%s165 + $0x24] sm:$0xf]
      %v179 = vld [vmem:[%s165 + $0x28] sm:$0xf]
      %v180 = vld [vmem:[%s165 + $0x30] sm:$0xf]
      %v181 = vld [vmem:[%s165 + $0x34] sm:$0xf]
      %v182 = vld [vmem:[%s165 + $0x3c] sm:$0xf]
      %v183 = vld [vmem:[%s165 + $0x40] sm:$0xf]
      %v184 = vld [vmem:[%s165 + $0x48] sm:$0xf]
      %v185 = vld [vmem:[%s165 + $0x4c] sm:$0xf]
      %v186 = vld [vmem:[%s165 + $0x54] sm:$0xf]
      %v187 = vld [vmem:[%s165 + $0x58] sm:$0xf]
      %v188 = vld [vmem:[%s165 + $0x60] sm:$0xf]
      %v189 = vld [vmem:[%s165 + $0x64] sm:$0xf]
      %v190 = vld [vmem:[%s165 + $0x6c] sm:$0xf]
      %v191 = vld [vmem:[%s165 + $0x70] sm:$0xf]
      %v192 = vld [vmem:[%s165 + $0x78] sm:$0xf]
      %v193 = vld [vmem:[%s165 + $0x7c] sm:$0xf]
      %v194 = vld [vmem:[%s165 + $0x84] sm:$0xf]
      %v195 = vld [vmem:[%s165 + $0x88] sm:$0xf]
      %v196 = vld [vmem:[%s165 + $0x90] sm:$0xf]
      %v197 = vld [vmem:[%s165 + $0x94] sm:$0xf]
      %v198 = vld [vmem:[%s165 + $0x9c] sm:$0xf]
      %v199 = vld [vmem:[%s165 + $0xa0] sm:$0xf]
      %v200 = vld [vmem:[%s165 + $0xa8] sm:$0xf]
      %v201 = vld [vmem:[%s165 + $0xac] sm:$0xf]
      %v202 = vld [vmem:[%s165 + $0xb4] sm:$0xf]
      %v203 = vld [vmem:[%s165 + $0xb8] sm:$0xf]
      %v204 = vld [vmem:[%s1] sm:$0xf]
      %v205 = vld [vmem:[%s1 + $0x4] sm:$0xf]
      %v206 = vld [vmem:[%s1 + $0x8] sm:$0xf]
      %v207 = vld [vmem:[%s1 + $0xc] sm:$0xf]
      %v208 = vld [vmem:[%s1 + $0x10] sm:$0xf]
      %v209 = vld [vmem:[%s1 + $0x14] sm:$0xf]
      %v210 = vld [vmem:[%s1 + $0x18] sm:$0xf]
      %v211 = vld [vmem:[%s1 + $0x1c] sm:$0xf]
      %v212 = vld [vmem:[%s1 + $0x20] sm:$0xf]
      %v213 = vld [vmem:[%s1 + $0x24] sm:$0xf]
      %v214 = vld [vmem:[%s1 + $0x28] sm:$0xf]
      %v215 = vld [vmem:[%s1 + $0x2c] sm:$0xf]
      %v216 = vld [vmem:[%s1 + $0x30] sm:$0xf]
      %v217 = vld [vmem:[%s1 + $0x34] sm:$0xf]
      %v218 = vld [vmem:[%s1 + $0x38] sm:$0xf]
      %v219 = vld [vmem:[%s1 + $0x3c] sm:$0xf]
      %v220 = vld [vmem:[%s165 + $0x8] sm:$0x1]
      %v221 = vld [vmem:[%s165 + $0x14] sm:$0x1]
      %v222 = vld [vmem:[%s165 + $0x20] sm:$0x1]
      %v223 = vld [vmem:[%s165 + $0x2c] sm:$0x1]
      %v224 = vld [vmem:[%s165 + $0x38] sm:$0x1]
      %v225 = vld [vmem:[%s165 + $0x44] sm:$0x1]
      %v226 = vld [vmem:[%s165 + $0x50] sm:$0x1]
      %v227 = vld [vmem:[%s165 + $0x5c] sm:$0x1]
      %v228 = vld [vmem:[%s165 + $0x68] sm:$0x1]
      %v229 = vld [vmem:[%s165 + $0x74] sm:$0x1]
      %v230 = vld [vmem:[%s165 + $0x80] sm:$0x1]
      %v231 = vld [vmem:[%s165 + $0x8c] sm:$0x1]
      %v232 = vld [vmem:[%s165 + $0x98] sm:$0x1]
      %v233 = vld [vmem:[%s165 + $0xa4] sm:$0x1]
      %v234 = vld [vmem:[%s165 + $0xb0] sm:$0x1]
      %v235 = vld [vmem:[%s165 + $0xbc] sm:$0x1]
      %vm236 = vsmask.f32 3328
      %vm237 = vsmask.f32 7440
      %vm238 = vmor %vm236, %vm237
      %v240 = vshrl.u32 %v172, 16
      %v242 = vrot.slane %v240, 4
      %v243 = vshll.u32 %v172, 16
      %v245 = vrot.slane %v243, 5
      %v246 = vor.u32 %v242, %v245
      %v247 = vrot.slane %v246, 4
      %v249 = vshll.u32 %v173, 16
      %v251 = vrot.slane %v249, 5
      %v252 = vsel %vm238, %v247, %v251
      %v253 = vshrl.u32 %v173, 16
      %v255 = vrot.slane %v253, 4
      %v256 = vor.u32 %v255, %v251
      %v257 = vrot.slane %v256, 4
      %v259 = vshll.u32 %v220, 16
      %v261 = vrot.slane %v259, 5
      %v262 = vsel %vm238, %v257, %v261
      %v264 = vshrl.u32 %v174, 16
      %v266 = vrot.slane %v264, 4
      %v267 = vshll.u32 %v174, 16
      %v269 = vrot.slane %v267, 5
      %v270 = vor.u32 %v266, %v269
      %v271 = vrot.slane %v270, 4
      %v273 = vshll.u32 %v175, 16
      %v275 = vrot.slane %v273, 5
      %v276 = vsel %vm238, %v271, %v275
      %v277 = vshrl.u32 %v175, 16
      %v279 = vrot.slane %v277, 4
      %v280 = vor.u32 %v279, %v275
      %v281 = vrot.slane %v280, 4
      %v283 = vshll.u32 %v221, 16
      %v285 = vrot.slane %v283, 5
      %v286 = vsel %vm238, %v281, %v285
      %v288 = vshrl.u32 %v176, 16
      %v290 = vrot.slane %v288, 4
      %v291 = vshll.u32 %v176, 16
      %v293 = vrot.slane %v291, 5
      %v294 = vor.u32 %v290, %v293
      %v295 = vrot.slane %v294, 4
      %v297 = vshll.u32 %v177, 16
      %v299 = vrot.slane %v297, 5
      %v300 = vsel %vm238, %v295, %v299
      %v301 = vshrl.u32 %v177, 16
      %v303 = vrot.slane %v301, 4
      %v304 = vor.u32 %v303, %v299
      %v305 = vrot.slane %v304, 4
      %v307 = vshll.u32 %v222, 16
      %v309 = vrot.slane %v307, 5
      %v310 = vsel %vm238, %v305, %v309
      %v312 = vshrl.u32 %v178, 16
      %v314 = vrot.slane %v312, 4
      %v315 = vshll.u32 %v178, 16
      %v317 = vrot.slane %v315, 5
      %v318 = vor.u32 %v314, %v317
      %v319 = vrot.slane %v318, 4
      %v321 = vshll.u32 %v179, 16
      %v323 = vrot.slane %v321, 5
      %v324 = vsel %vm238, %v319, %v323
      %v325 = vshrl.u32 %v179, 16
      %v327 = vrot.slane %v325, 4
      %v328 = vor.u32 %v327, %v323
      %v329 = vrot.slane %v328, 4
      %v331 = vshll.u32 %v223, 16
      %v333 = vrot.slane %v331, 5
      %v334 = vsel %vm238, %v329, %v333
      %v336 = vshrl.u32 %v180, 16
      %v338 = vrot.slane %v336, 4
      %v339 = vshll.u32 %v180, 16
      %v341 = vrot.slane %v339, 5
      %v342 = vor.u32 %v338, %v341
      %v343 = vrot.slane %v342, 4
      %v345 = vshll.u32 %v181, 16
      %v347 = vrot.slane %v345, 5
      %v348 = vsel %vm238, %v343, %v347
      %v349 = vshrl.u32 %v181, 16
      %v351 = vrot.slane %v349, 4
      %v352 = vor.u32 %v351, %v347
      %v353 = vrot.slane %v352, 4
      %v355 = vshll.u32 %v224, 16
      %v357 = vrot.slane %v355, 5
      %v358 = vsel %vm238, %v353, %v357
      %v360 = vshrl.u32 %v182, 16
      %v362 = vrot.slane %v360, 4
      %v363 = vshll.u32 %v182, 16
      %v365 = vrot.slane %v363, 5
      %v366 = vor.u32 %v362, %v365
      %v367 = vrot.slane %v366, 4
      %v369 = vshll.u32 %v183, 16
      %v371 = vrot.slane %v369, 5
      %v372 = vsel %vm238, %v367, %v371
      %v373 = vshrl.u32 %v183, 16
      %v375 = vrot.slane %v373, 4
      %v376 = vor.u32 %v375, %v371
      %v377 = vrot.slane %v376, 4
      %v379 = vshll.u32 %v225, 16
      %v381 = vrot.slane %v379, 5
      %v382 = vsel %vm238, %v377, %v381
      %v384 = vshrl.u32 %v184, 16
      %v386 = vrot.slane %v384, 4
      %v387 = vshll.u32 %v184, 16
      %v389 = vrot.slane %v387, 5
      %v390 = vor.u32 %v386, %v389
      %v391 = vrot.slane %v390, 4
      %v393 = vshll.u32 %v185, 16
      %v395 = vrot.slane %v393, 5
      %v396 = vsel %vm238, %v391, %v395
      %v397 = vshrl.u32 %v185, 16
      %v399 = vrot.slane %v397, 4
      %v400 = vor.u32 %v399, %v395
      %v401 = vrot.slane %v400, 4
      %v403 = vshll.u32 %v226, 16
      %v405 = vrot.slane %v403, 5
      %v406 = vsel %vm238, %v401, %v405
      %v408 = vshrl.u32 %v186, 16
      %v410 = vrot.slane %v408, 4
      %v411 = vshll.u32 %v186, 16
      %v413 = vrot.slane %v411, 5
      %v414 = vor.u32 %v410, %v413
      %v415 = vrot.slane %v414, 4
      %v417 = vshll.u32 %v187, 16
      %v419 = vrot.slane %v417, 5
      %v420 = vsel %vm238, %v415, %v419
      %v421 = vshrl.u32 %v187, 16
      %v423 = vrot.slane %v421, 4
      %v424 = vor.u32 %v423, %v419
      %v425 = vrot.slane %v424, 4
      %v427 = vshll.u32 %v227, 16
      %v429 = vrot.slane %v427, 5
      %v430 = vsel %vm238, %v425, %v429
      %v432 = vshrl.u32 %v188, 16
      %v434 = vrot.slane %v432, 4
      %v435 = vshll.u32 %v188, 16
      %v437 = vrot.slane %v435, 5
      %v438 = vor.u32 %v434, %v437
      %v439 = vrot.slane %v438, 4
      %v441 = vshll.u32 %v189, 16
      %v443 = vrot.slane %v441, 5
      %v444 = vsel %vm238, %v439, %v443
      %v445 = vshrl.u32 %v189, 16
      %v447 = vrot.slane %v445, 4
      %v448 = vor.u32 %v447, %v443
      %v449 = vrot.slane %v448, 4
      %v451 = vshll.u32 %v228, 16
      %v453 = vrot.slane %v451, 5
      %v454 = vsel %vm238, %v449, %v453
      %v456 = vshrl.u32 %v190, 16
      %v458 = vrot.slane %v456, 4
      %v459 = vshll.u32 %v190, 16
      %v461 = vrot.slane %v459, 5
      %v462 = vor.u32 %v458, %v461
      %v463 = vrot.slane %v462, 4
      %v465 = vshll.u32 %v191, 16
      %v467 = vrot.slane %v465, 5
      %v468 = vsel %vm238, %v463, %v467
      %v469 = vshrl.u32 %v191, 16
      %v471 = vrot.slane %v469, 4
      %v472 = vor.u32 %v471, %v467
      %v473 = vrot.slane %v472, 4
      %v475 = vshll.u32 %v229, 16
      %v477 = vrot.slane %v475, 5
      %v478 = vsel %vm238, %v473, %v477
      %v480 = vshrl.u32 %v192, 16
      %v482 = vrot.slane %v480, 4
      %v483 = vshll.u32 %v192, 16
      %v485 = vrot.slane %v483, 5
      %v486 = vor.u32 %v482, %v485
      %v487 = vrot.slane %v486, 4
      %v489 = vshll.u32 %v193, 16
      %v491 = vrot.slane %v489, 5
      %v492 = vsel %vm238, %v487, %v491
      %v493 = vshrl.u32 %v193, 16
      %v495 = vrot.slane %v493, 4
      %v496 = vor.u32 %v495, %v491
      %v497 = vrot.slane %v496, 4
      %v499 = vshll.u32 %v230, 16
      %v501 = vrot.slane %v499, 5
      %v502 = vsel %vm238, %v497, %v501
      %v504 = vshrl.u32 %v194, 16
      %v506 = vrot.slane %v504, 4
      %v507 = vshll.u32 %v194, 16
      %v509 = vrot.slane %v507, 5
      %v510 = vor.u32 %v506, %v509
      %v511 = vrot.slane %v510, 4
      %v513 = vshll.u32 %v195, 16
      %v515 = vrot.slane %v513, 5
      %v516 = vsel %vm238, %v511, %v515
      %v517 = vshrl.u32 %v195, 16
      %v519 = vrot.slane %v517, 4
      %v520 = vor.u32 %v519, %v515
      %v521 = vrot.slane %v520, 4
      %v523 = vshll.u32 %v231, 16
      %v525 = vrot.slane %v523, 5
      %v526 = vsel %vm238, %v521, %v525
      %v528 = vshrl.u32 %v196, 16
      %v530 = vrot.slane %v528, 4
      %v531 = vshll.u32 %v196, 16
      %v533 = vrot.slane %v531, 5
      %v534 = vor.u32 %v530, %v533
      %v535 = vrot.slane %v534, 4
      %v537 = vshll.u32 %v197, 16
      %v539 = vrot.slane %v537, 5
      %v540 = vsel %vm238, %v535, %v539
      %v541 = vshrl.u32 %v197, 16
      %v543 = vrot.slane %v541, 4
      %v544 = vor.u32 %v543, %v539
      %v545 = vrot.slane %v544, 4
      %v547 = vshll.u32 %v232, 16
      %v549 = vrot.slane %v547, 5
      %v550 = vsel %vm238, %v545, %v549
      %v552 = vshrl.u32 %v198, 16
      %v554 = vrot.slane %v552, 4
      %v555 = vshll.u32 %v198, 16
      %v557 = vrot.slane %v555, 5
      %v558 = vor.u32 %v554, %v557
      %v559 = vrot.slane %v558, 4
      %v561 = vshll.u32 %v199, 16
      %v563 = vrot.slane %v561, 5
      %v564 = vsel %vm238, %v559, %v563
      %v565 = vshrl.u32 %v199, 16
      %v567 = vrot.slane %v565, 4
      %v568 = vor.u32 %v567, %v563
      %v569 = vrot.slane %v568, 4
      %v571 = vshll.u32 %v233, 16
      %v573 = vrot.slane %v571, 5
      %v574 = vsel %vm238, %v569, %v573
      %v576 = vshrl.u32 %v200, 16
      %v578 = vrot.slane %v576, 4
      %v579 = vshll.u32 %v200, 16
      %v581 = vrot.slane %v579, 5
      %v582 = vor.u32 %v578, %v581
      %v583 = vrot.slane %v582, 4
      %v585 = vshll.u32 %v201, 16
      %v587 = vrot.slane %v585, 5
      %v588 = vsel %vm238, %v583, %v587
      %v589 = vshrl.u32 %v201, 16
      %v591 = vrot.slane %v589, 4
      %v592 = vor.u32 %v591, %v587
      %v593 = vrot.slane %v592, 4
      %v595 = vshll.u32 %v234, 16
      %v597 = vrot.slane %v595, 5
      %v598 = vsel %vm238, %v593, %v597
      %v600 = vshrl.u32 %v202, 16
      %v602 = vrot.slane %v600, 4
      %v603 = vshll.u32 %v202, 16
      %v605 = vrot.slane %v603, 5
      %v606 = vor.u32 %v602, %v605
      %v607 = vrot.slane %v606, 4
      %v609 = vshll.u32 %v203, 16
      %v611 = vrot.slane %v609, 5
      %v612 = vsel %vm238, %v607, %v611
      %v613 = vshrl.u32 %v203, 16
      %v615 = vrot.slane %v613, 4
      %v616 = vor.u32 %v615, %v611
      %v617 = vrot.slane %v616, 4
      %v619 = vshll.u32 %v235, 16
      %v621 = vrot.slane %v619, 5
      %v622 = vsel %vm238, %v617, %v621
      %v623 = vld [vmem:[%s1 + $0x40] sm:$0xf]
      %v624 = vld [vmem:[%s1 + $0x44] sm:$0xf]
      %v625 = vld [vmem:[%s1 + $0x48] sm:$0xf]
      %v626 = vld [vmem:[%s1 + $0x4c] sm:$0xf]
      %v627 = vld [vmem:[%s1 + $0x50] sm:$0xf]
      %v628 = vld [vmem:[%s1 + $0x54] sm:$0xf]
      %v629 = vld [vmem:[%s1 + $0x58] sm:$0xf]
      %v630 = vld [vmem:[%s1 + $0x5c] sm:$0xf]
      %v631 = vld [vmem:[%s1 + $0x60] sm:$0xf]
      %v632 = vld [vmem:[%s1 + $0x64] sm:$0xf]
      %v633 = vld [vmem:[%s1 + $0x68] sm:$0xf]
      %v634 = vld [vmem:[%s1 + $0x6c] sm:$0xf]
      %v635 = vld [vmem:[%s1 + $0x70] sm:$0xf]
      %v636 = vld [vmem:[%s1 + $0x74] sm:$0xf]
      %v637 = vld [vmem:[%s1 + $0x78] sm:$0xf]
      %v638 = vld [vmem:[%s1 + $0x7c] sm:$0xf]
      %v639 = vunpack.c.l.b16 %v252
      %v640 = vunpack.c.l.b16 %v262
      %v641 = vunpack.c.l.b16 %v276
      %v642 = vunpack.c.l.b16 %v286
      %v643 = vunpack.c.l.b16 %v300
      %v644 = vunpack.c.l.b16 %v310
      %v645 = vunpack.c.l.b16 %v324
      %v646 = vunpack.c.l.b16 %v334
      %v647 = vunpack.c.l.b16 %v348
      %v648 = vunpack.c.l.b16 %v358
      %v649 = vunpack.c.l.b16 %v372
      %v650 = vunpack.c.l.b16 %v382
      %v651 = vunpack.c.l.b16 %v396
      %v652 = vunpack.c.l.b16 %v406
      %v653 = vunpack.c.l.b16 %v420
      %v654 = vunpack.c.l.b16 %v430
      %v655 = vunpack.c.l.b16 %v444
      %v656 = vunpack.c.l.b16 %v454
      %v657 = vunpack.c.l.b16 %v468
      %v658 = vunpack.c.l.b16 %v478
      %v659 = vunpack.c.l.b16 %v492
      %v660 = vunpack.c.l.b16 %v502
      %v661 = vunpack.c.l.b16 %v516
      %v662 = vunpack.c.l.b16 %v526
      %v663 = vunpack.c.l.b16 %v540
      %v664 = vunpack.c.l.b16 %v550
      %v665 = vunpack.c.l.b16 %v564
      %v666 = vunpack.c.l.b16 %v574
      %v667 = vunpack.c.l.b16 %v588
      %v668 = vunpack.c.l.b16 %v598
      %v669 = vunpack.c.l.b16 %v612
      %v670 = vunpack.c.l.b16 %v622
      %v671 = vpack.c.b16 %v640, %v639
      %v672 = vpack.c.b16 %v642, %v641
      %v673 = vpack.c.b16 %v644, %v643
      %v674 = vpack.c.b16 %v646, %v645
      %v675 = vpack.c.b16 %v648, %v647
      %v676 = vpack.c.b16 %v650, %v649
      %v677 = vpack.c.b16 %v652, %v651
      %v678 = vpack.c.b16 %v654, %v653
      %v679 = vpack.c.b16 %v656, %v655
      %v680 = vpack.c.b16 %v658, %v657
      %v681 = vpack.c.b16 %v660, %v659
      %v682 = vpack.c.b16 %v662, %v661
      %v683 = vpack.c.b16 %v664, %v663
      %v684 = vpack.c.b16 %v666, %v665
      %v685 = vpack.c.b16 %v668, %v667
      %v686 = vpack.c.b16 %v670, %v669
      %v719 = vunpack.c.l.b16 %v623
      %v720 = vunpack.c.l.b16 %v624
      %v721 = vunpack.c.l.b16 %v625
      %v722 = vunpack.c.l.b16 %v626
      %v723 = vunpack.c.l.b16 %v627
      %v724 = vunpack.c.l.b16 %v628
      %v725 = vunpack.c.l.b16 %v629
      %v726 = vunpack.c.l.b16 %v630
      %v727 = vunpack.c.l.b16 %v631
      %v728 = vunpack.c.l.b16 %v632
      %v729 = vunpack.c.l.b16 %v633
      %v730 = vunpack.c.l.b16 %v634
      %v731 = vunpack.c.l.b16 %v635
      %v732 = vunpack.c.l.b16 %v636
      %v733 = vunpack.c.l.b16 %v637
      %v734 = vunpack.c.l.b16 %v638
      %v735 = vpack.c.b16 %v720, %v719
      %v736 = vpack.c.b16 %v722, %v721
      %v737 = vpack.c.b16 %v724, %v723
      %v738 = vpack.c.b16 %v726, %v725
      %v739 = vpack.c.b16 %v728, %v727
      %v740 = vpack.c.b16 %v730, %v729
      %v741 = vpack.c.b16 %v732, %v731
      %v742 = vpack.c.b16 %v734, %v733
      %751 = vmatprep.subr.bf16.mxu0 0
      %752 = vmatpush1.bf16.msra.mxu0 %v735
      %753 = vmatprep.subr.bf16.mxu0 0
      %754 = vmatpush1.bf16.msra.mxu0 %v736
      %755 = vmatprep.subr.bf16.mxu0 0
      %756 = vmatpush1.bf16.msra.mxu0 %v737
      %757 = vmatprep.subr.bf16.mxu0 0
      %758 = vmatpush1.bf16.msra.mxu0 %v738
      %759 = vmatprep.subr.bf16.mxu0 0
      %760 = vmatpush1.bf16.msra.mxu0 %v739
      %761 = vmatprep.subr.bf16.mxu0 0
      %762 = vmatpush1.bf16.msra.mxu0 %v740
      %763 = vmatprep.subr.bf16.mxu0 0
      %764 = vmatpush1.bf16.msra.mxu0 %v741
      %765 = vmatprep.subr.bf16.mxu0 0
      %766 = vmatpush1.bf16.msra.mxu0 %v742
      %767 = vmatprep.subr.bf16.mxu0 0
      %768 = vmatpush1.bf16.msra.mxu0 0
      %769 = vmatprep.subr.bf16.mxu0 0
      %770 = vmatpush1.bf16.msra.mxu0 0
      %771 = vmatprep.subr.bf16.mxu0 0
      %772 = vmatpush1.bf16.msra.mxu0 0
      %773 = vmatprep.subr.bf16.mxu0 0
      %774 = vmatpush1.bf16.msra.mxu0 0
      %775 = vmatprep.subr.bf16.mxu0 0
      %776 = vmatpush1.bf16.msra.mxu0 0
      %777 = vmatprep.subr.bf16.mxu0 0
      %778 = vmatpush1.bf16.msra.mxu0 0
      %779 = vmatprep.subr.bf16.mxu0 0
      %780 = vmatpush1.bf16.msra.mxu0 0
      %781 = vmatprep.subr.bf16.mxu0 0
      %782 = vmatpush1.bf16.msra.mxu0 0
      %783 = vmatprep.mubr.bf16.mxu0 0
      %784 = vmatmul.mubr.bf16.gmra.mrb[0].mxu0 %v671
      %v785 = vpop.f32.mrb[0].mxu0
      %v786 = vadd.f32 0.0, %v785
      %v787 = vpop.f32.mrb[0].mxu0
      %v788 = vpop.f32.mrb[0].mxu0
      %v789 = vadd.f32 0.0, %v788
      %v790 = vpop.f32.mrb[0].mxu0
      %791 = vmatprep.mubr.bf16.mxu0 0
      %792 = vmatmul.mubr.bf16.gmra.mrb[0].mxu0 %v672
      %v793 = vpop.f32.mrb[0].mxu0
      %v794 = vadd.f32 0.0, %v793
      %v795 = vpop.f32.mrb[0].mxu0
      %v796 = vpop.f32.mrb[0].mxu0
      %v797 = vadd.f32 0.0, %v796
      %v798 = vpop.f32.mrb[0].mxu0
      %799 = vmatprep.mubr.bf16.mxu0 0
      %800 = vmatmul.mubr.bf16.gmra.mrb[0].mxu0 %v673
      %v801 = vpop.f32.mrb[0].mxu0
      %v802 = vadd.f32 0.0, %v801
      %v803 = vpop.f32.mrb[0].mxu0
      %v804 = vpop.f32.mrb[0].mxu0
      %v805 = vadd.f32 0.0, %v804
      %v806 = vpop.f32.mrb[0].mxu0
      %807 = vmatprep.mubr.bf16.mxu0 0
      %808 = vmatmul.mubr.bf16.gmra.mrb[0].mxu0 %v674
      %v809 = vpop.f32.mrb[0].mxu0
      %v810 = vadd.f32 0.0, %v809
      %v811 = vpop.f32.mrb[0].mxu0
      %v812 = vpop.f32.mrb[0].mxu0
      %v813 = vadd.f32 0.0, %v812
      %v814 = vpop.f32.mrb[0].mxu0
      %815 = vmatprep.mubr.bf16.mxu0 0
      %816 = vmatmul.mubr.bf16.gmra.mrb[0].mxu0 %v675
      %v817 = vpop.f32.mrb[0].mxu0
      %v818 = vadd.f32 0.0, %v817
      %v819 = vpop.f32.mrb[0].mxu0
      %v820 = vpop.f32.mrb[0].mxu0
      %v821 = vadd.f32 0.0, %v820
      %v822 = vpop.f32.mrb[0].mxu0
      %823 = vmatprep.mubr.bf16.mxu0 0
      %824 = vmatmul.mubr.bf16.gmra.mrb[0].mxu0 %v676
      %v825 = vpop.f32.mrb[0].mxu0
      %v826 = vadd.f32 0.0, %v825
      %v827 = vpop.f32.mrb[0].mxu0
      %v828 = vpop.f32.mrb[0].mxu0
      %v829 = vadd.f32 0.0, %v828
      %v830 = vpop.f32.mrb[0].mxu0
      %831 = vmatprep.mubr.bf16.mxu0 0
      %832 = vmatmul.mubr.bf16.gmra.mrb[0].mxu0 %v677
      %v833 = vpop.f32.mrb[0].mxu0
      %v834 = vadd.f32 0.0, %v833
      %v835 = vpop.f32.mrb[0].mxu0
      %v836 = vpop.f32.mrb[0].mxu0
      %v837 = vadd.f32 0.0, %v836
      %v838 = vpop.f32.mrb[0].mxu0
      %839 = vmatprep.mubr.bf16.mxu0 0
      %840 = vmatmul.mubr.bf16.gmra.mrb[0].mxu0 %v678
      %v841 = vpop.f32.mrb[0].mxu0
      %v842 = vadd.f32 0.0, %v841
      %v843 = vpop.f32.mrb[0].mxu0
      %v844 = vpop.f32.mrb[0].mxu0
      %v845 = vadd.f32 0.0, %v844
      %v846 = vpop.f32.mrb[0].mxu0
      %847 = vmatprep.mubr.bf16.mxu0 0
      %848 = vmatmul.mubr.bf16.gmra.mrb[0].mxu0 %v679
      %v849 = vpop.f32.mrb[0].mxu0
      %v850 = vadd.f32 0.0, %v849
      %v851 = vpop.f32.mrb[0].mxu0
      %v852 = vpop.f32.mrb[0].mxu0
      %v853 = vadd.f32 0.0, %v852
      %v854 = vpop.f32.mrb[0].mxu0
      %855 = vmatprep.mubr.bf16.mxu0 0
      %856 = vmatmul.mubr.bf16.gmra.mrb[0].mxu0 %v680
      %v857 = vpop.f32.mrb[0].mxu0
      %v858 = vadd.f32 0.0, %v857
      %v859 = vpop.f32.mrb[0].mxu0
      %v860 = vpop.f32.mrb[0].mxu0
      %v861 = vadd.f32 0.0, %v860
      %v862 = vpop.f32.mrb[0].mxu0
      %863 = vmatprep.mubr.bf16.mxu0 0
      %864 = vmatmul.mubr.bf16.gmra.mrb[0].mxu0 %v681
      %v865 = vpop.f32.mrb[0].mxu0
      %v866 = vadd.f32 0.0, %v865
      %v867 = vpop.f32.mrb[0].mxu0
      %v868 = vpop.f32.mrb[0].mxu0
      %v869 = vadd.f32 0.0, %v868
      %v870 = vpop.f32.mrb[0].mxu0
      %871 = vmatprep.mubr.bf16.mxu0 0
      %872 = vmatmul.mubr.bf16.gmra.mrb[0].mxu0 %v682
      %v873 = vpop.f32.mrb[0].mxu0
      %v874 = vadd.f32 0.0, %v873
      %v875 = vpop.f32.mrb[0].mxu0
      %v876 = vpop.f32.mrb[0].mxu0
      %v877 = vadd.f32 0.0, %v876
      %v878 = vpop.f32.mrb[0].mxu0
      %879 = vmatprep.mubr.bf16.mxu0 0
      %880 = vmatmul.mubr.bf16.gmra.mrb[0].mxu0 %v683
      %v881 = vpop.f32.mrb[0].mxu0
      %v882 = vadd.f32 0.0, %v881
      %v883 = vpop.f32.mrb[0].mxu0
      %v884 = vpop.f32.mrb[0].mxu0
      %v885 = vadd.f32 0.0, %v884
      %v886 = vpop.f32.mrb[0].mxu0
      %887 = vmatprep.mubr.bf16.mxu0 0
      %888 = vmatmul.mubr.bf16.gmra.mrb[0].mxu0 %v684
      %v889 = vpop.f32.mrb[0].mxu0
      %v890 = vadd.f32 0.0, %v889
      %v891 = vpop.f32.mrb[0].mxu0
      %v892 = vpop.f32.mrb[0].mxu0
      %v893 = vadd.f32 0.0, %v892
      %v894 = vpop.f32.mrb[0].mxu0
      %895 = vmatprep.mubr.bf16.mxu0 0
      %896 = vmatmul.mubr.bf16.gmra.mrb[0].mxu0 %v685
      %v897 = vpop.f32.mrb[0].mxu0
      %v898 = vadd.f32 0.0, %v897
      %v899 = vpop.f32.mrb[0].mxu0
      %v900 = vpop.f32.mrb[0].mxu0
      %v901 = vadd.f32 0.0, %v900
      %v902 = vpop.f32.mrb[0].mxu0
      %903 = vmatprep.mubr.bf16.mxu0 0
      %904 = vmatmul.mubr.bf16.gmra.mrb[0].mxu0 %v686
      %v905 = vpop.f32.mrb[0].mxu0
      %v906 = vadd.f32 0.0, %v905
      %v907 = vpop.f32.mrb[0].mxu0
      %v908 = vpop.f32.mrb[0].mxu0
      %v909 = vadd.f32 0.0, %v908
      %v910 = vpop.f32.mrb[0].mxu0
      %911 = vdwg.mxu0
      %v944 = vunpack.c.l.b16 %v172
      %v945 = vunpack.c.l.b16 %v173
      %v946 = vunpack.c.l.b16 %v174
      %v947 = vunpack.c.l.b16 %v175
      %v948 = vunpack.c.l.b16 %v176
      %v949 = vunpack.c.l.b16 %v177
      %v950 = vunpack.c.l.b16 %v178
      %v951 = vunpack.c.l.b16 %v179
      %v952 = vunpack.c.l.b16 %v180
      %v953 = vunpack.c.l.b16 %v181
      %v954 = vunpack.c.l.b16 %v182
      %v955 = vunpack.c.l.b16 %v183
      %v956 = vunpack.c.l.b16 %v184
      %v957 = vunpack.c.l.b16 %v185
      %v958 = vunpack.c.l.b16 %v186
      %v959 = vunpack.c.l.b16 %v187
      %v960 = vunpack.c.l.b16 %v188
      %v961 = vunpack.c.l.b16 %v189
      %v962 = vunpack.c.l.b16 %v190
      %v963 = vunpack.c.l.b16 %v191
      %v964 = vunpack.c.l.b16 %v192
      %v965 = vunpack.c.l.b16 %v193
      %v966 = vunpack.c.l.b16 %v194
      %v967 = vunpack.c.l.b16 %v195
      %v968 = vunpack.c.l.b16 %v196
      %v969 = vunpack.c.l.b16 %v197
      %v970 = vunpack.c.l.b16 %v198
      %v971 = vunpack.c.l.b16 %v199
      %v972 = vunpack.c.l.b16 %v200
      %v973 = vunpack.c.l.b16 %v201
      %v974 = vunpack.c.l.b16 %v202
      %v975 = vunpack.c.l.b16 %v203
      %v976 = vpack.c.b16 %v945, %v944
      %v977 = vpack.c.b16 %v947, %v946
      %v978 = vpack.c.b16 %v949, %v948
      %v979 = vpack.c.b16 %v951, %v950
      %v980 = vpack.c.b16 %v953, %v952
      %v981 = vpack.c.b16 %v955, %v954
      %v982 = vpack.c.b16 %v957, %v956
      %v983 = vpack.c.b16 %v959, %v958
      %v984 = vpack.c.b16 %v961, %v960
      %v985 = vpack.c.b16 %v963, %v962
      %v986 = vpack.c.b16 %v965, %v964
      %v987 = vpack.c.b16 %v967, %v966
      %v988 = vpack.c.b16 %v969, %v968
      %v989 = vpack.c.b16 %v971, %v970
      %v990 = vpack.c.b16 %v973, %v972
      %v991 = vpack.c.b16 %v975, %v974
      %v1024 = vunpack.c.l.b16 %v204
      %v1025 = vunpack.c.l.b16 %v205
      %v1026 = vunpack.c.l.b16 %v206
      %v1027 = vunpack.c.l.b16 %v207
      %v1028 = vunpack.c.l.b16 %v208
      %v1029 = vunpack.c.l.b16 %v209
      %v1030 = vunpack.c.l.b16 %v210
      %v1031 = vunpack.c.l.b16 %v211
      %v1032 = vunpack.c.l.b16 %v212
      %v1033 = vunpack.c.l.b16 %v213
      %v1034 = vunpack.c.l.b16 %v214
      %v1035 = vunpack.c.l.b16 %v215
      %v1036 = vunpack.c.l.b16 %v216
      %v1037 = vunpack.c.l.b16 %v217
      %v1038 = vunpack.c.l.b16 %v218
      %v1039 = vunpack.c.l.b16 %v219
      %v1040 = vpack.c.b16 %v1025, %v1024
      %v1041 = vpack.c.b16 %v1027, %v1026
      %v1042 = vpack.c.b16 %v1029, %v1028
      %v1043 = vpack.c.b16 %v1031, %v1030
      %v1044 = vpack.c.b16 %v1033, %v1032
      %v1045 = vpack.c.b16 %v1035, %v1034
      %v1046 = vpack.c.b16 %v1037, %v1036
      %v1047 = vpack.c.b16 %v1039, %v1038
      %1056 = vmatprep.subr.bf16.mxu0 0
      %1057 = vmatpush1.bf16.msra.mxu0 %v1040
      %1058 = vmatprep.subr.bf16.mxu0 0
      %1059 = vmatpush1.bf16.msra.mxu0 %v1041
      %1060 = vmatprep.subr.bf16.mxu0 0
      %1061 = vmatpush1.bf16.msra.mxu0 %v1042
      %1062 = vmatprep.subr.bf16.mxu0 0
      %1063 = vmatpush1.bf16.msra.mxu0 %v1043
      %1064 = vmatprep.subr.bf16.mxu0 0
      %1065 = vmatpush1.bf16.msra.mxu0 %v1044
      %1066 = vmatprep.subr.bf16.mxu0 0
      %1067 = vmatpush1.bf16.msra.mxu0 %v1045
      %1068 = vmatprep.subr.bf16.mxu0 0
      %1069 = vmatpush1.bf16.msra.mxu0 %v1046
      %1070 = vmatprep.subr.bf16.mxu0 0
      %1071 = vmatpush1.bf16.msra.mxu0 %v1047
      %1072 = vmatprep.subr.bf16.mxu0 0
      %1073 = vmatpush1.bf16.msra.mxu0 0
      %1074 = vmatprep.subr.bf16.mxu0 0
      %1075 = vmatpush1.bf16.msra.mxu0 0
      %1076 = vmatprep.subr.bf16.mxu0 0
      %1077 = vmatpush1.bf16.msra.mxu0 0
      %1078 = vmatprep.subr.bf16.mxu0 0
      %1079 = vmatpush1.bf16.msra.mxu0 0
      %1080 = vmatprep.subr.bf16.mxu0 0
      %1081 = vmatpush1.bf16.msra.mxu0 0
      %1082 = vmatprep.subr.bf16.mxu0 0
      %1083 = vmatpush1.bf16.msra.mxu0 0
      %1084 = vmatprep.subr.bf16.mxu0 0
      %1085 = vmatpush1.bf16.msra.mxu0 0
      %1086 = vmatprep.subr.bf16.mxu0 0
      %1087 = vmatpush1.bf16.msra.mxu0 0
      %1088 = vmatprep.mubr.bf16.mxu0 0
      %1089 = vmatmul.mubr.bf16.gmra.mrb[0].mxu0 %v976
      %v1090 = vpop.f32.mrb[0].mxu0
      %v1091 = vadd.f32 %v786, %v1090
      %v1092 = vpop.f32.mrb[0].mxu0
      %v1093 = vpop.f32.mrb[0].mxu0
      %v1094 = vadd.f32 %v789, %v1093
      %v1095 = vpop.f32.mrb[0].mxu0
      %1096 = vmatprep.mubr.bf16.mxu0 0
      %1097 = vmatmul.mubr.bf16.gmra.mrb[0].mxu0 %v977
      %v1098 = vpop.f32.mrb[0].mxu0
      %v1099 = vadd.f32 %v794, %v1098
      %v1100 = vpop.f32.mrb[0].mxu0
      %v1101 = vpop.f32.mrb[0].mxu0
      %v1102 = vadd.f32 %v797, %v1101
      %v1103 = vpop.f32.mrb[0].mxu0
      %1104 = vmatprep.mubr.bf16.mxu0 0
      %1105 = vmatmul.mubr.bf16.gmra.mrb[0].mxu0 %v978
      %v1106 = vpop.f32.mrb[0].mxu0
      %v1107 = vadd.f32 %v802, %v1106
      %v1108 = vpop.f32.mrb[0].mxu0
      %v1109 = vpop.f32.mrb[0].mxu0
      %v1110 = vadd.f32 %v805, %v1109
      %v1111 = vpop.f32.mrb[0].mxu0
      %1112 = vmatprep.mubr.bf16.mxu0 0
      %1113 = vmatmul.mubr.bf16.gmra.mrb[0].mxu0 %v979
      %v1114 = vpop.f32.mrb[0].mxu0
      %v1115 = vadd.f32 %v810, %v1114
      %v1116 = vpop.f32.mrb[0].mxu0
      %v1117 = vpop.f32.mrb[0].mxu0
      %v1118 = vadd.f32 %v813, %v1117
      %v1119 = vpop.f32.mrb[0].mxu0
      %1120 = vmatprep.mubr.bf16.mxu0 0
      %1121 = vmatmul.mubr.bf16.gmra.mrb[0].mxu0 %v980
      %v1122 = vpop.f32.mrb[0].mxu0
      %v1123 = vadd.f32 %v818, %v1122
      %v1124 = vpop.f32.mrb[0].mxu0
      %v1125 = vpop.f32.mrb[0].mxu0
      %v1126 = vadd.f32 %v821, %v1125
      %v1127 = vpop.f32.mrb[0].mxu0
      %1128 = vmatprep.mubr.bf16.mxu0 0
      %1129 = vmatmul.mubr.bf16.gmra.mrb[0].mxu0 %v981
      %v1130 = vpop.f32.mrb[0].mxu0
      %v1131 = vadd.f32 %v826, %v1130
      %v1132 = vpop.f32.mrb[0].mxu0
      %v1133 = vpop.f32.mrb[0].mxu0
      %v1134 = vadd.f32 %v829, %v1133
      %v1135 = vpop.f32.mrb[0].mxu0
      %1136 = vmatprep.mubr.bf16.mxu0 0
      %1137 = vmatmul.mubr.bf16.gmra.mrb[0].mxu0 %v982
      %v1138 = vpop.f32.mrb[0].mxu0
      %v1139 = vadd.f32 %v834, %v1138
      %v1140 = vpop.f32.mrb[0].mxu0
      %v1141 = vpop.f32.mrb[0].mxu0
      %v1142 = vadd.f32 %v837, %v1141
      %v1143 = vpop.f32.mrb[0].mxu0
      %1144 = vmatprep.mubr.bf16.mxu0 0
      %1145 = vmatmul.mubr.bf16.gmra.mrb[0].mxu0 %v983
      %v1146 = vpop.f32.mrb[0].mxu0
      %v1147 = vadd.f32 %v842, %v1146
      %v1148 = vpop.f32.mrb[0].mxu0
      %v1149 = vpop.f32.mrb[0].mxu0
      %v1150 = vadd.f32 %v845, %v1149
      %v1151 = vpop.f32.mrb[0].mxu0
      %1152 = vmatprep.mubr.bf16.mxu0 0
      %1153 = vmatmul.mubr.bf16.gmra.mrb[0].mxu0 %v984
      %v1154 = vpop.f32.mrb[0].mxu0
      %v1155 = vadd.f32 %v850, %v1154
      %v1156 = vpop.f32.mrb[0].mxu0
      %v1157 = vpop.f32.mrb[0].mxu0
      %v1158 = vadd.f32 %v853, %v1157
      %v1159 = vpop.f32.mrb[0].mxu0
      %1160 = vmatprep.mubr.bf16.mxu0 0
      %1161 = vmatmul.mubr.bf16.gmra.mrb[0].mxu0 %v985
      %v1162 = vpop.f32.mrb[0].mxu0
      %v1163 = vadd.f32 %v858, %v1162
      %v1164 = vpop.f32.mrb[0].mxu0
      %v1165 = vpop.f32.mrb[0].mxu0
      %v1166 = vadd.f32 %v861, %v1165
      %v1167 = vpop.f32.mrb[0].mxu0
      %1168 = vmatprep.mubr.bf16.mxu0 0
      %1169 = vmatmul.mubr.bf16.gmra.mrb[0].mxu0 %v986
      %v1170 = vpop.f32.mrb[0].mxu0
      %v1171 = vadd.f32 %v866, %v1170
      %v1172 = vpop.f32.mrb[0].mxu0
      %v1173 = vpop.f32.mrb[0].mxu0
      %v1174 = vadd.f32 %v869, %v1173
      %v1175 = vpop.f32.mrb[0].mxu0
      %1176 = vmatprep.mubr.bf16.mxu0 0
      %1177 = vmatmul.mubr.bf16.gmra.mrb[0].mxu0 %v987
      %v1178 = vpop.f32.mrb[0].mxu0
      %v1179 = vadd.f32 %v874, %v1178
      %v1180 = vpop.f32.mrb[0].mxu0
      %v1181 = vpop.f32.mrb[0].mxu0
      %v1182 = vadd.f32 %v877, %v1181
      %v1183 = vpop.f32.mrb[0].mxu0
      %1184 = vmatprep.mubr.bf16.mxu0 0
      %1185 = vmatmul.mubr.bf16.gmra.mrb[0].mxu0 %v988
      %v1186 = vpop.f32.mrb[0].mxu0
      %v1187 = vadd.f32 %v882, %v1186
      %v1188 = vpop.f32.mrb[0].mxu0
      %v1189 = vpop.f32.mrb[0].mxu0
      %v1190 = vadd.f32 %v885, %v1189
      %v1191 = vpop.f32.mrb[0].mxu0
      %1192 = vmatprep.mubr.bf16.mxu0 0
      %1193 = vmatmul.mubr.bf16.gmra.mrb[0].mxu0 %v989
      %v1194 = vpop.f32.mrb[0].mxu0
      %v1195 = vadd.f32 %v890, %v1194
      %v1196 = vpop.f32.mrb[0].mxu0
      %v1197 = vpop.f32.mrb[0].mxu0
      %v1198 = vadd.f32 %v893, %v1197
      %v1199 = vpop.f32.mrb[0].mxu0
      %1200 = vmatprep.mubr.bf16.mxu0 0
      %1201 = vmatmul.mubr.bf16.gmra.mrb[0].mxu0 %v990
      %v1202 = vpop.f32.mrb[0].mxu0
      %v1203 = vadd.f32 %v898, %v1202
      %v1204 = vpop.f32.mrb[0].mxu0
      %v1205 = vpop.f32.mrb[0].mxu0
      %v1206 = vadd.f32 %v901, %v1205
      %v1207 = vpop.f32.mrb[0].mxu0
      %1208 = vmatprep.mubr.bf16.mxu0 0
      %1209 = vmatmul.mubr.bf16.gmra.mrb[0].mxu0 %v991
      %v1210 = vpop.f32.mrb[0].mxu0
      %v1211 = vadd.f32 %v906, %v1210
      %v1212 = vpop.f32.mrb[0].mxu0
      %v1213 = vpop.f32.mrb[0].mxu0
      %v1214 = vadd.f32 %v909, %v1213
      %v1215 = vpop.f32.mrb[0].mxu0
      %1216 = vdwg.mxu0
      %v1217 = vld [vmem:[%s165] sm:$0xe]
      %v1218 = vld [vmem:[%s165 + $0xc] sm:$0xe]
      %v1219 = vld [vmem:[%s165 + $0x18] sm:$0xe]
      %v1220 = vld [vmem:[%s165 + $0x24] sm:$0xe]
      %v1221 = vld [vmem:[%s165 + $0x30] sm:$0xe]
      %v1222 = vld [vmem:[%s165 + $0x3c] sm:$0xe]
      %v1223 = vld [vmem:[%s165 + $0x48] sm:$0xe]
      %v1224 = vld [vmem:[%s165 + $0x54] sm:$0xe]
      %v1225 = vld [vmem:[%s165 + $0x60] sm:$0xe]
      %v1226 = vld [vmem:[%s165 + $0x6c] sm:$0xe]
      %v1227 = vld [vmem:[%s165 + $0x78] sm:$0xe]
      %v1228 = vld [vmem:[%s165 + $0x84] sm:$0xe]
      %v1229 = vld [vmem:[%s165 + $0x90] sm:$0xe]
      %v1230 = vld [vmem:[%s165 + $0x9c] sm:$0xe]
      %v1231 = vld [vmem:[%s165 + $0xa8] sm:$0xe]
      %v1232 = vld [vmem:[%s165 + $0xb4] sm:$0xe]
      %vm1265 = vcmask 1042432
      %vm1266 = vcmask 1046532
      %vm1267 = vmor %vm1265, %vm1266
      %v1268 = vrot.slane %v1217, 5
      %v1269 = vrot.slane %v1268, 4
      %v1270 = vrot.slane %v173, 5
      %v1271 = vsel %vm1267, %v1269, %v1270
      %v1272 = vrot.slane %v1270, 4
      %v1273 = vrot.slane %v220, 5
      %v1274 = vsel %vm1267, %v1272, %v1273
      %v1275 = vrot.slane %v1218, 5
      %v1276 = vrot.slane %v1275, 4
      %v1277 = vrot.slane %v175, 5
      %v1278 = vsel %vm1267, %v1276, %v1277
      %v1279 = vrot.slane %v1277, 4
      %v1280 = vrot.slane %v221, 5
      %v1281 = vsel %vm1267, %v1279, %v1280
      %v1282 = vrot.slane %v1219, 5
      %v1283 = vrot.slane %v1282, 4
      %v1284 = vrot.slane %v177, 5
      %v1285 = vsel %vm1267, %v1283, %v1284
      %v1286 = vrot.slane %v1284, 4
      %v1287 = vrot.slane %v222, 5
      %v1288 = vsel %vm1267, %v1286, %v1287
      %v1289 = vrot.slane %v1220, 5
      %v1290 = vrot.slane %v1289, 4
      %v1291 = vrot.slane %v179, 5
      %v1292 = vsel %vm1267, %v1290, %v1291
      %v1293 = vrot.slane %v1291, 4
      %v1294 = vrot.slane %v223, 5
      %v1295 = vsel %vm1267, %v1293, %v1294
      %v1296 = vrot.slane %v1221, 5
      %v1297 = vrot.slane %v1296, 4
      %v1298 = vrot.slane %v181, 5
      %v1299 = vsel %vm1267, %v1297, %v1298
      %v1300 = vrot.slane %v1298, 4
      %v1301 = vrot.slane %v224, 5
      %v1302 = vsel %vm1267, %v1300, %v1301
      %v1303 = vrot.slane %v1222, 5
      %v1304 = vrot.slane %v1303, 4
      %v1305 = vrot.slane %v183, 5
      %v1306 = vsel %vm1267, %v1304, %v1305
      %v1307 = vrot.slane %v1305, 4
      %v1308 = vrot.slane %v225, 5
      %v1309 = vsel %vm1267, %v1307, %v1308
      %v1310 = vrot.slane %v1223, 5
      %v1311 = vrot.slane %v1310, 4
      %v1312 = vrot.slane %v185, 5
      %v1313 = vsel %vm1267, %v1311, %v1312
      %v1314 = vrot.slane %v1312, 4
      %v1315 = vrot.slane %v226, 5
      %v1316 = vsel %vm1267, %v1314, %v1315
      %v1317 = vrot.slane %v1224, 5
      %v1318 = vrot.slane %v1317, 4
      %v1319 = vrot.slane %v187, 5
      %v1320 = vsel %vm1267, %v1318, %v1319
      %v1321 = vrot.slane %v1319, 4
      %v1322 = vrot.slane %v227, 5
      %v1323 = vsel %vm1267, %v1321, %v1322
      %v1324 = vrot.slane %v1225, 5
      %v1325 = vrot.slane %v1324, 4
      %v1326 = vrot.slane %v189, 5
      %v1327 = vsel %vm1267, %v1325, %v1326
      %v1328 = vrot.slane %v1326, 4
      %v1329 = vrot.slane %v228, 5
      %v1330 = vsel %vm1267, %v1328, %v1329
      %v1331 = vrot.slane %v1226, 5
      %v1332 = vrot.slane %v1331, 4
      %v1333 = vrot.slane %v191, 5
      %v1334 = vsel %vm1267, %v1332, %v1333
      %v1335 = vrot.slane %v1333, 4
      %v1336 = vrot.slane %v229, 5
      %v1337 = vsel %vm1267, %v1335, %v1336
      %v1338 = vrot.slane %v1227, 5
      %v1339 = vrot.slane %v1338, 4
      %v1340 = vrot.slane %v193, 5
      %v1341 = vsel %vm1267, %v1339, %v1340
      %v1342 = vrot.slane %v1340, 4
      %v1343 = vrot.slane %v230, 5
      %v1344 = vsel %vm1267, %v1342, %v1343
      %v1345 = vrot.slane %v1228, 5
      %v1346 = vrot.slane %v1345, 4
      %v1347 = vrot.slane %v195, 5
      %v1348 = vsel %vm1267, %v1346, %v1347
      %v1349 = vrot.slane %v1347, 4
      %v1350 = vrot.slane %v231, 5
      %v1351 = vsel %vm1267, %v1349, %v1350
      %v1352 = vrot.slane %v1229, 5
      %v1353 = vrot.slane %v1352, 4
      %v1354 = vrot.slane %v197, 5
      %v1355 = vsel %vm1267, %v1353, %v1354
      %v1356 = vrot.slane %v1354, 4
      %v1357 = vrot.slane %v232, 5
      %v1358 = vsel %vm1267, %v1356, %v1357
      %v1359 = vrot.slane %v1230, 5
      %v1360 = vrot.slane %v1359, 4
      %v1361 = vrot.slane %v199, 5
      %v1362 = vsel %vm1267, %v1360, %v1361
      %v1363 = vrot.slane %v1361, 4
      %v1364 = vrot.slane %v233, 5
      %v1365 = vsel %vm1267, %v1363, %v1364
      %v1366 = vrot.slane %v1231, 5
      %v1367 = vrot.slane %v1366, 4
      %v1368 = vrot.slane %v201, 5
      %v1369 = vsel %vm1267, %v1367, %v1368
      %v1370 = vrot.slane %v1368, 4
      %v1371 = vrot.slane %v234, 5
      %v1372 = vsel %vm1267, %v1370, %v1371
      %v1373 = vrot.slane %v1232, 5
      %v1374 = vrot.slane %v1373, 4
      %v1375 = vrot.slane %v203, 5
      %v1376 = vsel %vm1267, %v1374, %v1375
      %v1377 = vrot.slane %v1375, 4
      %v1378 = vrot.slane %v235, 5
      %v1379 = vsel %vm1267, %v1377, %v1378
      %v1380 = vld [vmem:[%s1 + $0x80] sm:$0xf]
      %v1381 = vld [vmem:[%s1 + $0x84] sm:$0xf]
      %v1382 = vld [vmem:[%s1 + $0x88] sm:$0xf]
      %v1383 = vld [vmem:[%s1 + $0x8c] sm:$0xf]
      %v1384 = vld [vmem:[%s1 + $0x90] sm:$0xf]
      %v1385 = vld [vmem:[%s1 + $0x94] sm:$0xf]
      %v1386 = vld [vmem:[%s1 + $0x98] sm:$0xf]
      %v1387 = vld [vmem:[%s1 + $0x9c] sm:$0xf]
      %v1388 = vld [vmem:[%s1 + $0xa0] sm:$0xf]
      %v1389 = vld [vmem:[%s1 + $0xa4] sm:$0xf]
      %v1390 = vld [vmem:[%s1 + $0xa8] sm:$0xf]
      %v1391 = vld [vmem:[%s1 + $0xac] sm:$0xf]
      %v1392 = vld [vmem:[%s1 + $0xb0] sm:$0xf]
      %v1393 = vld [vmem:[%s1 + $0xb4] sm:$0xf]
      %v1394 = vld [vmem:[%s1 + $0xb8] sm:$0xf]
      %v1395 = vld [vmem:[%s1 + $0xbc] sm:$0xf]
      %v1396 = vunpack.c.l.b16 %v1271
      %v1397 = vunpack.c.l.b16 %v1274
      %v1398 = vunpack.c.l.b16 %v1278
      %v1399 = vunpack.c.l.b16 %v1281
      %v1400 = vunpack.c.l.b16 %v1285
      %v1401 = vunpack.c.l.b16 %v1288
      %v1402 = vunpack.c.l.b16 %v1292
      %v1403 = vunpack.c.l.b16 %v1295
      %v1404 = vunpack.c.l.b16 %v1299
      %v1405 = vunpack.c.l.b16 %v1302
      %v1406 = vunpack.c.l.b16 %v1306
      %v1407 = vunpack.c.l.b16 %v1309
      %v1408 = vunpack.c.l.b16 %v1313
      %v1409 = vunpack.c.l.b16 %v1316
      %v1410 = vunpack.c.l.b16 %v1320
      %v1411 = vunpack.c.l.b16 %v1323
      %v1412 = vunpack.c.l.b16 %v1327
      %v1413 = vunpack.c.l.b16 %v1330
      %v1414 = vunpack.c.l.b16 %v1334
      %v1415 = vunpack.c.l.b16 %v1337
      %v1416 = vunpack.c.l.b16 %v1341
      %v1417 = vunpack.c.l.b16 %v1344
      %v1418 = vunpack.c.l.b16 %v1348
      %v1419 = vunpack.c.l.b16 %v1351
      %v1420 = vunpack.c.l.b16 %v1355
      %v1421 = vunpack.c.l.b16 %v1358
      %v1422 = vunpack.c.l.b16 %v1362
      %v1423 = vunpack.c.l.b16 %v1365
      %v1424 = vunpack.c.l.b16 %v1369
      %v1425 = vunpack.c.l.b16 %v1372
      %v1426 = vunpack.c.l.b16 %v1376
      %v1427 = vunpack.c.l.b16 %v1379
      %v1428 = vpack.c.b16 %v1397, %v1396
      %v1429 = vpack.c.b16 %v1399, %v1398
      %v1430 = vpack.c.b16 %v1401, %v1400
      %v1431 = vpack.c.b16 %v1403, %v1402
      %v1432 = vpack.c.b16 %v1405, %v1404
      %v1433 = vpack.c.b16 %v1407, %v1406
      %v1434 = vpack.c.b16 %v1409, %v1408
      %v1435 = vpack.c.b16 %v1411, %v1410
      %v1436 = vpack.c.b16 %v1413, %v1412
      %v1437 = vpack.c.b16 %v1415, %v1414
      %v1438 = vpack.c.b16 %v1417, %v1416
      %v1439 = vpack.c.b16 %v1419, %v1418
      %v1440 = vpack.c.b16 %v1421, %v1420
      %v1441 = vpack.c.b16 %v1423, %v1422
      %v1442 = vpack.c.b16 %v1425, %v1424
      %v1443 = vpack.c.b16 %v1427, %v1426
      %v1476 = vunpack.c.l.b16 %v1380
      %v1477 = vunpack.c.l.b16 %v1381
      %v1478 = vunpack.c.l.b16 %v1382
      %v1479 = vunpack.c.l.b16 %v1383
      %v1480 = vunpack.c.l.b16 %v1384
      %v1481 = vunpack.c.l.b16 %v1385
      %v1482 = vunpack.c.l.b16 %v1386
      %v1483 = vunpack.c.l.b16 %v1387
      %v1484 = vunpack.c.l.b16 %v1388
      %v1485 = vunpack.c.l.b16 %v1389
      %v1486 = vunpack.c.l.b16 %v1390
      %v1487 = vunpack.c.l.b16 %v1391
      %v1488 = vunpack.c.l.b16 %v1392
      %v1489 = vunpack.c.l.b16 %v1393
      %v1490 = vunpack.c.l.b16 %v1394
      %v1491 = vunpack.c.l.b16 %v1395
      %v1492 = vpack.c.b16 %v1477, %v1476
      %v1493 = vpack.c.b16 %v1479, %v1478
      %v1494 = vpack.c.b16 %v1481, %v1480
      %v1495 = vpack.c.b16 %v1483, %v1482
      %v1496 = vpack.c.b16 %v1485, %v1484
      %v1497 = vpack.c.b16 %v1487, %v1486
      %v1498 = vpack.c.b16 %v1489, %v1488
      %v1499 = vpack.c.b16 %v1491, %v1490
      %1508 = vmatprep.subr.bf16.mxu0 0
      %1509 = vmatpush1.bf16.msra.mxu0 %v1492
      %1510 = vmatprep.subr.bf16.mxu0 0
      %1511 = vmatpush1.bf16.msra.mxu0 %v1493
      %1512 = vmatprep.subr.bf16.mxu0 0
      %1513 = vmatpush1.bf16.msra.mxu0 %v1494
      %1514 = vmatprep.subr.bf16.mxu0 0
      %1515 = vmatpush1.bf16.msra.mxu0 %v1495
      %1516 = vmatprep.subr.bf16.mxu0 0
      %1517 = vmatpush1.bf16.msra.mxu0 %v1496
      %1518 = vmatprep.subr.bf16.mxu0 0
      %1519 = vmatpush1.bf16.msra.mxu0 %v1497
      %1520 = vmatprep.subr.bf16.mxu0 0
      %1521 = vmatpush1.bf16.msra.mxu0 %v1498
      %1522 = vmatprep.subr.bf16.mxu0 0
      %1523 = vmatpush1.bf16.msra.mxu0 %v1499
      %1524 = vmatprep.subr.bf16.mxu0 0
      %1525 = vmatpush1.bf16.msra.mxu0 0
      %1526 = vmatprep.subr.bf16.mxu0 0
      %1527 = vmatpush1.bf16.msra.mxu0 0
      %1528 = vmatprep.subr.bf16.mxu0 0
      %1529 = vmatpush1.bf16.msra.mxu0 0
      %1530 = vmatprep.subr.bf16.mxu0 0
      %1531 = vmatpush1.bf16.msra.mxu0 0
      %1532 = vmatprep.subr.bf16.mxu0 0
      %1533 = vmatpush1.bf16.msra.mxu0 0
      %1534 = vmatprep.subr.bf16.mxu0 0
      %1535 = vmatpush1.bf16.msra.mxu0 0
      %1536 = vmatprep.subr.bf16.mxu0 0
      %1537 = vmatpush1.bf16.msra.mxu0 0
      %1538 = vmatprep.subr.bf16.mxu0 0
      %1539 = vmatpush1.bf16.msra.mxu0 0
      %1540 = vmatprep.mubr.bf16.mxu0 0
      %1541 = vmatmul.mubr.bf16.gmra.mrb[0].mxu0 %v1428
      %v1542 = vpop.f32.mrb[0].mxu0
      %v1543 = vadd.f32 0.0, %v1542
      %v1544 = vpop.f32.mrb[0].mxu0
      %v1545 = vpop.f32.mrb[0].mxu0
      %v1546 = vadd.f32 0.0, %v1545
      %v1547 = vpop.f32.mrb[0].mxu0
      %1548 = vmatprep.mubr.bf16.mxu0 0
      %1549 = vmatmul.mubr.bf16.gmra.mrb[0].mxu0 %v1429
      %v1550 = vpop.f32.mrb[0].mxu0
      %v1551 = vadd.f32 0.0, %v1550
      %v1552 = vpop.f32.mrb[0].mxu0
      %v1553 = vpop.f32.mrb[0].mxu0
      %v1554 = vadd.f32 0.0, %v1553
      %v1555 = vpop.f32.mrb[0].mxu0
      %1556 = vmatprep.mubr.bf16.mxu0 0
      %1557 = vmatmul.mubr.bf16.gmra.mrb[0].mxu0 %v1430
      %v1558 = vpop.f32.mrb[0].mxu0
      %v1559 = vadd.f32 0.0, %v1558
      %v1560 = vpop.f32.mrb[0].mxu0
      %v1561 = vpop.f32.mrb[0].mxu0
      %v1562 = vadd.f32 0.0, %v1561
      %v1563 = vpop.f32.mrb[0].mxu0
      %1564 = vmatprep.mubr.bf16.mxu0 0
      %1565 = vmatmul.mubr.bf16.gmra.mrb[0].mxu0 %v1431
      %v1566 = vpop.f32.mrb[0].mxu0
      %v1567 = vadd.f32 0.0, %v1566
      %v1568 = vpop.f32.mrb[0].mxu0
      %v1569 = vpop.f32.mrb[0].mxu0
      %v1570 = vadd.f32 0.0, %v1569
      %v1571 = vpop.f32.mrb[0].mxu0
      %1572 = vmatprep.mubr.bf16.mxu0 0
      %1573 = vmatmul.mubr.bf16.gmra.mrb[0].mxu0 %v1432
      %v1574 = vpop.f32.mrb[0].mxu0
      %v1575 = vadd.f32 0.0, %v1574
      %v1576 = vpop.f32.mrb[0].mxu0
      %v1577 = vpop.f32.mrb[0].mxu0
      %v1578 = vadd.f32 0.0, %v1577
      %v1579 = vpop.f32.mrb[0].mxu0
      %1580 = vmatprep.mubr.bf16.mxu0 0
      %1581 = vmatmul.mubr.bf16.gmra.mrb[0].mxu0 %v1433
      %v1582 = vpop.f32.mrb[0].mxu0
      %v1583 = vadd.f32 0.0, %v1582
      %v1584 = vpop.f32.mrb[0].mxu0
      %v1585 = vpop.f32.mrb[0].mxu0
      %v1586 = vadd.f32 0.0, %v1585
      %v1587 = vpop.f32.mrb[0].mxu0
      %1588 = vmatprep.mubr.bf16.mxu0 0
      %1589 = vmatmul.mubr.bf16.gmra.mrb[0].mxu0 %v1434
      %v1590 = vpop.f32.mrb[0].mxu0
      %v1591 = vadd.f32 0.0, %v1590
      %v1592 = vpop.f32.mrb[0].mxu0
      %v1593 = vpop.f32.mrb[0].mxu0
      %v1594 = vadd.f32 0.0, %v1593
      %v1595 = vpop.f32.mrb[0].mxu0
      %1596 = vmatprep.mubr.bf16.mxu0 0
      %1597 = vmatmul.mubr.bf16.gmra.mrb[0].mxu0 %v1435
      %v1598 = vpop.f32.mrb[0].mxu0
      %v1599 = vadd.f32 0.0, %v1598
      %v1600 = vpop.f32.mrb[0].mxu0
      %v1601 = vpop.f32.mrb[0].mxu0
      %v1602 = vadd.f32 0.0, %v1601
      %v1603 = vpop.f32.mrb[0].mxu0
      %1604 = vmatprep.mubr.bf16.mxu0 0
      %1605 = vmatmul.mubr.bf16.gmra.mrb[0].mxu0 %v1436
      %v1606 = vpop.f32.mrb[0].mxu0
      %v1607 = vadd.f32 0.0, %v1606
      %v1608 = vpop.f32.mrb[0].mxu0
      %v1609 = vpop.f32.mrb[0].mxu0
      %v1610 = vadd.f32 0.0, %v1609
      %v1611 = vpop.f32.mrb[0].mxu0
      %1612 = vmatprep.mubr.bf16.mxu0 0
      %1613 = vmatmul.mubr.bf16.gmra.mrb[0].mxu0 %v1437
      %v1614 = vpop.f32.mrb[0].mxu0
      %v1615 = vadd.f32 0.0, %v1614
      %v1616 = vpop.f32.mrb[0].mxu0
      %v1617 = vpop.f32.mrb[0].mxu0
      %v1618 = vadd.f32 0.0, %v1617
      %v1619 = vpop.f32.mrb[0].mxu0
      %1620 = vmatprep.mubr.bf16.mxu0 0
      %1621 = vmatmul.mubr.bf16.gmra.mrb[0].mxu0 %v1438
      %v1622 = vpop.f32.mrb[0].mxu0
      %v1623 = vadd.f32 0.0, %v1622
      %v1624 = vpop.f32.mrb[0].mxu0
      %v1625 = vpop.f32.mrb[0].mxu0
      %v1626 = vadd.f32 0.0, %v1625
      %v1627 = vpop.f32.mrb[0].mxu0
      %1628 = vmatprep.mubr.bf16.mxu0 0
      %1629 = vmatmul.mubr.bf16.gmra.mrb[0].mxu0 %v1439
      %v1630 = vpop.f32.mrb[0].mxu0
      %v1631 = vadd.f32 0.0, %v1630
      %v1632 = vpop.f32.mrb[0].mxu0
      %v1633 = vpop.f32.mrb[0].mxu0
      %v1634 = vadd.f32 0.0, %v1633
      %v1635 = vpop.f32.mrb[0].mxu0
      %1636 = vmatprep.mubr.bf16.mxu0 0
      %1637 = vmatmul.mubr.bf16.gmra.mrb[0].mxu0 %v1440
      %v1638 = vpop.f32.mrb[0].mxu0
      %v1639 = vadd.f32 0.0, %v1638
      %v1640 = vpop.f32.mrb[0].mxu0
      %v1641 = vpop.f32.mrb[0].mxu0
      %v1642 = vadd.f32 0.0, %v1641
      %v1643 = vpop.f32.mrb[0].mxu0
      %1644 = vmatprep.mubr.bf16.mxu0 0
      %1645 = vmatmul.mubr.bf16.gmra.mrb[0].mxu0 %v1441
      %v1646 = vpop.f32.mrb[0].mxu0
      %v1647 = vadd.f32 0.0, %v1646
      %v1648 = vpop.f32.mrb[0].mxu0
      %v1649 = vpop.f32.mrb[0].mxu0
      %v1650 = vadd.f32 0.0, %v1649
      %v1651 = vpop.f32.mrb[0].mxu0
      %1652 = vmatprep.mubr.bf16.mxu0 0
      %1653 = vmatmul.mubr.bf16.gmra.mrb[0].mxu0 %v1442
      %v1654 = vpop.f32.mrb[0].mxu0
      %v1655 = vadd.f32 0.0, %v1654
      %v1656 = vpop.f32.mrb[0].mxu0
      %v1657 = vpop.f32.mrb[0].mxu0
      %v1658 = vadd.f32 0.0, %v1657
      %v1659 = vpop.f32.mrb[0].mxu0
      %1660 = vmatprep.mubr.bf16.mxu0 0
      %1661 = vmatmul.mubr.bf16.gmra.mrb[0].mxu0 %v1443
      %v1662 = vpop.f32.mrb[0].mxu0
      %v1663 = vadd.f32 0.0, %v1662
      %v1664 = vpop.f32.mrb[0].mxu0
      %v1665 = vpop.f32.mrb[0].mxu0
      %v1666 = vadd.f32 0.0, %v1665
      %v1667 = vpop.f32.mrb[0].mxu0
      %1668 = vdwg.mxu0
      %v1669 = vadd.f32 %v1091, %v1543
      %v1670 = vadd.f32 %v1094, %v1546
      %v1671 = vadd.f32 %v1099, %v1551
      %v1672 = vadd.f32 %v1102, %v1554
      %v1673 = vadd.f32 %v1107, %v1559
      %v1674 = vadd.f32 %v1110, %v1562
      %v1675 = vadd.f32 %v1115, %v1567
      %v1676 = vadd.f32 %v1118, %v1570
      %v1677 = vadd.f32 %v1123, %v1575
      %v1678 = vadd.f32 %v1126, %v1578
      %v1679 = vadd.f32 %v1131, %v1583
      %v1680 = vadd.f32 %v1134, %v1586
      %v1681 = vadd.f32 %v1139, %v1591
      %v1682 = vadd.f32 %v1142, %v1594
      %v1683 = vadd.f32 %v1147, %v1599
      %v1684 = vadd.f32 %v1150, %v1602
      %v1685 = vadd.f32 %v1155, %v1607
      %v1686 = vadd.f32 %v1158, %v1610
      %v1687 = vadd.f32 %v1163, %v1615
      %v1688 = vadd.f32 %v1166, %v1618
      %v1689 = vadd.f32 %v1171, %v1623
      %v1690 = vadd.f32 %v1174, %v1626
      %v1691 = vadd.f32 %v1179, %v1631
      %v1692 = vadd.f32 %v1182, %v1634
      %v1693 = vadd.f32 %v1187, %v1639
      %v1694 = vadd.f32 %v1190, %v1642
      %v1695 = vadd.f32 %v1195, %v1647
      %v1696 = vadd.f32 %v1198, %v1650
      %v1697 = vadd.f32 %v1203, %v1655
      %v1698 = vadd.f32 %v1206, %v1658
      %v1699 = vadd.f32 %v1211, %v1663
      %v1700 = vadd.f32 %v1214, %v1666
      %s1701 = scalar_lea.vmem %s165, 12
      %v1702 = vld [vmem:[%s1701] sm:$0xf]
      %v1703 = vld [vmem:[%s1701 + $0x4] sm:$0xf]
      %v1704 = vld [vmem:[%s1701 + $0xc] sm:$0xf]
      %v1705 = vld [vmem:[%s1701 + $0x10] sm:$0xf]
      %v1706 = vld [vmem:[%s1701 + $0x18] sm:$0xf]
      %v1707 = vld [vmem:[%s1701 + $0x1c] sm:$0xf]
      %v1708 = vld [vmem:[%s1701 + $0x24] sm:$0xf]
      %v1709 = vld [vmem:[%s1701 + $0x28] sm:$0xf]
      %v1710 = vld [vmem:[%s1701 + $0x30] sm:$0xf]
      %v1711 = vld [vmem:[%s1701 + $0x34] sm:$0xf]
      %v1712 = vld [vmem:[%s1701 + $0x3c] sm:$0xf]
      %v1713 = vld [vmem:[%s1701 + $0x40] sm:$0xf]
      %v1714 = vld [vmem:[%s1701 + $0x48] sm:$0xf]
      %v1715 = vld [vmem:[%s1701 + $0x4c] sm:$0xf]
      %v1716 = vld [vmem:[%s1701 + $0x54] sm:$0xf]
      %v1717 = vld [vmem:[%s1701 + $0x58] sm:$0xf]
      %v1718 = vld [vmem:[%s1701 + $0x60] sm:$0xf]
      %v1719 = vld [vmem:[%s1701 + $0x64] sm:$0xf]
      %v1720 = vld [vmem:[%s1701 + $0x6c] sm:$0xf]
      %v1721 = vld [vmem:[%s1701 + $0x70] sm:$0xf]
      %v1722 = vld [vmem:[%s1701 + $0x78] sm:$0xf]
      %v1723 = vld [vmem:[%s1701 + $0x7c] sm:$0xf]
      %v1724 = vld [vmem:[%s1701 + $0x84] sm:$0xf]
      %v1725 = vld [vmem:[%s1701 + $0x88] sm:$0xf]
      %v1726 = vld [vmem:[%s1701 + $0x90] sm:$0xf]
      %v1727 = vld [vmem:[%s1701 + $0x94] sm:$0xf]
      %v1728 = vld [vmem:[%s1701 + $0x9c] sm:$0xf]
      %v1729 = vld [vmem:[%s1701 + $0xa0] sm:$0xf]
      %v1730 = vld [vmem:[%s1701 + $0xa8] sm:$0xf]
      %v1731 = vld [vmem:[%s1701 + $0xac] sm:$0xf]
      %v1732 = vld [vmem:[%s1701 + $0xb4] sm:$0xf]
      %v1733 = vld [vmem:[%s1701 + $0xb8] sm:$0xf]
      %v1734 = vld [vmem:[%s1 + $0xc0] sm:$0xf]
      %v1735 = vld [vmem:[%s1 + $0xc4] sm:$0xf]
      %v1736 = vld [vmem:[%s1 + $0xc8] sm:$0xf]
      %v1737 = vld [vmem:[%s1 + $0xcc] sm:$0xf]
      %v1738 = vld [vmem:[%s1 + $0xd0] sm:$0xf]
      %v1739 = vld [vmem:[%s1 + $0xd4] sm:$0xf]
      %v1740 = vld [vmem:[%s1 + $0xd8] sm:$0xf]
      %v1741 = vld [vmem:[%s1 + $0xdc] sm:$0xf]
      %v1742 = vld [vmem:[%s1 + $0xe0] sm:$0xf]
      %v1743 = vld [vmem:[%s1 + $0xe4] sm:$0xf]
      %v1744 = vld [vmem:[%s1 + $0xe8] sm:$0xf]
      %v1745 = vld [vmem:[%s1 + $0xec] sm:$0xf]
      %v1746 = vld [vmem:[%s1 + $0xf0] sm:$0xf]
      %v1747 = vld [vmem:[%s1 + $0xf4] sm:$0xf]
      %v1748 = vld [vmem:[%s1 + $0xf8] sm:$0xf]
      %v1749 = vld [vmem:[%s1 + $0xfc] sm:$0xf]
      %v1782 = vunpack.c.l.b16 %v1702
      %v1783 = vunpack.c.l.b16 %v1703
      %v1784 = vunpack.c.l.b16 %v1704
      %v1785 = vunpack.c.l.b16 %v1705
      %v1786 = vunpack.c.l.b16 %v1706
      %v1787 = vunpack.c.l.b16 %v1707
      %v1788 = vunpack.c.l.b16 %v1708
      %v1789 = vunpack.c.l.b16 %v1709
      %v1790 = vunpack.c.l.b16 %v1710
      %v1791 = vunpack.c.l.b16 %v1711
      %v1792 = vunpack.c.l.b16 %v1712
      %v1793 = vunpack.c.l.b16 %v1713
      %v1794 = vunpack.c.l.b16 %v1714
      %v1795 = vunpack.c.l.b16 %v1715
      %v1796 = vunpack.c.l.b16 %v1716
      %v1797 = vunpack.c.l.b16 %v1717
      %v1798 = vunpack.c.l.b16 %v1718
      %v1799 = vunpack.c.l.b16 %v1719
      %v1800 = vunpack.c.l.b16 %v1720
      %v1801 = vunpack.c.l.b16 %v1721
      %v1802 = vunpack.c.l.b16 %v1722
      %v1803 = vunpack.c.l.b16 %v1723
      %v1804 = vunpack.c.l.b16 %v1724
      %v1805 = vunpack.c.l.b16 %v1725
      %v1806 = vunpack.c.l.b16 %v1726
      %v1807 = vunpack.c.l.b16 %v1727
      %v1808 = vunpack.c.l.b16 %v1728
      %v1809 = vunpack.c.l.b16 %v1729
      %v1810 = vunpack.c.l.b16 %v1730
      %v1811 = vunpack.c.l.b16 %v1731
      %v1812 = vunpack.c.l.b16 %v1732
      %v1813 = vunpack.c.l.b16 %v1733
      %v1814 = vpack.c.b16 %v1783, %v1782
      %v1815 = vpack.c.b16 %v1785, %v1784
      %v1816 = vpack.c.b16 %v1787, %v1786
      %v1817 = vpack.c.b16 %v1789, %v1788
      %v1818 = vpack.c.b16 %v1791, %v1790
      %v1819 = vpack.c.b16 %v1793, %v1792
      %v1820 = vpack.c.b16 %v1795, %v1794
      %v1821 = vpack.c.b16 %v1797, %v1796
      %v1822 = vpack.c.b16 %v1799, %v1798
      %v1823 = vpack.c.b16 %v1801, %v1800
      %v1824 = vpack.c.b16 %v1803, %v1802
      %v1825 = vpack.c.b16 %v1805, %v1804
      %v1826 = vpack.c.b16 %v1807, %v1806
      %v1827 = vpack.c.b16 %v1809, %v1808
      %v1828 = vpack.c.b16 %v1811, %v1810
      %v1829 = vpack.c.b16 %v1813, %v1812
      %v1862 = vunpack.c.l.b16 %v1734
      %v1863 = vunpack.c.l.b16 %v1735
      %v1864 = vunpack.c.l.b16 %v1736
      %v1865 = vunpack.c.l.b16 %v1737
      %v1866 = vunpack.c.l.b16 %v1738
      %v1867 = vunpack.c.l.b16 %v1739
      %v1868 = vunpack.c.l.b16 %v1740
      %v1869 = vunpack.c.l.b16 %v1741
      %v1870 = vunpack.c.l.b16 %v1742
      %v1871 = vunpack.c.l.b16 %v1743
      %v1872 = vunpack.c.l.b16 %v1744
      %v1873 = vunpack.c.l.b16 %v1745
      %v1874 = vunpack.c.l.b16 %v1746
      %v1875 = vunpack.c.l.b16 %v1747
      %v1876 = vunpack.c.l.b16 %v1748
      %v1877 = vunpack.c.l.b16 %v1749
      %v1878 = vpack.c.b16 %v1863, %v1862
      %v1879 = vpack.c.b16 %v1865, %v1864
      %v1880 = vpack.c.b16 %v1867, %v1866
      %v1881 = vpack.c.b16 %v1869, %v1868
      %v1882 = vpack.c.b16 %v1871, %v1870
      %v1883 = vpack.c.b16 %v1873, %v1872
      %v1884 = vpack.c.b16 %v1875, %v1874
      %v1885 = vpack.c.b16 %v1877, %v1876
      %1894 = vmatprep.subr.bf16.mxu0 0
      %1895 = vmatpush1.bf16.msra.mxu0 %v1878
      %1896 = vmatprep.subr.bf16.mxu0 0
      %1897 = vmatpush1.bf16.msra.mxu0 %v1879
      %1898 = vmatprep.subr.bf16.mxu0 0
      %1899 = vmatpush1.bf16.msra.mxu0 %v1880
      %1900 = vmatprep.subr.bf16.mxu0 0
      %1901 = vmatpush1.bf16.msra.mxu0 %v1881
      %1902 = vmatprep.subr.bf16.mxu0 0
      %1903 = vmatpush1.bf16.msra.mxu0 %v1882
      %1904 = vmatprep.subr.bf16.mxu0 0
      %1905 = vmatpush1.bf16.msra.mxu0 %v1883
      %1906 = vmatprep.subr.bf16.mxu0 0
      %1907 = vmatpush1.bf16.msra.mxu0 %v1884
      %1908 = vmatprep.subr.bf16.mxu0 0
      %1909 = vmatpush1.bf16.msra.mxu0 %v1885
      %1910 = vmatprep.subr.bf16.mxu0 0
      %1911 = vmatpush1.bf16.msra.mxu0 0
      %1912 = vmatprep.subr.bf16.mxu0 0
      %1913 = vmatpush1.bf16.msra.mxu0 0
      %1914 = vmatprep.subr.bf16.mxu0 0
      %1915 = vmatpush1.bf16.msra.mxu0 0
      %1916 = vmatprep.subr.bf16.mxu0 0
      %1917 = vmatpush1.bf16.msra.mxu0 0
      %1918 = vmatprep.subr.bf16.mxu0 0
      %1919 = vmatpush1.bf16.msra.mxu0 0
      %1920 = vmatprep.subr.bf16.mxu0 0
      %1921 = vmatpush1.bf16.msra.mxu0 0
      %1922 = vmatprep.subr.bf16.mxu0 0
      %1923 = vmatpush1.bf16.msra.mxu0 0
      %1924 = vmatprep.subr.bf16.mxu0 0
      %1925 = vmatpush1.bf16.msra.mxu0 0
      %1926 = vmatprep.mubr.bf16.mxu0 0
      %1927 = vmatmul.mubr.bf16.gmra.mrb[0].mxu0 %v1814
      %v1928 = vpop.f32.mrb[0].mxu0
      %v1929 = vadd.f32 0.0, %v1928
      %v1930 = vpop.f32.mrb[0].mxu0
      %v1931 = vpop.f32.mrb[0].mxu0
      %v1932 = vadd.f32 0.0, %v1931
      %v1933 = vpop.f32.mrb[0].mxu0
      %1934 = vmatprep.mubr.bf16.mxu0 0
      %1935 = vmatmul.mubr.bf16.gmra.mrb[0].mxu0 %v1815
      %v1936 = vpop.f32.mrb[0].mxu0
      %v1937 = vadd.f32 0.0, %v1936
      %v1938 = vpop.f32.mrb[0].mxu0
      %v1939 = vpop.f32.mrb[0].mxu0
      %v1940 = vadd.f32 0.0, %v1939
      %v1941 = vpop.f32.mrb[0].mxu0
      %1942 = vmatprep.mubr.bf16.mxu0 0
      %1943 = vmatmul.mubr.bf16.gmra.mrb[0].mxu0 %v1816
      %v1944 = vpop.f32.mrb[0].mxu0
      %v1945 = vadd.f32 0.0, %v1944
      %v1946 = vpop.f32.mrb[0].mxu0
      %v1947 = vpop.f32.mrb[0].mxu0
      %v1948 = vadd.f32 0.0, %v1947
      %v1949 = vpop.f32.mrb[0].mxu0
      %1950 = vmatprep.mubr.bf16.mxu0 0
      %1951 = vmatmul.mubr.bf16.gmra.mrb[0].mxu0 %v1817
      %v1952 = vpop.f32.mrb[0].mxu0
      %v1953 = vadd.f32 0.0, %v1952
      %v1954 = vpop.f32.mrb[0].mxu0
      %v1955 = vpop.f32.mrb[0].mxu0
      %v1956 = vadd.f32 0.0, %v1955
      %v1957 = vpop.f32.mrb[0].mxu0
      %1958 = vmatprep.mubr.bf16.mxu0 0
      %1959 = vmatmul.mubr.bf16.gmra.mrb[0].mxu0 %v1818
      %v1960 = vpop.f32.mrb[0].mxu0
      %v1961 = vadd.f32 0.0, %v1960
      %v1962 = vpop.f32.mrb[0].mxu0
      %v1963 = vpop.f32.mrb[0].mxu0
      %v1964 = vadd.f32 0.0, %v1963
      %v1965 = vpop.f32.mrb[0].mxu0
      %1966 = vmatprep.mubr.bf16.mxu0 0
      %1967 = vmatmul.mubr.bf16.gmra.mrb[0].mxu0 %v1819
      %v1968 = vpop.f32.mrb[0].mxu0
      %v1969 = vadd.f32 0.0, %v1968
      %v1970 = vpop.f32.mrb[0].mxu0
      %v1971 = vpop.f32.mrb[0].mxu0
      %v1972 = vadd.f32 0.0, %v1971
      %v1973 = vpop.f32.mrb[0].mxu0
      %1974 = vmatprep.mubr.bf16.mxu0 0
      %1975 = vmatmul.mubr.bf16.gmra.mrb[0].mxu0 %v1820
      %v1976 = vpop.f32.mrb[0].mxu0
      %v1977 = vadd.f32 0.0, %v1976
      %v1978 = vpop.f32.mrb[0].mxu0
      %v1979 = vpop.f32.mrb[0].mxu0
      %v1980 = vadd.f32 0.0, %v1979
      %v1981 = vpop.f32.mrb[0].mxu0
      %1982 = vmatprep.mubr.bf16.mxu0 0
      %1983 = vmatmul.mubr.bf16.gmra.mrb[0].mxu0 %v1821
      %v1984 = vpop.f32.mrb[0].mxu0
      %v1985 = vadd.f32 0.0, %v1984
      %v1986 = vpop.f32.mrb[0].mxu0
      %v1987 = vpop.f32.mrb[0].mxu0
      %v1988 = vadd.f32 0.0, %v1987
      %v1989 = vpop.f32.mrb[0].mxu0
      %1990 = vmatprep.mubr.bf16.mxu0 0
      %1991 = vmatmul.mubr.bf16.gmra.mrb[0].mxu0 %v1822
      %v1992 = vpop.f32.mrb[0].mxu0
      %v1993 = vadd.f32 0.0, %v1992
      %v1994 = vpop.f32.mrb[0].mxu0
      %v1995 = vpop.f32.mrb[0].mxu0
      %v1996 = vadd.f32 0.0, %v1995
      %v1997 = vpop.f32.mrb[0].mxu0
      %1998 = vmatprep.mubr.bf16.mxu0 0
      %1999 = vmatmul.mubr.bf16.gmra.mrb[0].mxu0 %v1823
      %v2000 = vpop.f32.mrb[0].mxu0
      %v2001 = vadd.f32 0.0, %v2000
      %v2002 = vpop.f32.mrb[0].mxu0
      %v2003 = vpop.f32.mrb[0].mxu0
      %v2004 = vadd.f32 0.0, %v2003
      %v2005 = vpop.f32.mrb[0].mxu0
      %2006 = vmatprep.mubr.bf16.mxu0 0
      %2007 = vmatmul.mubr.bf16.gmra.mrb[0].mxu0 %v1824
      %v2008 = vpop.f32.mrb[0].mxu0
      %v2009 = vadd.f32 0.0, %v2008
      %v2010 = vpop.f32.mrb[0].mxu0
      %v2011 = vpop.f32.mrb[0].mxu0
      %v2012 = vadd.f32 0.0, %v2011
      %v2013 = vpop.f32.mrb[0].mxu0
      %2014 = vmatprep.mubr.bf16.mxu0 0
      %2015 = vmatmul.mubr.bf16.gmra.mrb[0].mxu0 %v1825
      %v2016 = vpop.f32.mrb[0].mxu0
      %v2017 = vadd.f32 0.0, %v2016
      %v2018 = vpop.f32.mrb[0].mxu0
      %v2019 = vpop.f32.mrb[0].mxu0
      %v2020 = vadd.f32 0.0, %v2019
      %v2021 = vpop.f32.mrb[0].mxu0
      %2022 = vmatprep.mubr.bf16.mxu0 0
      %2023 = vmatmul.mubr.bf16.gmra.mrb[0].mxu0 %v1826
      %v2024 = vpop.f32.mrb[0].mxu0
      %v2025 = vadd.f32 0.0, %v2024
      %v2026 = vpop.f32.mrb[0].mxu0
      %v2027 = vpop.f32.mrb[0].mxu0
      %v2028 = vadd.f32 0.0, %v2027
      %v2029 = vpop.f32.mrb[0].mxu0
      %2030 = vmatprep.mubr.bf16.mxu0 0
      %2031 = vmatmul.mubr.bf16.gmra.mrb[0].mxu0 %v1827
      %v2032 = vpop.f32.mrb[0].mxu0
      %v2033 = vadd.f32 0.0, %v2032
      %v2034 = vpop.f32.mrb[0].mxu0
      %v2035 = vpop.f32.mrb[0].mxu0
      %v2036 = vadd.f32 0.0, %v2035
      %v2037 = vpop.f32.mrb[0].mxu0
      %2038 = vmatprep.mubr.bf16.mxu0 0
      %2039 = vmatmul.mubr.bf16.gmra.mrb[0].mxu0 %v1828
      %v2040 = vpop.f32.mrb[0].mxu0
      %v2041 = vadd.f32 0.0, %v2040
      %v2042 = vpop.f32.mrb[0].mxu0
      %v2043 = vpop.f32.mrb[0].mxu0
      %v2044 = vadd.f32 0.0, %v2043
      %v2045 = vpop.f32.mrb[0].mxu0
      %2046 = vmatprep.mubr.bf16.mxu0 0
      %2047 = vmatmul.mubr.bf16.gmra.mrb[0].mxu0 %v1829
      %v2048 = vpop.f32.mrb[0].mxu0
      %v2049 = vadd.f32 0.0, %v2048
      %v2050 = vpop.f32.mrb[0].mxu0
      %v2051 = vpop.f32.mrb[0].mxu0
      %v2052 = vadd.f32 0.0, %v2051
      %v2053 = vpop.f32.mrb[0].mxu0
      %2054 = vdwg.mxu0
      %v2055 = vadd.f32 %v1669, %v1929
      %v2056 = vadd.f32 %v1670, %v1932
      %v2057 = vadd.f32 %v1671, %v1937
      %v2058 = vadd.f32 %v1672, %v1940
      %v2059 = vadd.f32 %v1673, %v1945
      %v2060 = vadd.f32 %v1674, %v1948
      %v2061 = vadd.f32 %v1675, %v1953
      %v2062 = vadd.f32 %v1676, %v1956
      %v2063 = vadd.f32 %v1677, %v1961
      %v2064 = vadd.f32 %v1678, %v1964
      %v2065 = vadd.f32 %v1679, %v1969
      %v2066 = vadd.f32 %v1680, %v1972
      %v2067 = vadd.f32 %v1681, %v1977
      %v2068 = vadd.f32 %v1682, %v1980
      %v2069 = vadd.f32 %v1683, %v1985
      %v2070 = vadd.f32 %v1684, %v1988
      %v2071 = vadd.f32 %v1685, %v1993
      %v2072 = vadd.f32 %v1686, %v1996
      %v2073 = vadd.f32 %v1687, %v2001
      %v2074 = vadd.f32 %v1688, %v2004
      %v2075 = vadd.f32 %v1689, %v2009
      %v2076 = vadd.f32 %v1690, %v2012
      %v2077 = vadd.f32 %v1691, %v2017
      %v2078 = vadd.f32 %v1692, %v2020
      %v2079 = vadd.f32 %v1693, %v2025
      %v2080 = vadd.f32 %v1694, %v2028
      %v2081 = vadd.f32 %v1695, %v2033
      %v2082 = vadd.f32 %v1696, %v2036
      %v2083 = vadd.f32 %v1697, %v2041
      %v2084 = vadd.f32 %v1698, %v2044
      %v2085 = vadd.f32 %v1699, %v2049
      %v2086 = vadd.f32 %v1700, %v2052
      %v2087 = vld [vmem:[%s1701] sm:$0xf]
      %v2088 = vld [vmem:[%s1701 + $0x4] sm:$0xf]
      %v2089 = vld [vmem:[%s1701 + $0x8] sm:$0x1]
      %v2090 = vld [vmem:[%s1701 + $0xc] sm:$0xf]
      %v2091 = vld [vmem:[%s1701 + $0x10] sm:$0xf]
      %v2092 = vld [vmem:[%s1701 + $0x14] sm:$0x1]
      %v2093 = vld [vmem:[%s1701 + $0x18] sm:$0xf]
      %v2094 = vld [vmem:[%s1701 + $0x1c] sm:$0xf]
      %v2095 = vld [vmem:[%s1701 + $0x20] sm:$0x1]
      %v2096 = vld [vmem:[%s1701 + $0x24] sm:$0xf]
      %v2097 = vld [vmem:[%s1701 + $0x28] sm:$0xf]
      %v2098 = vld [vmem:[%s1701 + $0x2c] sm:$0x1]
      %v2099 = vld [vmem:[%s1701 + $0x30] sm:$0xf]
      %v2100 = vld [vmem:[%s1701 + $0x34] sm:$0xf]
      %v2101 = vld [vmem:[%s1701 + $0x38] sm:$0x1]
      %v2102 = vld [vmem:[%s1701 + $0x3c] sm:$0xf]
      %v2103 = vld [vmem:[%s1701 + $0x40] sm:$0xf]
      %v2104 = vld [vmem:[%s1701 + $0x44] sm:$0x1]
      %v2105 = vld [vmem:[%s1701 + $0x48] sm:$0xf]
      %v2106 = vld [vmem:[%s1701 + $0x4c] sm:$0xf]
      %v2107 = vld [vmem:[%s1701 + $0x50] sm:$0x1]
      %v2108 = vld [vmem:[%s1701 + $0x54] sm:$0xf]
      %v2109 = vld [vmem:[%s1701 + $0x58] sm:$0xf]
      %v2110 = vld [vmem:[%s1701 + $0x5c] sm:$0x1]
      %v2111 = vld [vmem:[%s1701 + $0x60] sm:$0xf]
      %v2112 = vld [vmem:[%s1701 + $0x64] sm:$0xf]
      %v2113 = vld [vmem:[%s1701 + $0x68] sm:$0x1]
      %v2114 = vld [vmem:[%s1701 + $0x6c] sm:$0xf]
      %v2115 = vld [vmem:[%s1701 + $0x70] sm:$0xf]
      %v2116 = vld [vmem:[%s1701 + $0x74] sm:$0x1]
      %v2117 = vld [vmem:[%s1701 + $0x78] sm:$0xf]
      %v2118 = vld [vmem:[%s1701 + $0x7c] sm:$0xf]
      %v2119 = vld [vmem:[%s1701 + $0x80] sm:$0x1]
      %v2120 = vld [vmem:[%s1701 + $0x84] sm:$0xf]
      %v2121 = vld [vmem:[%s1701 + $0x88] sm:$0xf]
      %v2122 = vld [vmem:[%s1701 + $0x8c] sm:$0x1]
      %v2123 = vld [vmem:[%s1701 + $0x90] sm:$0xf]
      %v2124 = vld [vmem:[%s1701 + $0x94] sm:$0xf]
      %v2125 = vld [vmem:[%s1701 + $0x98] sm:$0x1]
      %v2126 = vld [vmem:[%s1701 + $0x9c] sm:$0xf]
      %v2127 = vld [vmem:[%s1701 + $0xa0] sm:$0xf]
      %v2128 = vld [vmem:[%s1701 + $0xa4] sm:$0x1]
      %v2129 = vld [vmem:[%s1701 + $0xa8] sm:$0xf]
      %v2130 = vld [vmem:[%s1701 + $0xac] sm:$0xf]
      %v2131 = vld [vmem:[%s1701 + $0xb0] sm:$0x1]
      %v2132 = vld [vmem:[%s1701 + $0xb4] sm:$0xf]
      %v2133 = vld [vmem:[%s1701 + $0xb8] sm:$0xf]
      %v2134 = vld [vmem:[%s1701 + $0xbc] sm:$0x1]
      %v2136 = vshrl.u32 %v2087, 16
      %v2138 = vrot.slane %v2136, 4
      %v2139 = vshll.u32 %v2087, 16
      %v2141 = vrot.slane %v2139, 5
      %v2142 = vor.u32 %v2138, %v2141
      %v2143 = vrot.slane %v2142, 4
      %v2145 = vshll.u32 %v2088, 16
      %v2147 = vrot.slane %v2145, 5
      %v2148 = vsel %vm238, %v2143, %v2147
      %v2149 = vshrl.u32 %v2088, 16
      %v2151 = vrot.slane %v2149, 4
      %v2152 = vor.u32 %v2151, %v2147
      %v2153 = vrot.slane %v2152, 4
      %v2155 = vshll.u32 %v2089, 16
      %v2157 = vrot.slane %v2155, 5
      %v2158 = vsel %vm238, %v2153, %v2157
      %v2160 = vshrl.u32 %v2090, 16
      %v2162 = vrot.slane %v2160, 4
      %v2163 = vshll.u32 %v2090, 16
      %v2165 = vrot.slane %v2163, 5
      %v2166 = vor.u32 %v2162, %v2165
      %v2167 = vrot.slane %v2166, 4
      %v2169 = vshll.u32 %v2091, 16
      %v2171 = vrot.slane %v2169, 5
      %v2172 = vsel %vm238, %v2167, %v2171
      %v2173 = vshrl.u32 %v2091, 16
      %v2175 = vrot.slane %v2173, 4
      %v2176 = vor.u32 %v2175, %v2171
      %v2177 = vrot.slane %v2176, 4
      %v2179 = vshll.u32 %v2092, 16
      %v2181 = vrot.slane %v2179, 5
      %v2182 = vsel %vm238, %v2177, %v2181
      %v2184 = vshrl.u32 %v2093, 16
      %v2186 = vrot.slane %v2184, 4
      %v2187 = vshll.u32 %v2093, 16
      %v2189 = vrot.slane %v2187, 5
      %v2190 = vor.u32 %v2186, %v2189
      %v2191 = vrot.slane %v2190, 4
      %v2193 = vshll.u32 %v2094, 16
      %v2195 = vrot.slane %v2193, 5
      %v2196 = vsel %vm238, %v2191, %v2195
      %v2197 = vshrl.u32 %v2094, 16
      %v2199 = vrot.slane %v2197, 4
      %v2200 = vor.u32 %v2199, %v2195
      %v2201 = vrot.slane %v2200, 4
      %v2203 = vshll.u32 %v2095, 16
      %v2205 = vrot.slane %v2203, 5
      %v2206 = vsel %vm238, %v2201, %v2205
      %v2208 = vshrl.u32 %v2096, 16
      %v2210 = vrot.slane %v2208, 4
      %v2211 = vshll.u32 %v2096, 16
      %v2213 = vrot.slane %v2211, 5
      %v2214 = vor.u32 %v2210, %v2213
      %v2215 = vrot.slane %v2214, 4
      %v2217 = vshll.u32 %v2097, 16
      %v2219 = vrot.slane %v2217, 5
      %v2220 = vsel %vm238, %v2215, %v2219
      %v2221 = vshrl.u32 %v2097, 16
      %v2223 = vrot.slane %v2221, 4
      %v2224 = vor.u32 %v2223, %v2219
      %v2225 = vrot.slane %v2224, 4
      %v2227 = vshll.u32 %v2098, 16
      %v2229 = vrot.slane %v2227, 5
      %v2230 = vsel %vm238, %v2225, %v2229
      %v2232 = vshrl.u32 %v2099, 16
      %v2234 = vrot.slane %v2232, 4
      %v2235 = vshll.u32 %v2099, 16
      %v2237 = vrot.slane %v2235, 5
      %v2238 = vor.u32 %v2234, %v2237
      %v2239 = vrot.slane %v2238, 4
      %v2241 = vshll.u32 %v2100, 16
      %v2243 = vrot.slane %v2241, 5
      %v2244 = vsel %vm238, %v2239, %v2243
      %v2245 = vshrl.u32 %v2100, 16
      %v2247 = vrot.slane %v2245, 4
      %v2248 = vor.u32 %v2247, %v2243
      %v2249 = vrot.slane %v2248, 4
      %v2251 = vshll.u32 %v2101, 16
      %v2253 = vrot.slane %v2251, 5
      %v2254 = vsel %vm238, %v2249, %v2253
      %v2256 = vshrl.u32 %v2102, 16
      %v2258 = vrot.slane %v2256, 4
      %v2259 = vshll.u32 %v2102, 16
      %v2261 = vrot.slane %v2259, 5
      %v2262 = vor.u32 %v2258, %v2261
      %v2263 = vrot.slane %v2262, 4
      %v2265 = vshll.u32 %v2103, 16
      %v2267 = vrot.slane %v2265, 5
      %v2268 = vsel %vm238, %v2263, %v2267
      %v2269 = vshrl.u32 %v2103, 16
      %v2271 = vrot.slane %v2269, 4
      %v2272 = vor.u32 %v2271, %v2267
      %v2273 = vrot.slane %v2272, 4
      %v2275 = vshll.u32 %v2104, 16
      %v2277 = vrot.slane %v2275, 5
      %v2278 = vsel %vm238, %v2273, %v2277
      %v2280 = vshrl.u32 %v2105, 16
      %v2282 = vrot.slane %v2280, 4
      %v2283 = vshll.u32 %v2105, 16
      %v2285 = vrot.slane %v2283, 5
      %v2286 = vor.u32 %v2282, %v2285
      %v2287 = vrot.slane %v2286, 4
      %v2289 = vshll.u32 %v2106, 16
      %v2291 = vrot.slane %v2289, 5
      %v2292 = vsel %vm238, %v2287, %v2291
      %v2293 = vshrl.u32 %v2106, 16
      %v2295 = vrot.slane %v2293, 4
      %v2296 = vor.u32 %v2295, %v2291
      %v2297 = vrot.slane %v2296, 4
      %v2299 = vshll.u32 %v2107, 16
      %v2301 = vrot.slane %v2299, 5
      %v2302 = vsel %vm238, %v2297, %v2301
      %v2304 = vshrl.u32 %v2108, 16
      %v2306 = vrot.slane %v2304, 4
      %v2307 = vshll.u32 %v2108, 16
      %v2309 = vrot.slane %v2307, 5
      %v2310 = vor.u32 %v2306, %v2309
      %v2311 = vrot.slane %v2310, 4
      %v2313 = vshll.u32 %v2109, 16
      %v2315 = vrot.slane %v2313, 5
      %v2316 = vsel %vm238, %v2311, %v2315
      %v2317 = vshrl.u32 %v2109, 16
      %v2319 = vrot.slane %v2317, 4
      %v2320 = vor.u32 %v2319, %v2315
      %v2321 = vrot.slane %v2320, 4
      %v2323 = vshll.u32 %v2110, 16
      %v2325 = vrot.slane %v2323, 5
      %v2326 = vsel %vm238, %v2321, %v2325
      %v2328 = vshrl.u32 %v2111, 16
      %v2330 = vrot.slane %v2328, 4
      %v2331 = vshll.u32 %v2111, 16
      %v2333 = vrot.slane %v2331, 5
      %v2334 = vor.u32 %v2330, %v2333
      %v2335 = vrot.slane %v2334, 4
      %v2337 = vshll.u32 %v2112, 16
      %v2339 = vrot.slane %v2337, 5
      %v2340 = vsel %vm238, %v2335, %v2339
      %v2341 = vshrl.u32 %v2112, 16
      %v2343 = vrot.slane %v2341, 4
      %v2344 = vor.u32 %v2343, %v2339
      %v2345 = vrot.slane %v2344, 4
      %v2347 = vshll.u32 %v2113, 16
      %v2349 = vrot.slane %v2347, 5
      %v2350 = vsel %vm238, %v2345, %v2349
      %v2352 = vshrl.u32 %v2114, 16
      %v2354 = vrot.slane %v2352, 4
      %v2355 = vshll.u32 %v2114, 16
      %v2357 = vrot.slane %v2355, 5
      %v2358 = vor.u32 %v2354, %v2357
      %v2359 = vrot.slane %v2358, 4
      %v2361 = vshll.u32 %v2115, 16
      %v2363 = vrot.slane %v2361, 5
      %v2364 = vsel %vm238, %v2359, %v2363
      %v2365 = vshrl.u32 %v2115, 16
      %v2367 = vrot.slane %v2365, 4
      %v2368 = vor.u32 %v2367, %v2363
      %v2369 = vrot.slane %v2368, 4
      %v2371 = vshll.u32 %v2116, 16
      %v2373 = vrot.slane %v2371, 5
      %v2374 = vsel %vm238, %v2369, %v2373
      %v2376 = vshrl.u32 %v2117, 16
      %v2378 = vrot.slane %v2376, 4
      %v2379 = vshll.u32 %v2117, 16
      %v2381 = vrot.slane %v2379, 5
      %v2382 = vor.u32 %v2378, %v2381
      %v2383 = vrot.slane %v2382, 4
      %v2385 = vshll.u32 %v2118, 16
      %v2387 = vrot.slane %v2385, 5
      %v2388 = vsel %vm238, %v2383, %v2387
      %v2389 = vshrl.u32 %v2118, 16
      %v2391 = vrot.slane %v2389, 4
      %v2392 = vor.u32 %v2391, %v2387
      %v2393 = vrot.slane %v2392, 4
      %v2395 = vshll.u32 %v2119, 16
      %v2397 = vrot.slane %v2395, 5
      %v2398 = vsel %vm238, %v2393, %v2397
      %v2400 = vshrl.u32 %v2120, 16
      %v2402 = vrot.slane %v2400, 4
      %v2403 = vshll.u32 %v2120, 16
      %v2405 = vrot.slane %v2403, 5
      %v2406 = vor.u32 %v2402, %v2405
      %v2407 = vrot.slane %v2406, 4
      %v2409 = vshll.u32 %v2121, 16
      %v2411 = vrot.slane %v2409, 5
      %v2412 = vsel %vm238, %v2407, %v2411
      %v2413 = vshrl.u32 %v2121, 16
      %v2415 = vrot.slane %v2413, 4
      %v2416 = vor.u32 %v2415, %v2411
      %v2417 = vrot.slane %v2416, 4
      %v2419 = vshll.u32 %v2122, 16
      %v2421 = vrot.slane %v2419, 5
      %v2422 = vsel %vm238, %v2417, %v2421
      %v2424 = vshrl.u32 %v2123, 16
      %v2426 = vrot.slane %v2424, 4
      %v2427 = vshll.u32 %v2123, 16
      %v2429 = vrot.slane %v2427, 5
      %v2430 = vor.u32 %v2426, %v2429
      %v2431 = vrot.slane %v2430, 4
      %v2433 = vshll.u32 %v2124, 16
      %v2435 = vrot.slane %v2433, 5
      %v2436 = vsel %vm238, %v2431, %v2435
      %v2437 = vshrl.u32 %v2124, 16
      %v2439 = vrot.slane %v2437, 4
      %v2440 = vor.u32 %v2439, %v2435
      %v2441 = vrot.slane %v2440, 4
      %v2443 = vshll.u32 %v2125, 16
      %v2445 = vrot.slane %v2443, 5
      %v2446 = vsel %vm238, %v2441, %v2445
      %v2448 = vshrl.u32 %v2126, 16
      %v2450 = vrot.slane %v2448, 4
      %v2451 = vshll.u32 %v2126, 16
      %v2453 = vrot.slane %v2451, 5
      %v2454 = vor.u32 %v2450, %v2453
      %v2455 = vrot.slane %v2454, 4
      %v2457 = vshll.u32 %v2127, 16
      %v2459 = vrot.slane %v2457, 5
      %v2460 = vsel %vm238, %v2455, %v2459
      %v2461 = vshrl.u32 %v2127, 16
      %v2463 = vrot.slane %v2461, 4
      %v2464 = vor.u32 %v2463, %v2459
      %v2465 = vrot.slane %v2464, 4
      %v2467 = vshll.u32 %v2128, 16
      %v2469 = vrot.slane %v2467, 5
      %v2470 = vsel %vm238, %v2465, %v2469
      %v2472 = vshrl.u32 %v2129, 16
      %v2474 = vrot.slane %v2472, 4
      %v2475 = vshll.u32 %v2129, 16
      %v2477 = vrot.slane %v2475, 5
      %v2478 = vor.u32 %v2474, %v2477
      %v2479 = vrot.slane %v2478, 4
      %v2481 = vshll.u32 %v2130, 16
      %v2483 = vrot.slane %v2481, 5
      %v2484 = vsel %vm238, %v2479, %v2483
      %v2485 = vshrl.u32 %v2130, 16
      %v2487 = vrot.slane %v2485, 4
      %v2488 = vor.u32 %v2487, %v2483
      %v2489 = vrot.slane %v2488, 4
      %v2491 = vshll.u32 %v2131, 16
      %v2493 = vrot.slane %v2491, 5
      %v2494 = vsel %vm238, %v2489, %v2493
      %v2496 = vshrl.u32 %v2132, 16
      %v2498 = vrot.slane %v2496, 4
      %v2499 = vshll.u32 %v2132, 16
      %v2501 = vrot.slane %v2499, 5
      %v2502 = vor.u32 %v2498, %v2501
      %v2503 = vrot.slane %v2502, 4
      %v2505 = vshll.u32 %v2133, 16
      %v2507 = vrot.slane %v2505, 5
      %v2508 = vsel %vm238, %v2503, %v2507
      %v2509 = vshrl.u32 %v2133, 16
      %v2511 = vrot.slane %v2509, 4
      %v2512 = vor.u32 %v2511, %v2507
      %v2513 = vrot.slane %v2512, 4
      %v2515 = vshll.u32 %v2134, 16
      %v2517 = vrot.slane %v2515, 5
      %v2518 = vsel %vm238, %v2513, %v2517
      %v2519 = vld [vmem:[%s1 + $0x100] sm:$0xf]
      %v2520 = vld [vmem:[%s1 + $0x104] sm:$0xf]
      %v2521 = vld [vmem:[%s1 + $0x108] sm:$0xf]
      %v2522 = vld [vmem:[%s1 + $0x10c] sm:$0xf]
      %v2523 = vld [vmem:[%s1 + $0x110] sm:$0xf]
      %v2524 = vld [vmem:[%s1 + $0x114] sm:$0xf]
      %v2525 = vld [vmem:[%s1 + $0x118] sm:$0xf]
      %v2526 = vld [vmem:[%s1 + $0x11c] sm:$0xf]
      %v2527 = vld [vmem:[%s1 + $0x120] sm:$0xf]
      %v2528 = vld [vmem:[%s1 + $0x124] sm:$0xf]
      %v2529 = vld [vmem:[%s1 + $0x128] sm:$0xf]
      %v2530 = vld [vmem:[%s1 + $0x12c] sm:$0xf]
      %v2531 = vld [vmem:[%s1 + $0x130] sm:$0xf]
      %v2532 = vld [vmem:[%s1 + $0x134] sm:$0xf]
      %v2533 = vld [vmem:[%s1 + $0x138] sm:$0xf]
      %v2534 = vld [vmem:[%s1 + $0x13c] sm:$0xf]
      %v2535 = vunpack.c.l.b16 %v2148
      %v2536 = vunpack.c.l.b16 %v2158
      %v2537 = vunpack.c.l.b16 %v2172
      %v2538 = vunpack.c.l.b16 %v2182
      %v2539 = vunpack.c.l.b16 %v2196
      %v2540 = vunpack.c.l.b16 %v2206
      %v2541 = vunpack.c.l.b16 %v2220
      %v2542 = vunpack.c.l.b16 %v2230
      %v2543 = vunpack.c.l.b16 %v2244
      %v2544 = vunpack.c.l.b16 %v2254
      %v2545 = vunpack.c.l.b16 %v2268
      %v2546 = vunpack.c.l.b16 %v2278
      %v2547 = vunpack.c.l.b16 %v2292
      %v2548 = vunpack.c.l.b16 %v2302
      %v2549 = vunpack.c.l.b16 %v2316
      %v2550 = vunpack.c.l.b16 %v2326
      %v2551 = vunpack.c.l.b16 %v2340
      %v2552 = vunpack.c.l.b16 %v2350
      %v2553 = vunpack.c.l.b16 %v2364
      %v2554 = vunpack.c.l.b16 %v2374
      %v2555 = vunpack.c.l.b16 %v2388
      %v2556 = vunpack.c.l.b16 %v2398
      %v2557 = vunpack.c.l.b16 %v2412
      %v2558 = vunpack.c.l.b16 %v2422
      %v2559 = vunpack.c.l.b16 %v2436
      %v2560 = vunpack.c.l.b16 %v2446
      %v2561 = vunpack.c.l.b16 %v2460
      %v2562 = vunpack.c.l.b16 %v2470
      %v2563 = vunpack.c.l.b16 %v2484
      %v2564 = vunpack.c.l.b16 %v2494
      %v2565 = vunpack.c.l.b16 %v2508
      %v2566 = vunpack.c.l.b16 %v2518
      %v2567 = vpack.c.b16 %v2536, %v2535
      %v2568 = vpack.c.b16 %v2538, %v2537
      %v2569 = vpack.c.b16 %v2540, %v2539
      %v2570 = vpack.c.b16 %v2542, %v2541
      %v2571 = vpack.c.b16 %v2544, %v2543
      %v2572 = vpack.c.b16 %v2546, %v2545
      %v2573 = vpack.c.b16 %v2548, %v2547
      %v2574 = vpack.c.b16 %v2550, %v2549
      %v2575 = vpack.c.b16 %v2552, %v2551
      %v2576 = vpack.c.b16 %v2554, %v2553
      %v2577 = vpack.c.b16 %v2556, %v2555
      %v2578 = vpack.c.b16 %v2558, %v2557
      %v2579 = vpack.c.b16 %v2560, %v2559
      %v2580 = vpack.c.b16 %v2562, %v2561
      %v2581 = vpack.c.b16 %v2564, %v2563
      %v2582 = vpack.c.b16 %v2566, %v2565
      %v2615 = vunpack.c.l.b16 %v2519
      %v2616 = vunpack.c.l.b16 %v2520
      %v2617 = vunpack.c.l.b16 %v2521
      %v2618 = vunpack.c.l.b16 %v2522
      %v2619 = vunpack.c.l.b16 %v2523
      %v2620 = vunpack.c.l.b16 %v2524
      %v2621 = vunpack.c.l.b16 %v2525
      %v2622 = vunpack.c.l.b16 %v2526
      %v2623 = vunpack.c.l.b16 %v2527
      %v2624 = vunpack.c.l.b16 %v2528
      %v2625 = vunpack.c.l.b16 %v2529
      %v2626 = vunpack.c.l.b16 %v2530
      %v2627 = vunpack.c.l.b16 %v2531
      %v2628 = vunpack.c.l.b16 %v2532
      %v2629 = vunpack.c.l.b16 %v2533
      %v2630 = vunpack.c.l.b16 %v2534
      %v2631 = vpack.c.b16 %v2616, %v2615
      %v2632 = vpack.c.b16 %v2618, %v2617
      %v2633 = vpack.c.b16 %v2620, %v2619
      %v2634 = vpack.c.b16 %v2622, %v2621
      %v2635 = vpack.c.b16 %v2624, %v2623
      %v2636 = vpack.c.b16 %v2626, %v2625
      %v2637 = vpack.c.b16 %v2628, %v2627
      %v2638 = vpack.c.b16 %v2630, %v2629
      %2647 = vmatprep.subr.bf16.mxu0 0
      %2648 = vmatpush1.bf16.msra.mxu0 %v2631
      %2649 = vmatprep.subr.bf16.mxu0 0
      %2650 = vmatpush1.bf16.msra.mxu0 %v2632
      %2651 = vmatprep.subr.bf16.mxu0 0
      %2652 = vmatpush1.bf16.msra.mxu0 %v2633
      %2653 = vmatprep.subr.bf16.mxu0 0
      %2654 = vmatpush1.bf16.msra.mxu0 %v2634
      %2655 = vmatprep.subr.bf16.mxu0 0
      %2656 = vmatpush1.bf16.msra.mxu0 %v2635
      %2657 = vmatprep.subr.bf16.mxu0 0
      %2658 = vmatpush1.bf16.msra.mxu0 %v2636
      %2659 = vmatprep.subr.bf16.mxu0 0
      %2660 = vmatpush1.bf16.msra.mxu0 %v2637
      %2661 = vmatprep.subr.bf16.mxu0 0
      %2662 = vmatpush1.bf16.msra.mxu0 %v2638
      %2663 = vmatprep.subr.bf16.mxu0 0
      %2664 = vmatpush1.bf16.msra.mxu0 0
      %2665 = vmatprep.subr.bf16.mxu0 0
      %2666 = vmatpush1.bf16.msra.mxu0 0
      %2667 = vmatprep.subr.bf16.mxu0 0
      %2668 = vmatpush1.bf16.msra.mxu0 0
      %2669 = vmatprep.subr.bf16.mxu0 0
      %2670 = vmatpush1.bf16.msra.mxu0 0
      %2671 = vmatprep.subr.bf16.mxu0 0
      %2672 = vmatpush1.bf16.msra.mxu0 0
      %2673 = vmatprep.subr.bf16.mxu0 0
      %2674 = vmatpush1.bf16.msra.mxu0 0
      %2675 = vmatprep.subr.bf16.mxu0 0
      %2676 = vmatpush1.bf16.msra.mxu0 0
      %2677 = vmatprep.subr.bf16.mxu0 0
      %2678 = vmatpush1.bf16.msra.mxu0 0
      %2679 = vmatprep.mubr.bf16.mxu0 0
      %2680 = vmatmul.mubr.bf16.gmra.mrb[0].mxu0 %v2567
      %v2681 = vpop.f32.mrb[0].mxu0
      %v2682 = vadd.f32 0.0, %v2681
      %v2683 = vpop.f32.mrb[0].mxu0
      %v2684 = vpop.f32.mrb[0].mxu0
      %v2685 = vadd.f32 0.0, %v2684
      %v2686 = vpop.f32.mrb[0].mxu0
      %2687 = vmatprep.mubr.bf16.mxu0 0
      %2688 = vmatmul.mubr.bf16.gmra.mrb[0].mxu0 %v2568
      %v2689 = vpop.f32.mrb[0].mxu0
      %v2690 = vadd.f32 0.0, %v2689
      %v2691 = vpop.f32.mrb[0].mxu0
      %v2692 = vpop.f32.mrb[0].mxu0
      %v2693 = vadd.f32 0.0, %v2692
      %v2694 = vpop.f32.mrb[0].mxu0
      %2695 = vmatprep.mubr.bf16.mxu0 0
      %2696 = vmatmul.mubr.bf16.gmra.mrb[0].mxu0 %v2569
      %v2697 = vpop.f32.mrb[0].mxu0
      %v2698 = vadd.f32 0.0, %v2697
      %v2699 = vpop.f32.mrb[0].mxu0
      %v2700 = vpop.f32.mrb[0].mxu0
      %v2701 = vadd.f32 0.0, %v2700
      %v2702 = vpop.f32.mrb[0].mxu0
      %2703 = vmatprep.mubr.bf16.mxu0 0
      %2704 = vmatmul.mubr.bf16.gmra.mrb[0].mxu0 %v2570
      %v2705 = vpop.f32.mrb[0].mxu0
      %v2706 = vadd.f32 0.0, %v2705
      %v2707 = vpop.f32.mrb[0].mxu0
      %v2708 = vpop.f32.mrb[0].mxu0
      %v2709 = vadd.f32 0.0, %v2708
      %v2710 = vpop.f32.mrb[0].mxu0
      %2711 = vmatprep.mubr.bf16.mxu0 0
      %2712 = vmatmul.mubr.bf16.gmra.mrb[0].mxu0 %v2571
      %v2713 = vpop.f32.mrb[0].mxu0
      %v2714 = vadd.f32 0.0, %v2713
      %v2715 = vpop.f32.mrb[0].mxu0
      %v2716 = vpop.f32.mrb[0].mxu0
      %v2717 = vadd.f32 0.0, %v2716
      %v2718 = vpop.f32.mrb[0].mxu0
      %2719 = vmatprep.mubr.bf16.mxu0 0
      %2720 = vmatmul.mubr.bf16.gmra.mrb[0].mxu0 %v2572
      %v2721 = vpop.f32.mrb[0].mxu0
      %v2722 = vadd.f32 0.0, %v2721
      %v2723 = vpop.f32.mrb[0].mxu0
      %v2724 = vpop.f32.mrb[0].mxu0
      %v2725 = vadd.f32 0.0, %v2724
      %v2726 = vpop.f32.mrb[0].mxu0
      %2727 = vmatprep.mubr.bf16.mxu0 0
      %2728 = vmatmul.mubr.bf16.gmra.mrb[0].mxu0 %v2573
      %v2729 = vpop.f32.mrb[0].mxu0
      %v2730 = vadd.f32 0.0, %v2729
      %v2731 = vpop.f32.mrb[0].mxu0
      %v2732 = vpop.f32.mrb[0].mxu0
      %v2733 = vadd.f32 0.0, %v2732
      %v2734 = vpop.f32.mrb[0].mxu0
      %2735 = vmatprep.mubr.bf16.mxu0 0
      %2736 = vmatmul.mubr.bf16.gmra.mrb[0].mxu0 %v2574
      %v2737 = vpop.f32.mrb[0].mxu0
      %v2738 = vadd.f32 0.0, %v2737
      %v2739 = vpop.f32.mrb[0].mxu0
      %v2740 = vpop.f32.mrb[0].mxu0
      %v2741 = vadd.f32 0.0, %v2740
      %v2742 = vpop.f32.mrb[0].mxu0
      %2743 = vmatprep.mubr.bf16.mxu0 0
      %2744 = vmatmul.mubr.bf16.gmra.mrb[0].mxu0 %v2575
      %v2745 = vpop.f32.mrb[0].mxu0
      %v2746 = vadd.f32 0.0, %v2745
      %v2747 = vpop.f32.mrb[0].mxu0
      %v2748 = vpop.f32.mrb[0].mxu0
      %v2749 = vadd.f32 0.0, %v2748
      %v2750 = vpop.f32.mrb[0].mxu0
      %2751 = vmatprep.mubr.bf16.mxu0 0
      %2752 = vmatmul.mubr.bf16.gmra.mrb[0].mxu0 %v2576
      %v2753 = vpop.f32.mrb[0].mxu0
      %v2754 = vadd.f32 0.0, %v2753
      %v2755 = vpop.f32.mrb[0].mxu0
      %v2756 = vpop.f32.mrb[0].mxu0
      %v2757 = vadd.f32 0.0, %v2756
      %v2758 = vpop.f32.mrb[0].mxu0
      %2759 = vmatprep.mubr.bf16.mxu0 0
      %2760 = vmatmul.mubr.bf16.gmra.mrb[0].mxu0 %v2577
      %v2761 = vpop.f32.mrb[0].mxu0
      %v2762 = vadd.f32 0.0, %v2761
      %v2763 = vpop.f32.mrb[0].mxu0
      %v2764 = vpop.f32.mrb[0].mxu0
      %v2765 = vadd.f32 0.0, %v2764
      %v2766 = vpop.f32.mrb[0].mxu0
      %2767 = vmatprep.mubr.bf16.mxu0 0
      %2768 = vmatmul.mubr.bf16.gmra.mrb[0].mxu0 %v2578
      %v2769 = vpop.f32.mrb[0].mxu0
      %v2770 = vadd.f32 0.0, %v2769
      %v2771 = vpop.f32.mrb[0].mxu0
      %v2772 = vpop.f32.mrb[0].mxu0
      %v2773 = vadd.f32 0.0, %v2772
      %v2774 = vpop.f32.mrb[0].mxu0
      %2775 = vmatprep.mubr.bf16.mxu0 0
      %2776 = vmatmul.mubr.bf16.gmra.mrb[0].mxu0 %v2579
      %v2777 = vpop.f32.mrb[0].mxu0
      %v2778 = vadd.f32 0.0, %v2777
      %v2779 = vpop.f32.mrb[0].mxu0
      %v2780 = vpop.f32.mrb[0].mxu0
      %v2781 = vadd.f32 0.0, %v2780
      %v2782 = vpop.f32.mrb[0].mxu0
      %2783 = vmatprep.mubr.bf16.mxu0 0
      %2784 = vmatmul.mubr.bf16.gmra.mrb[0].mxu0 %v2580
      %v2785 = vpop.f32.mrb[0].mxu0
      %v2786 = vadd.f32 0.0, %v2785
      %v2787 = vpop.f32.mrb[0].mxu0
      %v2788 = vpop.f32.mrb[0].mxu0
      %v2789 = vadd.f32 0.0, %v2788
      %v2790 = vpop.f32.mrb[0].mxu0
      %2791 = vmatprep.mubr.bf16.mxu0 0
      %2792 = vmatmul.mubr.bf16.gmra.mrb[0].mxu0 %v2581
      %v2793 = vpop.f32.mrb[0].mxu0
      %v2794 = vadd.f32 0.0, %v2793
      %v2795 = vpop.f32.mrb[0].mxu0
      %v2796 = vpop.f32.mrb[0].mxu0
      %v2797 = vadd.f32 0.0, %v2796
      %v2798 = vpop.f32.mrb[0].mxu0
      %2799 = vmatprep.mubr.bf16.mxu0 0
      %2800 = vmatmul.mubr.bf16.gmra.mrb[0].mxu0 %v2582
      %v2801 = vpop.f32.mrb[0].mxu0
      %v2802 = vadd.f32 0.0, %v2801
      %v2803 = vpop.f32.mrb[0].mxu0
      %v2804 = vpop.f32.mrb[0].mxu0
      %v2805 = vadd.f32 0.0, %v2804
      %v2806 = vpop.f32.mrb[0].mxu0
      %2807 = vdwg.mxu0
      %v2808 = vadd.f32 %v2055, %v2682
      %v2809 = vadd.f32 %v2056, %v2685
      %v2810 = vadd.f32 %v2057, %v2690
      %v2811 = vadd.f32 %v2058, %v2693
      %v2812 = vadd.f32 %v2059, %v2698
      %v2813 = vadd.f32 %v2060, %v2701
      %v2814 = vadd.f32 %v2061, %v2706
      %v2815 = vadd.f32 %v2062, %v2709
      %v2816 = vadd.f32 %v2063, %v2714
      %v2817 = vadd.f32 %v2064, %v2717
      %v2818 = vadd.f32 %v2065, %v2722
      %v2819 = vadd.f32 %v2066, %v2725
      %v2820 = vadd.f32 %v2067, %v2730
      %v2821 = vadd.f32 %v2068, %v2733
      %v2822 = vadd.f32 %v2069, %v2738
      %v2823 = vadd.f32 %v2070, %v2741
      %v2824 = vadd.f32 %v2071, %v2746
      %v2825 = vadd.f32 %v2072, %v2749
      %v2826 = vadd.f32 %v2073, %v2754
      %v2827 = vadd.f32 %v2074, %v2757
      %v2828 = vadd.f32 %v2075, %v2762
      %v2829 = vadd.f32 %v2076, %v2765
      %v2830 = vadd.f32 %v2077, %v2770
      %v2831 = vadd.f32 %v2078, %v2773
      %v2832 = vadd.f32 %v2079, %v2778
      %v2833 = vadd.f32 %v2080, %v2781
      %v2834 = vadd.f32 %v2081, %v2786
      %v2835 = vadd.f32 %v2082, %v2789
      %v2836 = vadd.f32 %v2083, %v2794
      %v2837 = vadd.f32 %v2084, %v2797
      %v2838 = vadd.f32 %v2085, %v2802
      %v2839 = vadd.f32 %v2086, %v2805
      %v2840 = vld [vmem:[%s1701] sm:$0xe]
      %v2841 = vld [vmem:[%s1701 + $0xc] sm:$0xe]
      %v2842 = vld [vmem:[%s1701 + $0x18] sm:$0xe]
      %v2843 = vld [vmem:[%s1701 + $0x24] sm:$0xe]
      %v2844 = vld [vmem:[%s1701 + $0x30] sm:$0xe]
      %v2845 = vld [vmem:[%s1701 + $0x3c] sm:$0xe]
      %v2846 = vld [vmem:[%s1701 + $0x48] sm:$0xe]
      %v2847 = vld [vmem:[%s1701 + $0x54] sm:$0xe]
      %v2848 = vld [vmem:[%s1701 + $0x60] sm:$0xe]
      %v2849 = vld [vmem:[%s1701 + $0x6c] sm:$0xe]
      %v2850 = vld [vmem:[%s1701 + $0x78] sm:$0xe]
      %v2851 = vld [vmem:[%s1701 + $0x84] sm:$0xe]
      %v2852 = vld [vmem:[%s1701 + $0x90] sm:$0xe]
      %v2853 = vld [vmem:[%s1701 + $0x9c] sm:$0xe]
      %v2854 = vld [vmem:[%s1701 + $0xa8] sm:$0xe]
      %v2855 = vld [vmem:[%s1701 + $0xb4] sm:$0xe]
      %v2904 = vrot.slane %v2840, 5
      %v2905 = vrot.slane %v2904, 4
      %v2906 = vrot.slane %v2088, 5
      %v2907 = vsel %vm1267, %v2905, %v2906
      %v2908 = vrot.slane %v2906, 4
      %v2909 = vrot.slane %v2089, 5
      %v2910 = vsel %vm1267, %v2908, %v2909
      %v2911 = vrot.slane %v2841, 5
      %v2912 = vrot.slane %v2911, 4
      %v2913 = vrot.slane %v2091, 5
      %v2914 = vsel %vm1267, %v2912, %v2913
      %v2915 = vrot.slane %v2913, 4
      %v2916 = vrot.slane %v2092, 5
      %v2917 = vsel %vm1267, %v2915, %v2916
      %v2918 = vrot.slane %v2842, 5
      %v2919 = vrot.slane %v2918, 4
      %v2920 = vrot.slane %v2094, 5
      %v2921 = vsel %vm1267, %v2919, %v2920
      %v2922 = vrot.slane %v2920, 4
      %v2923 = vrot.slane %v2095, 5
      %v2924 = vsel %vm1267, %v2922, %v2923
      %v2925 = vrot.slane %v2843, 5
      %v2926 = vrot.slane %v2925, 4
      %v2927 = vrot.slane %v2097, 5
      %v2928 = vsel %vm1267, %v2926, %v2927
      %v2929 = vrot.slane %v2927, 4
      %v2930 = vrot.slane %v2098, 5
      %v2931 = vsel %vm1267, %v2929, %v2930
      %v2932 = vrot.slane %v2844, 5
      %v2933 = vrot.slane %v2932, 4
      %v2934 = vrot.slane %v2100, 5
      %v2935 = vsel %vm1267, %v2933, %v2934
      %v2936 = vrot.slane %v2934, 4
      %v2937 = vrot.slane %v2101, 5
      %v2938 = vsel %vm1267, %v2936, %v2937
      %v2939 = vrot.slane %v2845, 5
      %v2940 = vrot.slane %v2939, 4
      %v2941 = vrot.slane %v2103, 5
      %v2942 = vsel %vm1267, %v2940, %v2941
      %v2943 = vrot.slane %v2941, 4
      %v2944 = vrot.slane %v2104, 5
      %v2945 = vsel %vm1267, %v2943, %v2944
      %v2946 = vrot.slane %v2846, 5
      %v2947 = vrot.slane %v2946, 4
      %v2948 = vrot.slane %v2106, 5
      %v2949 = vsel %vm1267, %v2947, %v2948
      %v2950 = vrot.slane %v2948, 4
      %v2951 = vrot.slane %v2107, 5
      %v2952 = vsel %vm1267, %v2950, %v2951
      %v2953 = vrot.slane %v2847, 5
      %v2954 = vrot.slane %v2953, 4
      %v2955 = vrot.slane %v2109, 5
      %v2956 = vsel %vm1267, %v2954, %v2955
      %v2957 = vrot.slane %v2955, 4
      %v2958 = vrot.slane %v2110, 5
      %v2959 = vsel %vm1267, %v2957, %v2958
      %v2960 = vrot.slane %v2848, 5
      %v2961 = vrot.slane %v2960, 4
      %v2962 = vrot.slane %v2112, 5
      %v2963 = vsel %vm1267, %v2961, %v2962
      %v2964 = vrot.slane %v2962, 4
      %v2965 = vrot.slane %v2113, 5
      %v2966 = vsel %vm1267, %v2964, %v2965
      %v2967 = vrot.slane %v2849, 5
      %v2968 = vrot.slane %v2967, 4
      %v2969 = vrot.slane %v2115, 5
      %v2970 = vsel %vm1267, %v2968, %v2969
      %v2971 = vrot.slane %v2969, 4
      %v2972 = vrot.slane %v2116, 5
      %v2973 = vsel %vm1267, %v2971, %v2972
      %v2974 = vrot.slane %v2850, 5
      %v2975 = vrot.slane %v2974, 4
      %v2976 = vrot.slane %v2118, 5
      %v2977 = vsel %vm1267, %v2975, %v2976
      %v2978 = vrot.slane %v2976, 4
      %v2979 = vrot.slane %v2119, 5
      %v2980 = vsel %vm1267, %v2978, %v2979
      %v2981 = vrot.slane %v2851, 5
      %v2982 = vrot.slane %v2981, 4
      %v2983 = vrot.slane %v2121, 5
      %v2984 = vsel %vm1267, %v2982, %v2983
      %v2985 = vrot.slane %v2983, 4
      %v2986 = vrot.slane %v2122, 5
      %v2987 = vsel %vm1267, %v2985, %v2986
      %v2988 = vrot.slane %v2852, 5
      %v2989 = vrot.slane %v2988, 4
      %v2990 = vrot.slane %v2124, 5
      %v2991 = vsel %vm1267, %v2989, %v2990
      %v2992 = vrot.slane %v2990, 4
      %v2993 = vrot.slane %v2125, 5
      %v2994 = vsel %vm1267, %v2992, %v2993
      %v2995 = vrot.slane %v2853, 5
      %v2996 = vrot.slane %v2995, 4
      %v2997 = vrot.slane %v2127, 5
      %v2998 = vsel %vm1267, %v2996, %v2997
      %v2999 = vrot.slane %v2997, 4
      %v3000 = vrot.slane %v2128, 5
      %v3001 = vsel %vm1267, %v2999, %v3000
      %v3002 = vrot.slane %v2854, 5
      %v3003 = vrot.slane %v3002, 4
      %v3004 = vrot.slane %v2130, 5
      %v3005 = vsel %vm1267, %v3003, %v3004
      %v3006 = vrot.slane %v3004, 4
      %v3007 = vrot.slane %v2131, 5
      %v3008 = vsel %vm1267, %v3006, %v3007
      %v3009 = vrot.slane %v2855, 5
      %v3010 = vrot.slane %v3009, 4
      %v3011 = vrot.slane %v2133, 5
      %v3012 = vsel %vm1267, %v3010, %v3011
      %v3013 = vrot.slane %v3011, 4
      %v3014 = vrot.slane %v2134, 5
      %v3015 = vsel %vm1267, %v3013, %v3014
      %v3016 = vld [vmem:[%s1 + $0x140] sm:$0xf]
      %v3017 = vld [vmem:[%s1 + $0x144] sm:$0xf]
      %v3018 = vld [vmem:[%s1 + $0x148] sm:$0xf]
      %v3019 = vld [vmem:[%s1 + $0x14c] sm:$0xf]
      %v3020 = vld [vmem:[%s1 + $0x150] sm:$0xf]
      %v3021 = vld [vmem:[%s1 + $0x154] sm:$0xf]
      %v3022 = vld [vmem:[%s1 + $0x158] sm:$0xf]
      %v3023 = vld [vmem:[%s1 + $0x15c] sm:$0xf]
      %v3024 = vld [vmem:[%s1 + $0x160] sm:$0xf]
      %v3025 = vld [vmem:[%s1 + $0x164] sm:$0xf]
      %v3026 = vld [vmem:[%s1 + $0x168] sm:$0xf]
      %v3027 = vld [vmem:[%s1 + $0x16c] sm:$0xf]
      %v3028 = vld [vmem:[%s1 + $0x170] sm:$0xf]
      %v3029 = vld [vmem:[%s1 + $0x174] sm:$0xf]
      %v3030 = vld [vmem:[%s1 + $0x178] sm:$0xf]
      %v3031 = vld [vmem:[%s1 + $0x17c] sm:$0xf]
      %v3032 = vunpack.c.l.b16 %v2907
      %v3033 = vunpack.c.l.b16 %v2910
      %v3034 = vunpack.c.l.b16 %v2914
      %v3035 = vunpack.c.l.b16 %v2917
      %v3036 = vunpack.c.l.b16 %v2921
      %v3037 = vunpack.c.l.b16 %v2924
      %v3038 = vunpack.c.l.b16 %v2928
      %v3039 = vunpack.c.l.b16 %v2931
      %v3040 = vunpack.c.l.b16 %v2935
      %v3041 = vunpack.c.l.b16 %v2938
      %v3042 = vunpack.c.l.b16 %v2942
      %v3043 = vunpack.c.l.b16 %v2945
      %v3044 = vunpack.c.l.b16 %v2949
      %v3045 = vunpack.c.l.b16 %v2952
      %v3046 = vunpack.c.l.b16 %v2956
      %v3047 = vunpack.c.l.b16 %v2959
      %v3048 = vunpack.c.l.b16 %v2963
      %v3049 = vunpack.c.l.b16 %v2966
      %v3050 = vunpack.c.l.b16 %v2970
      %v3051 = vunpack.c.l.b16 %v2973
      %v3052 = vunpack.c.l.b16 %v2977
      %v3053 = vunpack.c.l.b16 %v2980
      %v3054 = vunpack.c.l.b16 %v2984
      %v3055 = vunpack.c.l.b16 %v2987
      %v3056 = vunpack.c.l.b16 %v2991
      %v3057 = vunpack.c.l.b16 %v2994
      %v3058 = vunpack.c.l.b16 %v2998
      %v3059 = vunpack.c.l.b16 %v3001
      %v3060 = vunpack.c.l.b16 %v3005
      %v3061 = vunpack.c.l.b16 %v3008
      %v3062 = vunpack.c.l.b16 %v3012
      %v3063 = vunpack.c.l.b16 %v3015
      %v3064 = vpack.c.b16 %v3033, %v3032
      %v3065 = vpack.c.b16 %v3035, %v3034
      %v3066 = vpack.c.b16 %v3037, %v3036
      %v3067 = vpack.c.b16 %v3039, %v3038
      %v3068 = vpack.c.b16 %v3041, %v3040
      %v3069 = vpack.c.b16 %v3043, %v3042
      %v3070 = vpack.c.b16 %v3045, %v3044
      %v3071 = vpack.c.b16 %v3047, %v3046
      %v3072 = vpack.c.b16 %v3049, %v3048
      %v3073 = vpack.c.b16 %v3051, %v3050
      %v3074 = vpack.c.b16 %v3053, %v3052
      %v3075 = vpack.c.b16 %v3055, %v3054
      %v3076 = vpack.c.b16 %v3057, %v3056
      %v3077 = vpack.c.b16 %v3059, %v3058
      %v3078 = vpack.c.b16 %v3061, %v3060
      %v3079 = vpack.c.b16 %v3063, %v3062
      %v3112 = vunpack.c.l.b16 %v3016
      %v3113 = vunpack.c.l.b16 %v3017
      %v3114 = vunpack.c.l.b16 %v3018
      %v3115 = vunpack.c.l.b16 %v3019
      %v3116 = vunpack.c.l.b16 %v3020
      %v3117 = vunpack.c.l.b16 %v3021
      %v3118 = vunpack.c.l.b16 %v3022
      %v3119 = vunpack.c.l.b16 %v3023
      %v3120 = vunpack.c.l.b16 %v3024
      %v3121 = vunpack.c.l.b16 %v3025
      %v3122 = vunpack.c.l.b16 %v3026
      %v3123 = vunpack.c.l.b16 %v3027
      %v3124 = vunpack.c.l.b16 %v3028
      %v3125 = vunpack.c.l.b16 %v3029
      %v3126 = vunpack.c.l.b16 %v3030
      %v3127 = vunpack.c.l.b16 %v3031
      %v3128 = vpack.c.b16 %v3113, %v3112
      %v3129 = vpack.c.b16 %v3115, %v3114
      %v3130 = vpack.c.b16 %v3117, %v3116
      %v3131 = vpack.c.b16 %v3119, %v3118
      %v3132 = vpack.c.b16 %v3121, %v3120
      %v3133 = vpack.c.b16 %v3123, %v3122
      %v3134 = vpack.c.b16 %v3125, %v3124
      %v3135 = vpack.c.b16 %v3127, %v3126
      %3144 = vmatprep.subr.bf16.mxu0 0
      %3145 = vmatpush1.bf16.msra.mxu0 %v3128
      %3146 = vmatprep.subr.bf16.mxu0 0
      %3147 = vmatpush1.bf16.msra.mxu0 %v3129
      %3148 = vmatprep.subr.bf16.mxu0 0
      %3149 = vmatpush1.bf16.msra.mxu0 %v3130
      %3150 = vmatprep.subr.bf16.mxu0 0
      %3151 = vmatpush1.bf16.msra.mxu0 %v3131
      %3152 = vmatprep.subr.bf16.mxu0 0
      %3153 = vmatpush1.bf16.msra.mxu0 %v3132
      %3154 = vmatprep.subr.bf16.mxu0 0
      %3155 = vmatpush1.bf16.msra.mxu0 %v3133
      %3156 = vmatprep.subr.bf16.mxu0 0
      %3157 = vmatpush1.bf16.msra.mxu0 %v3134
      %3158 = vmatprep.subr.bf16.mxu0 0
      %3159 = vmatpush1.bf16.msra.mxu0 %v3135
      %3160 = vmatprep.subr.bf16.mxu0 0
      %3161 = vmatpush1.bf16.msra.mxu0 0
      %3162 = vmatprep.subr.bf16.mxu0 0
      %3163 = vmatpush1.bf16.msra.mxu0 0
      %3164 = vmatprep.subr.bf16.mxu0 0
      %3165 = vmatpush1.bf16.msra.mxu0 0
      %3166 = vmatprep.subr.bf16.mxu0 0
      %3167 = vmatpush1.bf16.msra.mxu0 0
      %3168 = vmatprep.subr.bf16.mxu0 0
      %3169 = vmatpush1.bf16.msra.mxu0 0
      %3170 = vmatprep.subr.bf16.mxu0 0
      %3171 = vmatpush1.bf16.msra.mxu0 0
      %3172 = vmatprep.subr.bf16.mxu0 0
      %3173 = vmatpush1.bf16.msra.mxu0 0
      %3174 = vmatprep.subr.bf16.mxu0 0
      %3175 = vmatpush1.bf16.msra.mxu0 0
      %3176 = vmatprep.mubr.bf16.mxu0 0
      %3177 = vmatmul.mubr.bf16.gmra.mrb[0].mxu0 %v3064
      %v3178 = vpop.f32.mrb[0].mxu0
      %v3179 = vadd.f32 0.0, %v3178
      %v3180 = vpop.f32.mrb[0].mxu0
      %v3181 = vpop.f32.mrb[0].mxu0
      %v3182 = vadd.f32 0.0, %v3181
      %v3183 = vpop.f32.mrb[0].mxu0
      %3184 = vmatprep.mubr.bf16.mxu0 0
      %3185 = vmatmul.mubr.bf16.gmra.mrb[0].mxu0 %v3065
      %v3186 = vpop.f32.mrb[0].mxu0
      %v3187 = vadd.f32 0.0, %v3186
      %v3188 = vpop.f32.mrb[0].mxu0
      %v3189 = vpop.f32.mrb[0].mxu0
      %v3190 = vadd.f32 0.0, %v3189
      %v3191 = vpop.f32.mrb[0].mxu0
      %3192 = vmatprep.mubr.bf16.mxu0 0
      %3193 = vmatmul.mubr.bf16.gmra.mrb[0].mxu0 %v3066
      %v3194 = vpop.f32.mrb[0].mxu0
      %v3195 = vadd.f32 0.0, %v3194
      %v3196 = vpop.f32.mrb[0].mxu0
      %v3197 = vpop.f32.mrb[0].mxu0
      %v3198 = vadd.f32 0.0, %v3197
      %v3199 = vpop.f32.mrb[0].mxu0
      %3200 = vmatprep.mubr.bf16.mxu0 0
      %3201 = vmatmul.mubr.bf16.gmra.mrb[0].mxu0 %v3067
      %v3202 = vpop.f32.mrb[0].mxu0
      %v3203 = vadd.f32 0.0, %v3202
      %v3204 = vpop.f32.mrb[0].mxu0
      %v3205 = vpop.f32.mrb[0].mxu0
      %v3206 = vadd.f32 0.0, %v3205
      %v3207 = vpop.f32.mrb[0].mxu0
      %3208 = vmatprep.mubr.bf16.mxu0 0
      %3209 = vmatmul.mubr.bf16.gmra.mrb[0].mxu0 %v3068
      %v3210 = vpop.f32.mrb[0].mxu0
      %v3211 = vadd.f32 0.0, %v3210
      %v3212 = vpop.f32.mrb[0].mxu0
      %v3213 = vpop.f32.mrb[0].mxu0
      %v3214 = vadd.f32 0.0, %v3213
      %v3215 = vpop.f32.mrb[0].mxu0
      %3216 = vmatprep.mubr.bf16.mxu0 0
      %3217 = vmatmul.mubr.bf16.gmra.mrb[0].mxu0 %v3069
      %v3218 = vpop.f32.mrb[0].mxu0
      %v3219 = vadd.f32 0.0, %v3218
      %v3220 = vpop.f32.mrb[0].mxu0
      %v3221 = vpop.f32.mrb[0].mxu0
      %v3222 = vadd.f32 0.0, %v3221
      %v3223 = vpop.f32.mrb[0].mxu0
      %3224 = vmatprep.mubr.bf16.mxu0 0
      %3225 = vmatmul.mubr.bf16.gmra.mrb[0].mxu0 %v3070
      %v3226 = vpop.f32.mrb[0].mxu0
      %v3227 = vadd.f32 0.0, %v3226
      %v3228 = vpop.f32.mrb[0].mxu0
      %v3229 = vpop.f32.mrb[0].mxu0
      %v3230 = vadd.f32 0.0, %v3229
      %v3231 = vpop.f32.mrb[0].mxu0
      %3232 = vmatprep.mubr.bf16.mxu0 0
      %3233 = vmatmul.mubr.bf16.gmra.mrb[0].mxu0 %v3071
      %v3234 = vpop.f32.mrb[0].mxu0
      %v3235 = vadd.f32 0.0, %v3234
      %v3236 = vpop.f32.mrb[0].mxu0
      %v3237 = vpop.f32.mrb[0].mxu0
      %v3238 = vadd.f32 0.0, %v3237
      %v3239 = vpop.f32.mrb[0].mxu0
      %3240 = vmatprep.mubr.bf16.mxu0 0
      %3241 = vmatmul.mubr.bf16.gmra.mrb[0].mxu0 %v3072
      %v3242 = vpop.f32.mrb[0].mxu0
      %v3243 = vadd.f32 0.0, %v3242
      %v3244 = vpop.f32.mrb[0].mxu0
      %v3245 = vpop.f32.mrb[0].mxu0
      %v3246 = vadd.f32 0.0, %v3245
      %v3247 = vpop.f32.mrb[0].mxu0
      %3248 = vmatprep.mubr.bf16.mxu0 0
      %3249 = vmatmul.mubr.bf16.gmra.mrb[0].mxu0 %v3073
      %v3250 = vpop.f32.mrb[0].mxu0
      %v3251 = vadd.f32 0.0, %v3250
      %v3252 = vpop.f32.mrb[0].mxu0
      %v3253 = vpop.f32.mrb[0].mxu0
      %v3254 = vadd.f32 0.0, %v3253
      %v3255 = vpop.f32.mrb[0].mxu0
      %3256 = vmatprep.mubr.bf16.mxu0 0
      %3257 = vmatmul.mubr.bf16.gmra.mrb[0].mxu0 %v3074
      %v3258 = vpop.f32.mrb[0].mxu0
      %v3259 = vadd.f32 0.0, %v3258
      %v3260 = vpop.f32.mrb[0].mxu0
      %v3261 = vpop.f32.mrb[0].mxu0
      %v3262 = vadd.f32 0.0, %v3261
      %v3263 = vpop.f32.mrb[0].mxu0
      %3264 = vmatprep.mubr.bf16.mxu0 0
      %3265 = vmatmul.mubr.bf16.gmra.mrb[0].mxu0 %v3075
      %v3266 = vpop.f32.mrb[0].mxu0
      %v3267 = vadd.f32 0.0, %v3266
      %v3268 = vpop.f32.mrb[0].mxu0
      %v3269 = vpop.f32.mrb[0].mxu0
      %v3270 = vadd.f32 0.0, %v3269
      %v3271 = vpop.f32.mrb[0].mxu0
      %3272 = vmatprep.mubr.bf16.mxu0 0
      %3273 = vmatmul.mubr.bf16.gmra.mrb[0].mxu0 %v3076
      %v3274 = vpop.f32.mrb[0].mxu0
      %v3275 = vadd.f32 0.0, %v3274
      %v3276 = vpop.f32.mrb[0].mxu0
      %v3277 = vpop.f32.mrb[0].mxu0
      %v3278 = vadd.f32 0.0, %v3277
      %v3279 = vpop.f32.mrb[0].mxu0
      %3280 = vmatprep.mubr.bf16.mxu0 0
      %3281 = vmatmul.mubr.bf16.gmra.mrb[0].mxu0 %v3077
      %v3282 = vpop.f32.mrb[0].mxu0
      %v3283 = vadd.f32 0.0, %v3282
      %v3284 = vpop.f32.mrb[0].mxu0
      %v3285 = vpop.f32.mrb[0].mxu0
      %v3286 = vadd.f32 0.0, %v3285
      %v3287 = vpop.f32.mrb[0].mxu0
      %3288 = vmatprep.mubr.bf16.mxu0 0
      %3289 = vmatmul.mubr.bf16.gmra.mrb[0].mxu0 %v3078
      %v3290 = vpop.f32.mrb[0].mxu0
      %v3291 = vadd.f32 0.0, %v3290
      %v3292 = vpop.f32.mrb[0].mxu0
      %v3293 = vpop.f32.mrb[0].mxu0
      %v3294 = vadd.f32 0.0, %v3293
      %v3295 = vpop.f32.mrb[0].mxu0
      %3296 = vmatprep.mubr.bf16.mxu0 0
      %3297 = vmatmul.mubr.bf16.gmra.mrb[0].mxu0 %v3079
      %v3298 = vpop.f32.mrb[0].mxu0
      %v3299 = vadd.f32 0.0, %v3298
      %v3300 = vpop.f32.mrb[0].mxu0
      %v3301 = vpop.f32.mrb[0].mxu0
      %v3302 = vadd.f32 0.0, %v3301
      %v3303 = vpop.f32.mrb[0].mxu0
      %3304 = vdwg.mxu0
      %v3305 = vadd.f32 %v2808, %v3179
      %v3306 = vadd.f32 %v2809, %v3182
      %v3307 = vadd.f32 %v2810, %v3187
      %v3308 = vadd.f32 %v2811, %v3190
      %v3309 = vadd.f32 %v2812, %v3195
      %v3310 = vadd.f32 %v2813, %v3198
      %v3311 = vadd.f32 %v2814, %v3203
      %v3312 = vadd.f32 %v2815, %v3206
      %v3313 = vadd.f32 %v2816, %v3211
      %v3314 = vadd.f32 %v2817, %v3214
      %v3315 = vadd.f32 %v2818, %v3219
      %v3316 = vadd.f32 %v2819, %v3222
      %v3317 = vadd.f32 %v2820, %v3227
      %v3318 = vadd.f32 %v2821, %v3230
      %v3319 = vadd.f32 %v2822, %v3235
      %v3320 = vadd.f32 %v2823, %v3238
      %v3321 = vadd.f32 %v2824, %v3243
      %v3322 = vadd.f32 %v2825, %v3246
      %v3323 = vadd.f32 %v2826, %v3251
      %v3324 = vadd.f32 %v2827, %v3254
      %v3325 = vadd.f32 %v2828, %v3259
      %v3326 = vadd.f32 %v2829, %v3262
      %v3327 = vadd.f32 %v2830, %v3267
      %v3328 = vadd.f32 %v2831, %v3270
      %v3329 = vadd.f32 %v2832, %v3275
      %v3330 = vadd.f32 %v2833, %v3278
      %v3331 = vadd.f32 %v2834, %v3283
      %v3332 = vadd.f32 %v2835, %v3286
      %v3333 = vadd.f32 %v2836, %v3291
      %v3334 = vadd.f32 %v2837, %v3294
      %v3335 = vadd.f32 %v2838, %v3299
      %v3336 = vadd.f32 %v2839, %v3302
      %s3337 = scalar_lea.vmem %s165, 24
      %v3338 = vld [vmem:[%s3337] sm:$0xf]
      %v3339 = vld [vmem:[%s3337 + $0x4] sm:$0xf]
      %v3340 = vld [vmem:[%s3337 + $0xc] sm:$0xf]
      %v3341 = vld [vmem:[%s3337 + $0x10] sm:$0xf]
      %v3342 = vld [vmem:[%s3337 + $0x18] sm:$0xf]
      %v3343 = vld [vmem:[%s3337 + $0x1c] sm:$0xf]
      %v3344 = vld [vmem:[%s3337 + $0x24] sm:$0xf]
      %v3345 = vld [vmem:[%s3337 + $0x28] sm:$0xf]
      %v3346 = vld [vmem:[%s3337 + $0x30] sm:$0xf]
      %v3347 = vld [vmem:[%s3337 + $0x34] sm:$0xf]
      %v3348 = vld [vmem:[%s3337 + $0x3c] sm:$0xf]
      %v3349 = vld [vmem:[%s3337 + $0x40] sm:$0xf]
      %v3350 = vld [vmem:[%s3337 + $0x48] sm:$0xf]
      %v3351 = vld [vmem:[%s3337 + $0x4c] sm:$0xf]
      %v3352 = vld [vmem:[%s3337 + $0x54] sm:$0xf]
      %v3353 = vld [vmem:[%s3337 + $0x58] sm:$0xf]
      %v3354 = vld [vmem:[%s3337 + $0x60] sm:$0xf]
      %v3355 = vld [vmem:[%s3337 + $0x64] sm:$0xf]
      %v3356 = vld [vmem:[%s3337 + $0x6c] sm:$0xf]
      %v3357 = vld [vmem:[%s3337 + $0x70] sm:$0xf]
      %v3358 = vld [vmem:[%s3337 + $0x78] sm:$0xf]
      %v3359 = vld [vmem:[%s3337 + $0x7c] sm:$0xf]
      %v3360 = vld [vmem:[%s3337 + $0x84] sm:$0xf]
      %v3361 = vld [vmem:[%s3337 + $0x88] sm:$0xf]
      %v3362 = vld [vmem:[%s3337 + $0x90] sm:$0xf]
      %v3363 = vld [vmem:[%s3337 + $0x94] sm:$0xf]
      %v3364 = vld [vmem:[%s3337 + $0x9c] sm:$0xf]
      %v3365 = vld [vmem:[%s3337 + $0xa0] sm:$0xf]
      %v3366 = vld [vmem:[%s3337 + $0xa8] sm:$0xf]
      %v3367 = vld [vmem:[%s3337 + $0xac] sm:$0xf]
      %v3368 = vld [vmem:[%s3337 + $0xb4] sm:$0xf]
      %v3369 = vld [vmem:[%s3337 + $0xb8] sm:$0xf]
      %v3370 = vld [vmem:[%s1 + $0x180] sm:$0xf]
      %v3371 = vld [vmem:[%s1 + $0x184] sm:$0xf]
      %v3372 = vld [vmem:[%s1 + $0x188] sm:$0xf]
      %v3373 = vld [vmem:[%s1 + $0x18c] sm:$0xf]
      %v3374 = vld [vmem:[%s1 + $0x190] sm:$0xf]
      %v3375 = vld [vmem:[%s1 + $0x194] sm:$0xf]
      %v3376 = vld [vmem:[%s1 + $0x198] sm:$0xf]
      %v3377 = vld [vmem:[%s1 + $0x19c] sm:$0xf]
      %v3378 = vld [vmem:[%s1 + $0x1a0] sm:$0xf]
      %v3379 = vld [vmem:[%s1 + $0x1a4] sm:$0xf]
      %v3380 = vld [vmem:[%s1 + $0x1a8] sm:$0xf]
      %v3381 = vld [vmem:[%s1 + $0x1ac] sm:$0xf]
      %v3382 = vld [vmem:[%s1 + $0x1b0] sm:$0xf]
      %v3383 = vld [vmem:[%s1 + $0x1b4] sm:$0xf]
      %v3384 = vld [vmem:[%s1 + $0x1b8] sm:$0xf]
      %v3385 = vld [vmem:[%s1 + $0x1bc] sm:$0xf]
      %v3418 = vunpack.c.l.b16 %v3338
      %v3419 = vunpack.c.l.b16 %v3339
      %v3420 = vunpack.c.l.b16 %v3340
      %v3421 = vunpack.c.l.b16 %v3341
      %v3422 = vunpack.c.l.b16 %v3342
      %v3423 = vunpack.c.l.b16 %v3343
      %v3424 = vunpack.c.l.b16 %v3344
      %v3425 = vunpack.c.l.b16 %v3345
      %v3426 = vunpack.c.l.b16 %v3346
      %v3427 = vunpack.c.l.b16 %v3347
      %v3428 = vunpack.c.l.b16 %v3348
      %v3429 = vunpack.c.l.b16 %v3349
      %v3430 = vunpack.c.l.b16 %v3350
      %v3431 = vunpack.c.l.b16 %v3351
      %v3432 = vunpack.c.l.b16 %v3352
      %v3433 = vunpack.c.l.b16 %v3353
      %v3434 = vunpack.c.l.b16 %v3354
      %v3435 = vunpack.c.l.b16 %v3355
      %v3436 = vunpack.c.l.b16 %v3356
      %v3437 = vunpack.c.l.b16 %v3357
      %v3438 = vunpack.c.l.b16 %v3358
      %v3439 = vunpack.c.l.b16 %v3359
      %v3440 = vunpack.c.l.b16 %v3360
      %v3441 = vunpack.c.l.b16 %v3361
      %v3442 = vunpack.c.l.b16 %v3362
      %v3443 = vunpack.c.l.b16 %v3363
      %v3444 = vunpack.c.l.b16 %v3364
      %v3445 = vunpack.c.l.b16 %v3365
      %v3446 = vunpack.c.l.b16 %v3366
      %v3447 = vunpack.c.l.b16 %v3367
      %v3448 = vunpack.c.l.b16 %v3368
      %v3449 = vunpack.c.l.b16 %v3369
      %v3450 = vpack.c.b16 %v3419, %v3418
      %v3451 = vpack.c.b16 %v3421, %v3420
      %v3452 = vpack.c.b16 %v3423, %v3422
      %v3453 = vpack.c.b16 %v3425, %v3424
      %v3454 = vpack.c.b16 %v3427, %v3426
      %v3455 = vpack.c.b16 %v3429, %v3428
      %v3456 = vpack.c.b16 %v3431, %v3430
      %v3457 = vpack.c.b16 %v3433, %v3432
      %v3458 = vpack.c.b16 %v3435, %v3434
      %v3459 = vpack.c.b16 %v3437, %v3436
      %v3460 = vpack.c.b16 %v3439, %v3438
      %v3461 = vpack.c.b16 %v3441, %v3440
      %v3462 = vpack.c.b16 %v3443, %v3442
      %v3463 = vpack.c.b16 %v3445, %v3444
      %v3464 = vpack.c.b16 %v3447, %v3446
      %v3465 = vpack.c.b16 %v3449, %v3448
      %v3498 = vunpack.c.l.b16 %v3370
      %v3499 = vunpack.c.l.b16 %v3371
      %v3500 = vunpack.c.l.b16 %v3372
      %v3501 = vunpack.c.l.b16 %v3373
      %v3502 = vunpack.c.l.b16 %v3374
      %v3503 = vunpack.c.l.b16 %v3375
      %v3504 = vunpack.c.l.b16 %v3376
      %v3505 = vunpack.c.l.b16 %v3377
      %v3506 = vunpack.c.l.b16 %v3378
      %v3507 = vunpack.c.l.b16 %v3379
      %v3508 = vunpack.c.l.b16 %v3380
      %v3509 = vunpack.c.l.b16 %v3381
      %v3510 = vunpack.c.l.b16 %v3382
      %v3511 = vunpack.c.l.b16 %v3383
      %v3512 = vunpack.c.l.b16 %v3384
      %v3513 = vunpack.c.l.b16 %v3385
      %v3514 = vpack.c.b16 %v3499, %v3498
      %v3515 = vpack.c.b16 %v3501, %v3500
      %v3516 = vpack.c.b16 %v3503, %v3502
      %v3517 = vpack.c.b16 %v3505, %v3504
      %v3518 = vpack.c.b16 %v3507, %v3506
      %v3519 = vpack.c.b16 %v3509, %v3508
      %v3520 = vpack.c.b16 %v3511, %v3510
      %v3521 = vpack.c.b16 %v3513, %v3512
      %3530 = vmatprep.subr.bf16.mxu0 0
      %3531 = vmatpush1.bf16.msra.mxu0 %v3514
      %3532 = vmatprep.subr.bf16.mxu0 0
      %3533 = vmatpush1.bf16.msra.mxu0 %v3515
      %3534 = vmatprep.subr.bf16.mxu0 0
      %3535 = vmatpush1.bf16.msra.mxu0 %v3516
      %3536 = vmatprep.subr.bf16.mxu0 0
      %3537 = vmatpush1.bf16.msra.mxu0 %v3517
      %3538 = vmatprep.subr.bf16.mxu0 0
      %3539 = vmatpush1.bf16.msra.mxu0 %v3518
      %3540 = vmatprep.subr.bf16.mxu0 0
      %3541 = vmatpush1.bf16.msra.mxu0 %v3519
      %3542 = vmatprep.subr.bf16.mxu0 0
      %3543 = vmatpush1.bf16.msra.mxu0 %v3520
      %3544 = vmatprep.subr.bf16.mxu0 0
      %3545 = vmatpush1.bf16.msra.mxu0 %v3521
      %3546 = vmatprep.subr.bf16.mxu0 0
      %3547 = vmatpush1.bf16.msra.mxu0 0
      %3548 = vmatprep.subr.bf16.mxu0 0
      %3549 = vmatpush1.bf16.msra.mxu0 0
      %3550 = vmatprep.subr.bf16.mxu0 0
      %3551 = vmatpush1.bf16.msra.mxu0 0
      %3552 = vmatprep.subr.bf16.mxu0 0
      %3553 = vmatpush1.bf16.msra.mxu0 0
      %3554 = vmatprep.subr.bf16.mxu0 0
      %3555 = vmatpush1.bf16.msra.mxu0 0
      %3556 = vmatprep.subr.bf16.mxu0 0
      %3557 = vmatpush1.bf16.msra.mxu0 0
      %3558 = vmatprep.subr.bf16.mxu0 0
      %3559 = vmatpush1.bf16.msra.mxu0 0
      %3560 = vmatprep.subr.bf16.mxu0 0
      %3561 = vmatpush1.bf16.msra.mxu0 0
      %3562 = vmatprep.mubr.bf16.mxu0 0
      %3563 = vmatmul.mubr.bf16.gmra.mrb[0].mxu0 %v3450
      %v3564 = vpop.f32.mrb[0].mxu0
      %v3565 = vadd.f32 0.0, %v3564
      %v3566 = vpop.f32.mrb[0].mxu0
      %v3567 = vpop.f32.mrb[0].mxu0
      %v3568 = vadd.f32 0.0, %v3567
      %v3569 = vpop.f32.mrb[0].mxu0
      %3570 = vmatprep.mubr.bf16.mxu0 0
      %3571 = vmatmul.mubr.bf16.gmra.mrb[0].mxu0 %v3451
      %v3572 = vpop.f32.mrb[0].mxu0
      %v3573 = vadd.f32 0.0, %v3572
      %v3574 = vpop.f32.mrb[0].mxu0
      %v3575 = vpop.f32.mrb[0].mxu0
      %v3576 = vadd.f32 0.0, %v3575
      %v3577 = vpop.f32.mrb[0].mxu0
      %3578 = vmatprep.mubr.bf16.mxu0 0
      %3579 = vmatmul.mubr.bf16.gmra.mrb[0].mxu0 %v3452
      %v3580 = vpop.f32.mrb[0].mxu0
      %v3581 = vadd.f32 0.0, %v3580
      %v3582 = vpop.f32.mrb[0].mxu0
      %v3583 = vpop.f32.mrb[0].mxu0
      %v3584 = vadd.f32 0.0, %v3583
      %v3585 = vpop.f32.mrb[0].mxu0
      %3586 = vmatprep.mubr.bf16.mxu0 0
      %3587 = vmatmul.mubr.bf16.gmra.mrb[0].mxu0 %v3453
      %v3588 = vpop.f32.mrb[0].mxu0
      %v3589 = vadd.f32 0.0, %v3588
      %v3590 = vpop.f32.mrb[0].mxu0
      %v3591 = vpop.f32.mrb[0].mxu0
      %v3592 = vadd.f32 0.0, %v3591
      %v3593 = vpop.f32.mrb[0].mxu0
      %3594 = vmatprep.mubr.bf16.mxu0 0
      %3595 = vmatmul.mubr.bf16.gmra.mrb[0].mxu0 %v3454
      %v3596 = vpop.f32.mrb[0].mxu0
      %v3597 = vadd.f32 0.0, %v3596
      %v3598 = vpop.f32.mrb[0].mxu0
      %v3599 = vpop.f32.mrb[0].mxu0
      %v3600 = vadd.f32 0.0, %v3599
      %v3601 = vpop.f32.mrb[0].mxu0
      %3602 = vmatprep.mubr.bf16.mxu0 0
      %3603 = vmatmul.mubr.bf16.gmra.mrb[0].mxu0 %v3455
      %v3604 = vpop.f32.mrb[0].mxu0
      %v3605 = vadd.f32 0.0, %v3604
      %v3606 = vpop.f32.mrb[0].mxu0
      %v3607 = vpop.f32.mrb[0].mxu0
      %v3608 = vadd.f32 0.0, %v3607
      %v3609 = vpop.f32.mrb[0].mxu0
      %3610 = vmatprep.mubr.bf16.mxu0 0
      %3611 = vmatmul.mubr.bf16.gmra.mrb[0].mxu0 %v3456
      %v3612 = vpop.f32.mrb[0].mxu0
      %v3613 = vadd.f32 0.0, %v3612
      %v3614 = vpop.f32.mrb[0].mxu0
      %v3615 = vpop.f32.mrb[0].mxu0
      %v3616 = vadd.f32 0.0, %v3615
      %v3617 = vpop.f32.mrb[0].mxu0
      %3618 = vmatprep.mubr.bf16.mxu0 0
      %3619 = vmatmul.mubr.bf16.gmra.mrb[0].mxu0 %v3457
      %v3620 = vpop.f32.mrb[0].mxu0
      %v3621 = vadd.f32 0.0, %v3620
      %v3622 = vpop.f32.mrb[0].mxu0
      %v3623 = vpop.f32.mrb[0].mxu0
      %v3624 = vadd.f32 0.0, %v3623
      %v3625 = vpop.f32.mrb[0].mxu0
      %3626 = vmatprep.mubr.bf16.mxu0 0
      %3627 = vmatmul.mubr.bf16.gmra.mrb[0].mxu0 %v3458
      %v3628 = vpop.f32.mrb[0].mxu0
      %v3629 = vadd.f32 0.0, %v3628
      %v3630 = vpop.f32.mrb[0].mxu0
      %v3631 = vpop.f32.mrb[0].mxu0
      %v3632 = vadd.f32 0.0, %v3631
      %v3633 = vpop.f32.mrb[0].mxu0
      %3634 = vmatprep.mubr.bf16.mxu0 0
      %3635 = vmatmul.mubr.bf16.gmra.mrb[0].mxu0 %v3459
      %v3636 = vpop.f32.mrb[0].mxu0
      %v3637 = vadd.f32 0.0, %v3636
      %v3638 = vpop.f32.mrb[0].mxu0
      %v3639 = vpop.f32.mrb[0].mxu0
      %v3640 = vadd.f32 0.0, %v3639
      %v3641 = vpop.f32.mrb[0].mxu0
      %3642 = vmatprep.mubr.bf16.mxu0 0
      %3643 = vmatmul.mubr.bf16.gmra.mrb[0].mxu0 %v3460
      %v3644 = vpop.f32.mrb[0].mxu0
      %v3645 = vadd.f32 0.0, %v3644
      %v3646 = vpop.f32.mrb[0].mxu0
      %v3647 = vpop.f32.mrb[0].mxu0
      %v3648 = vadd.f32 0.0, %v3647
      %v3649 = vpop.f32.mrb[0].mxu0
      %3650 = vmatprep.mubr.bf16.mxu0 0
      %3651 = vmatmul.mubr.bf16.gmra.mrb[0].mxu0 %v3461
      %v3652 = vpop.f32.mrb[0].mxu0
      %v3653 = vadd.f32 0.0, %v3652
      %v3654 = vpop.f32.mrb[0].mxu0
      %v3655 = vpop.f32.mrb[0].mxu0
      %v3656 = vadd.f32 0.0, %v3655
      %v3657 = vpop.f32.mrb[0].mxu0
      %3658 = vmatprep.mubr.bf16.mxu0 0
      %3659 = vmatmul.mubr.bf16.gmra.mrb[0].mxu0 %v3462
      %v3660 = vpop.f32.mrb[0].mxu0
      %v3661 = vadd.f32 0.0, %v3660
      %v3662 = vpop.f32.mrb[0].mxu0
      %v3663 = vpop.f32.mrb[0].mxu0
      %v3664 = vadd.f32 0.0, %v3663
      %v3665 = vpop.f32.mrb[0].mxu0
      %3666 = vmatprep.mubr.bf16.mxu0 0
      %3667 = vmatmul.mubr.bf16.gmra.mrb[0].mxu0 %v3463
      %v3668 = vpop.f32.mrb[0].mxu0
      %v3669 = vadd.f32 0.0, %v3668
      %v3670 = vpop.f32.mrb[0].mxu0
      %v3671 = vpop.f32.mrb[0].mxu0
      %v3672 = vadd.f32 0.0, %v3671
      %v3673 = vpop.f32.mrb[0].mxu0
      %3674 = vmatprep.mubr.bf16.mxu0 0
      %3675 = vmatmul.mubr.bf16.gmra.mrb[0].mxu0 %v3464
      %v3676 = vpop.f32.mrb[0].mxu0
      %v3677 = vadd.f32 0.0, %v3676
      %v3678 = vpop.f32.mrb[0].mxu0
      %v3679 = vpop.f32.mrb[0].mxu0
      %v3680 = vadd.f32 0.0, %v3679
      %v3681 = vpop.f32.mrb[0].mxu0
      %3682 = vmatprep.mubr.bf16.mxu0 0
      %3683 = vmatmul.mubr.bf16.gmra.mrb[0].mxu0 %v3465
      %v3684 = vpop.f32.mrb[0].mxu0
      %v3685 = vadd.f32 0.0, %v3684
      %v3686 = vpop.f32.mrb[0].mxu0
      %v3687 = vpop.f32.mrb[0].mxu0
      %v3688 = vadd.f32 0.0, %v3687
      %v3689 = vpop.f32.mrb[0].mxu0
      %3690 = vdwg.mxu0
      %v3691 = vadd.f32 %v3305, %v3565
      %v3692 = vadd.f32 %v3306, %v3568
      %v3693 = vadd.f32 %v3307, %v3573
      %v3694 = vadd.f32 %v3308, %v3576
      %v3695 = vadd.f32 %v3309, %v3581
      %v3696 = vadd.f32 %v3310, %v3584
      %v3697 = vadd.f32 %v3311, %v3589
      %v3698 = vadd.f32 %v3312, %v3592
      %v3699 = vadd.f32 %v3313, %v3597
      %v3700 = vadd.f32 %v3314, %v3600
      %v3701 = vadd.f32 %v3315, %v3605
      %v3702 = vadd.f32 %v3316, %v3608
      %v3703 = vadd.f32 %v3317, %v3613
      %v3704 = vadd.f32 %v3318, %v3616
      %v3705 = vadd.f32 %v3319, %v3621
      %v3706 = vadd.f32 %v3320, %v3624
      %v3707 = vadd.f32 %v3321, %v3629
      %v3708 = vadd.f32 %v3322, %v3632
      %v3709 = vadd.f32 %v3323, %v3637
      %v3710 = vadd.f32 %v3324, %v3640
      %v3711 = vadd.f32 %v3325, %v3645
      %v3712 = vadd.f32 %v3326, %v3648
      %v3713 = vadd.f32 %v3327, %v3653
      %v3714 = vadd.f32 %v3328, %v3656
      %v3715 = vadd.f32 %v3329, %v3661
      %v3716 = vadd.f32 %v3330, %v3664
      %v3717 = vadd.f32 %v3331, %v3669
      %v3718 = vadd.f32 %v3332, %v3672
      %v3719 = vadd.f32 %v3333, %v3677
      %v3720 = vadd.f32 %v3334, %v3680
      %v3721 = vadd.f32 %v3335, %v3685
      %v3722 = vadd.f32 %v3336, %v3688
      %v3723 = vld [vmem:[%s3337] sm:$0xf]
      %v3724 = vld [vmem:[%s3337 + $0x4] sm:$0xf]
      %v3725 = vld [vmem:[%s3337 + $0x8] sm:$0x1]
      %v3726 = vld [vmem:[%s3337 + $0xc] sm:$0xf]
      %v3727 = vld [vmem:[%s3337 + $0x10] sm:$0xf]
      %v3728 = vld [vmem:[%s3337 + $0x14] sm:$0x1]
      %v3729 = vld [vmem:[%s3337 + $0x18] sm:$0xf]
      %v3730 = vld [vmem:[%s3337 + $0x1c] sm:$0xf]
      %v3731 = vld [vmem:[%s3337 + $0x20] sm:$0x1]
      %v3732 = vld [vmem:[%s3337 + $0x24] sm:$0xf]
      %v3733 = vld [vmem:[%s3337 + $0x28] sm:$0xf]
      %v3734 = vld [vmem:[%s3337 + $0x2c] sm:$0x1]
      %v3735 = vld [vmem:[%s3337 + $0x30] sm:$0xf]
      %v3736 = vld [vmem:[%s3337 + $0x34] sm:$0xf]
      %v3737 = vld [vmem:[%s3337 + $0x38] sm:$0x1]
      %v3738 = vld [vmem:[%s3337 + $0x3c] sm:$0xf]
      %v3739 = vld [vmem:[%s3337 + $0x40] sm:$0xf]
      %v3740 = vld [vmem:[%s3337 + $0x44] sm:$0x1]
      %v3741 = vld [vmem:[%s3337 + $0x48] sm:$0xf]
      %v3742 = vld [vmem:[%s3337 + $0x4c] sm:$0xf]
      %v3743 = vld [vmem:[%s3337 + $0x50] sm:$0x1]
      %v3744 = vld [vmem:[%s3337 + $0x54] sm:$0xf]
      %v3745 = vld [vmem:[%s3337 + $0x58] sm:$0xf]
      %v3746 = vld [vmem:[%s3337 + $0x5c] sm:$0x1]
      %v3747 = vld [vmem:[%s3337 + $0x60] sm:$0xf]
      %v3748 = vld [vmem:[%s3337 + $0x64] sm:$0xf]
      %v3749 = vld [vmem:[%s3337 + $0x68] sm:$0x1]
      %v3750 = vld [vmem:[%s3337 + $0x6c] sm:$0xf]
      %v3751 = vld [vmem:[%s3337 + $0x70] sm:$0xf]
      %v3752 = vld [vmem:[%s3337 + $0x74] sm:$0x1]
      %v3753 = vld [vmem:[%s3337 + $0x78] sm:$0xf]
      %v3754 = vld [vmem:[%s3337 + $0x7c] sm:$0xf]
      %v3755 = vld [vmem:[%s3337 + $0x80] sm:$0x1]
      %v3756 = vld [vmem:[%s3337 + $0x84] sm:$0xf]
      %v3757 = vld [vmem:[%s3337 + $0x88] sm:$0xf]
      %v3758 = vld [vmem:[%s3337 + $0x8c] sm:$0x1]
      %v3759 = vld [vmem:[%s3337 + $0x90] sm:$0xf]
      %v3760 = vld [vmem:[%s3337 + $0x94] sm:$0xf]
      %v3761 = vld [vmem:[%s3337 + $0x98] sm:$0x1]
      %v3762 = vld [vmem:[%s3337 + $0x9c] sm:$0xf]
      %v3763 = vld [vmem:[%s3337 + $0xa0] sm:$0xf]
      %v3764 = vld [vmem:[%s3337 + $0xa4] sm:$0x1]
      %v3765 = vld [vmem:[%s3337 + $0xa8] sm:$0xf]
      %v3766 = vld [vmem:[%s3337 + $0xac] sm:$0xf]
      %v3767 = vld [vmem:[%s3337 + $0xb0] sm:$0x1]
      %v3768 = vld [vmem:[%s3337 + $0xb4] sm:$0xf]
      %v3769 = vld [vmem:[%s3337 + $0xb8] sm:$0xf]
      %v3770 = vld [vmem:[%s3337 + $0xbc] sm:$0x1]
      %v3772 = vshrl.u32 %v3723, 16
      %v3774 = vrot.slane %v3772, 4
      %v3775 = vshll.u32 %v3723, 16
      %v3777 = vrot.slane %v3775, 5
      %v3778 = vor.u32 %v3774, %v3777
      %v3779 = vrot.slane %v3778, 4
      %v3781 = vshll.u32 %v3724, 16
      %v3783 = vrot.slane %v3781, 5
      %v3784 = vsel %vm238, %v3779, %v3783
      %v3785 = vshrl.u32 %v3724, 16
      %v3787 = vrot.slane %v3785, 4
      %v3788 = vor.u32 %v3787, %v3783
      %v3789 = vrot.slane %v3788, 4
      %v3791 = vshll.u32 %v3725, 16
      %v3793 = vrot.slane %v3791, 5
      %v3794 = vsel %vm238, %v3789, %v3793
      %v3796 = vshrl.u32 %v3726, 16
      %v3798 = vrot.slane %v3796, 4
      %v3799 = vshll.u32 %v3726, 16
      %v3801 = vrot.slane %v3799, 5
      %v3802 = vor.u32 %v3798, %v3801
      %v3803 = vrot.slane %v3802, 4
      %v3805 = vshll.u32 %v3727, 16
      %v3807 = vrot.slane %v3805, 5
      %v3808 = vsel %vm238, %v3803, %v3807
      %v3809 = vshrl.u32 %v3727, 16
      %v3811 = vrot.slane %v3809, 4
      %v3812 = vor.u32 %v3811, %v3807
      %v3813 = vrot.slane %v3812, 4
      %v3815 = vshll.u32 %v3728, 16
      %v3817 = vrot.slane %v3815, 5
      %v3818 = vsel %vm238, %v3813, %v3817
      %v3820 = vshrl.u32 %v3729, 16
      %v3822 = vrot.slane %v3820, 4
      %v3823 = vshll.u32 %v3729, 16
      %v3825 = vrot.slane %v3823, 5
      %v3826 = vor.u32 %v3822, %v3825
      %v3827 = vrot.slane %v3826, 4
      %v3829 = vshll.u32 %v3730, 16
      %v3831 = vrot.slane %v3829, 5
      %v3832 = vsel %vm238, %v3827, %v3831
      %v3833 = vshrl.u32 %v3730, 16
      %v3835 = vrot.slane %v3833, 4
      %v3836 = vor.u32 %v3835, %v3831
      %v3837 = vrot.slane %v3836, 4
      %v3839 = vshll.u32 %v3731, 16
      %v3841 = vrot.slane %v3839, 5
      %v3842 = vsel %vm238, %v3837, %v3841
      %v3844 = vshrl.u32 %v3732, 16
      %v3846 = vrot.slane %v3844, 4
      %v3847 = vshll.u32 %v3732, 16
      %v3849 = vrot.slane %v3847, 5
      %v3850 = vor.u32 %v3846, %v3849
      %v3851 = vrot.slane %v3850, 4
      %v3853 = vshll.u32 %v3733, 16
      %v3855 = vrot.slane %v3853, 5
      %v3856 = vsel %vm238, %v3851, %v3855
      %v3857 = vshrl.u32 %v3733, 16
      %v3859 = vrot.slane %v3857, 4
      %v3860 = vor.u32 %v3859, %v3855
      %v3861 = vrot.slane %v3860, 4
      %v3863 = vshll.u32 %v3734, 16
      %v3865 = vrot.slane %v3863, 5
      %v3866 = vsel %vm238, %v3861, %v3865
      %v3868 = vshrl.u32 %v3735, 16
      %v3870 = vrot.slane %v3868, 4
      %v3871 = vshll.u32 %v3735, 16
      %v3873 = vrot.slane %v3871, 5
      %v3874 = vor.u32 %v3870, %v3873
      %v3875 = vrot.slane %v3874, 4
      %v3877 = vshll.u32 %v3736, 16
      %v3879 = vrot.slane %v3877, 5
      %v3880 = vsel %vm238, %v3875, %v3879
      %v3881 = vshrl.u32 %v3736, 16
      %v3883 = vrot.slane %v3881, 4
      %v3884 = vor.u32 %v3883, %v3879
      %v3885 = vrot.slane %v3884, 4
      %v3887 = vshll.u32 %v3737, 16
      %v3889 = vrot.slane %v3887, 5
      %v3890 = vsel %vm238, %v3885, %v3889
      %v3892 = vshrl.u32 %v3738, 16
      %v3894 = vrot.slane %v3892, 4
      %v3895 = vshll.u32 %v3738, 16
      %v3897 = vrot.slane %v3895, 5
      %v3898 = vor.u32 %v3894, %v3897
      %v3899 = vrot.slane %v3898, 4
      %v3901 = vshll.u32 %v3739, 16
      %v3903 = vrot.slane %v3901, 5
      %v3904 = vsel %vm238, %v3899, %v3903
      %v3905 = vshrl.u32 %v3739, 16
      %v3907 = vrot.slane %v3905, 4
      %v3908 = vor.u32 %v3907, %v3903
      %v3909 = vrot.slane %v3908, 4
      %v3911 = vshll.u32 %v3740, 16
      %v3913 = vrot.slane %v3911, 5
      %v3914 = vsel %vm238, %v3909, %v3913
      %v3916 = vshrl.u32 %v3741, 16
      %v3918 = vrot.slane %v3916, 4
      %v3919 = vshll.u32 %v3741, 16
      %v3921 = vrot.slane %v3919, 5
      %v3922 = vor.u32 %v3918, %v3921
      %v3923 = vrot.slane %v3922, 4
      %v3925 = vshll.u32 %v3742, 16
      %v3927 = vrot.slane %v3925, 5
      %v3928 = vsel %vm238, %v3923, %v3927
      %v3929 = vshrl.u32 %v3742, 16
      %v3931 = vrot.slane %v3929, 4
      %v3932 = vor.u32 %v3931, %v3927
      %v3933 = vrot.slane %v3932, 4
      %v3935 = vshll.u32 %v3743, 16
      %v3937 = vrot.slane %v3935, 5
      %v3938 = vsel %vm238, %v3933, %v3937
      %v3940 = vshrl.u32 %v3744, 16
      %v3942 = vrot.slane %v3940, 4
      %v3943 = vshll.u32 %v3744, 16
      %v3945 = vrot.slane %v3943, 5
      %v3946 = vor.u32 %v3942, %v3945
      %v3947 = vrot.slane %v3946, 4
      %v3949 = vshll.u32 %v3745, 16
      %v3951 = vrot.slane %v3949, 5
      %v3952 = vsel %vm238, %v3947, %v3951
      %v3953 = vshrl.u32 %v3745, 16
      %v3955 = vrot.slane %v3953, 4
      %v3956 = vor.u32 %v3955, %v3951
      %v3957 = vrot.slane %v3956, 4
      %v3959 = vshll.u32 %v3746, 16
      %v3961 = vrot.slane %v3959, 5
      %v3962 = vsel %vm238, %v3957, %v3961
      %v3964 = vshrl.u32 %v3747, 16
      %v3966 = vrot.slane %v3964, 4
      %v3967 = vshll.u32 %v3747, 16
      %v3969 = vrot.slane %v3967, 5
      %v3970 = vor.u32 %v3966, %v3969
      %v3971 = vrot.slane %v3970, 4
      %v3973 = vshll.u32 %v3748, 16
      %v3975 = vrot.slane %v3973, 5
      %v3976 = vsel %vm238, %v3971, %v3975
      %v3977 = vshrl.u32 %v3748, 16
      %v3979 = vrot.slane %v3977, 4
      %v3980 = vor.u32 %v3979, %v3975
      %v3981 = vrot.slane %v3980, 4
      %v3983 = vshll.u32 %v3749, 16
      %v3985 = vrot.slane %v3983, 5
      %v3986 = vsel %vm238, %v3981, %v3985
      %v3988 = vshrl.u32 %v3750, 16
      %v3990 = vrot.slane %v3988, 4
      %v3991 = vshll.u32 %v3750, 16
      %v3993 = vrot.slane %v3991, 5
      %v3994 = vor.u32 %v3990, %v3993
      %v3995 = vrot.slane %v3994, 4
      %v3997 = vshll.u32 %v3751, 16
      %v3999 = vrot.slane %v3997, 5
      %v4000 = vsel %vm238, %v3995, %v3999
      %v4001 = vshrl.u32 %v3751, 16
      %v4003 = vrot.slane %v4001, 4
      %v4004 = vor.u32 %v4003, %v3999
      %v4005 = vrot.slane %v4004, 4
      %v4007 = vshll.u32 %v3752, 16
      %v4009 = vrot.slane %v4007, 5
      %v4010 = vsel %vm238, %v4005, %v4009
      %v4012 = vshrl.u32 %v3753, 16
      %v4014 = vrot.slane %v4012, 4
      %v4015 = vshll.u32 %v3753, 16
      %v4017 = vrot.slane %v4015, 5
      %v4018 = vor.u32 %v4014, %v4017
      %v4019 = vrot.slane %v4018, 4
      %v4021 = vshll.u32 %v3754, 16
      %v4023 = vrot.slane %v4021, 5
      %v4024 = vsel %vm238, %v4019, %v4023
      %v4025 = vshrl.u32 %v3754, 16
      %v4027 = vrot.slane %v4025, 4
      %v4028 = vor.u32 %v4027, %v4023
      %v4029 = vrot.slane %v4028, 4
      %v4031 = vshll.u32 %v3755, 16
      %v4033 = vrot.slane %v4031, 5
      %v4034 = vsel %vm238, %v4029, %v4033
      %v4036 = vshrl.u32 %v3756, 16
      %v4038 = vrot.slane %v4036, 4
      %v4039 = vshll.u32 %v3756, 16
      %v4041 = vrot.slane %v4039, 5
      %v4042 = vor.u32 %v4038, %v4041
      %v4043 = vrot.slane %v4042, 4
      %v4045 = vshll.u32 %v3757, 16
      %v4047 = vrot.slane %v4045, 5
      %v4048 = vsel %vm238, %v4043, %v4047
      %v4049 = vshrl.u32 %v3757, 16
      %v4051 = vrot.slane %v4049, 4
      %v4052 = vor.u32 %v4051, %v4047
      %v4053 = vrot.slane %v4052, 4
      %v4055 = vshll.u32 %v3758, 16
      %v4057 = vrot.slane %v4055, 5
      %v4058 = vsel %vm238, %v4053, %v4057
      %v4060 = vshrl.u32 %v3759, 16
      %v4062 = vrot.slane %v4060, 4
      %v4063 = vshll.u32 %v3759, 16
      %v4065 = vrot.slane %v4063, 5
      %v4066 = vor.u32 %v4062, %v4065
      %v4067 = vrot.slane %v4066, 4
      %v4069 = vshll.u32 %v3760, 16
      %v4071 = vrot.slane %v4069, 5
      %v4072 = vsel %vm238, %v4067, %v4071
      %v4073 = vshrl.u32 %v3760, 16
      %v4075 = vrot.slane %v4073, 4
      %v4076 = vor.u32 %v4075, %v4071
      %v4077 = vrot.slane %v4076, 4
      %v4079 = vshll.u32 %v3761, 16
      %v4081 = vrot.slane %v4079, 5
      %v4082 = vsel %vm238, %v4077, %v4081
      %v4084 = vshrl.u32 %v3762, 16
      %v4086 = vrot.slane %v4084, 4
      %v4087 = vshll.u32 %v3762, 16
      %v4089 = vrot.slane %v4087, 5
      %v4090 = vor.u32 %v4086, %v4089
      %v4091 = vrot.slane %v4090, 4
      %v4093 = vshll.u32 %v3763, 16
      %v4095 = vrot.slane %v4093, 5
      %v4096 = vsel %vm238, %v4091, %v4095
      %v4097 = vshrl.u32 %v3763, 16
      %v4099 = vrot.slane %v4097, 4
      %v4100 = vor.u32 %v4099, %v4095
      %v4101 = vrot.slane %v4100, 4
      %v4103 = vshll.u32 %v3764, 16
      %v4105 = vrot.slane %v4103, 5
      %v4106 = vsel %vm238, %v4101, %v4105
      %v4108 = vshrl.u32 %v3765, 16
      %v4110 = vrot.slane %v4108, 4
      %v4111 = vshll.u32 %v3765, 16
      %v4113 = vrot.slane %v4111, 5
      %v4114 = vor.u32 %v4110, %v4113
      %v4115 = vrot.slane %v4114, 4
      %v4117 = vshll.u32 %v3766, 16
      %v4119 = vrot.slane %v4117, 5
      %v4120 = vsel %vm238, %v4115, %v4119
      %v4121 = vshrl.u32 %v3766, 16
      %v4123 = vrot.slane %v4121, 4
      %v4124 = vor.u32 %v4123, %v4119
      %v4125 = vrot.slane %v4124, 4
      %v4127 = vshll.u32 %v3767, 16
      %v4129 = vrot.slane %v4127, 5
      %v4130 = vsel %vm238, %v4125, %v4129
      %v4132 = vshrl.u32 %v3768, 16
      %v4134 = vrot.slane %v4132, 4
      %v4135 = vshll.u32 %v3768, 16
      %v4137 = vrot.slane %v4135, 5
      %v4138 = vor.u32 %v4134, %v4137
      %v4139 = vrot.slane %v4138, 4
      %v4141 = vshll.u32 %v3769, 16
      %v4143 = vrot.slane %v4141, 5
      %v4144 = vsel %vm238, %v4139, %v4143
      %v4145 = vshrl.u32 %v3769, 16
      %v4147 = vrot.slane %v4145, 4
      %v4148 = vor.u32 %v4147, %v4143
      %v4149 = vrot.slane %v4148, 4
      %v4151 = vshll.u32 %v3770, 16
      %v4153 = vrot.slane %v4151, 5
      %v4154 = vsel %vm238, %v4149, %v4153
      %v4155 = vld [vmem:[%s1 + $0x1c0] sm:$0xf]
      %v4156 = vld [vmem:[%s1 + $0x1c4] sm:$0xf]
      %v4157 = vld [vmem:[%s1 + $0x1c8] sm:$0xf]
      %v4158 = vld [vmem:[%s1 + $0x1cc] sm:$0xf]
      %v4159 = vld [vmem:[%s1 + $0x1d0] sm:$0xf]
      %v4160 = vld [vmem:[%s1 + $0x1d4] sm:$0xf]
      %v4161 = vld [vmem:[%s1 + $0x1d8] sm:$0xf]
      %v4162 = vld [vmem:[%s1 + $0x1dc] sm:$0xf]
      %v4163 = vld [vmem:[%s1 + $0x1e0] sm:$0xf]
      %v4164 = vld [vmem:[%s1 + $0x1e4] sm:$0xf]
      %v4165 = vld [vmem:[%s1 + $0x1e8] sm:$0xf]
      %v4166 = vld [vmem:[%s1 + $0x1ec] sm:$0xf]
      %v4167 = vld [vmem:[%s1 + $0x1f0] sm:$0xf]
      %v4168 = vld [vmem:[%s1 + $0x1f4] sm:$0xf]
      %v4169 = vld [vmem:[%s1 + $0x1f8] sm:$0xf]
      %v4170 = vld [vmem:[%s1 + $0x1fc] sm:$0xf]
      %v4171 = vunpack.c.l.b16 %v3784
      %v4172 = vunpack.c.l.b16 %v3794
      %v4173 = vunpack.c.l.b16 %v3808
      %v4174 = vunpack.c.l.b16 %v3818
      %v4175 = vunpack.c.l.b16 %v3832
      %v4176 = vunpack.c.l.b16 %v3842
      %v4177 = vunpack.c.l.b16 %v3856
      %v4178 = vunpack.c.l.b16 %v3866
      %v4179 = vunpack.c.l.b16 %v3880
      %v4180 = vunpack.c.l.b16 %v3890
      %v4181 = vunpack.c.l.b16 %v3904
      %v4182 = vunpack.c.l.b16 %v3914
      %v4183 = vunpack.c.l.b16 %v3928
      %v4184 = vunpack.c.l.b16 %v3938
      %v4185 = vunpack.c.l.b16 %v3952
      %v4186 = vunpack.c.l.b16 %v3962
      %v4187 = vunpack.c.l.b16 %v3976
      %v4188 = vunpack.c.l.b16 %v3986
      %v4189 = vunpack.c.l.b16 %v4000
      %v4190 = vunpack.c.l.b16 %v4010
      %v4191 = vunpack.c.l.b16 %v4024
      %v4192 = vunpack.c.l.b16 %v4034
      %v4193 = vunpack.c.l.b16 %v4048
      %v4194 = vunpack.c.l.b16 %v4058
      %v4195 = vunpack.c.l.b16 %v4072
      %v4196 = vunpack.c.l.b16 %v4082
      %v4197 = vunpack.c.l.b16 %v4096
      %v4198 = vunpack.c.l.b16 %v4106
      %v4199 = vunpack.c.l.b16 %v4120
      %v4200 = vunpack.c.l.b16 %v4130
      %v4201 = vunpack.c.l.b16 %v4144
      %v4202 = vunpack.c.l.b16 %v4154
      %v4203 = vpack.c.b16 %v4172, %v4171
      %v4204 = vpack.c.b16 %v4174, %v4173
      %v4205 = vpack.c.b16 %v4176, %v4175
      %v4206 = vpack.c.b16 %v4178, %v4177
      %v4207 = vpack.c.b16 %v4180, %v4179
      %v4208 = vpack.c.b16 %v4182, %v4181
      %v4209 = vpack.c.b16 %v4184, %v4183
      %v4210 = vpack.c.b16 %v4186, %v4185
      %v4211 = vpack.c.b16 %v4188, %v4187
      %v4212 = vpack.c.b16 %v4190, %v4189
      %v4213 = vpack.c.b16 %v4192, %v4191
      %v4214 = vpack.c.b16 %v4194, %v4193
      %v4215 = vpack.c.b16 %v4196, %v4195
      %v4216 = vpack.c.b16 %v4198, %v4197
      %v4217 = vpack.c.b16 %v4200, %v4199
      %v4218 = vpack.c.b16 %v4202, %v4201
      %v4251 = vunpack.c.l.b16 %v4155
      %v4252 = vunpack.c.l.b16 %v4156
      %v4253 = vunpack.c.l.b16 %v4157
      %v4254 = vunpack.c.l.b16 %v4158
      %v4255 = vunpack.c.l.b16 %v4159
      %v4256 = vunpack.c.l.b16 %v4160
      %v4257 = vunpack.c.l.b16 %v4161
      %v4258 = vunpack.c.l.b16 %v4162
      %v4259 = vunpack.c.l.b16 %v4163
      %v4260 = vunpack.c.l.b16 %v4164
      %v4261 = vunpack.c.l.b16 %v4165
      %v4262 = vunpack.c.l.b16 %v4166
      %v4263 = vunpack.c.l.b16 %v4167
      %v4264 = vunpack.c.l.b16 %v4168
      %v4265 = vunpack.c.l.b16 %v4169
      %v4266 = vunpack.c.l.b16 %v4170
      %v4267 = vpack.c.b16 %v4252, %v4251
      %v4268 = vpack.c.b16 %v4254, %v4253
      %v4269 = vpack.c.b16 %v4256, %v4255
      %v4270 = vpack.c.b16 %v4258, %v4257
      %v4271 = vpack.c.b16 %v4260, %v4259
      %v4272 = vpack.c.b16 %v4262, %v4261
      %v4273 = vpack.c.b16 %v4264, %v4263
      %v4274 = vpack.c.b16 %v4266, %v4265
      %4283 = vmatprep.subr.bf16.mxu0 0
      %4284 = vmatpush1.bf16.msra.mxu0 %v4267
      %4285 = vmatprep.subr.bf16.mxu0 0
      %4286 = vmatpush1.bf16.msra.mxu0 %v4268
      %4287 = vmatprep.subr.bf16.mxu0 0
      %4288 = vmatpush1.bf16.msra.mxu0 %v4269
      %4289 = vmatprep.subr.bf16.mxu0 0
      %4290 = vmatpush1.bf16.msra.mxu0 %v4270
      %4291 = vmatprep.subr.bf16.mxu0 0
      %4292 = vmatpush1.bf16.msra.mxu0 %v4271
      %4293 = vmatprep.subr.bf16.mxu0 0
      %4294 = vmatpush1.bf16.msra.mxu0 %v4272
      %4295 = vmatprep.subr.bf16.mxu0 0
      %4296 = vmatpush1.bf16.msra.mxu0 %v4273
      %4297 = vmatprep.subr.bf16.mxu0 0
      %4298 = vmatpush1.bf16.msra.mxu0 %v4274
      %4299 = vmatprep.subr.bf16.mxu0 0
      %4300 = vmatpush1.bf16.msra.mxu0 0
      %4301 = vmatprep.subr.bf16.mxu0 0
      %4302 = vmatpush1.bf16.msra.mxu0 0
      %4303 = vmatprep.subr.bf16.mxu0 0
      %4304 = vmatpush1.bf16.msra.mxu0 0
      %4305 = vmatprep.subr.bf16.mxu0 0
      %4306 = vmatpush1.bf16.msra.mxu0 0
      %4307 = vmatprep.subr.bf16.mxu0 0
      %4308 = vmatpush1.bf16.msra.mxu0 0
      %4309 = vmatprep.subr.bf16.mxu0 0
      %4310 = vmatpush1.bf16.msra.mxu0 0
      %4311 = vmatprep.subr.bf16.mxu0 0
      %4312 = vmatpush1.bf16.msra.mxu0 0
      %4313 = vmatprep.subr.bf16.mxu0 0
      %4314 = vmatpush1.bf16.msra.mxu0 0
      %4315 = vmatprep.mubr.bf16.mxu0 0
      %4316 = vmatmul.mubr.bf16.gmra.mrb[0].mxu0 %v4203
      %v4317 = vpop.f32.mrb[0].mxu0
      %v4318 = vadd.f32 0.0, %v4317
      %v4319 = vpop.f32.mrb[0].mxu0
      %v4320 = vpop.f32.mrb[0].mxu0
      %v4321 = vadd.f32 0.0, %v4320
      %v4322 = vpop.f32.mrb[0].mxu0
      %4323 = vmatprep.mubr.bf16.mxu0 0
      %4324 = vmatmul.mubr.bf16.gmra.mrb[0].mxu0 %v4204
      %v4325 = vpop.f32.mrb[0].mxu0
      %v4326 = vadd.f32 0.0, %v4325
      %v4327 = vpop.f32.mrb[0].mxu0
      %v4328 = vpop.f32.mrb[0].mxu0
      %v4329 = vadd.f32 0.0, %v4328
      %v4330 = vpop.f32.mrb[0].mxu0
      %4331 = vmatprep.mubr.bf16.mxu0 0
      %4332 = vmatmul.mubr.bf16.gmra.mrb[0].mxu0 %v4205
      %v4333 = vpop.f32.mrb[0].mxu0
      %v4334 = vadd.f32 0.0, %v4333
      %v4335 = vpop.f32.mrb[0].mxu0
      %v4336 = vpop.f32.mrb[0].mxu0
      %v4337 = vadd.f32 0.0, %v4336
      %v4338 = vpop.f32.mrb[0].mxu0
      %4339 = vmatprep.mubr.bf16.mxu0 0
      %4340 = vmatmul.mubr.bf16.gmra.mrb[0].mxu0 %v4206
      %v4341 = vpop.f32.mrb[0].mxu0
      %v4342 = vadd.f32 0.0, %v4341
      %v4343 = vpop.f32.mrb[0].mxu0
      %v4344 = vpop.f32.mrb[0].mxu0
      %v4345 = vadd.f32 0.0, %v4344
      %v4346 = vpop.f32.mrb[0].mxu0
      %4347 = vmatprep.mubr.bf16.mxu0 0
      %4348 = vmatmul.mubr.bf16.gmra.mrb[0].mxu0 %v4207
      %v4349 = vpop.f32.mrb[0].mxu0
      %v4350 = vadd.f32 0.0, %v4349
      %v4351 = vpop.f32.mrb[0].mxu0
      %v4352 = vpop.f32.mrb[0].mxu0
      %v4353 = vadd.f32 0.0, %v4352
      %v4354 = vpop.f32.mrb[0].mxu0
      %4355 = vmatprep.mubr.bf16.mxu0 0
      %4356 = vmatmul.mubr.bf16.gmra.mrb[0].mxu0 %v4208
      %v4357 = vpop.f32.mrb[0].mxu0
      %v4358 = vadd.f32 0.0, %v4357
      %v4359 = vpop.f32.mrb[0].mxu0
      %v4360 = vpop.f32.mrb[0].mxu0
      %v4361 = vadd.f32 0.0, %v4360
      %v4362 = vpop.f32.mrb[0].mxu0
      %4363 = vmatprep.mubr.bf16.mxu0 0
      %4364 = vmatmul.mubr.bf16.gmra.mrb[0].mxu0 %v4209
      %v4365 = vpop.f32.mrb[0].mxu0
      %v4366 = vadd.f32 0.0, %v4365
      %v4367 = vpop.f32.mrb[0].mxu0
      %v4368 = vpop.f32.mrb[0].mxu0
      %v4369 = vadd.f32 0.0, %v4368
      %v4370 = vpop.f32.mrb[0].mxu0
      %4371 = vmatprep.mubr.bf16.mxu0 0
      %4372 = vmatmul.mubr.bf16.gmra.mrb[0].mxu0 %v4210
      %v4373 = vpop.f32.mrb[0].mxu0
      %v4374 = vadd.f32 0.0, %v4373
      %v4375 = vpop.f32.mrb[0].mxu0
      %v4376 = vpop.f32.mrb[0].mxu0
      %v4377 = vadd.f32 0.0, %v4376
      %v4378 = vpop.f32.mrb[0].mxu0
      %4379 = vmatprep.mubr.bf16.mxu0 0
      %4380 = vmatmul.mubr.bf16.gmra.mrb[0].mxu0 %v4211
      %v4381 = vpop.f32.mrb[0].mxu0
      %v4382 = vadd.f32 0.0, %v4381
      %v4383 = vpop.f32.mrb[0].mxu0
      %v4384 = vpop.f32.mrb[0].mxu0
      %v4385 = vadd.f32 0.0, %v4384
      %v4386 = vpop.f32.mrb[0].mxu0
      %4387 = vmatprep.mubr.bf16.mxu0 0
      %4388 = vmatmul.mubr.bf16.gmra.mrb[0].mxu0 %v4212
      %v4389 = vpop.f32.mrb[0].mxu0
      %v4390 = vadd.f32 0.0, %v4389
      %v4391 = vpop.f32.mrb[0].mxu0
      %v4392 = vpop.f32.mrb[0].mxu0
      %v4393 = vadd.f32 0.0, %v4392
      %v4394 = vpop.f32.mrb[0].mxu0
      %4395 = vmatprep.mubr.bf16.mxu0 0
      %4396 = vmatmul.mubr.bf16.gmra.mrb[0].mxu0 %v4213
      %v4397 = vpop.f32.mrb[0].mxu0
      %v4398 = vadd.f32 0.0, %v4397
      %v4399 = vpop.f32.mrb[0].mxu0
      %v4400 = vpop.f32.mrb[0].mxu0
      %v4401 = vadd.f32 0.0, %v4400
      %v4402 = vpop.f32.mrb[0].mxu0
      %4403 = vmatprep.mubr.bf16.mxu0 0
      %4404 = vmatmul.mubr.bf16.gmra.mrb[0].mxu0 %v4214
      %v4405 = vpop.f32.mrb[0].mxu0
      %v4406 = vadd.f32 0.0, %v4405
      %v4407 = vpop.f32.mrb[0].mxu0
      %v4408 = vpop.f32.mrb[0].mxu0
      %v4409 = vadd.f32 0.0, %v4408
      %v4410 = vpop.f32.mrb[0].mxu0
      %4411 = vmatprep.mubr.bf16.mxu0 0
      %4412 = vmatmul.mubr.bf16.gmra.mrb[0].mxu0 %v4215
      %v4413 = vpop.f32.mrb[0].mxu0
      %v4414 = vadd.f32 0.0, %v4413
      %v4415 = vpop.f32.mrb[0].mxu0
      %v4416 = vpop.f32.mrb[0].mxu0
      %v4417 = vadd.f32 0.0, %v4416
      %v4418 = vpop.f32.mrb[0].mxu0
      %4419 = vmatprep.mubr.bf16.mxu0 0
      %4420 = vmatmul.mubr.bf16.gmra.mrb[0].mxu0 %v4216
      %v4421 = vpop.f32.mrb[0].mxu0
      %v4422 = vadd.f32 0.0, %v4421
      %v4423 = vpop.f32.mrb[0].mxu0
      %v4424 = vpop.f32.mrb[0].mxu0
      %v4425 = vadd.f32 0.0, %v4424
      %v4426 = vpop.f32.mrb[0].mxu0
      %4427 = vmatprep.mubr.bf16.mxu0 0
      %4428 = vmatmul.mubr.bf16.gmra.mrb[0].mxu0 %v4217
      %v4429 = vpop.f32.mrb[0].mxu0
      %v4430 = vadd.f32 0.0, %v4429
      %v4431 = vpop.f32.mrb[0].mxu0
      %v4432 = vpop.f32.mrb[0].mxu0
      %v4433 = vadd.f32 0.0, %v4432
      %v4434 = vpop.f32.mrb[0].mxu0
      %4435 = vmatprep.mubr.bf16.mxu0 0
      %4436 = vmatmul.mubr.bf16.gmra.mrb[0].mxu0 %v4218
      %v4437 = vpop.f32.mrb[0].mxu0
      %v4438 = vadd.f32 0.0, %v4437
      %v4439 = vpop.f32.mrb[0].mxu0
      %v4440 = vpop.f32.mrb[0].mxu0
      %v4441 = vadd.f32 0.0, %v4440
      %v4442 = vpop.f32.mrb[0].mxu0
      %4443 = vdwg.mxu0
      %v4444 = vadd.f32 %v3691, %v4318
      %v4445 = vadd.f32 %v3692, %v4321
      %v4446 = vadd.f32 %v3693, %v4326
      %v4447 = vadd.f32 %v3694, %v4329
      %v4448 = vadd.f32 %v3695, %v4334
      %v4449 = vadd.f32 %v3696, %v4337
      %v4450 = vadd.f32 %v3697, %v4342
      %v4451 = vadd.f32 %v3698, %v4345
      %v4452 = vadd.f32 %v3699, %v4350
      %v4453 = vadd.f32 %v3700, %v4353
      %v4454 = vadd.f32 %v3701, %v4358
      %v4455 = vadd.f32 %v3702, %v4361
      %v4456 = vadd.f32 %v3703, %v4366
      %v4457 = vadd.f32 %v3704, %v4369
      %v4458 = vadd.f32 %v3705, %v4374
      %v4459 = vadd.f32 %v3706, %v4377
      %v4460 = vadd.f32 %v3707, %v4382
      %v4461 = vadd.f32 %v3708, %v4385
      %v4462 = vadd.f32 %v3709, %v4390
      %v4463 = vadd.f32 %v3710, %v4393
      %v4464 = vadd.f32 %v3711, %v4398
      %v4465 = vadd.f32 %v3712, %v4401
      %v4466 = vadd.f32 %v3713, %v4406
      %v4467 = vadd.f32 %v3714, %v4409
      %v4468 = vadd.f32 %v3715, %v4414
      %v4469 = vadd.f32 %v3716, %v4417
      %v4470 = vadd.f32 %v3717, %v4422
      %v4471 = vadd.f32 %v3718, %v4425
      %v4472 = vadd.f32 %v3719, %v4430
      %v4473 = vadd.f32 %v3720, %v4433
      %v4474 = vadd.f32 %v3721, %v4438
      %v4475 = vadd.f32 %v3722, %v4441
      %v4476 = vld [vmem:[%s3337] sm:$0xe]
      %v4477 = vld [vmem:[%s3337 + $0xc] sm:$0xe]
      %v4478 = vld [vmem:[%s3337 + $0x18] sm:$0xe]
      %v4479 = vld [vmem:[%s3337 + $0x24] sm:$0xe]
      %v4480 = vld [vmem:[%s3337 + $0x30] sm:$0xe]
      %v4481 = vld [vmem:[%s3337 + $0x3c] sm:$0xe]
      %v4482 = vld [vmem:[%s3337 + $0x48] sm:$0xe]
      %v4483 = vld [vmem:[%s3337 + $0x54] sm:$0xe]
      %v4484 = vld [vmem:[%s3337 + $0x60] sm:$0xe]
      %v4485 = vld [vmem:[%s3337 + $0x6c] sm:$0xe]
      %v4486 = vld [vmem:[%s3337 + $0x78] sm:$0xe]
      %v4487 = vld [vmem:[%s3337 + $0x84] sm:$0xe]
      %v4488 = vld [vmem:[%s3337 + $0x90] sm:$0xe]
      %v4489 = vld [vmem:[%s3337 + $0x9c] sm:$0xe]
      %v4490 = vld [vmem:[%s3337 + $0xa8] sm:$0xe]
      %v4491 = vld [vmem:[%s3337 + $0xb4] sm:$0xe]
      %v4540 = vrot.slane %v4476, 5
      %v4541 = vrot.slane %v4540, 4
      %v4542 = vrot.slane %v3724, 5
      %v4543 = vsel %vm1267, %v4541, %v4542
      %v4544 = vrot.slane %v4542, 4
      %v4545 = vrot.slane %v3725, 5
      %v4546 = vsel %vm1267, %v4544, %v4545
      %v4547 = vrot.slane %v4477, 5
      %v4548 = vrot.slane %v4547, 4
      %v4549 = vrot.slane %v3727, 5
      %v4550 = vsel %vm1267, %v4548, %v4549
      %v4551 = vrot.slane %v4549, 4
      %v4552 = vrot.slane %v3728, 5
      %v4553 = vsel %vm1267, %v4551, %v4552
      %v4554 = vrot.slane %v4478, 5
      %v4555 = vrot.slane %v4554, 4
      %v4556 = vrot.slane %v3730, 5
      %v4557 = vsel %vm1267, %v4555, %v4556
      %v4558 = vrot.slane %v4556, 4
      %v4559 = vrot.slane %v3731, 5
      %v4560 = vsel %vm1267, %v4558, %v4559
      %v4561 = vrot.slane %v4479, 5
      %v4562 = vrot.slane %v4561, 4
      %v4563 = vrot.slane %v3733, 5
      %v4564 = vsel %vm1267, %v4562, %v4563
      %v4565 = vrot.slane %v4563, 4
      %v4566 = vrot.slane %v3734, 5
      %v4567 = vsel %vm1267, %v4565, %v4566
      %v4568 = vrot.slane %v4480, 5
      %v4569 = vrot.slane %v4568, 4
      %v4570 = vrot.slane %v3736, 5
      %v4571 = vsel %vm1267, %v4569, %v4570
      %v4572 = vrot.slane %v4570, 4
      %v4573 = vrot.slane %v3737, 5
      %v4574 = vsel %vm1267, %v4572, %v4573
      %v4575 = vrot.slane %v4481, 5
      %v4576 = vrot.slane %v4575, 4
      %v4577 = vrot.slane %v3739, 5
      %v4578 = vsel %vm1267, %v4576, %v4577
      %v4579 = vrot.slane %v4577, 4
      %v4580 = vrot.slane %v3740, 5
      %v4581 = vsel %vm1267, %v4579, %v4580
      %v4582 = vrot.slane %v4482, 5
      %v4583 = vrot.slane %v4582, 4
      %v4584 = vrot.slane %v3742, 5
      %v4585 = vsel %vm1267, %v4583, %v4584
      %v4586 = vrot.slane %v4584, 4
      %v4587 = vrot.slane %v3743, 5
      %v4588 = vsel %vm1267, %v4586, %v4587
      %v4589 = vrot.slane %v4483, 5
      %v4590 = vrot.slane %v4589, 4
      %v4591 = vrot.slane %v3745, 5
      %v4592 = vsel %vm1267, %v4590, %v4591
      %v4593 = vrot.slane %v4591, 4
      %v4594 = vrot.slane %v3746, 5
      %v4595 = vsel %vm1267, %v4593, %v4594
      %v4596 = vrot.slane %v4484, 5
      %v4597 = vrot.slane %v4596, 4
      %v4598 = vrot.slane %v3748, 5
      %v4599 = vsel %vm1267, %v4597, %v4598
      %v4600 = vrot.slane %v4598, 4
      %v4601 = vrot.slane %v3749, 5
      %v4602 = vsel %vm1267, %v4600, %v4601
      %v4603 = vrot.slane %v4485, 5
      %v4604 = vrot.slane %v4603, 4
      %v4605 = vrot.slane %v3751, 5
      %v4606 = vsel %vm1267, %v4604, %v4605
      %v4607 = vrot.slane %v4605, 4
      %v4608 = vrot.slane %v3752, 5
      %v4609 = vsel %vm1267, %v4607, %v4608
      %v4610 = vrot.slane %v4486, 5
      %v4611 = vrot.slane %v4610, 4
      %v4612 = vrot.slane %v3754, 5
      %v4613 = vsel %vm1267, %v4611, %v4612
      %v4614 = vrot.slane %v4612, 4
      %v4615 = vrot.slane %v3755, 5
      %v4616 = vsel %vm1267, %v4614, %v4615
      %v4617 = vrot.slane %v4487, 5
      %v4618 = vrot.slane %v4617, 4
      %v4619 = vrot.slane %v3757, 5
      %v4620 = vsel %vm1267, %v4618, %v4619
      %v4621 = vrot.slane %v4619, 4
      %v4622 = vrot.slane %v3758, 5
      %v4623 = vsel %vm1267, %v4621, %v4622
      %v4624 = vrot.slane %v4488, 5
      %v4625 = vrot.slane %v4624, 4
      %v4626 = vrot.slane %v3760, 5
      %v4627 = vsel %vm1267, %v4625, %v4626
      %v4628 = vrot.slane %v4626, 4
      %v4629 = vrot.slane %v3761, 5
      %v4630 = vsel %vm1267, %v4628, %v4629
      %v4631 = vrot.slane %v4489, 5
      %v4632 = vrot.slane %v4631, 4
      %v4633 = vrot.slane %v3763, 5
      %v4634 = vsel %vm1267, %v4632, %v4633
      %v4635 = vrot.slane %v4633, 4
      %v4636 = vrot.slane %v3764, 5
      %v4637 = vsel %vm1267, %v4635, %v4636
      %v4638 = vrot.slane %v4490, 5
      %v4639 = vrot.slane %v4638, 4
      %v4640 = vrot.slane %v3766, 5
      %v4641 = vsel %vm1267, %v4639, %v4640
      %v4642 = vrot.slane %v4640, 4
      %v4643 = vrot.slane %v3767, 5
      %v4644 = vsel %vm1267, %v4642, %v4643
      %v4645 = vrot.slane %v4491, 5
      %v4646 = vrot.slane %v4645, 4
      %v4647 = vrot.slane %v3769, 5
      %v4648 = vsel %vm1267, %v4646, %v4647
      %v4649 = vrot.slane %v4647, 4
      %v4650 = vrot.slane %v3770, 5
      %v4651 = vsel %vm1267, %v4649, %v4650
      %v4652 = vld [vmem:[%s1 + $0x200] sm:$0xf]
      %v4653 = vld [vmem:[%s1 + $0x204] sm:$0xf]
      %v4654 = vld [vmem:[%s1 + $0x208] sm:$0xf]
      %v4655 = vld [vmem:[%s1 + $0x20c] sm:$0xf]
      %v4656 = vld [vmem:[%s1 + $0x210] sm:$0xf]
      %v4657 = vld [vmem:[%s1 + $0x214] sm:$0xf]
      %v4658 = vld [vmem:[%s1 + $0x218] sm:$0xf]
      %v4659 = vld [vmem:[%s1 + $0x21c] sm:$0xf]
      %v4660 = vld [vmem:[%s1 + $0x220] sm:$0xf]
      %v4661 = vld [vmem:[%s1 + $0x224] sm:$0xf]
      %v4662 = vld [vmem:[%s1 + $0x228] sm:$0xf]
      %v4663 = vld [vmem:[%s1 + $0x22c] sm:$0xf]
      %v4664 = vld [vmem:[%s1 + $0x230] sm:$0xf]
      %v4665 = vld [vmem:[%s1 + $0x234] sm:$0xf]
      %v4666 = vld [vmem:[%s1 + $0x238] sm:$0xf]
      %v4667 = vld [vmem:[%s1 + $0x23c] sm:$0xf]
      %v4668 = vunpack.c.l.b16 %v4543
      %v4669 = vunpack.c.l.b16 %v4546
      %v4670 = vunpack.c.l.b16 %v4550
      %v4671 = vunpack.c.l.b16 %v4553
      %v4672 = vunpack.c.l.b16 %v4557
      %v4673 = vunpack.c.l.b16 %v4560
      %v4674 = vunpack.c.l.b16 %v4564
      %v4675 = vunpack.c.l.b16 %v4567
      %v4676 = vunpack.c.l.b16 %v4571
      %v4677 = vunpack.c.l.b16 %v4574
      %v4678 = vunpack.c.l.b16 %v4578
      %v4679 = vunpack.c.l.b16 %v4581
      %v4680 = vunpack.c.l.b16 %v4585
      %v4681 = vunpack.c.l.b16 %v4588
      %v4682 = vunpack.c.l.b16 %v4592
      %v4683 = vunpack.c.l.b16 %v4595
      %v4684 = vunpack.c.l.b16 %v4599
      %v4685 = vunpack.c.l.b16 %v4602
      %v4686 = vunpack.c.l.b16 %v4606
      %v4687 = vunpack.c.l.b16 %v4609
      %v4688 = vunpack.c.l.b16 %v4613
      %v4689 = vunpack.c.l.b16 %v4616
      %v4690 = vunpack.c.l.b16 %v4620
      %v4691 = vunpack.c.l.b16 %v4623
      %v4692 = vunpack.c.l.b16 %v4627
      %v4693 = vunpack.c.l.b16 %v4630
      %v4694 = vunpack.c.l.b16 %v4634
      %v4695 = vunpack.c.l.b16 %v4637
      %v4696 = vunpack.c.l.b16 %v4641
      %v4697 = vunpack.c.l.b16 %v4644
      %v4698 = vunpack.c.l.b16 %v4648
      %v4699 = vunpack.c.l.b16 %v4651
      %v4700 = vpack.c.b16 %v4669, %v4668
      %v4701 = vpack.c.b16 %v4671, %v4670
      %v4702 = vpack.c.b16 %v4673, %v4672
      %v4703 = vpack.c.b16 %v4675, %v4674
      %v4704 = vpack.c.b16 %v4677, %v4676
      %v4705 = vpack.c.b16 %v4679, %v4678
      %v4706 = vpack.c.b16 %v4681, %v4680
      %v4707 = vpack.c.b16 %v4683, %v4682
      %v4708 = vpack.c.b16 %v4685, %v4684
      %v4709 = vpack.c.b16 %v4687, %v4686
      %v4710 = vpack.c.b16 %v4689, %v4688
      %v4711 = vpack.c.b16 %v4691, %v4690
      %v4712 = vpack.c.b16 %v4693, %v4692
      %v4713 = vpack.c.b16 %v4695, %v4694
      %v4714 = vpack.c.b16 %v4697, %v4696
      %v4715 = vpack.c.b16 %v4699, %v4698
      %v4748 = vunpack.c.l.b16 %v4652
      %v4749 = vunpack.c.l.b16 %v4653
      %v4750 = vunpack.c.l.b16 %v4654
      %v4751 = vunpack.c.l.b16 %v4655
      %v4752 = vunpack.c.l.b16 %v4656
      %v4753 = vunpack.c.l.b16 %v4657
      %v4754 = vunpack.c.l.b16 %v4658
      %v4755 = vunpack.c.l.b16 %v4659
      %v4756 = vunpack.c.l.b16 %v4660
      %v4757 = vunpack.c.l.b16 %v4661
      %v4758 = vunpack.c.l.b16 %v4662
      %v4759 = vunpack.c.l.b16 %v4663
      %v4760 = vunpack.c.l.b16 %v4664
      %v4761 = vunpack.c.l.b16 %v4665
      %v4762 = vunpack.c.l.b16 %v4666
      %v4763 = vunpack.c.l.b16 %v4667
      %v4764 = vpack.c.b16 %v4749, %v4748
      %v4765 = vpack.c.b16 %v4751, %v4750
      %v4766 = vpack.c.b16 %v4753, %v4752
      %v4767 = vpack.c.b16 %v4755, %v4754
      %v4768 = vpack.c.b16 %v4757, %v4756
      %v4769 = vpack.c.b16 %v4759, %v4758
      %v4770 = vpack.c.b16 %v4761, %v4760
      %v4771 = vpack.c.b16 %v4763, %v4762
      %4780 = vmatprep.subr.bf16.mxu0 0
      %4781 = vmatpush1.bf16.msra.mxu0 %v4764
      %4782 = vmatprep.subr.bf16.mxu0 0
      %4783 = vmatpush1.bf16.msra.mxu0 %v4765
      %4784 = vmatprep.subr.bf16.mxu0 0
      %4785 = vmatpush1.bf16.msra.mxu0 %v4766
      %4786 = vmatprep.subr.bf16.mxu0 0
      %4787 = vmatpush1.bf16.msra.mxu0 %v4767
      %4788 = vmatprep.subr.bf16.mxu0 0
      %4789 = vmatpush1.bf16.msra.mxu0 %v4768
      %4790 = vmatprep.subr.bf16.mxu0 0
      %4791 = vmatpush1.bf16.msra.mxu0 %v4769
      %4792 = vmatprep.subr.bf16.mxu0 0
      %4793 = vmatpush1.bf16.msra.mxu0 %v4770
      %4794 = vmatprep.subr.bf16.mxu0 0
      %4795 = vmatpush1.bf16.msra.mxu0 %v4771
      %4796 = vmatprep.subr.bf16.mxu0 0
      %4797 = vmatpush1.bf16.msra.mxu0 0
      %4798 = vmatprep.subr.bf16.mxu0 0
      %4799 = vmatpush1.bf16.msra.mxu0 0
      %4800 = vmatprep.subr.bf16.mxu0 0
      %4801 = vmatpush1.bf16.msra.mxu0 0
      %4802 = vmatprep.subr.bf16.mxu0 0
      %4803 = vmatpush1.bf16.msra.mxu0 0
      %4804 = vmatprep.subr.bf16.mxu0 0
      %4805 = vmatpush1.bf16.msra.mxu0 0
      %4806 = vmatprep.subr.bf16.mxu0 0
      %4807 = vmatpush1.bf16.msra.mxu0 0
      %4808 = vmatprep.subr.bf16.mxu0 0
      %4809 = vmatpush1.bf16.msra.mxu0 0
      %4810 = vmatprep.subr.bf16.mxu0 0
      %4811 = vmatpush1.bf16.msra.mxu0 0
      %4812 = vmatprep.mubr.bf16.mxu0 0
      %4813 = vmatmul.mubr.bf16.gmra.mrb[0].mxu0 %v4700
      %v4814 = vpop.f32.mrb[0].mxu0
      %v4815 = vadd.f32 0.0, %v4814
      %v4816 = vpop.f32.mrb[0].mxu0
      %v4817 = vpop.f32.mrb[0].mxu0
      %v4818 = vadd.f32 0.0, %v4817
      %v4819 = vpop.f32.mrb[0].mxu0
      %4820 = vmatprep.mubr.bf16.mxu0 0
      %4821 = vmatmul.mubr.bf16.gmra.mrb[0].mxu0 %v4701
      %v4822 = vpop.f32.mrb[0].mxu0
      %v4823 = vadd.f32 0.0, %v4822
      %v4824 = vpop.f32.mrb[0].mxu0
      %v4825 = vpop.f32.mrb[0].mxu0
      %v4826 = vadd.f32 0.0, %v4825
      %v4827 = vpop.f32.mrb[0].mxu0
      %4828 = vmatprep.mubr.bf16.mxu0 0
      %4829 = vmatmul.mubr.bf16.gmra.mrb[0].mxu0 %v4702
      %v4830 = vpop.f32.mrb[0].mxu0
      %v4831 = vadd.f32 0.0, %v4830
      %v4832 = vpop.f32.mrb[0].mxu0
      %v4833 = vpop.f32.mrb[0].mxu0
      %v4834 = vadd.f32 0.0, %v4833
      %v4835 = vpop.f32.mrb[0].mxu0
      %4836 = vmatprep.mubr.bf16.mxu0 0
      %4837 = vmatmul.mubr.bf16.gmra.mrb[0].mxu0 %v4703
      %v4838 = vpop.f32.mrb[0].mxu0
      %v4839 = vadd.f32 0.0, %v4838
      %v4840 = vpop.f32.mrb[0].mxu0
      %v4841 = vpop.f32.mrb[0].mxu0
      %v4842 = vadd.f32 0.0, %v4841
      %v4843 = vpop.f32.mrb[0].mxu0
      %4844 = vmatprep.mubr.bf16.mxu0 0
      %4845 = vmatmul.mubr.bf16.gmra.mrb[0].mxu0 %v4704
      %v4846 = vpop.f32.mrb[0].mxu0
      %v4847 = vadd.f32 0.0, %v4846
      %v4848 = vpop.f32.mrb[0].mxu0
      %v4849 = vpop.f32.mrb[0].mxu0
      %v4850 = vadd.f32 0.0, %v4849
      %v4851 = vpop.f32.mrb[0].mxu0
      %4852 = vmatprep.mubr.bf16.mxu0 0
      %4853 = vmatmul.mubr.bf16.gmra.mrb[0].mxu0 %v4705
      %v4854 = vpop.f32.mrb[0].mxu0
      %v4855 = vadd.f32 0.0, %v4854
      %v4856 = vpop.f32.mrb[0].mxu0
      %v4857 = vpop.f32.mrb[0].mxu0
      %v4858 = vadd.f32 0.0, %v4857
      %v4859 = vpop.f32.mrb[0].mxu0
      %4860 = vmatprep.mubr.bf16.mxu0 0
      %4861 = vmatmul.mubr.bf16.gmra.mrb[0].mxu0 %v4706
      %v4862 = vpop.f32.mrb[0].mxu0
      %v4863 = vadd.f32 0.0, %v4862
      %v4864 = vpop.f32.mrb[0].mxu0
      %v4865 = vpop.f32.mrb[0].mxu0
      %v4866 = vadd.f32 0.0, %v4865
      %v4867 = vpop.f32.mrb[0].mxu0
      %4868 = vmatprep.mubr.bf16.mxu0 0
      %4869 = vmatmul.mubr.bf16.gmra.mrb[0].mxu0 %v4707
      %v4870 = vpop.f32.mrb[0].mxu0
      %v4871 = vadd.f32 0.0, %v4870
      %v4872 = vpop.f32.mrb[0].mxu0
      %v4873 = vpop.f32.mrb[0].mxu0
      %v4874 = vadd.f32 0.0, %v4873
      %v4875 = vpop.f32.mrb[0].mxu0
      %4876 = vmatprep.mubr.bf16.mxu0 0
      %4877 = vmatmul.mubr.bf16.gmra.mrb[0].mxu0 %v4708
      %v4878 = vpop.f32.mrb[0].mxu0
      %v4879 = vadd.f32 0.0, %v4878
      %v4880 = vpop.f32.mrb[0].mxu0
      %v4881 = vpop.f32.mrb[0].mxu0
      %v4882 = vadd.f32 0.0, %v4881
      %v4883 = vpop.f32.mrb[0].mxu0
      %4884 = vmatprep.mubr.bf16.mxu0 0
      %4885 = vmatmul.mubr.bf16.gmra.mrb[0].mxu0 %v4709
      %v4886 = vpop.f32.mrb[0].mxu0
      %v4887 = vadd.f32 0.0, %v4886
      %v4888 = vpop.f32.mrb[0].mxu0
      %v4889 = vpop.f32.mrb[0].mxu0
      %v4890 = vadd.f32 0.0, %v4889
      %v4891 = vpop.f32.mrb[0].mxu0
      %4892 = vmatprep.mubr.bf16.mxu0 0
      %4893 = vmatmul.mubr.bf16.gmra.mrb[0].mxu0 %v4710
      %v4894 = vpop.f32.mrb[0].mxu0
      %v4895 = vadd.f32 0.0, %v4894
      %v4896 = vpop.f32.mrb[0].mxu0
      %v4897 = vpop.f32.mrb[0].mxu0
      %v4898 = vadd.f32 0.0, %v4897
      %v4899 = vpop.f32.mrb[0].mxu0
      %4900 = vmatprep.mubr.bf16.mxu0 0
      %4901 = vmatmul.mubr.bf16.gmra.mrb[0].mxu0 %v4711
      %v4902 = vpop.f32.mrb[0].mxu0
      %v4903 = vadd.f32 0.0, %v4902
      %v4904 = vpop.f32.mrb[0].mxu0
      %v4905 = vpop.f32.mrb[0].mxu0
      %v4906 = vadd.f32 0.0, %v4905
      %v4907 = vpop.f32.mrb[0].mxu0
      %4908 = vmatprep.mubr.bf16.mxu0 0
      %4909 = vmatmul.mubr.bf16.gmra.mrb[0].mxu0 %v4712
      %v4910 = vpop.f32.mrb[0].mxu0
      %v4911 = vadd.f32 0.0, %v4910
      %v4912 = vpop.f32.mrb[0].mxu0
      %v4913 = vpop.f32.mrb[0].mxu0
      %v4914 = vadd.f32 0.0, %v4913
      %v4915 = vpop.f32.mrb[0].mxu0
      %4916 = vmatprep.mubr.bf16.mxu0 0
      %4917 = vmatmul.mubr.bf16.gmra.mrb[0].mxu0 %v4713
      %v4918 = vpop.f32.mrb[0].mxu0
      %v4919 = vadd.f32 0.0, %v4918
      %v4920 = vpop.f32.mrb[0].mxu0
      %v4921 = vpop.f32.mrb[0].mxu0
      %v4922 = vadd.f32 0.0, %v4921
      %v4923 = vpop.f32.mrb[0].mxu0
      %4924 = vmatprep.mubr.bf16.mxu0 0
      %4925 = vmatmul.mubr.bf16.gmra.mrb[0].mxu0 %v4714
      %v4926 = vpop.f32.mrb[0].mxu0
      %v4927 = vadd.f32 0.0, %v4926
      %v4928 = vpop.f32.mrb[0].mxu0
      %v4929 = vpop.f32.mrb[0].mxu0
      %v4930 = vadd.f32 0.0, %v4929
      %v4931 = vpop.f32.mrb[0].mxu0
      %4932 = vmatprep.mubr.bf16.mxu0 0
      %4933 = vmatmul.mubr.bf16.gmra.mrb[0].mxu0 %v4715
      %v4934 = vpop.f32.mrb[0].mxu0
      %v4935 = vadd.f32 0.0, %v4934
      %v4936 = vpop.f32.mrb[0].mxu0
      %v4937 = vpop.f32.mrb[0].mxu0
      %v4938 = vadd.f32 0.0, %v4937
      %v4939 = vpop.f32.mrb[0].mxu0
      %4940 = vdwg.mxu0
      %v4941 = vadd.f32 %v4444, %v4815
      %v4942 = vadd.f32 %v4445, %v4818
      %v4943 = vadd.f32 %v4446, %v4823
      %v4944 = vadd.f32 %v4447, %v4826
      %v4945 = vadd.f32 %v4448, %v4831
      %v4946 = vadd.f32 %v4449, %v4834
      %v4947 = vadd.f32 %v4450, %v4839
      %v4948 = vadd.f32 %v4451, %v4842
      %v4949 = vadd.f32 %v4452, %v4847
      %v4950 = vadd.f32 %v4453, %v4850
      %v4951 = vadd.f32 %v4454, %v4855
      %v4952 = vadd.f32 %v4455, %v4858
      %v4953 = vadd.f32 %v4456, %v4863
      %v4954 = vadd.f32 %v4457, %v4866
      %v4955 = vadd.f32 %v4458, %v4871
      %v4956 = vadd.f32 %v4459, %v4874
      %v4957 = vadd.f32 %v4460, %v4879
      %v4958 = vadd.f32 %v4461, %v4882
      %v4959 = vadd.f32 %v4462, %v4887
      %v4960 = vadd.f32 %v4463, %v4890
      %v4961 = vadd.f32 %v4464, %v4895
      %v4962 = vadd.f32 %v4465, %v4898
      %v4963 = vadd.f32 %v4466, %v4903
      %v4964 = vadd.f32 %v4467, %v4906
      %v4965 = vadd.f32 %v4468, %v4911
      %v4966 = vadd.f32 %v4469, %v4914
      %v4967 = vadd.f32 %v4470, %v4919
      %v4968 = vadd.f32 %v4471, %v4922
      %v4969 = vadd.f32 %v4472, %v4927
      %v4970 = vadd.f32 %v4473, %v4930
      %v4971 = vadd.f32 %v4474, %v4935
      %v4972 = vadd.f32 %v4475, %v4938
      %v4973 = vadd.f32 %v4941, %v4942
      %v4974 = vadd.f32 %v4973, %v4943
      %v4975 = vadd.f32 %v4974, %v4944
      %v4976 = vadd.f32 %v4975, %v4945
      %v4977 = vadd.f32 %v4976, %v4946
      %v4978 = vadd.f32 %v4977, %v4947
      %v4979 = vadd.f32 %v4978, %v4948
      %v4980 = vadd.f32 %v4979, %v4949
      %v4981 = vadd.f32 %v4980, %v4950
      %v4982 = vadd.f32 %v4981, %v4951
      %v4983 = vadd.f32 %v4982, %v4952
      %v4984 = vadd.f32 %v4983, %v4953
      %v4985 = vadd.f32 %v4984, %v4954
      %v4986 = vadd.f32 %v4985, %v4955
      %v4987 = vadd.f32 %v4986, %v4956
      %v4988 = vadd.f32 %v4987, %v4957
      %v4989 = vadd.f32 %v4988, %v4958
      %v4990 = vadd.f32 %v4989, %v4959
      %v4991 = vadd.f32 %v4990, %v4960
      %v4992 = vadd.f32 %v4991, %v4961
      %v4993 = vadd.f32 %v4992, %v4962
      %v4994 = vadd.f32 %v4993, %v4963
      %v4995 = vadd.f32 %v4994, %v4964
      %v4996 = vadd.f32 %v4995, %v4965
      %v4997 = vadd.f32 %v4996, %v4966
      %v4998 = vadd.f32 %v4997, %v4967
      %v4999 = vadd.f32 %v4998, %v4968
      %v5000 = vadd.f32 %v4999, %v4969
      %v5001 = vadd.f32 %v5000, %v4970
      %v5002 = vadd.f32 %v5001, %v4971
      %v5003 = vadd.f32 %v5002, %v4972
      %v5004 = vrot.slane %v5003, 4
      %v5005 = vadd.f32 %v5003, %v5004
      %v5006 = vrot.slane %v5005, 2
      %v5007 = vadd.f32 %v5005, %v5006
      %v5008 = vrot.slane %v5007, 1
      %v5009 = vadd.f32 %v5007, %v5008
      %v5010 = vmul.f32 %v4941, %v4941
      %v5011 = vmul.f32 %v4942, %v4942
      %v5012 = vmul.f32 %v4943, %v4943
      %v5013 = vmul.f32 %v4944, %v4944
      %v5014 = vmul.f32 %v4945, %v4945
      %v5015 = vmul.f32 %v4946, %v4946
      %v5016 = vmul.f32 %v4947, %v4947
      %v5017 = vmul.f32 %v4948, %v4948
      %v5018 = vmul.f32 %v4949, %v4949
      %v5019 = vmul.f32 %v4950, %v4950
      %v5020 = vmul.f32 %v4951, %v4951
      %v5021 = vmul.f32 %v4952, %v4952
      %v5022 = vmul.f32 %v4953, %v4953
      %v5023 = vmul.f32 %v4954, %v4954
      %v5024 = vmul.f32 %v4955, %v4955
      %v5025 = vmul.f32 %v4956, %v4956
      %v5026 = vmul.f32 %v4957, %v4957
      %v5027 = vmul.f32 %v4958, %v4958
      %v5028 = vmul.f32 %v4959, %v4959
      %v5029 = vmul.f32 %v4960, %v4960
      %v5030 = vmul.f32 %v4961, %v4961
      %v5031 = vmul.f32 %v4962, %v4962
      %v5032 = vmul.f32 %v4963, %v4963
      %v5033 = vmul.f32 %v4964, %v4964
      %v5034 = vmul.f32 %v4965, %v4965
      %v5035 = vmul.f32 %v4966, %v4966
      %v5036 = vmul.f32 %v4967, %v4967
      %v5037 = vmul.f32 %v4968, %v4968
      %v5038 = vmul.f32 %v4969, %v4969
      %v5039 = vmul.f32 %v4970, %v4970
      %v5040 = vmul.f32 %v4971, %v4971
      %v5041 = vmul.f32 %v4972, %v4972
      %v5042 = vadd.f32 %v5010, %v5011
      %v5043 = vadd.f32 %v5042, %v5012
      %v5044 = vadd.f32 %v5043, %v5013
      %v5045 = vadd.f32 %v5044, %v5014
      %v5046 = vadd.f32 %v5045, %v5015
      %v5047 = vadd.f32 %v5046, %v5016
      %v5048 = vadd.f32 %v5047, %v5017
      %v5049 = vadd.f32 %v5048, %v5018
      %v5050 = vadd.f32 %v5049, %v5019
      %v5051 = vadd.f32 %v5050, %v5020
      %v5052 = vadd.f32 %v5051, %v5021
      %v5053 = vadd.f32 %v5052, %v5022
      %v5054 = vadd.f32 %v5053, %v5023
      %v5055 = vadd.f32 %v5054, %v5024
      %v5056 = vadd.f32 %v5055, %v5025
      %v5057 = vadd.f32 %v5056, %v5026
      %v5058 = vadd.f32 %v5057, %v5027
      %v5059 = vadd.f32 %v5058, %v5028
      %v5060 = vadd.f32 %v5059, %v5029
      %v5061 = vadd.f32 %v5060, %v5030
      %v5062 = vadd.f32 %v5061, %v5031
      %v5063 = vadd.f32 %v5062, %v5032
      %v5064 = vadd.f32 %v5063, %v5033
      %v5065 = vadd.f32 %v5064, %v5034
      %v5066 = vadd.f32 %v5065, %v5035
      %v5067 = vadd.f32 %v5066, %v5036
      %v5068 = vadd.f32 %v5067, %v5037
      %v5069 = vadd.f32 %v5068, %v5038
      %v5070 = vadd.f32 %v5069, %v5039
      %v5071 = vadd.f32 %v5070, %v5040
      %v5072 = vadd.f32 %v5071, %v5041
      %v5073 = vrot.slane %v5072, 4
      %v5074 = vadd.f32 %v5072, %v5073
      %v5075 = vrot.slane %v5074, 2
      %v5076 = vadd.f32 %v5074, %v5075
      %v5077 = vrot.slane %v5076, 1
      %v5078 = vadd.f32 %v5076, %v5077
      %v5079 = vmul.f32 %v5009, 0.00390625
      %v5080 = vmul.f32 %v5078, 0.00390625
      %v5081 = vmul.f32 %v5079, %v5079
      %v5082 = vsub.f32 %v5080, %v5081
      %v5083 = vmax.f32 %v5082, 0.0
      %v5084 = vsub.f32 %v4941, %v5079
      %v5085 = vsub.f32 %v4942, %v5079
      %v5086 = vsub.f32 %v4943, %v5079
      %v5087 = vsub.f32 %v4944, %v5079
      %v5088 = vsub.f32 %v4945, %v5079
      %v5089 = vsub.f32 %v4946, %v5079
      %v5090 = vsub.f32 %v4947, %v5079
      %v5091 = vsub.f32 %v4948, %v5079
      %v5092 = vsub.f32 %v4949, %v5079
      %v5093 = vsub.f32 %v4950, %v5079
      %v5094 = vsub.f32 %v4951, %v5079
      %v5095 = vsub.f32 %v4952, %v5079
      %v5096 = vsub.f32 %v4953, %v5079
      %v5097 = vsub.f32 %v4954, %v5079
      %v5098 = vsub.f32 %v4955, %v5079
      %v5099 = vsub.f32 %v4956, %v5079
      %v5100 = vsub.f32 %v4957, %v5079
      %v5101 = vsub.f32 %v4958, %v5079
      %v5102 = vsub.f32 %v4959, %v5079
      %v5103 = vsub.f32 %v4960, %v5079
      %v5104 = vsub.f32 %v4961, %v5079
      %v5105 = vsub.f32 %v4962, %v5079
      %v5106 = vsub.f32 %v4963, %v5079
      %v5107 = vsub.f32 %v4964, %v5079
      %v5108 = vsub.f32 %v4965, %v5079
      %v5109 = vsub.f32 %v4966, %v5079
      %v5110 = vsub.f32 %v4967, %v5079
      %v5111 = vsub.f32 %v4968, %v5079
      %v5112 = vsub.f32 %v4969, %v5079
      %v5113 = vsub.f32 %v4970, %v5079
      %v5114 = vsub.f32 %v4971, %v5079
      %v5115 = vsub.f32 %v4972, %v5079
      %v5116 = vadd.f32 %v5083, 1e-05
      %v5117 = vrsqrt.pop %v5116
      %v5118 = vmul.f32 %v5084, %v5117
      %v5119 = vmul.f32 %v5085, %v5117
      %v5120 = vmul.f32 %v5086, %v5117
      %v5121 = vmul.f32 %v5087, %v5117
      %v5122 = vmul.f32 %v5088, %v5117
      %v5123 = vmul.f32 %v5089, %v5117
      %v5124 = vmul.f32 %v5090, %v5117
      %v5125 = vmul.f32 %v5091, %v5117
      %v5126 = vmul.f32 %v5092, %v5117
      %v5127 = vmul.f32 %v5093, %v5117
      %v5128 = vmul.f32 %v5094, %v5117
      %v5129 = vmul.f32 %v5095, %v5117
      %v5130 = vmul.f32 %v5096, %v5117
      %v5131 = vmul.f32 %v5097, %v5117
      %v5132 = vmul.f32 %v5098, %v5117
      %v5133 = vmul.f32 %v5099, %v5117
      %v5134 = vmul.f32 %v5100, %v5117
      %v5135 = vmul.f32 %v5101, %v5117
      %v5136 = vmul.f32 %v5102, %v5117
      %v5137 = vmul.f32 %v5103, %v5117
      %v5138 = vmul.f32 %v5104, %v5117
      %v5139 = vmul.f32 %v5105, %v5117
      %v5140 = vmul.f32 %v5106, %v5117
      %v5141 = vmul.f32 %v5107, %v5117
      %v5142 = vmul.f32 %v5108, %v5117
      %v5143 = vmul.f32 %v5109, %v5117
      %v5144 = vmul.f32 %v5110, %v5117
      %v5145 = vmul.f32 %v5111, %v5117
      %v5146 = vmul.f32 %v5112, %v5117
      %v5147 = vmul.f32 %v5113, %v5117
      %v5148 = vmul.f32 %v5114, %v5117
      %v5149 = vmul.f32 %v5115, %v5117
      %v5150 = vmax.f32 %v5118, 0.0
      %v5151 = vmax.f32 %v5119, 0.0
      %v5152 = vmax.f32 %v5120, 0.0
      %v5153 = vmax.f32 %v5121, 0.0
      %v5154 = vmax.f32 %v5122, 0.0
      %v5155 = vmax.f32 %v5123, 0.0
      %v5156 = vmax.f32 %v5124, 0.0
      %v5157 = vmax.f32 %v5125, 0.0
      %v5158 = vmax.f32 %v5126, 0.0
      %v5159 = vmax.f32 %v5127, 0.0
      %v5160 = vmax.f32 %v5128, 0.0
      %v5161 = vmax.f32 %v5129, 0.0
      %v5162 = vmax.f32 %v5130, 0.0
      %v5163 = vmax.f32 %v5131, 0.0
      %v5164 = vmax.f32 %v5132, 0.0
      %v5165 = vmax.f32 %v5133, 0.0
      %v5166 = vmax.f32 %v5134, 0.0
      %v5167 = vmax.f32 %v5135, 0.0
      %v5168 = vmax.f32 %v5136, 0.0
      %v5169 = vmax.f32 %v5137, 0.0
      %v5170 = vmax.f32 %v5138, 0.0
      %v5171 = vmax.f32 %v5139, 0.0
      %v5172 = vmax.f32 %v5140, 0.0
      %v5173 = vmax.f32 %v5141, 0.0
      %v5174 = vmax.f32 %v5142, 0.0
      %v5175 = vmax.f32 %v5143, 0.0
      %v5176 = vmax.f32 %v5144, 0.0
      %v5177 = vmax.f32 %v5145, 0.0
      %v5178 = vmax.f32 %v5146, 0.0
      %v5179 = vmax.f32 %v5147, 0.0
      %v5180 = vmax.f32 %v5148, 0.0
      %v5181 = vmax.f32 %v5149, 0.0
      %5182 = vst [vmem:[#allocation2] sm:$0xf] 0
      %5183 = vst [vmem:[#allocation2 + $0x4] sm:$0xf] 0
      %5184 = vst [vmem:[#allocation2 + $0x8] sm:$0x1] 0
      %s5185 = scalar_lea.vmem [#allocation2], 204
      %5186 = vst [vmem:[%s5185] sm:$0xf] 0
      %5187 = vst [vmem:[%s5185 + $0x4] sm:$0xf] 0
      %5188 = vst [vmem:[%s5185 + $0x8] sm:$0x1] 0
      %vm5189 = vcmask 1040384
      %vm5190 = vsmask.f32 256
      %vm5191 = vmand %vm5189, %vm5190
      %v5192 = vld [vmem:[#allocation2] sm:$0x1]
      %v5193 = vsel %vm5191, 0, %v5192
      %5194 = vst [vmem:[#allocation2] sm:$0x1] %v5193
      %v5195 = vld [vmem:[#allocation2 + $0xc] sm:$0x1]
      %v5196 = vsel %vm5191, 0, %v5195
      %5197 = vst [vmem:[#allocation2 + $0xc] sm:$0x1] %v5196
      %v5198 = vld [vmem:[#allocation2 + $0x18] sm:$0x1]
      %v5199 = vsel %vm5191, 0, %v5198
      %5200 = vst [vmem:[#allocation2 + $0x18] sm:$0x1] %v5199
      %v5201 = vld [vmem:[#allocation2 + $0x24] sm:$0x1]
      %v5202 = vsel %vm5191, 0, %v5201
      %5203 = vst [vmem:[#allocation2 + $0x24] sm:$0x1] %v5202
      %v5204 = vld [vmem:[#allocation2 + $0x30] sm:$0x1]
      %v5205 = vsel %vm5191, 0, %v5204
      %5206 = vst [vmem:[#allocation2 + $0x30] sm:$0x1] %v5205
      %v5207 = vld [vmem:[#allocation2 + $0x3c] sm:$0x1]
      %v5208 = vsel %vm5191, 0, %v5207
      %5209 = vst [vmem:[#allocation2 + $0x3c] sm:$0x1] %v5208
      %v5210 = vld [vmem:[#allocation2 + $0x48] sm:$0x1]
      %v5211 = vsel %vm5191, 0, %v5210
      %5212 = vst [vmem:[#allocation2 + $0x48] sm:$0x1] %v5211
      %v5213 = vld [vmem:[#allocation2 + $0x54] sm:$0x1]
      %v5214 = vsel %vm5191, 0, %v5213
      %5215 = vst [vmem:[#allocation2 + $0x54] sm:$0x1] %v5214
      %v5216 = vld [vmem:[#allocation2 + $0x60] sm:$0x1]
      %v5217 = vsel %vm5191, 0, %v5216
      %5218 = vst [vmem:[#allocation2 + $0x60] sm:$0x1] %v5217
      %v5219 = vld [vmem:[#allocation2 + $0x6c] sm:$0x1]
      %v5220 = vsel %vm5191, 0, %v5219
      %5221 = vst [vmem:[#allocation2 + $0x6c] sm:$0x1] %v5220
      %v5222 = vld [vmem:[#allocation2 + $0x78] sm:$0x1]
      %v5223 = vsel %vm5191, 0, %v5222
      %5224 = vst [vmem:[#allocation2 + $0x78] sm:$0x1] %v5223
      %v5225 = vld [vmem:[#allocation2 + $0x84] sm:$0x1]
      %v5226 = vsel %vm5191, 0, %v5225
      %5227 = vst [vmem:[#allocation2 + $0x84] sm:$0x1] %v5226
      %v5228 = vld [vmem:[#allocation2 + $0x90] sm:$0x1]
      %v5229 = vsel %vm5191, 0, %v5228
      %5230 = vst [vmem:[#allocation2 + $0x90] sm:$0x1] %v5229
      %v5231 = vld [vmem:[#allocation2 + $0x9c] sm:$0x1]
      %v5232 = vsel %vm5191, 0, %v5231
      %5233 = vst [vmem:[#allocation2 + $0x9c] sm:$0x1] %v5232
      %v5234 = vld [vmem:[#allocation2 + $0xa8] sm:$0x1]
      %v5235 = vsel %vm5191, 0, %v5234
      %5236 = vst [vmem:[#allocation2 + $0xa8] sm:$0x1] %v5235
      %v5237 = vld [vmem:[#allocation2 + $0xb4] sm:$0x1]
      %v5238 = vsel %vm5191, 0, %v5237
      %5239 = vst [vmem:[#allocation2 + $0xb4] sm:$0x1] %v5238
      %v5240 = vld [vmem:[#allocation2 + $0xc0] sm:$0x1]
      %v5241 = vsel %vm5191, 0, %v5240
      %5242 = vst [vmem:[#allocation2 + $0xc0] sm:$0x1] %v5241
      %v5243 = vld [vmem:[#allocation2 + $0xcc] sm:$0x1]
      %v5244 = vsel %vm5191, 0, %v5243
      %5245 = vst [vmem:[#allocation2 + $0xcc] sm:$0x1] %v5244
      %vm5246 = vsmask.f32 7938
      %vm5247 = vmand %vm5189, %vm5246
      %v5248 = vld [vmem:[#allocation2 + $0x8] sm:$0x1]
      %v5249 = vsel %vm5247, 0, %v5248
      %5250 = vst [vmem:[#allocation2 + $0x8] sm:$0x1] %v5249
      %v5251 = vld [vmem:[#allocation2 + $0x14] sm:$0x1]
      %v5252 = vsel %vm5247, 0, %v5251
      %5253 = vst [vmem:[#allocation2 + $0x14] sm:$0x1] %v5252
      %v5254 = vld [vmem:[#allocation2 + $0x20] sm:$0x1]
      %v5255 = vsel %vm5247, 0, %v5254
      %5256 = vst [vmem:[#allocation2 + $0x20] sm:$0x1] %v5255
      %v5257 = vld [vmem:[#allocation2 + $0x2c] sm:$0x1]
      %v5258 = vsel %vm5247, 0, %v5257
      %5259 = vst [vmem:[#allocation2 + $0x2c] sm:$0x1] %v5258
      %v5260 = vld [vmem:[#allocation2 + $0x38] sm:$0x1]
      %v5261 = vsel %vm5247, 0, %v5260
      %5262 = vst [vmem:[#allocation2 + $0x38] sm:$0x1] %v5261
      %v5263 = vld [vmem:[#allocation2 + $0x44] sm:$0x1]
      %v5264 = vsel %vm5247, 0, %v5263
      %5265 = vst [vmem:[#allocation2 + $0x44] sm:$0x1] %v5264
      %v5266 = vld [vmem:[#allocation2 + $0x50] sm:$0x1]
      %v5267 = vsel %vm5247, 0, %v5266
      %5268 = vst [vmem:[#allocation2 + $0x50] sm:$0x1] %v5267
      %v5269 = vld [vmem:[#allocation2 + $0x5c] sm:$0x1]
      %v5270 = vsel %vm5247, 0, %v5269
      %5271 = vst [vmem:[#allocation2 + $0x5c] sm:$0x1] %v5270
      %v5272 = vld [vmem:[#allocation2 + $0x68] sm:$0x1]
      %v5273 = vsel %vm5247, 0, %v5272
      %5274 = vst [vmem:[#allocation2 + $0x68] sm:$0x1] %v5273
      %v5275 = vld [vmem:[#allocation2 + $0x74] sm:$0x1]
      %v5276 = vsel %vm5247, 0, %v5275
      %5277 = vst [vmem:[#allocation2 + $0x74] sm:$0x1] %v5276
      %v5278 = vld [vmem:[#allocation2 + $0x80] sm:$0x1]
      %v5279 = vsel %vm5247, 0, %v5278
      %5280 = vst [vmem:[#allocation2 + $0x80] sm:$0x1] %v5279
      %v5281 = vld [vmem:[#allocation2 + $0x8c] sm:$0x1]
      %v5282 = vsel %vm5247, 0, %v5281
      %5283 = vst [vmem:[#allocation2 + $0x8c] sm:$0x1] %v5282
      %v5284 = vld [vmem:[#allocation2 + $0x98] sm:$0x1]
      %v5285 = vsel %vm5247, 0, %v5284
      %5286 = vst [vmem:[#allocation2 + $0x98] sm:$0x1] %v5285
      %v5287 = vld [vmem:[#allocation2 + $0xa4] sm:$0x1]
      %v5288 = vsel %vm5247, 0, %v5287
      %5289 = vst [vmem:[#allocation2 + $0xa4] sm:$0x1] %v5288
      %v5290 = vld [vmem:[#allocation2 + $0xb0] sm:$0x1]
      %v5291 = vsel %vm5247, 0, %v5290
      %5292 = vst [vmem:[#allocation2 + $0xb0] sm:$0x1] %v5291
      %v5293 = vld [vmem:[#allocation2 + $0xbc] sm:$0x1]
      %v5294 = vsel %vm5247, 0, %v5293
      %5295 = vst [vmem:[#allocation2 + $0xbc] sm:$0x1] %v5294
      %v5296 = vld [vmem:[#allocation2 + $0xc8] sm:$0x1]
      %v5297 = vsel %vm5247, 0, %v5296
      %5298 = vst [vmem:[#allocation2 + $0xc8] sm:$0x1] %v5297
      %v5299 = vld [vmem:[#allocation2 + $0xd4] sm:$0x1]
      %v5300 = vsel %vm5247, 0, %v5299
      %5301 = vst [vmem:[#allocation2 + $0xd4] sm:$0x1] %v5300
      %v5302 = vpack.c.bf16 %v5151, %v5150
      %v5303 = vpack.c.bf16 %v5153, %v5152
      %v5304 = vpack.c.bf16 %v5155, %v5154
      %v5305 = vpack.c.bf16 %v5157, %v5156
      %v5306 = vpack.c.bf16 %v5159, %v5158
      %v5307 = vpack.c.bf16 %v5161, %v5160
      %v5308 = vpack.c.bf16 %v5163, %v5162
      %v5309 = vpack.c.bf16 %v5165, %v5164
      %v5310 = vpack.c.bf16 %v5167, %v5166
      %v5311 = vpack.c.bf16 %v5169, %v5168
      %v5312 = vpack.c.bf16 %v5171, %v5170
      %v5313 = vpack.c.bf16 %v5173, %v5172
      %v5314 = vpack.c.bf16 %v5175, %v5174
      %v5315 = vpack.c.bf16 %v5177, %v5176
      %v5316 = vpack.c.bf16 %v5179, %v5178
      %v5317 = vpack.c.bf16 %v5181, %v5180
      %v5334 = vunpack.c.l.b16 %v5302
      %v5335 = vunpack.c.h.b16 %v5302
      %v5336 = vunpack.c.l.b16 %v5303
      %v5337 = vunpack.c.h.b16 %v5303
      %v5338 = vunpack.c.l.b16 %v5304
      %v5339 = vunpack.c.h.b16 %v5304
      %v5340 = vunpack.c.l.b16 %v5305
      %v5341 = vunpack.c.h.b16 %v5305
      %v5342 = vunpack.c.l.b16 %v5306
      %v5343 = vunpack.c.h.b16 %v5306
      %v5344 = vunpack.c.l.b16 %v5307
      %v5345 = vunpack.c.h.b16 %v5307
      %v5346 = vunpack.c.l.b16 %v5308
      %v5347 = vunpack.c.h.b16 %v5308
      %v5348 = vunpack.c.l.b16 %v5309
      %v5349 = vunpack.c.h.b16 %v5309
      %v5350 = vunpack.c.l.b16 %v5310
      %v5351 = vunpack.c.h.b16 %v5310
      %v5352 = vunpack.c.l.b16 %v5311
      %v5353 = vunpack.c.h.b16 %v5311
      %v5354 = vunpack.c.l.b16 %v5312
      %v5355 = vunpack.c.h.b16 %v5312
      %v5356 = vunpack.c.l.b16 %v5313
      %v5357 = vunpack.c.h.b16 %v5313
      %v5358 = vunpack.c.l.b16 %v5314
      %v5359 = vunpack.c.h.b16 %v5314
      %v5360 = vunpack.c.l.b16 %v5315
      %v5361 = vunpack.c.h.b16 %v5315
      %v5362 = vunpack.c.l.b16 %v5316
      %v5363 = vunpack.c.h.b16 %v5316
      %v5364 = vunpack.c.l.b16 %v5317
      %v5365 = vunpack.c.h.b16 %v5317
      %v5366 = vpack.c.b16 %v5334, %v5334
      %v5367 = vpack.c.b16 %v5335, %v5335
      %v5368 = vpack.c.b16 %v5336, %v5336
      %v5369 = vpack.c.b16 %v5337, %v5337
      %v5370 = vpack.c.b16 %v5338, %v5338
      %v5371 = vpack.c.b16 %v5339, %v5339
      %v5372 = vpack.c.b16 %v5340, %v5340
      %v5373 = vpack.c.b16 %v5341, %v5341
      %v5374 = vpack.c.b16 %v5342, %v5342
      %v5375 = vpack.c.b16 %v5343, %v5343
      %v5376 = vpack.c.b16 %v5344, %v5344
      %v5377 = vpack.c.b16 %v5345, %v5345
      %v5378 = vpack.c.b16 %v5346, %v5346
      %v5379 = vpack.c.b16 %v5347, %v5347
      %v5380 = vpack.c.b16 %v5348, %v5348
      %v5381 = vpack.c.b16 %v5349, %v5349
      %v5382 = vpack.c.b16 %v5350, %v5350
      %v5383 = vpack.c.b16 %v5351, %v5351
      %v5384 = vpack.c.b16 %v5352, %v5352
      %v5385 = vpack.c.b16 %v5353, %v5353
      %v5386 = vpack.c.b16 %v5354, %v5354
      %v5387 = vpack.c.b16 %v5355, %v5355
      %v5388 = vpack.c.b16 %v5356, %v5356
      %v5389 = vpack.c.b16 %v5357, %v5357
      %v5390 = vpack.c.b16 %v5358, %v5358
      %v5391 = vpack.c.b16 %v5359, %v5359
      %v5392 = vpack.c.b16 %v5360, %v5360
      %v5393 = vpack.c.b16 %v5361, %v5361
      %v5394 = vpack.c.b16 %v5362, %v5362
      %v5395 = vpack.c.b16 %v5363, %v5363
      %v5396 = vpack.c.b16 %v5364, %v5364
      %v5397 = vpack.c.b16 %v5365, %v5365
      %vm5398 = vsmask.f32 4368
      %vm5399 = vmor %vm5190, %vm5398
      %v5401 = vshrl.u32 %v5366, 16
      %v5403 = vrot.slane %v5401, 7
      %v5404 = vshll.u32 %v5366, 16
      %v5406 = vor.u32 %v5403, %v5404
      %v5407 = vrot.slane %v5403, 4
      %v5409 = vshrl.u32 %v5367, 16
      %v5411 = vrot.slane %v5409, 7
      %v5412 = vshll.u32 %v5367, 16
      %v5414 = vor.u32 %v5411, %v5412
      %v5415 = vsel %vm5399, %v5407, %v5414
      %v5416 = vrot.slane %v5411, 4
      %v5418 = vshrl.u32 %v5368, 16
      %v5420 = vrot.slane %v5418, 7
      %v5421 = vshll.u32 %v5368, 16
      %v5423 = vor.u32 %v5420, %v5421
      %v5424 = vrot.slane %v5420, 4
      %v5426 = vshrl.u32 %v5369, 16
      %v5428 = vrot.slane %v5426, 7
      %v5429 = vshll.u32 %v5369, 16
      %v5431 = vor.u32 %v5428, %v5429
      %v5432 = vsel %vm5399, %v5424, %v5431
      %v5433 = vrot.slane %v5428, 4
      %v5435 = vshrl.u32 %v5370, 16
      %v5437 = vrot.slane %v5435, 7
      %v5438 = vshll.u32 %v5370, 16
      %v5440 = vor.u32 %v5437, %v5438
      %v5441 = vrot.slane %v5437, 4
      %v5443 = vshrl.u32 %v5371, 16
      %v5445 = vrot.slane %v5443, 7
      %v5446 = vshll.u32 %v5371, 16
      %v5448 = vor.u32 %v5445, %v5446
      %v5449 = vsel %vm5399, %v5441, %v5448
      %v5450 = vrot.slane %v5445, 4
      %v5452 = vshrl.u32 %v5372, 16
      %v5454 = vrot.slane %v5452, 7
      %v5455 = vshll.u32 %v5372, 16
      %v5457 = vor.u32 %v5454, %v5455
      %v5458 = vrot.slane %v5454, 4
      %v5460 = vshrl.u32 %v5373, 16
      %v5462 = vrot.slane %v5460, 7
      %v5463 = vshll.u32 %v5373, 16
      %v5465 = vor.u32 %v5462, %v5463
      %v5466 = vsel %vm5399, %v5458, %v5465
      %v5467 = vrot.slane %v5462, 4
      %v5469 = vshrl.u32 %v5374, 16
      %v5471 = vrot.slane %v5469, 7
      %v5472 = vshll.u32 %v5374, 16
      %v5474 = vor.u32 %v5471, %v5472
      %v5475 = vrot.slane %v5471, 4
      %v5477 = vshrl.u32 %v5375, 16
      %v5479 = vrot.slane %v5477, 7
      %v5480 = vshll.u32 %v5375, 16
      %v5482 = vor.u32 %v5479, %v5480
      %v5483 = vsel %vm5399, %v5475, %v5482
      %v5484 = vrot.slane %v5479, 4
      %v5486 = vshrl.u32 %v5376, 16
      %v5488 = vrot.slane %v5486, 7
      %v5489 = vshll.u32 %v5376, 16
      %v5491 = vor.u32 %v5488, %v5489
      %v5492 = vrot.slane %v5488, 4
      %v5494 = vshrl.u32 %v5377, 16
      %v5496 = vrot.slane %v5494, 7
      %v5497 = vshll.u32 %v5377, 16
      %v5499 = vor.u32 %v5496, %v5497
      %v5500 = vsel %vm5399, %v5492, %v5499
      %v5501 = vrot.slane %v5496, 4
      %v5503 = vshrl.u32 %v5378, 16
      %v5505 = vrot.slane %v5503, 7
      %v5506 = vshll.u32 %v5378, 16
      %v5508 = vor.u32 %v5505, %v5506
      %v5509 = vrot.slane %v5505, 4
      %v5511 = vshrl.u32 %v5379, 16
      %v5513 = vrot.slane %v5511, 7
      %v5514 = vshll.u32 %v5379, 16
      %v5516 = vor.u32 %v5513, %v5514
      %v5517 = vsel %vm5399, %v5509, %v5516
      %v5518 = vrot.slane %v5513, 4
      %v5520 = vshrl.u32 %v5380, 16
      %v5522 = vrot.slane %v5520, 7
      %v5523 = vshll.u32 %v5380, 16
      %v5525 = vor.u32 %v5522, %v5523
      %v5526 = vrot.slane %v5522, 4
      %v5528 = vshrl.u32 %v5381, 16
      %v5530 = vrot.slane %v5528, 7
      %v5531 = vshll.u32 %v5381, 16
      %v5533 = vor.u32 %v5530, %v5531
      %v5534 = vsel %vm5399, %v5526, %v5533
      %v5535 = vrot.slane %v5530, 4
      %v5537 = vshrl.u32 %v5382, 16
      %v5539 = vrot.slane %v5537, 7
      %v5540 = vshll.u32 %v5382, 16
      %v5542 = vor.u32 %v5539, %v5540
      %v5543 = vrot.slane %v5539, 4
      %v5545 = vshrl.u32 %v5383, 16
      %v5547 = vrot.slane %v5545, 7
      %v5548 = vshll.u32 %v5383, 16
      %v5550 = vor.u32 %v5547, %v5548
      %v5551 = vsel %vm5399, %v5543, %v5550
      %v5552 = vrot.slane %v5547, 4
      %v5554 = vshrl.u32 %v5384, 16
      %v5556 = vrot.slane %v5554, 7
      %v5557 = vshll.u32 %v5384, 16
      %v5559 = vor.u32 %v5556, %v5557
      %v5560 = vrot.slane %v5556, 4
      %v5562 = vshrl.u32 %v5385, 16
      %v5564 = vrot.slane %v5562, 7
      %v5565 = vshll.u32 %v5385, 16
      %v5567 = vor.u32 %v5564, %v5565
      %v5568 = vsel %vm5399, %v5560, %v5567
      %v5569 = vrot.slane %v5564, 4
      %v5571 = vshrl.u32 %v5386, 16
      %v5573 = vrot.slane %v5571, 7
      %v5574 = vshll.u32 %v5386, 16
      %v5576 = vor.u32 %v5573, %v5574
      %v5577 = vrot.slane %v5573, 4
      %v5579 = vshrl.u32 %v5387, 16
      %v5581 = vrot.slane %v5579, 7
      %v5582 = vshll.u32 %v5387, 16
      %v5584 = vor.u32 %v5581, %v5582
      %v5585 = vsel %vm5399, %v5577, %v5584
      %v5586 = vrot.slane %v5581, 4
      %v5588 = vshrl.u32 %v5388, 16
      %v5590 = vrot.slane %v5588, 7
      %v5591 = vshll.u32 %v5388, 16
      %v5593 = vor.u32 %v5590, %v5591
      %v5594 = vrot.slane %v5590, 4
      %v5596 = vshrl.u32 %v5389, 16
      %v5598 = vrot.slane %v5596, 7
      %v5599 = vshll.u32 %v5389, 16
      %v5601 = vor.u32 %v5598, %v5599
      %v5602 = vsel %vm5399, %v5594, %v5601
      %v5603 = vrot.slane %v5598, 4
      %v5605 = vshrl.u32 %v5390, 16
      %v5607 = vrot.slane %v5605, 7
      %v5608 = vshll.u32 %v5390, 16
      %v5610 = vor.u32 %v5607, %v5608
      %v5611 = vrot.slane %v5607, 4
      %v5613 = vshrl.u32 %v5391, 16
      %v5615 = vrot.slane %v5613, 7
      %v5616 = vshll.u32 %v5391, 16
      %v5618 = vor.u32 %v5615, %v5616
      %v5619 = vsel %vm5399, %v5611, %v5618
      %v5620 = vrot.slane %v5615, 4
      %v5622 = vshrl.u32 %v5392, 16
      %v5624 = vrot.slane %v5622, 7
      %v5625 = vshll.u32 %v5392, 16
      %v5627 = vor.u32 %v5624, %v5625
      %v5628 = vrot.slane %v5624, 4
      %v5630 = vshrl.u32 %v5393, 16
      %v5632 = vrot.slane %v5630, 7
      %v5633 = vshll.u32 %v5393, 16
      %v5635 = vor.u32 %v5632, %v5633
      %v5636 = vsel %vm5399, %v5628, %v5635
      %v5637 = vrot.slane %v5632, 4
      %v5639 = vshrl.u32 %v5394, 16
      %v5641 = vrot.slane %v5639, 7
      %v5642 = vshll.u32 %v5394, 16
      %v5644 = vor.u32 %v5641, %v5642
      %v5645 = vrot.slane %v5641, 4
      %v5647 = vshrl.u32 %v5395, 16
      %v5649 = vrot.slane %v5647, 7
      %v5650 = vshll.u32 %v5395, 16
      %v5652 = vor.u32 %v5649, %v5650
      %v5653 = vsel %vm5399, %v5645, %v5652
      %v5654 = vrot.slane %v5649, 4
      %v5656 = vshrl.u32 %v5396, 16
      %v5658 = vrot.slane %v5656, 7
      %v5659 = vshll.u32 %v5396, 16
      %v5661 = vor.u32 %v5658, %v5659
      %v5662 = vrot.slane %v5658, 4
      %v5664 = vshrl.u32 %v5397, 16
      %v5666 = vrot.slane %v5664, 7
      %v5667 = vshll.u32 %v5397, 16
      %v5669 = vor.u32 %v5666, %v5667
      %v5670 = vsel %vm5399, %v5662, %v5669
      %v5671 = vrot.slane %v5666, 4
      %s5720 = scalar_lea.vmem [#allocation2], 12
      %vm5721 = vcmask 1043456
      %vm5722 = vmand %vm5721, %vm5246
      %v5723 = vld [vmem:[%s5720] sm:$0xf]
      %v5724 = vsel %vm5722, %v5406, %v5723
      %5725 = vst [vmem:[%s5720] sm:$0xf] %v5724
      %5726 = vst [vmem:[%s5720 + $0x4] sm:$0xf] %v5415
      %v5727 = vld [vmem:[%s5720 + $0x8] sm:$0x1]
      %v5728 = vsel %vm5191, %v5416, %v5727
      %5729 = vst [vmem:[%s5720 + $0x8] sm:$0x1] %v5728
      %v5730 = vld [vmem:[%s5720 + $0xc] sm:$0xf]
      %v5731 = vsel %vm5722, %v5423, %v5730
      %5732 = vst [vmem:[%s5720 + $0xc] sm:$0xf] %v5731
      %5733 = vst [vmem:[%s5720 + $0x10] sm:$0xf] %v5432
      %v5734 = vld [vmem:[%s5720 + $0x14] sm:$0x1]
      %v5735 = vsel %vm5191, %v5433, %v5734
      %5736 = vst [vmem:[%s5720 + $0x14] sm:$0x1] %v5735
      %v5737 = vld [vmem:[%s5720 + $0x18] sm:$0xf]
      %v5738 = vsel %vm5722, %v5440, %v5737
      %5739 = vst [vmem:[%s5720 + $0x18] sm:$0xf] %v5738
      %5740 = vst [vmem:[%s5720 + $0x1c] sm:$0xf] %v5449
      %v5741 = vld [vmem:[%s5720 + $0x20] sm:$0x1]
      %v5742 = vsel %vm5191, %v5450, %v5741
      %5743 = vst [vmem:[%s5720 + $0x20] sm:$0x1] %v5742
      %v5744 = vld [vmem:[%s5720 + $0x24] sm:$0xf]
      %v5745 = vsel %vm5722, %v5457, %v5744
      %5746 = vst [vmem:[%s5720 + $0x24] sm:$0xf] %v5745
      %5747 = vst [vmem:[%s5720 + $0x28] sm:$0xf] %v5466
      %v5748 = vld [vmem:[%s5720 + $0x2c] sm:$0x1]
      %v5749 = vsel %vm5191, %v5467, %v5748
      %5750 = vst [vmem:[%s5720 + $0x2c] sm:$0x1] %v5749
      %v5751 = vld [vmem:[%s5720 + $0x30] sm:$0xf]
      %v5752 = vsel %vm5722, %v5474, %v5751
      %5753 = vst [vmem:[%s5720 + $0x30] sm:$0xf] %v5752
      %5754 = vst [vmem:[%s5720 + $0x34] sm:$0xf] %v5483
      %v5755 = vld [vmem:[%s5720 + $0x38] sm:$0x1]
      %v5756 = vsel %vm5191, %v5484, %v5755
      %5757 = vst [vmem:[%s5720 + $0x38] sm:$0x1] %v5756
      %v5758 = vld [vmem:[%s5720 + $0x3c] sm:$0xf]
      %v5759 = vsel %vm5722, %v5491, %v5758
      %5760 = vst [vmem:[%s5720 + $0x3c] sm:$0xf] %v5759
      %5761 = vst [vmem:[%s5720 + $0x40] sm:$0xf] %v5500
      %v5762 = vld [vmem:[%s5720 + $0x44] sm:$0x1]
      %v5763 = vsel %vm5191, %v5501, %v5762
      %5764 = vst [vmem:[%s5720 + $0x44] sm:$0x1] %v5763
      %v5765 = vld [vmem:[%s5720 + $0x48] sm:$0xf]
      %v5766 = vsel %vm5722, %v5508, %v5765
      %5767 = vst [vmem:[%s5720 + $0x48] sm:$0xf] %v5766
      %5768 = vst [vmem:[%s5720 + $0x4c] sm:$0xf] %v5517
      %v5769 = vld [vmem:[%s5720 + $0x50] sm:$0x1]
      %v5770 = vsel %vm5191, %v5518, %v5769
      %5771 = vst [vmem:[%s5720 + $0x50] sm:$0x1] %v5770
      %v5772 = vld [vmem:[%s5720 + $0x54] sm:$0xf]
      %v5773 = vsel %vm5722, %v5525, %v5772
      %5774 = vst [vmem:[%s5720 + $0x54] sm:$0xf] %v5773
      %5775 = vst [vmem:[%s5720 + $0x58] sm:$0xf] %v5534
      %v5776 = vld [vmem:[%s5720 + $0x5c] sm:$0x1]
      %v5777 = vsel %vm5191, %v5535, %v5776
      %5778 = vst [vmem:[%s5720 + $0x5c] sm:$0x1] %v5777
      %v5779 = vld [vmem:[%s5720 + $0x60] sm:$0xf]
      %v5780 = vsel %vm5722, %v5542, %v5779
      %5781 = vst [vmem:[%s5720 + $0x60] sm:$0xf] %v5780
      %5782 = vst [vmem:[%s5720 + $0x64] sm:$0xf] %v5551
      %v5783 = vld [vmem:[%s5720 + $0x68] sm:$0x1]
      %v5784 = vsel %vm5191, %v5552, %v5783
      %5785 = vst [vmem:[%s5720 + $0x68] sm:$0x1] %v5784
      %v5786 = vld [vmem:[%s5720 + $0x6c] sm:$0xf]
      %v5787 = vsel %vm5722, %v5559, %v5786
      %5788 = vst [vmem:[%s5720 + $0x6c] sm:$0xf] %v5787
      %5789 = vst [vmem:[%s5720 + $0x70] sm:$0xf] %v5568
      %v5790 = vld [vmem:[%s5720 + $0x74] sm:$0x1]
      %v5791 = vsel %vm5191, %v5569, %v5790
      %5792 = vst [vmem:[%s5720 + $0x74] sm:$0x1] %v5791
      %v5793 = vld [vmem:[%s5720 + $0x78] sm:$0xf]
      %v5794 = vsel %vm5722, %v5576, %v5793
      %5795 = vst [vmem:[%s5720 + $0x78] sm:$0xf] %v5794
      %5796 = vst [vmem:[%s5720 + $0x7c] sm:$0xf] %v5585
      %v5797 = vld [vmem:[%s5720 + $0x80] sm:$0x1]
      %v5798 = vsel %vm5191, %v5586, %v5797
      %5799 = vst [vmem:[%s5720 + $0x80] sm:$0x1] %v5798
      %v5800 = vld [vmem:[%s5720 + $0x84] sm:$0xf]
      %v5801 = vsel %vm5722, %v5593, %v5800
      %5802 = vst [vmem:[%s5720 + $0x84] sm:$0xf] %v5801
      %5803 = vst [vmem:[%s5720 + $0x88] sm:$0xf] %v5602
      %v5804 = vld [vmem:[%s5720 + $0x8c] sm:$0x1]
      %v5805 = vsel %vm5191, %v5603, %v5804
      %5806 = vst [vmem:[%s5720 + $0x8c] sm:$0x1] %v5805
      %v5807 = vld [vmem:[%s5720 + $0x90] sm:$0xf]
      %v5808 = vsel %vm5722, %v5610, %v5807
      %5809 = vst [vmem:[%s5720 + $0x90] sm:$0xf] %v5808
      %5810 = vst [vmem:[%s5720 + $0x94] sm:$0xf] %v5619
      %v5811 = vld [vmem:[%s5720 + $0x98] sm:$0x1]
      %v5812 = vsel %vm5191, %v5620, %v5811
      %5813 = vst [vmem:[%s5720 + $0x98] sm:$0x1] %v5812
      %v5814 = vld [vmem:[%s5720 + $0x9c] sm:$0xf]
      %v5815 = vsel %vm5722, %v5627, %v5814
      %5816 = vst [vmem:[%s5720 + $0x9c] sm:$0xf] %v5815
      %5817 = vst [vmem:[%s5720 + $0xa0] sm:$0xf] %v5636
      %v5818 = vld [vmem:[%s5720 + $0xa4] sm:$0x1]
      %v5819 = vsel %vm5191, %v5637, %v5818
      %5820 = vst [vmem:[%s5720 + $0xa4] sm:$0x1] %v5819
      %v5821 = vld [vmem:[%s5720 + $0xa8] sm:$0xf]
      %v5822 = vsel %vm5722, %v5644, %v5821
      %5823 = vst [vmem:[%s5720 + $0xa8] sm:$0xf] %v5822
      %5824 = vst [vmem:[%s5720 + $0xac] sm:$0xf] %v5653
      %v5825 = vld [vmem:[%s5720 + $0xb0] sm:$0x1]
      %v5826 = vsel %vm5191, %v5654, %v5825
      %5827 = vst [vmem:[%s5720 + $0xb0] sm:$0x1] %v5826
      %v5828 = vld [vmem:[%s5720 + $0xb4] sm:$0xf]
      %v5829 = vsel %vm5722, %v5661, %v5828
      %5830 = vst [vmem:[%s5720 + $0xb4] sm:$0xf] %v5829
      %5831 = vst [vmem:[%s5720 + $0xb8] sm:$0xf] %v5670
      %v5832 = vld [vmem:[%s5720 + $0xbc] sm:$0x1]
      %v5833 = vsel %vm5191, %v5671, %v5832
      %5834 = vst [vmem:[%s5720 + $0xbc] sm:$0x1] %v5833
      %v5835 = vld [vmem:[#allocation2] sm:$0xf]
      %v5836 = vld [vmem:[#allocation2 + $0x4] sm:$0xf]
      %v5837 = vld [vmem:[#allocation2 + $0xc] sm:$0xf]
      %v5838 = vld [vmem:[#allocation2 + $0x10] sm:$0xf]
      %v5839 = vld [vmem:[#allocation2 + $0x18] sm:$0xf]
      %v5840 = vld [vmem:[#allocation2 + $0x1c] sm:$0xf]
      %v5841 = vld [vmem:[#allocation2 + $0x24] sm:$0xf]
      %v5842 = vld [vmem:[#allocation2 + $0x28] sm:$0xf]
      %v5843 = vld [vmem:[#allocation2 + $0x30] sm:$0xf]
      %v5844 = vld [vmem:[#allocation2 + $0x34] sm:$0xf]
      %v5845 = vld [vmem:[#allocation2 + $0x3c] sm:$0xf]
      %v5846 = vld [vmem:[#allocation2 + $0x40] sm:$0xf]
      %v5847 = vld [vmem:[#allocation2 + $0x48] sm:$0xf]
      %v5848 = vld [vmem:[#allocation2 + $0x4c] sm:$0xf]
      %v5849 = vld [vmem:[#allocation2 + $0x54] sm:$0xf]
      %v5850 = vld [vmem:[#allocation2 + $0x58] sm:$0xf]
      %v5851 = vld [vmem:[#allocation2 + $0x60] sm:$0xf]
      %v5852 = vld [vmem:[#allocation2 + $0x64] sm:$0xf]
      %v5853 = vld [vmem:[#allocation2 + $0x6c] sm:$0xf]
      %v5854 = vld [vmem:[#allocation2 + $0x70] sm:$0xf]
      %v5855 = vld [vmem:[#allocation2 + $0x78] sm:$0xf]
      %v5856 = vld [vmem:[#allocation2 + $0x7c] sm:$0xf]
      %v5857 = vld [vmem:[#allocation2 + $0x84] sm:$0xf]
      %v5858 = vld [vmem:[#allocation2 + $0x88] sm:$0xf]
      %v5859 = vld [vmem:[#allocation2 + $0x90] sm:$0xf]
      %v5860 = vld [vmem:[#allocation2 + $0x94] sm:$0xf]
      %v5861 = vld [vmem:[#allocation2 + $0x9c] sm:$0xf]
      %v5862 = vld [vmem:[#allocation2 + $0xa0] sm:$0xf]
      %v5863 = vld [vmem:[#allocation2 + $0xa8] sm:$0xf]
      %v5864 = vld [vmem:[#allocation2 + $0xac] sm:$0xf]
      %v5865 = vld [vmem:[#allocation2 + $0xb4] sm:$0xf]
      %v5866 = vld [vmem:[#allocation2 + $0xb8] sm:$0xf]
      %v5867 = vld [vmem:[%s2] sm:$0xf]
      %v5868 = vld [vmem:[%s2 + $0x4] sm:$0xf]
      %v5869 = vld [vmem:[%s2 + $0x8] sm:$0xf]
      %v5870 = vld [vmem:[%s2 + $0xc] sm:$0xf]
      %v5871 = vld [vmem:[%s2 + $0x10] sm:$0xf]
      %v5872 = vld [vmem:[%s2 + $0x14] sm:$0xf]
      %v5873 = vld [vmem:[%s2 + $0x18] sm:$0xf]
      %v5874 = vld [vmem:[%s2 + $0x1c] sm:$0xf]
      %v5875 = vld [vmem:[%s2 + $0x20] sm:$0xf]
      %v5876 = vld [vmem:[%s2 + $0x24] sm:$0xf]
      %v5877 = vld [vmem:[%s2 + $0x28] sm:$0xf]
      %v5878 = vld [vmem:[%s2 + $0x2c] sm:$0xf]
      %v5879 = vld [vmem:[%s2 + $0x30] sm:$0xf]
      %v5880 = vld [vmem:[%s2 + $0x34] sm:$0xf]
      %v5881 = vld [vmem:[%s2 + $0x38] sm:$0xf]
      %v5882 = vld [vmem:[%s2 + $0x3c] sm:$0xf]
      %v5883 = vld [vmem:[#allocation2 + $0x8] sm:$0x1]
      %v5884 = vld [vmem:[#allocation2 + $0x14] sm:$0x1]
      %v5885 = vld [vmem:[#allocation2 + $0x20] sm:$0x1]
      %v5886 = vld [vmem:[#allocation2 + $0x2c] sm:$0x1]
      %v5887 = vld [vmem:[#allocation2 + $0x38] sm:$0x1]
      %v5888 = vld [vmem:[#allocation2 + $0x44] sm:$0x1]
      %v5889 = vld [vmem:[#allocation2 + $0x50] sm:$0x1]
      %v5890 = vld [vmem:[#allocation2 + $0x5c] sm:$0x1]
      %v5891 = vld [vmem:[#allocation2 + $0x68] sm:$0x1]
      %v5892 = vld [vmem:[#allocation2 + $0x74] sm:$0x1]
      %v5893 = vld [vmem:[#allocation2 + $0x80] sm:$0x1]
      %v5894 = vld [vmem:[#allocation2 + $0x8c] sm:$0x1]
      %v5895 = vld [vmem:[#allocation2 + $0x98] sm:$0x1]
      %v5896 = vld [vmem:[#allocation2 + $0xa4] sm:$0x1]
      %v5897 = vld [vmem:[#allocation2 + $0xb0] sm:$0x1]
      %v5898 = vld [vmem:[#allocation2 + $0xbc] sm:$0x1]
      %v5900 = vshrl.u32 %v5835, 16
      %v5902 = vrot.slane %v5900, 4
      %v5903 = vshll.u32 %v5835, 16
      %v5905 = vrot.slane %v5903, 5
      %v5906 = vor.u32 %v5902, %v5905
      %v5907 = vrot.slane %v5906, 4
      %v5909 = vshll.u32 %v5836, 16
      %v5911 = vrot.slane %v5909, 5
      %v5912 = vsel %vm238, %v5907, %v5911
      %v5913 = vshrl.u32 %v5836, 16
      %v5915 = vrot.slane %v5913, 4
      %v5916 = vor.u32 %v5915, %v5911
      %v5917 = vrot.slane %v5916, 4
      %v5919 = vshll.u32 %v5883, 16
      %v5921 = vrot.slane %v5919, 5
      %v5922 = vsel %vm238, %v5917, %v5921
      %v5924 = vshrl.u32 %v5837, 16
      %v5926 = vrot.slane %v5924, 4
      %v5927 = vshll.u32 %v5837, 16
      %v5929 = vrot.slane %v5927, 5
      %v5930 = vor.u32 %v5926, %v5929
      %v5931 = vrot.slane %v5930, 4
      %v5933 = vshll.u32 %v5838, 16
      %v5935 = vrot.slane %v5933, 5
      %v5936 = vsel %vm238, %v5931, %v5935
      %v5937 = vshrl.u32 %v5838, 16
      %v5939 = vrot.slane %v5937, 4
      %v5940 = vor.u32 %v5939, %v5935
      %v5941 = vrot.slane %v5940, 4
      %v5943 = vshll.u32 %v5884, 16
      %v5945 = vrot.slane %v5943, 5
      %v5946 = vsel %vm238, %v5941, %v5945
      %v5948 = vshrl.u32 %v5839, 16
      %v5950 = vrot.slane %v5948, 4
      %v5951 = vshll.u32 %v5839, 16
      %v5953 = vrot.slane %v5951, 5
      %v5954 = vor.u32 %v5950, %v5953
      %v5955 = vrot.slane %v5954, 4
      %v5957 = vshll.u32 %v5840, 16
      %v5959 = vrot.slane %v5957, 5
      %v5960 = vsel %vm238, %v5955, %v5959
      %v5961 = vshrl.u32 %v5840, 16
      %v5963 = vrot.slane %v5961, 4
      %v5964 = vor.u32 %v5963, %v5959
      %v5965 = vrot.slane %v5964, 4
      %v5967 = vshll.u32 %v5885, 16
      %v5969 = vrot.slane %v5967, 5
      %v5970 = vsel %vm238, %v5965, %v5969
      %v5972 = vshrl.u32 %v5841, 16
      %v5974 = vrot.slane %v5972, 4
      %v5975 = vshll.u32 %v5841, 16
      %v5977 = vrot.slane %v5975, 5
      %v5978 = vor.u32 %v5974, %v5977
      %v5979 = vrot.slane %v5978, 4
      %v5981 = vshll.u32 %v5842, 16
      %v5983 = vrot.slane %v5981, 5
      %v5984 = vsel %vm238, %v5979, %v5983
      %v5985 = vshrl.u32 %v5842, 16
      %v5987 = vrot.slane %v5985, 4
      %v5988 = vor.u32 %v5987, %v5983
      %v5989 = vrot.slane %v5988, 4
      %v5991 = vshll.u32 %v5886, 16
      %v5993 = vrot.slane %v5991, 5
      %v5994 = vsel %vm238, %v5989, %v5993
      %v5996 = vshrl.u32 %v5843, 16
      %v5998 = vrot.slane %v5996, 4
      %v5999 = vshll.u32 %v5843, 16
      %v6001 = vrot.slane %v5999, 5
      %v6002 = vor.u32 %v5998, %v6001
      %v6003 = vrot.slane %v6002, 4
      %v6005 = vshll.u32 %v5844, 16
      %v6007 = vrot.slane %v6005, 5
      %v6008 = vsel %vm238, %v6003, %v6007
      %v6009 = vshrl.u32 %v5844, 16
      %v6011 = vrot.slane %v6009, 4
      %v6012 = vor.u32 %v6011, %v6007
      %v6013 = vrot.slane %v6012, 4
      %v6015 = vshll.u32 %v5887, 16
      %v6017 = vrot.slane %v6015, 5
      %v6018 = vsel %vm238, %v6013, %v6017
      %v6020 = vshrl.u32 %v5845, 16
      %v6022 = vrot.slane %v6020, 4
      %v6023 = vshll.u32 %v5845, 16
      %v6025 = vrot.slane %v6023, 5
      %v6026 = vor.u32 %v6022, %v6025
      %v6027 = vrot.slane %v6026, 4
      %v6029 = vshll.u32 %v5846, 16
      %v6031 = vrot.slane %v6029, 5
      %v6032 = vsel %vm238, %v6027, %v6031
      %v6033 = vshrl.u32 %v5846, 16
      %v6035 = vrot.slane %v6033, 4
      %v6036 = vor.u32 %v6035, %v6031
      %v6037 = vrot.slane %v6036, 4
      %v6039 = vshll.u32 %v5888, 16
      %v6041 = vrot.slane %v6039, 5
      %v6042 = vsel %vm238, %v6037, %v6041
      %v6044 = vshrl.u32 %v5847, 16
      %v6046 = vrot.slane %v6044, 4
      %v6047 = vshll.u32 %v5847, 16
      %v6049 = vrot.slane %v6047, 5
      %v6050 = vor.u32 %v6046, %v6049
      %v6051 = vrot.slane %v6050, 4
      %v6053 = vshll.u32 %v5848, 16
      %v6055 = vrot.slane %v6053, 5
      %v6056 = vsel %vm238, %v6051, %v6055
      %v6057 = vshrl.u32 %v5848, 16
      %v6059 = vrot.slane %v6057, 4
      %v6060 = vor.u32 %v6059, %v6055
      %v6061 = vrot.slane %v6060, 4
      %v6063 = vshll.u32 %v5889, 16
      %v6065 = vrot.slane %v6063, 5
      %v6066 = vsel %vm238, %v6061, %v6065
      %v6068 = vshrl.u32 %v5849, 16
      %v6070 = vrot.slane %v6068, 4
      %v6071 = vshll.u32 %v5849, 16
      %v6073 = vrot.slane %v6071, 5
      %v6074 = vor.u32 %v6070, %v6073
      %v6075 = vrot.slane %v6074, 4
      %v6077 = vshll.u32 %v5850, 16
      %v6079 = vrot.slane %v6077, 5
      %v6080 = vsel %vm238, %v6075, %v6079
      %v6081 = vshrl.u32 %v5850, 16
      %v6083 = vrot.slane %v6081, 4
      %v6084 = vor.u32 %v6083, %v6079
      %v6085 = vrot.slane %v6084, 4
      %v6087 = vshll.u32 %v5890, 16
      %v6089 = vrot.slane %v6087, 5
      %v6090 = vsel %vm238, %v6085, %v6089
      %v6092 = vshrl.u32 %v5851, 16
      %v6094 = vrot.slane %v6092, 4
      %v6095 = vshll.u32 %v5851, 16
      %v6097 = vrot.slane %v6095, 5
      %v6098 = vor.u32 %v6094, %v6097
      %v6099 = vrot.slane %v6098, 4
      %v6101 = vshll.u32 %v5852, 16
      %v6103 = vrot.slane %v6101, 5
      %v6104 = vsel %vm238, %v6099, %v6103
      %v6105 = vshrl.u32 %v5852, 16
      %v6107 = vrot.slane %v6105, 4
      %v6108 = vor.u32 %v6107, %v6103
      %v6109 = vrot.slane %v6108, 4
      %v6111 = vshll.u32 %v5891, 16
      %v6113 = vrot.slane %v6111, 5
      %v6114 = vsel %vm238, %v6109, %v6113
      %v6116 = vshrl.u32 %v5853, 16
      %v6118 = vrot.slane %v6116, 4
      %v6119 = vshll.u32 %v5853, 16
      %v6121 = vrot.slane %v6119, 5
      %v6122 = vor.u32 %v6118, %v6121
      %v6123 = vrot.slane %v6122, 4
      %v6125 = vshll.u32 %v5854, 16
      %v6127 = vrot.slane %v6125, 5
      %v6128 = vsel %vm238, %v6123, %v6127
      %v6129 = vshrl.u32 %v5854, 16
      %v6131 = vrot.slane %v6129, 4
      %v6132 = vor.u32 %v6131, %v6127
      %v6133 = vrot.slane %v6132, 4
      %v6135 = vshll.u32 %v5892, 16
      %v6137 = vrot.slane %v6135, 5
      %v6138 = vsel %vm238, %v6133, %v6137
      %v6140 = vshrl.u32 %v5855, 16
      %v6142 = vrot.slane %v6140, 4
      %v6143 = vshll.u32 %v5855, 16
      %v6145 = vrot.slane %v6143, 5
      %v6146 = vor.u32 %v6142, %v6145
      %v6147 = vrot.slane %v6146, 4
      %v6149 = vshll.u32 %v5856, 16
      %v6151 = vrot.slane %v6149, 5
      %v6152 = vsel %vm238, %v6147, %v6151
      %v6153 = vshrl.u32 %v5856, 16
      %v6155 = vrot.slane %v6153, 4
      %v6156 = vor.u32 %v6155, %v6151
      %v6157 = vrot.slane %v6156, 4
      %v6159 = vshll.u32 %v5893, 16
      %v6161 = vrot.slane %v6159, 5
      %v6162 = vsel %vm238, %v6157, %v6161
      %v6164 = vshrl.u32 %v5857, 16
      %v6166 = vrot.slane %v6164, 4
      %v6167 = vshll.u32 %v5857, 16
      %v6169 = vrot.slane %v6167, 5
      %v6170 = vor.u32 %v6166, %v6169
      %v6171 = vrot.slane %v6170, 4
      %v6173 = vshll.u32 %v5858, 16
      %v6175 = vrot.slane %v6173, 5
      %v6176 = vsel %vm238, %v6171, %v6175
      %v6177 = vshrl.u32 %v5858, 16
      %v6179 = vrot.slane %v6177, 4
      %v6180 = vor.u32 %v6179, %v6175
      %v6181 = vrot.slane %v6180, 4
      %v6183 = vshll.u32 %v5894, 16
      %v6185 = vrot.slane %v6183, 5
      %v6186 = vsel %vm238, %v6181, %v6185
      %v6188 = vshrl.u32 %v5859, 16
      %v6190 = vrot.slane %v6188, 4
      %v6191 = vshll.u32 %v5859, 16
      %v6193 = vrot.slane %v6191, 5
      %v6194 = vor.u32 %v6190, %v6193
      %v6195 = vrot.slane %v6194, 4
      %v6197 = vshll.u32 %v5860, 16
      %v6199 = vrot.slane %v6197, 5
      %v6200 = vsel %vm238, %v6195, %v6199
      %v6201 = vshrl.u32 %v5860, 16
      %v6203 = vrot.slane %v6201, 4
      %v6204 = vor.u32 %v6203, %v6199
      %v6205 = vrot.slane %v6204, 4
      %v6207 = vshll.u32 %v5895, 16
      %v6209 = vrot.slane %v6207, 5
      %v6210 = vsel %vm238, %v6205, %v6209
      %v6212 = vshrl.u32 %v5861, 16
      %v6214 = vrot.slane %v6212, 4
      %v6215 = vshll.u32 %v5861, 16
      %v6217 = vrot.slane %v6215, 5
      %v6218 = vor.u32 %v6214, %v6217
      %v6219 = vrot.slane %v6218, 4
      %v6221 = vshll.u32 %v5862, 16
      %v6223 = vrot.slane %v6221, 5
      %v6224 = vsel %vm238, %v6219, %v6223
      %v6225 = vshrl.u32 %v5862, 16
      %v6227 = vrot.slane %v6225, 4
      %v6228 = vor.u32 %v6227, %v6223
      %v6229 = vrot.slane %v6228, 4
      %v6231 = vshll.u32 %v5896, 16
      %v6233 = vrot.slane %v6231, 5
      %v6234 = vsel %vm238, %v6229, %v6233
      %v6236 = vshrl.u32 %v5863, 16
      %v6238 = vrot.slane %v6236, 4
      %v6239 = vshll.u32 %v5863, 16
      %v6241 = vrot.slane %v6239, 5
      %v6242 = vor.u32 %v6238, %v6241
      %v6243 = vrot.slane %v6242, 4
      %v6245 = vshll.u32 %v5864, 16
      %v6247 = vrot.slane %v6245, 5
      %v6248 = vsel %vm238, %v6243, %v6247
      %v6249 = vshrl.u32 %v5864, 16
      %v6251 = vrot.slane %v6249, 4
      %v6252 = vor.u32 %v6251, %v6247
      %v6253 = vrot.slane %v6252, 4
      %v6255 = vshll.u32 %v5897, 16
      %v6257 = vrot.slane %v6255, 5
      %v6258 = vsel %vm238, %v6253, %v6257
      %v6260 = vshrl.u32 %v5865, 16
      %v6262 = vrot.slane %v6260, 4
      %v6263 = vshll.u32 %v5865, 16
      %v6265 = vrot.slane %v6263, 5
      %v6266 = vor.u32 %v6262, %v6265
      %v6267 = vrot.slane %v6266, 4
      %v6269 = vshll.u32 %v5866, 16
      %v6271 = vrot.slane %v6269, 5
      %v6272 = vsel %vm238, %v6267, %v6271
      %v6273 = vshrl.u32 %v5866, 16
      %v6275 = vrot.slane %v6273, 4
      %v6276 = vor.u32 %v6275, %v6271
      %v6277 = vrot.slane %v6276, 4
      %v6279 = vshll.u32 %v5898, 16
      %v6281 = vrot.slane %v6279, 5
      %v6282 = vsel %vm238, %v6277, %v6281
      %v6283 = vld [vmem:[%s2 + $0x40] sm:$0xf]
      %v6284 = vld [vmem:[%s2 + $0x44] sm:$0xf]
      %v6285 = vld [vmem:[%s2 + $0x48] sm:$0xf]
      %v6286 = vld [vmem:[%s2 + $0x4c] sm:$0xf]
      %v6287 = vld [vmem:[%s2 + $0x50] sm:$0xf]
      %v6288 = vld [vmem:[%s2 + $0x54] sm:$0xf]
      %v6289 = vld [vmem:[%s2 + $0x58] sm:$0xf]
      %v6290 = vld [vmem:[%s2 + $0x5c] sm:$0xf]
      %v6291 = vld [vmem:[%s2 + $0x60] sm:$0xf]
      %v6292 = vld [vmem:[%s2 + $0x64] sm:$0xf]
      %v6293 = vld [vmem:[%s2 + $0x68] sm:$0xf]
      %v6294 = vld [vmem:[%s2 + $0x6c] sm:$0xf]
      %v6295 = vld [vmem:[%s2 + $0x70] sm:$0xf]
      %v6296 = vld [vmem:[%s2 + $0x74] sm:$0xf]
      %v6297 = vld [vmem:[%s2 + $0x78] sm:$0xf]
      %v6298 = vld [vmem:[%s2 + $0x7c] sm:$0xf]
      %v6299 = vunpack.c.l.b16 %v5912
      %v6300 = vunpack.c.l.b16 %v5922
      %v6301 = vunpack.c.l.b16 %v5936
      %v6302 = vunpack.c.l.b16 %v5946
      %v6303 = vunpack.c.l.b16 %v5960
      %v6304 = vunpack.c.l.b16 %v5970
      %v6305 = vunpack.c.l.b16 %v5984
      %v6306 = vunpack.c.l.b16 %v5994
      %v6307 = vunpack.c.l.b16 %v6008
      %v6308 = vunpack.c.l.b16 %v6018
      %v6309 = vunpack.c.l.b16 %v6032
      %v6310 = vunpack.c.l.b16 %v6042
      %v6311 = vunpack.c.l.b16 %v6056
      %v6312 = vunpack.c.l.b16 %v6066
      %v6313 = vunpack.c.l.b16 %v6080
      %v6314 = vunpack.c.l.b16 %v6090
      %v6315 = vunpack.c.l.b16 %v6104
      %v6316 = vunpack.c.l.b16 %v6114
      %v6317 = vunpack.c.l.b16 %v6128
      %v6318 = vunpack.c.l.b16 %v6138
      %v6319 = vunpack.c.l.b16 %v6152
      %v6320 = vunpack.c.l.b16 %v6162
      %v6321 = vunpack.c.l.b16 %v6176
      %v6322 = vunpack.c.l.b16 %v6186
      %v6323 = vunpack.c.l.b16 %v6200
      %v6324 = vunpack.c.l.b16 %v6210
      %v6325 = vunpack.c.l.b16 %v6224
      %v6326 = vunpack.c.l.b16 %v6234
      %v6327 = vunpack.c.l.b16 %v6248
      %v6328 = vunpack.c.l.b16 %v6258
      %v6329 = vunpack.c.l.b16 %v6272
      %v6330 = vunpack.c.l.b16 %v6282
      %v6331 = vpack.c.b16 %v6300, %v6299
      %v6332 = vpack.c.b16 %v6302, %v6301
      %v6333 = vpack.c.b16 %v6304, %v6303
      %v6334 = vpack.c.b16 %v6306, %v6305
      %v6335 = vpack.c.b16 %v6308, %v6307
      %v6336 = vpack.c.b16 %v6310, %v6309
      %v6337 = vpack.c.b16 %v6312, %v6311
      %v6338 = vpack.c.b16 %v6314, %v6313
      %v6339 = vpack.c.b16 %v6316, %v6315
      %v6340 = vpack.c.b16 %v6318, %v6317
      %v6341 = vpack.c.b16 %v6320, %v6319
      %v6342 = vpack.c.b16 %v6322, %v6321
      %v6343 = vpack.c.b16 %v6324, %v6323
      %v6344 = vpack.c.b16 %v6326, %v6325
      %v6345 = vpack.c.b16 %v6328, %v6327
      %v6346 = vpack.c.b16 %v6330, %v6329
      %v6379 = vunpack.c.l.b16 %v6283
      %v6380 = vunpack.c.l.b16 %v6284
      %v6381 = vunpack.c.l.b16 %v6285
      %v6382 = vunpack.c.l.b16 %v6286
      %v6383 = vunpack.c.l.b16 %v6287
      %v6384 = vunpack.c.l.b16 %v6288
      %v6385 = vunpack.c.l.b16 %v6289
      %v6386 = vunpack.c.l.b16 %v6290
      %v6387 = vunpack.c.l.b16 %v6291
      %v6388 = vunpack.c.l.b16 %v6292
      %v6389 = vunpack.c.l.b16 %v6293
      %v6390 = vunpack.c.l.b16 %v6294
      %v6391 = vunpack.c.l.b16 %v6295
      %v6392 = vunpack.c.l.b16 %v6296
      %v6393 = vunpack.c.l.b16 %v6297
      %v6394 = vunpack.c.l.b16 %v6298
      %v6395 = vpack.c.b16 %v6380, %v6379
      %v6396 = vpack.c.b16 %v6382, %v6381
      %v6397 = vpack.c.b16 %v6384, %v6383
      %v6398 = vpack.c.b16 %v6386, %v6385
      %v6399 = vpack.c.b16 %v6388, %v6387
      %v6400 = vpack.c.b16 %v6390, %v6389
      %v6401 = vpack.c.b16 %v6392, %v6391
      %v6402 = vpack.c.b16 %v6394, %v6393
      %6411 = vmatprep.subr.bf16.mxu0 0
      %6412 = vmatpush1.bf16.msra.mxu0 %v6395
      %6413 = vmatprep.subr.bf16.mxu0 0
      %6414 = vmatpush1.bf16.msra.mxu0 %v6396
      %6415 = vmatprep.subr.bf16.mxu0 0
      %6416 = vmatpush1.bf16.msra.mxu0 %v6397
      %6417 = vmatprep.subr.bf16.mxu0 0
      %6418 = vmatpush1.bf16.msra.mxu0 %v6398
      %6419 = vmatprep.subr.bf16.mxu0 0
      %6420 = vmatpush1.bf16.msra.mxu0 %v6399
      %6421 = vmatprep.subr.bf16.mxu0 0
      %6422 = vmatpush1.bf16.msra.mxu0 %v6400
      %6423 = vmatprep.subr.bf16.mxu0 0
      %6424 = vmatpush1.bf16.msra.mxu0 %v6401
      %6425 = vmatprep.subr.bf16.mxu0 0
      %6426 = vmatpush1.bf16.msra.mxu0 %v6402
      %6427 = vmatprep.subr.bf16.mxu0 0
      %6428 = vmatpush1.bf16.msra.mxu0 0
      %6429 = vmatprep.subr.bf16.mxu0 0
      %6430 = vmatpush1.bf16.msra.mxu0 0
      %6431 = vmatprep.subr.bf16.mxu0 0
      %6432 = vmatpush1.bf16.msra.mxu0 0
      %6433 = vmatprep.subr.bf16.mxu0 0
      %6434 = vmatpush1.bf16.msra.mxu0 0
      %6435 = vmatprep.subr.bf16.mxu0 0
      %6436 = vmatpush1.bf16.msra.mxu0 0
      %6437 = vmatprep.subr.bf16.mxu0 0
      %6438 = vmatpush1.bf16.msra.mxu0 0
      %6439 = vmatprep.subr.bf16.mxu0 0
      %6440 = vmatpush1.bf16.msra.mxu0 0
      %6441 = vmatprep.subr.bf16.mxu0 0
      %6442 = vmatpush1.bf16.msra.mxu0 0
      %6443 = vmatprep.mubr.bf16.mxu0 0
      %6444 = vmatmul.mubr.bf16.gmra.mrb[0].mxu0 %v6331
      %v6445 = vpop.f32.mrb[0].mxu0
      %v6446 = vadd.f32 0.0, %v6445
      %v6447 = vpop.f32.mrb[0].mxu0
      %v6448 = vpop.f32.mrb[0].mxu0
      %v6449 = vadd.f32 0.0, %v6448
      %v6450 = vpop.f32.mrb[0].mxu0
      %6451 = vmatprep.mubr.bf16.mxu0 0
      %6452 = vmatmul.mubr.bf16.gmra.mrb[0].mxu0 %v6332
      %v6453 = vpop.f32.mrb[0].mxu0
      %v6454 = vadd.f32 0.0, %v6453
      %v6455 = vpop.f32.mrb[0].mxu0
      %v6456 = vpop.f32.mrb[0].mxu0
      %v6457 = vadd.f32 0.0, %v6456
      %v6458 = vpop.f32.mrb[0].mxu0
      %6459 = vmatprep.mubr.bf16.mxu0 0
      %6460 = vmatmul.mubr.bf16.gmra.mrb[0].mxu0 %v6333
      %v6461 = vpop.f32.mrb[0].mxu0
      %v6462 = vadd.f32 0.0, %v6461
      %v6463 = vpop.f32.mrb[0].mxu0
      %v6464 = vpop.f32.mrb[0].mxu0
      %v6465 = vadd.f32 0.0, %v6464
      %v6466 = vpop.f32.mrb[0].mxu0
      %6467 = vmatprep.mubr.bf16.mxu0 0
      %6468 = vmatmul.mubr.bf16.gmra.mrb[0].mxu0 %v6334
      %v6469 = vpop.f32.mrb[0].mxu0
      %v6470 = vadd.f32 0.0, %v6469
      %v6471 = vpop.f32.mrb[0].mxu0
      %v6472 = vpop.f32.mrb[0].mxu0
      %v6473 = vadd.f32 0.0, %v6472
      %v6474 = vpop.f32.mrb[0].mxu0
      %6475 = vmatprep.mubr.bf16.mxu0 0
      %6476 = vmatmul.mubr.bf16.gmra.mrb[0].mxu0 %v6335
      %v6477 = vpop.f32.mrb[0].mxu0
      %v6478 = vadd.f32 0.0, %v6477
      %v6479 = vpop.f32.mrb[0].mxu0
      %v6480 = vpop.f32.mrb[0].mxu0
      %v6481 = vadd.f32 0.0, %v6480
      %v6482 = vpop.f32.mrb[0].mxu0
      %6483 = vmatprep.mubr.bf16.mxu0 0
      %6484 = vmatmul.mubr.bf16.gmra.mrb[0].mxu0 %v6336
      %v6485 = vpop.f32.mrb[0].mxu0
      %v6486 = vadd.f32 0.0, %v6485
      %v6487 = vpop.f32.mrb[0].mxu0
      %v6488 = vpop.f32.mrb[0].mxu0
      %v6489 = vadd.f32 0.0, %v6488
      %v6490 = vpop.f32.mrb[0].mxu0
      %6491 = vmatprep.mubr.bf16.mxu0 0
      %6492 = vmatmul.mubr.bf16.gmra.mrb[0].mxu0 %v6337
      %v6493 = vpop.f32.mrb[0].mxu0
      %v6494 = vadd.f32 0.0, %v6493
      %v6495 = vpop.f32.mrb[0].mxu0
      %v6496 = vpop.f32.mrb[0].mxu0
      %v6497 = vadd.f32 0.0, %v6496
      %v6498 = vpop.f32.mrb[0].mxu0
      %6499 = vmatprep.mubr.bf16.mxu0 0
      %6500 = vmatmul.mubr.bf16.gmra.mrb[0].mxu0 %v6338
      %v6501 = vpop.f32.mrb[0].mxu0
      %v6502 = vadd.f32 0.0, %v6501
      %v6503 = vpop.f32.mrb[0].mxu0
      %v6504 = vpop.f32.mrb[0].mxu0
      %v6505 = vadd.f32 0.0, %v6504
      %v6506 = vpop.f32.mrb[0].mxu0
      %6507 = vmatprep.mubr.bf16.mxu0 0
      %6508 = vmatmul.mubr.bf16.gmra.mrb[0].mxu0 %v6339
      %v6509 = vpop.f32.mrb[0].mxu0
      %v6510 = vadd.f32 0.0, %v6509
      %v6511 = vpop.f32.mrb[0].mxu0
      %v6512 = vpop.f32.mrb[0].mxu0
      %v6513 = vadd.f32 0.0, %v6512
      %v6514 = vpop.f32.mrb[0].mxu0
      %6515 = vmatprep.mubr.bf16.mxu0 0
      %6516 = vmatmul.mubr.bf16.gmra.mrb[0].mxu0 %v6340
      %v6517 = vpop.f32.mrb[0].mxu0
      %v6518 = vadd.f32 0.0, %v6517
      %v6519 = vpop.f32.mrb[0].mxu0
      %v6520 = vpop.f32.mrb[0].mxu0
      %v6521 = vadd.f32 0.0, %v6520
      %v6522 = vpop.f32.mrb[0].mxu0
      %6523 = vmatprep.mubr.bf16.mxu0 0
      %6524 = vmatmul.mubr.bf16.gmra.mrb[0].mxu0 %v6341
      %v6525 = vpop.f32.mrb[0].mxu0
      %v6526 = vadd.f32 0.0, %v6525
      %v6527 = vpop.f32.mrb[0].mxu0
      %v6528 = vpop.f32.mrb[0].mxu0
      %v6529 = vadd.f32 0.0, %v6528
      %v6530 = vpop.f32.mrb[0].mxu0
      %6531 = vmatprep.mubr.bf16.mxu0 0
      %6532 = vmatmul.mubr.bf16.gmra.mrb[0].mxu0 %v6342
      %v6533 = vpop.f32.mrb[0].mxu0
      %v6534 = vadd.f32 0.0, %v6533
      %v6535 = vpop.f32.mrb[0].mxu0
      %v6536 = vpop.f32.mrb[0].mxu0
      %v6537 = vadd.f32 0.0, %v6536
      %v6538 = vpop.f32.mrb[0].mxu0
      %6539 = vmatprep.mubr.bf16.mxu0 0
      %6540 = vmatmul.mubr.bf16.gmra.mrb[0].mxu0 %v6343
      %v6541 = vpop.f32.mrb[0].mxu0
      %v6542 = vadd.f32 0.0, %v6541
      %v6543 = vpop.f32.mrb[0].mxu0
      %v6544 = vpop.f32.mrb[0].mxu0
      %v6545 = vadd.f32 0.0, %v6544
      %v6546 = vpop.f32.mrb[0].mxu0
      %6547 = vmatprep.mubr.bf16.mxu0 0
      %6548 = vmatmul.mubr.bf16.gmra.mrb[0].mxu0 %v6344
      %v6549 = vpop.f32.mrb[0].mxu0
      %v6550 = vadd.f32 0.0, %v6549
      %v6551 = vpop.f32.mrb[0].mxu0
      %v6552 = vpop.f32.mrb[0].mxu0
      %v6553 = vadd.f32 0.0, %v6552
      %v6554 = vpop.f32.mrb[0].mxu0
      %6555 = vmatprep.mubr.bf16.mxu0 0
      %6556 = vmatmul.mubr.bf16.gmra.mrb[0].mxu0 %v6345
      %v6557 = vpop.f32.mrb[0].mxu0
      %v6558 = vadd.f32 0.0, %v6557
      %v6559 = vpop.f32.mrb[0].mxu0
      %v6560 = vpop.f32.mrb[0].mxu0
      %v6561 = vadd.f32 0.0, %v6560
      %v6562 = vpop.f32.mrb[0].mxu0
      %6563 = vmatprep.mubr.bf16.mxu0 0
      %6564 = vmatmul.mubr.bf16.gmra.mrb[0].mxu0 %v6346
      %v6565 = vpop.f32.mrb[0].mxu0
      %v6566 = vadd.f32 0.0, %v6565
      %v6567 = vpop.f32.mrb[0].mxu0
      %v6568 = vpop.f32.mrb[0].mxu0
      %v6569 = vadd.f32 0.0, %v6568
      %v6570 = vpop.f32.mrb[0].mxu0
      %6571 = vdwg.mxu0
      %v6604 = vunpack.c.l.b16 %v5835
      %v6605 = vunpack.c.l.b16 %v5836
      %v6606 = vunpack.c.l.b16 %v5837
      %v6607 = vunpack.c.l.b16 %v5838
      %v6608 = vunpack.c.l.b16 %v5839
      %v6609 = vunpack.c.l.b16 %v5840
      %v6610 = vunpack.c.l.b16 %v5841
      %v6611 = vunpack.c.l.b16 %v5842
      %v6612 = vunpack.c.l.b16 %v5843
      %v6613 = vunpack.c.l.b16 %v5844
      %v6614 = vunpack.c.l.b16 %v5845
      %v6615 = vunpack.c.l.b16 %v5846
      %v6616 = vunpack.c.l.b16 %v5847
      %v6617 = vunpack.c.l.b16 %v5848
      %v6618 = vunpack.c.l.b16 %v5849
      %v6619 = vunpack.c.l.b16 %v5850
      %v6620 = vunpack.c.l.b16 %v5851
      %v6621 = vunpack.c.l.b16 %v5852
      %v6622 = vunpack.c.l.b16 %v5853
      %v6623 = vunpack.c.l.b16 %v5854
      %v6624 = vunpack.c.l.b16 %v5855
      %v6625 = vunpack.c.l.b16 %v5856
      %v6626 = vunpack.c.l.b16 %v5857
      %v6627 = vunpack.c.l.b16 %v5858
      %v6628 = vunpack.c.l.b16 %v5859
      %v6629 = vunpack.c.l.b16 %v5860
      %v6630 = vunpack.c.l.b16 %v5861
      %v6631 = vunpack.c.l.b16 %v5862
      %v6632 = vunpack.c.l.b16 %v5863
      %v6633 = vunpack.c.l.b16 %v5864
      %v6634 = vunpack.c.l.b16 %v5865
      %v6635 = vunpack.c.l.b16 %v5866
      %v6636 = vpack.c.b16 %v6605, %v6604
      %v6637 = vpack.c.b16 %v6607, %v6606
      %v6638 = vpack.c.b16 %v6609, %v6608
      %v6639 = vpack.c.b16 %v6611, %v6610
      %v6640 = vpack.c.b16 %v6613, %v6612
      %v6641 = vpack.c.b16 %v6615, %v6614
      %v6642 = vpack.c.b16 %v6617, %v6616
      %v6643 = vpack.c.b16 %v6619, %v6618
      %v6644 = vpack.c.b16 %v6621, %v6620
      %v6645 = vpack.c.b16 %v6623, %v6622
      %v6646 = vpack.c.b16 %v6625, %v6624
      %v6647 = vpack.c.b16 %v6627, %v6626
      %v6648 = vpack.c.b16 %v6629, %v6628
      %v6649 = vpack.c.b16 %v6631, %v6630
      %v6650 = vpack.c.b16 %v6633, %v6632
      %v6651 = vpack.c.b16 %v6635, %v6634
      %v6684 = vunpack.c.l.b16 %v5867
      %v6685 = vunpack.c.l.b16 %v5868
      %v6686 = vunpack.c.l.b16 %v5869
      %v6687 = vunpack.c.l.b16 %v5870
      %v6688 = vunpack.c.l.b16 %v5871
      %v6689 = vunpack.c.l.b16 %v5872
      %v6690 = vunpack.c.l.b16 %v5873
      %v6691 = vunpack.c.l.b16 %v5874
      %v6692 = vunpack.c.l.b16 %v5875
      %v6693 = vunpack.c.l.b16 %v5876
      %v6694 = vunpack.c.l.b16 %v5877
      %v6695 = vunpack.c.l.b16 %v5878
      %v6696 = vunpack.c.l.b16 %v5879
      %v6697 = vunpack.c.l.b16 %v5880
      %v6698 = vunpack.c.l.b16 %v5881
      %v6699 = vunpack.c.l.b16 %v5882
      %v6700 = vpack.c.b16 %v6685, %v6684
      %v6701 = vpack.c.b16 %v6687, %v6686
      %v6702 = vpack.c.b16 %v6689, %v6688
      %v6703 = vpack.c.b16 %v6691, %v6690
      %v6704 = vpack.c.b16 %v6693, %v6692
      %v6705 = vpack.c.b16 %v6695, %v6694
      %v6706 = vpack.c.b16 %v6697, %v6696
      %v6707 = vpack.c.b16 %v6699, %v6698
      %6716 = vmatprep.subr.bf16.mxu0 0
      %6717 = vmatpush1.bf16.msra.mxu0 %v6700
      %6718 = vmatprep.subr.bf16.mxu0 0
      %6719 = vmatpush1.bf16.msra.mxu0 %v6701
      %6720 = vmatprep.subr.bf16.mxu0 0
      %6721 = vmatpush1.bf16.msra.mxu0 %v6702
      %6722 = vmatprep.subr.bf16.mxu0 0
      %6723 = vmatpush1.bf16.msra.mxu0 %v6703
      %6724 = vmatprep.subr.bf16.mxu0 0
      %6725 = vmatpush1.bf16.msra.mxu0 %v6704
      %6726 = vmatprep.subr.bf16.mxu0 0
      %6727 = vmatpush1.bf16.msra.mxu0 %v6705
      %6728 = vmatprep.subr.bf16.mxu0 0
      %6729 = vmatpush1.bf16.msra.mxu0 %v6706
      %6730 = vmatprep.subr.bf16.mxu0 0
      %6731 = vmatpush1.bf16.msra.mxu0 %v6707
      %6732 = vmatprep.subr.bf16.mxu0 0
      %6733 = vmatpush1.bf16.msra.mxu0 0
      %6734 = vmatprep.subr.bf16.mxu0 0
      %6735 = vmatpush1.bf16.msra.mxu0 0
      %6736 = vmatprep.subr.bf16.mxu0 0
      %6737 = vmatpush1.bf16.msra.mxu0 0
      %6738 = vmatprep.subr.bf16.mxu0 0
      %6739 = vmatpush1.bf16.msra.mxu0 0
      %6740 = vmatprep.subr.bf16.mxu0 0
      %6741 = vmatpush1.bf16.msra.mxu0 0
      %6742 = vmatprep.subr.bf16.mxu0 0
      %6743 = vmatpush1.bf16.msra.mxu0 0
      %6744 = vmatprep.subr.bf16.mxu0 0
      %6745 = vmatpush1.bf16.msra.mxu0 0
      %6746 = vmatprep.subr.bf16.mxu0 0
      %6747 = vmatpush1.bf16.msra.mxu0 0
      %6748 = vmatprep.mubr.bf16.mxu0 0
      %6749 = vmatmul.mubr.bf16.gmra.mrb[0].mxu0 %v6636
      %v6750 = vpop.f32.mrb[0].mxu0
      %v6751 = vadd.f32 %v6446, %v6750
      %v6752 = vpop.f32.mrb[0].mxu0
      %v6753 = vpop.f32.mrb[0].mxu0
      %v6754 = vadd.f32 %v6449, %v6753
      %v6755 = vpop.f32.mrb[0].mxu0
      %6756 = vmatprep.mubr.bf16.mxu0 0
      %6757 = vmatmul.mubr.bf16.gmra.mrb[0].mxu0 %v6637
      %v6758 = vpop.f32.mrb[0].mxu0
      %v6759 = vadd.f32 %v6454, %v6758
      %v6760 = vpop.f32.mrb[0].mxu0
      %v6761 = vpop.f32.mrb[0].mxu0
      %v6762 = vadd.f32 %v6457, %v6761
      %v6763 = vpop.f32.mrb[0].mxu0
      %6764 = vmatprep.mubr.bf16.mxu0 0
      %6765 = vmatmul.mubr.bf16.gmra.mrb[0].mxu0 %v6638
      %v6766 = vpop.f32.mrb[0].mxu0
      %v6767 = vadd.f32 %v6462, %v6766
      %v6768 = vpop.f32.mrb[0].mxu0
      %v6769 = vpop.f32.mrb[0].mxu0
      %v6770 = vadd.f32 %v6465, %v6769
      %v6771 = vpop.f32.mrb[0].mxu0
      %6772 = vmatprep.mubr.bf16.mxu0 0
      %6773 = vmatmul.mubr.bf16.gmra.mrb[0].mxu0 %v6639
      %v6774 = vpop.f32.mrb[0].mxu0
      %v6775 = vadd.f32 %v6470, %v6774
      %v6776 = vpop.f32.mrb[0].mxu0
      %v6777 = vpop.f32.mrb[0].mxu0
      %v6778 = vadd.f32 %v6473, %v6777
      %v6779 = vpop.f32.mrb[0].mxu0
      %6780 = vmatprep.mubr.bf16.mxu0 0
      %6781 = vmatmul.mubr.bf16.gmra.mrb[0].mxu0 %v6640
      %v6782 = vpop.f32.mrb[0].mxu0
      %v6783 = vadd.f32 %v6478, %v6782
      %v6784 = vpop.f32.mrb[0].mxu0
      %v6785 = vpop.f32.mrb[0].mxu0
      %v6786 = vadd.f32 %v6481, %v6785
      %v6787 = vpop.f32.mrb[0].mxu0
      %6788 = vmatprep.mubr.bf16.mxu0 0
      %6789 = vmatmul.mubr.bf16.gmra.mrb[0].mxu0 %v6641
      %v6790 = vpop.f32.mrb[0].mxu0
      %v6791 = vadd.f32 %v6486, %v6790
      %v6792 = vpop.f32.mrb[0].mxu0
      %v6793 = vpop.f32.mrb[0].mxu0
      %v6794 = vadd.f32 %v6489, %v6793
      %v6795 = vpop.f32.mrb[0].mxu0
      %6796 = vmatprep.mubr.bf16.mxu0 0
      %6797 = vmatmul.mubr.bf16.gmra.mrb[0].mxu0 %v6642
      %v6798 = vpop.f32.mrb[0].mxu0
      %v6799 = vadd.f32 %v6494, %v6798
      %v6800 = vpop.f32.mrb[0].mxu0
      %v6801 = vpop.f32.mrb[0].mxu0
      %v6802 = vadd.f32 %v6497, %v6801
      %v6803 = vpop.f32.mrb[0].mxu0
      %6804 = vmatprep.mubr.bf16.mxu0 0
      %6805 = vmatmul.mubr.bf16.gmra.mrb[0].mxu0 %v6643
      %v6806 = vpop.f32.mrb[0].mxu0
      %v6807 = vadd.f32 %v6502, %v6806
      %v6808 = vpop.f32.mrb[0].mxu0
      %v6809 = vpop.f32.mrb[0].mxu0
      %v6810 = vadd.f32 %v6505, %v6809
      %v6811 = vpop.f32.mrb[0].mxu0
      %6812 = vmatprep.mubr.bf16.mxu0 0
      %6813 = vmatmul.mubr.bf16.gmra.mrb[0].mxu0 %v6644
      %v6814 = vpop.f32.mrb[0].mxu0
      %v6815 = vadd.f32 %v6510, %v6814
      %v6816 = vpop.f32.mrb[0].mxu0
      %v6817 = vpop.f32.mrb[0].mxu0
      %v6818 = vadd.f32 %v6513, %v6817
      %v6819 = vpop.f32.mrb[0].mxu0
      %6820 = vmatprep.mubr.bf16.mxu0 0
      %6821 = vmatmul.mubr.bf16.gmra.mrb[0].mxu0 %v6645
      %v6822 = vpop.f32.mrb[0].mxu0
      %v6823 = vadd.f32 %v6518, %v6822
      %v6824 = vpop.f32.mrb[0].mxu0
      %v6825 = vpop.f32.mrb[0].mxu0
      %v6826 = vadd.f32 %v6521, %v6825
      %v6827 = vpop.f32.mrb[0].mxu0
      %6828 = vmatprep.mubr.bf16.mxu0 0
      %6829 = vmatmul.mubr.bf16.gmra.mrb[0].mxu0 %v6646
      %v6830 = vpop.f32.mrb[0].mxu0
      %v6831 = vadd.f32 %v6526, %v6830
      %v6832 = vpop.f32.mrb[0].mxu0
      %v6833 = vpop.f32.mrb[0].mxu0
      %v6834 = vadd.f32 %v6529, %v6833
      %v6835 = vpop.f32.mrb[0].mxu0
      %6836 = vmatprep.mubr.bf16.mxu0 0
      %6837 = vmatmul.mubr.bf16.gmra.mrb[0].mxu0 %v6647
      %v6838 = vpop.f32.mrb[0].mxu0
      %v6839 = vadd.f32 %v6534, %v6838
      %v6840 = vpop.f32.mrb[0].mxu0
      %v6841 = vpop.f32.mrb[0].mxu0
      %v6842 = vadd.f32 %v6537, %v6841
      %v6843 = vpop.f32.mrb[0].mxu0
      %6844 = vmatprep.mubr.bf16.mxu0 0
      %6845 = vmatmul.mubr.bf16.gmra.mrb[0].mxu0 %v6648
      %v6846 = vpop.f32.mrb[0].mxu0
      %v6847 = vadd.f32 %v6542, %v6846
      %v6848 = vpop.f32.mrb[0].mxu0
      %v6849 = vpop.f32.mrb[0].mxu0
      %v6850 = vadd.f32 %v6545, %v6849
      %v6851 = vpop.f32.mrb[0].mxu0
      %6852 = vmatprep.mubr.bf16.mxu0 0
      %6853 = vmatmul.mubr.bf16.gmra.mrb[0].mxu0 %v6649
      %v6854 = vpop.f32.mrb[0].mxu0
      %v6855 = vadd.f32 %v6550, %v6854
      %v6856 = vpop.f32.mrb[0].mxu0
      %v6857 = vpop.f32.mrb[0].mxu0
      %v6858 = vadd.f32 %v6553, %v6857
      %v6859 = vpop.f32.mrb[0].mxu0
      %6860 = vmatprep.mubr.bf16.mxu0 0
      %6861 = vmatmul.mubr.bf16.gmra.mrb[0].mxu0 %v6650
      %v6862 = vpop.f32.mrb[0].mxu0
      %v6863 = vadd.f32 %v6558, %v6862
      %v6864 = vpop.f32.mrb[0].mxu0
      %v6865 = vpop.f32.mrb[0].mxu0
      %v6866 = vadd.f32 %v6561, %v6865
      %v6867 = vpop.f32.mrb[0].mxu0
      %6868 = vmatprep.mubr.bf16.mxu0 0
      %6869 = vmatmul.mubr.bf16.gmra.mrb[0].mxu0 %v6651
      %v6870 = vpop.f32.mrb[0].mxu0
      %v6871 = vadd.f32 %v6566, %v6870
      %v6872 = vpop.f32.mrb[0].mxu0
      %v6873 = vpop.f32.mrb[0].mxu0
      %v6874 = vadd.f32 %v6569, %v6873
      %v6875 = vpop.f32.mrb[0].mxu0
      %6876 = vdwg.mxu0
      %v6877 = vld [vmem:[#allocation2] sm:$0xe]
      %v6878 = vld [vmem:[#allocation2 + $0xc] sm:$0xe]
      %v6879 = vld [vmem:[#allocation2 + $0x18] sm:$0xe]
      %v6880 = vld [vmem:[#allocation2 + $0x24] sm:$0xe]
      %v6881 = vld [vmem:[#allocation2 + $0x30] sm:$0xe]
      %v6882 = vld [vmem:[#allocation2 + $0x3c] sm:$0xe]
      %v6883 = vld [vmem:[#allocation2 + $0x48] sm:$0xe]
      %v6884 = vld [vmem:[#allocation2 + $0x54] sm:$0xe]
      %v6885 = vld [vmem:[#allocation2 + $0x60] sm:$0xe]
      %v6886 = vld [vmem:[#allocation2 + $0x6c] sm:$0xe]
      %v6887 = vld [vmem:[#allocation2 + $0x78] sm:$0xe]
      %v6888 = vld [vmem:[#allocation2 + $0x84] sm:$0xe]
      %v6889 = vld [vmem:[#allocation2 + $0x90] sm:$0xe]
      %v6890 = vld [vmem:[#allocation2 + $0x9c] sm:$0xe]
      %v6891 = vld [vmem:[#allocation2 + $0xa8] sm:$0xe]
      %v6892 = vld [vmem:[#allocation2 + $0xb4] sm:$0xe]
      %v6925 = vrot.slane %v6877, 5
      %v6926 = vrot.slane %v6925, 4
      %v6927 = vrot.slane %v5836, 5
      %v6928 = vsel %vm1267, %v6926, %v6927
      %v6929 = vrot.slane %v6927, 4
      %v6930 = vrot.slane %v5883, 5
      %v6931 = vsel %vm1267, %v6929, %v6930
      %v6932 = vrot.slane %v6878, 5
      %v6933 = vrot.slane %v6932, 4
      %v6934 = vrot.slane %v5838, 5
      %v6935 = vsel %vm1267, %v6933, %v6934
      %v6936 = vrot.slane %v6934, 4
      %v6937 = vrot.slane %v5884, 5
      %v6938 = vsel %vm1267, %v6936, %v6937
      %v6939 = vrot.slane %v6879, 5
      %v6940 = vrot.slane %v6939, 4
      %v6941 = vrot.slane %v5840, 5
      %v6942 = vsel %vm1267, %v6940, %v6941
      %v6943 = vrot.slane %v6941, 4
      %v6944 = vrot.slane %v5885, 5
      %v6945 = vsel %vm1267, %v6943, %v6944
      %v6946 = vrot.slane %v6880, 5
      %v6947 = vrot.slane %v6946, 4
      %v6948 = vrot.slane %v5842, 5
      %v6949 = vsel %vm1267, %v6947, %v6948
      %v6950 = vrot.slane %v6948, 4
      %v6951 = vrot.slane %v5886, 5
      %v6952 = vsel %vm1267, %v6950, %v6951
      %v6953 = vrot.slane %v6881, 5
      %v6954 = vrot.slane %v6953, 4
      %v6955 = vrot.slane %v5844, 5
      %v6956 = vsel %vm1267, %v6954, %v6955
      %v6957 = vrot.slane %v6955, 4
      %v6958 = vrot.slane %v5887, 5
      %v6959 = vsel %vm1267, %v6957, %v6958
      %v6960 = vrot.slane %v6882, 5
      %v6961 = vrot.slane %v6960, 4
      %v6962 = vrot.slane %v5846, 5
      %v6963 = vsel %vm1267, %v6961, %v6962
      %v6964 = vrot.slane %v6962, 4
      %v6965 = vrot.slane %v5888, 5
      %v6966 = vsel %vm1267, %v6964, %v6965
      %v6967 = vrot.slane %v6883, 5
      %v6968 = vrot.slane %v6967, 4
      %v6969 = vrot.slane %v5848, 5
      %v6970 = vsel %vm1267, %v6968, %v6969
      %v6971 = vrot.slane %v6969, 4
      %v6972 = vrot.slane %v5889, 5
      %v6973 = vsel %vm1267, %v6971, %v6972
      %v6974 = vrot.slane %v6884, 5
      %v6975 = vrot.slane %v6974, 4
      %v6976 = vrot.slane %v5850, 5
      %v6977 = vsel %vm1267, %v6975, %v6976
      %v6978 = vrot.slane %v6976, 4
      %v6979 = vrot.slane %v5890, 5
      %v6980 = vsel %vm1267, %v6978, %v6979
      %v6981 = vrot.slane %v6885, 5
      %v6982 = vrot.slane %v6981, 4
      %v6983 = vrot.slane %v5852, 5
      %v6984 = vsel %vm1267, %v6982, %v6983
      %v6985 = vrot.slane %v6983, 4
      %v6986 = vrot.slane %v5891, 5
      %v6987 = vsel %vm1267, %v6985, %v6986
      %v6988 = vrot.slane %v6886, 5
      %v6989 = vrot.slane %v6988, 4
      %v6990 = vrot.slane %v5854, 5
      %v6991 = vsel %vm1267, %v6989, %v6990
      %v6992 = vrot.slane %v6990, 4
      %v6993 = vrot.slane %v5892, 5
      %v6994 = vsel %vm1267, %v6992, %v6993
      %v6995 = vrot.slane %v6887, 5
      %v6996 = vrot.slane %v6995, 4
      %v6997 = vrot.slane %v5856, 5
      %v6998 = vsel %vm1267, %v6996, %v6997
      %v6999 = vrot.slane %v6997, 4
      %v7000 = vrot.slane %v5893, 5
      %v7001 = vsel %vm1267, %v6999, %v7000
      %v7002 = vrot.slane %v6888, 5
      %v7003 = vrot.slane %v7002, 4
      %v7004 = vrot.slane %v5858, 5
      %v7005 = vsel %vm1267, %v7003, %v7004
      %v7006 = vrot.slane %v7004, 4
      %v7007 = vrot.slane %v5894, 5
      %v7008 = vsel %vm1267, %v7006, %v7007
      %v7009 = vrot.slane %v6889, 5
      %v7010 = vrot.slane %v7009, 4
      %v7011 = vrot.slane %v5860, 5
      %v7012 = vsel %vm1267, %v7010, %v7011
      %v7013 = vrot.slane %v7011, 4
      %v7014 = vrot.slane %v5895, 5
      %v7015 = vsel %vm1267, %v7013, %v7014
      %v7016 = vrot.slane %v6890, 5
      %v7017 = vrot.slane %v7016, 4
      %v7018 = vrot.slane %v5862, 5
      %v7019 = vsel %vm1267, %v7017, %v7018
      %v7020 = vrot.slane %v7018, 4
      %v7021 = vrot.slane %v5896, 5
      %v7022 = vsel %vm1267, %v7020, %v7021
      %v7023 = vrot.slane %v6891, 5
      %v7024 = vrot.slane %v7023, 4
      %v7025 = vrot.slane %v5864, 5
      %v7026 = vsel %vm1267, %v7024, %v7025
      %v7027 = vrot.slane %v7025, 4
      %v7028 = vrot.slane %v5897, 5
      %v7029 = vsel %vm1267, %v7027, %v7028
      %v7030 = vrot.slane %v6892, 5
      %v7031 = vrot.slane %v7030, 4
      %v7032 = vrot.slane %v5866, 5
      %v7033 = vsel %vm1267, %v7031, %v7032
      %v7034 = vrot.slane %v7032, 4
      %v7035 = vrot.slane %v5898, 5
      %v7036 = vsel %vm1267, %v7034, %v7035
      %v7037 = vld [vmem:[%s2 + $0x80] sm:$0xf]
      %v7038 = vld [vmem:[%s2 + $0x84] sm:$0xf]
      %v7039 = vld [vmem:[%s2 + $0x88] sm:$0xf]
      %v7040 = vld [vmem:[%s2 + $0x8c] sm:$0xf]
      %v7041 = vld [vmem:[%s2 + $0x90] sm:$0xf]
      %v7042 = vld [vmem:[%s2 + $0x94] sm:$0xf]
      %v7043 = vld [vmem:[%s2 + $0x98] sm:$0xf]
      %v7044 = vld [vmem:[%s2 + $0x9c] sm:$0xf]
      %v7045 = vld [vmem:[%s2 + $0xa0] sm:$0xf]
      %v7046 = vld [vmem:[%s2 + $0xa4] sm:$0xf]
      %v7047 = vld [vmem:[%s2 + $0xa8] sm:$0xf]
      %v7048 = vld [vmem:[%s2 + $0xac] sm:$0xf]
      %v7049 = vld [vmem:[%s2 + $0xb0] sm:$0xf]
      %v7050 = vld [vmem:[%s2 + $0xb4] sm:$0xf]
      %v7051 = vld [vmem:[%s2 + $0xb8] sm:$0xf]
      %v7052 = vld [vmem:[%s2 + $0xbc] sm:$0xf]
      %v7053 = vunpack.c.l.b16 %v6928
      %v7054 = vunpack.c.l.b16 %v6931
      %v7055 = vunpack.c.l.b16 %v6935
      %v7056 = vunpack.c.l.b16 %v6938
      %v7057 = vunpack.c.l.b16 %v6942
      %v7058 = vunpack.c.l.b16 %v6945
      %v7059 = vunpack.c.l.b16 %v6949
      %v7060 = vunpack.c.l.b16 %v6952
      %v7061 = vunpack.c.l.b16 %v6956
      %v7062 = vunpack.c.l.b16 %v6959
      %v7063 = vunpack.c.l.b16 %v6963
      %v7064 = vunpack.c.l.b16 %v6966
      %v7065 = vunpack.c.l.b16 %v6970
      %v7066 = vunpack.c.l.b16 %v6973
      %v7067 = vunpack.c.l.b16 %v6977
      %v7068 = vunpack.c.l.b16 %v6980
      %v7069 = vunpack.c.l.b16 %v6984
      %v7070 = vunpack.c.l.b16 %v6987
      %v7071 = vunpack.c.l.b16 %v6991
      %v7072 = vunpack.c.l.b16 %v6994
      %v7073 = vunpack.c.l.b16 %v6998
      %v7074 = vunpack.c.l.b16 %v7001
      %v7075 = vunpack.c.l.b16 %v7005
      %v7076 = vunpack.c.l.b16 %v7008
      %v7077 = vunpack.c.l.b16 %v7012
      %v7078 = vunpack.c.l.b16 %v7015
      %v7079 = vunpack.c.l.b16 %v7019
      %v7080 = vunpack.c.l.b16 %v7022
      %v7081 = vunpack.c.l.b16 %v7026
      %v7082 = vunpack.c.l.b16 %v7029
      %v7083 = vunpack.c.l.b16 %v7033
      %v7084 = vunpack.c.l.b16 %v7036
      %v7085 = vpack.c.b16 %v7054, %v7053
      %v7086 = vpack.c.b16 %v7056, %v7055
      %v7087 = vpack.c.b16 %v7058, %v7057
      %v7088 = vpack.c.b16 %v7060, %v7059
      %v7089 = vpack.c.b16 %v7062, %v7061
      %v7090 = vpack.c.b16 %v7064, %v7063
      %v7091 = vpack.c.b16 %v7066, %v7065
      %v7092 = vpack.c.b16 %v7068, %v7067
      %v7093 = vpack.c.b16 %v7070, %v7069
      %v7094 = vpack.c.b16 %v7072, %v7071
      %v7095 = vpack.c.b16 %v7074, %v7073
      %v7096 = vpack.c.b16 %v7076, %v7075
      %v7097 = vpack.c.b16 %v7078, %v7077
      %v7098 = vpack.c.b16 %v7080, %v7079
      %v7099 = vpack.c.b16 %v7082, %v7081
      %v7100 = vpack.c.b16 %v7084, %v7083
      %v7133 = vunpack.c.l.b16 %v7037
      %v7134 = vunpack.c.l.b16 %v7038
      %v7135 = vunpack.c.l.b16 %v7039
      %v7136 = vunpack.c.l.b16 %v7040
      %v7137 = vunpack.c.l.b16 %v7041
      %v7138 = vunpack.c.l.b16 %v7042
      %v7139 = vunpack.c.l.b16 %v7043
      %v7140 = vunpack.c.l.b16 %v7044
      %v7141 = vunpack.c.l.b16 %v7045
      %v7142 = vunpack.c.l.b16 %v7046
      %v7143 = vunpack.c.l.b16 %v7047
      %v7144 = vunpack.c.l.b16 %v7048
      %v7145 = vunpack.c.l.b16 %v7049
      %v7146 = vunpack.c.l.b16 %v7050
      %v7147 = vunpack.c.l.b16 %v7051
      %v7148 = vunpack.c.l.b16 %v7052
      %v7149 = vpack.c.b16 %v7134, %v7133
      %v7150 = vpack.c.b16 %v7136, %v7135
      %v7151 = vpack.c.b16 %v7138, %v7137
      %v7152 = vpack.c.b16 %v7140, %v7139
      %v7153 = vpack.c.b16 %v7142, %v7141
      %v7154 = vpack.c.b16 %v7144, %v7143
      %v7155 = vpack.c.b16 %v7146, %v7145
      %v7156 = vpack.c.b16 %v7148, %v7147
      %7165 = vmatprep.subr.bf16.mxu0 0
      %7166 = vmatpush1.bf16.msra.mxu0 %v7149
      %7167 = vmatprep.subr.bf16.mxu0 0
      %7168 = vmatpush1.bf16.msra.mxu0 %v7150
      %7169 = vmatprep.subr.bf16.mxu0 0
      %7170 = vmatpush1.bf16.msra.mxu0 %v7151
      %7171 = vmatprep.subr.bf16.mxu0 0
      %7172 = vmatpush1.bf16.msra.mxu0 %v7152
      %7173 = vmatprep.subr.bf16.mxu0 0
      %7174 = vmatpush1.bf16.msra.mxu0 %v7153
      %7175 = vmatprep.subr.bf16.mxu0 0
      %7176 = vmatpush1.bf16.msra.mxu0 %v7154
      %7177 = vmatprep.subr.bf16.mxu0 0
      %7178 = vmatpush1.bf16.msra.mxu0 %v7155
      %7179 = vmatprep.subr.bf16.mxu0 0
      %7180 = vmatpush1.bf16.msra.mxu0 %v7156
      %7181 = vmatprep.subr.bf16.mxu0 0
      %7182 = vmatpush1.bf16.msra.mxu0 0
      %7183 = vmatprep.subr.bf16.mxu0 0
      %7184 = vmatpush1.bf16.msra.mxu0 0
      %7185 = vmatprep.subr.bf16.mxu0 0
      %7186 = vmatpush1.bf16.msra.mxu0 0
      %7187 = vmatprep.subr.bf16.mxu0 0
      %7188 = vmatpush1.bf16.msra.mxu0 0
      %7189 = vmatprep.subr.bf16.mxu0 0
      %7190 = vmatpush1.bf16.msra.mxu0 0
      %7191 = vmatprep.subr.bf16.mxu0 0
      %7192 = vmatpush1.bf16.msra.mxu0 0
      %7193 = vmatprep.subr.bf16.mxu0 0
      %7194 = vmatpush1.bf16.msra.mxu0 0
      %7195 = vmatprep.subr.bf16.mxu0 0
      %7196 = vmatpush1.bf16.msra.mxu0 0
      %7197 = vmatprep.mubr.bf16.mxu0 0
      %7198 = vmatmul.mubr.bf16.gmra.mrb[0].mxu0 %v7085
      %v7199 = vpop.f32.mrb[0].mxu0
      %v7200 = vadd.f32 0.0, %v7199
      %v7201 = vpop.f32.mrb[0].mxu0
      %v7202 = vpop.f32.mrb[0].mxu0
      %v7203 = vadd.f32 0.0, %v7202
      %v7204 = vpop.f32.mrb[0].mxu0
      %7205 = vmatprep.mubr.bf16.mxu0 0
      %7206 = vmatmul.mubr.bf16.gmra.mrb[0].mxu0 %v7086
      %v7207 = vpop.f32.mrb[0].mxu0
      %v7208 = vadd.f32 0.0, %v7207
      %v7209 = vpop.f32.mrb[0].mxu0
      %v7210 = vpop.f32.mrb[0].mxu0
      %v7211 = vadd.f32 0.0, %v7210
      %v7212 = vpop.f32.mrb[0].mxu0
      %7213 = vmatprep.mubr.bf16.mxu0 0
      %7214 = vmatmul.mubr.bf16.gmra.mrb[0].mxu0 %v7087
      %v7215 = vpop.f32.mrb[0].mxu0
      %v7216 = vadd.f32 0.0, %v7215
      %v7217 = vpop.f32.mrb[0].mxu0
      %v7218 = vpop.f32.mrb[0].mxu0
      %v7219 = vadd.f32 0.0, %v7218
      %v7220 = vpop.f32.mrb[0].mxu0
      %7221 = vmatprep.mubr.bf16.mxu0 0
      %7222 = vmatmul.mubr.bf16.gmra.mrb[0].mxu0 %v7088
      %v7223 = vpop.f32.mrb[0].mxu0
      %v7224 = vadd.f32 0.0, %v7223
      %v7225 = vpop.f32.mrb[0].mxu0
      %v7226 = vpop.f32.mrb[0].mxu0
      %v7227 = vadd.f32 0.0, %v7226
      %v7228 = vpop.f32.mrb[0].mxu0
      %7229 = vmatprep.mubr.bf16.mxu0 0
      %7230 = vmatmul.mubr.bf16.gmra.mrb[0].mxu0 %v7089
      %v7231 = vpop.f32.mrb[0].mxu0
      %v7232 = vadd.f32 0.0, %v7231
      %v7233 = vpop.f32.mrb[0].mxu0
      %v7234 = vpop.f32.mrb[0].mxu0
      %v7235 = vadd.f32 0.0, %v7234
      %v7236 = vpop.f32.mrb[0].mxu0
      %7237 = vmatprep.mubr.bf16.mxu0 0
      %7238 = vmatmul.mubr.bf16.gmra.mrb[0].mxu0 %v7090
      %v7239 = vpop.f32.mrb[0].mxu0
      %v7240 = vadd.f32 0.0, %v7239
      %v7241 = vpop.f32.mrb[0].mxu0
      %v7242 = vpop.f32.mrb[0].mxu0
      %v7243 = vadd.f32 0.0, %v7242
      %v7244 = vpop.f32.mrb[0].mxu0
      %7245 = vmatprep.mubr.bf16.mxu0 0
      %7246 = vmatmul.mubr.bf16.gmra.mrb[0].mxu0 %v7091
      %v7247 = vpop.f32.mrb[0].mxu0
      %v7248 = vadd.f32 0.0, %v7247
      %v7249 = vpop.f32.mrb[0].mxu0
      %v7250 = vpop.f32.mrb[0].mxu0
      %v7251 = vadd.f32 0.0, %v7250
      %v7252 = vpop.f32.mrb[0].mxu0
      %7253 = vmatprep.mubr.bf16.mxu0 0
      %7254 = vmatmul.mubr.bf16.gmra.mrb[0].mxu0 %v7092
      %v7255 = vpop.f32.mrb[0].mxu0
      %v7256 = vadd.f32 0.0, %v7255
      %v7257 = vpop.f32.mrb[0].mxu0
      %v7258 = vpop.f32.mrb[0].mxu0
      %v7259 = vadd.f32 0.0, %v7258
      %v7260 = vpop.f32.mrb[0].mxu0
      %7261 = vmatprep.mubr.bf16.mxu0 0
      %7262 = vmatmul.mubr.bf16.gmra.mrb[0].mxu0 %v7093
      %v7263 = vpop.f32.mrb[0].mxu0
      %v7264 = vadd.f32 0.0, %v7263
      %v7265 = vpop.f32.mrb[0].mxu0
      %v7266 = vpop.f32.mrb[0].mxu0
      %v7267 = vadd.f32 0.0, %v7266
      %v7268 = vpop.f32.mrb[0].mxu0
      %7269 = vmatprep.mubr.bf16.mxu0 0
      %7270 = vmatmul.mubr.bf16.gmra.mrb[0].mxu0 %v7094
      %v7271 = vpop.f32.mrb[0].mxu0
      %v7272 = vadd.f32 0.0, %v7271
      %v7273 = vpop.f32.mrb[0].mxu0
      %v7274 = vpop.f32.mrb[0].mxu0
      %v7275 = vadd.f32 0.0, %v7274
      %v7276 = vpop.f32.mrb[0].mxu0
      %7277 = vmatprep.mubr.bf16.mxu0 0
      %7278 = vmatmul.mubr.bf16.gmra.mrb[0].mxu0 %v7095
      %v7279 = vpop.f32.mrb[0].mxu0
      %v7280 = vadd.f32 0.0, %v7279
      %v7281 = vpop.f32.mrb[0].mxu0
      %v7282 = vpop.f32.mrb[0].mxu0
      %v7283 = vadd.f32 0.0, %v7282
      %v7284 = vpop.f32.mrb[0].mxu0
      %7285 = vmatprep.mubr.bf16.mxu0 0
      %7286 = vmatmul.mubr.bf16.gmra.mrb[0].mxu0 %v7096
      %v7287 = vpop.f32.mrb[0].mxu0
      %v7288 = vadd.f32 0.0, %v7287
      %v7289 = vpop.f32.mrb[0].mxu0
      %v7290 = vpop.f32.mrb[0].mxu0
      %v7291 = vadd.f32 0.0, %v7290
      %v7292 = vpop.f32.mrb[0].mxu0
      %7293 = vmatprep.mubr.bf16.mxu0 0
      %7294 = vmatmul.mubr.bf16.gmra.mrb[0].mxu0 %v7097
      %v7295 = vpop.f32.mrb[0].mxu0
      %v7296 = vadd.f32 0.0, %v7295
      %v7297 = vpop.f32.mrb[0].mxu0
      %v7298 = vpop.f32.mrb[0].mxu0
      %v7299 = vadd.f32 0.0, %v7298
      %v7300 = vpop.f32.mrb[0].mxu0
      %7301 = vmatprep.mubr.bf16.mxu0 0
      %7302 = vmatmul.mubr.bf16.gmra.mrb[0].mxu0 %v7098
      %v7303 = vpop.f32.mrb[0].mxu0
      %v7304 = vadd.f32 0.0, %v7303
      %v7305 = vpop.f32.mrb[0].mxu0
      %v7306 = vpop.f32.mrb[0].mxu0
      %v7307 = vadd.f32 0.0, %v7306
      %v7308 = vpop.f32.mrb[0].mxu0
      %7309 = vmatprep.mubr.bf16.mxu0 0
      %7310 = vmatmul.mubr.bf16.gmra.mrb[0].mxu0 %v7099
      %v7311 = vpop.f32.mrb[0].mxu0
      %v7312 = vadd.f32 0.0, %v7311
      %v7313 = vpop.f32.mrb[0].mxu0
      %v7314 = vpop.f32.mrb[0].mxu0
      %v7315 = vadd.f32 0.0, %v7314
      %v7316 = vpop.f32.mrb[0].mxu0
      %7317 = vmatprep.mubr.bf16.mxu0 0
      %7318 = vmatmul.mubr.bf16.gmra.mrb[0].mxu0 %v7100
      %v7319 = vpop.f32.mrb[0].mxu0
      %v7320 = vadd.f32 0.0, %v7319
      %v7321 = vpop.f32.mrb[0].mxu0
      %v7322 = vpop.f32.mrb[0].mxu0
      %v7323 = vadd.f32 0.0, %v7322
      %v7324 = vpop.f32.mrb[0].mxu0
      %7325 = vdwg.mxu0
      %v7326 = vadd.f32 %v6751, %v7200
      %v7327 = vadd.f32 %v6754, %v7203
      %v7328 = vadd.f32 %v6759, %v7208
      %v7329 = vadd.f32 %v6762, %v7211
      %v7330 = vadd.f32 %v6767, %v7216
      %v7331 = vadd.f32 %v6770, %v7219
      %v7332 = vadd.f32 %v6775, %v7224
      %v7333 = vadd.f32 %v6778, %v7227
      %v7334 = vadd.f32 %v6783, %v7232
      %v7335 = vadd.f32 %v6786, %v7235
      %v7336 = vadd.f32 %v6791, %v7240
      %v7337 = vadd.f32 %v6794, %v7243
      %v7338 = vadd.f32 %v6799, %v7248
      %v7339 = vadd.f32 %v6802, %v7251
      %v7340 = vadd.f32 %v6807, %v7256
      %v7341 = vadd.f32 %v6810, %v7259
      %v7342 = vadd.f32 %v6815, %v7264
      %v7343 = vadd.f32 %v6818, %v7267
      %v7344 = vadd.f32 %v6823, %v7272
      %v7345 = vadd.f32 %v6826, %v7275
      %v7346 = vadd.f32 %v6831, %v7280
      %v7347 = vadd.f32 %v6834, %v7283
      %v7348 = vadd.f32 %v6839, %v7288
      %v7349 = vadd.f32 %v6842, %v7291
      %v7350 = vadd.f32 %v6847, %v7296
      %v7351 = vadd.f32 %v6850, %v7299
      %v7352 = vadd.f32 %v6855, %v7304
      %v7353 = vadd.f32 %v6858, %v7307
      %v7354 = vadd.f32 %v6863, %v7312
      %v7355 = vadd.f32 %v6866, %v7315
      %v7356 = vadd.f32 %v6871, %v7320
      %v7357 = vadd.f32 %v6874, %v7323
      %v7358 = vld [vmem:[%s5720] sm:$0xf]
      %v7359 = vld [vmem:[%s5720 + $0x4] sm:$0xf]
      %v7360 = vld [vmem:[%s5720 + $0xc] sm:$0xf]
      %v7361 = vld [vmem:[%s5720 + $0x10] sm:$0xf]
      %v7362 = vld [vmem:[%s5720 + $0x18] sm:$0xf]
      %v7363 = vld [vmem:[%s5720 + $0x1c] sm:$0xf]
      %v7364 = vld [vmem:[%s5720 + $0x24] sm:$0xf]
      %v7365 = vld [vmem:[%s5720 + $0x28] sm:$0xf]
      %v7366 = vld [vmem:[%s5720 + $0x30] sm:$0xf]
      %v7367 = vld [vmem:[%s5720 + $0x34] sm:$0xf]
      %v7368 = vld [vmem:[%s5720 + $0x3c] sm:$0xf]
      %v7369 = vld [vmem:[%s5720 + $0x40] sm:$0xf]
      %v7370 = vld [vmem:[%s5720 + $0x48] sm:$0xf]
      %v7371 = vld [vmem:[%s5720 + $0x4c] sm:$0xf]
      %v7372 = vld [vmem:[%s5720 + $0x54] sm:$0xf]
      %v7373 = vld [vmem:[%s5720 + $0x58] sm:$0xf]
      %v7374 = vld [vmem:[%s5720 + $0x60] sm:$0xf]
      %v7375 = vld [vmem:[%s5720 + $0x64] sm:$0xf]
      %v7376 = vld [vmem:[%s5720 + $0x6c] sm:$0xf]
      %v7377 = vld [vmem:[%s5720 + $0x70] sm:$0xf]
      %v7378 = vld [vmem:[%s5720 + $0x78] sm:$0xf]
      %v7379 = vld [vmem:[%s5720 + $0x7c] sm:$0xf]
      %v7380 = vld [vmem:[%s5720 + $0x84] sm:$0xf]
      %v7381 = vld [vmem:[%s5720 + $0x88] sm:$0xf]
      %v7382 = vld [vmem:[%s5720 + $0x90] sm:$0xf]
      %v7383 = vld [vmem:[%s5720 + $0x94] sm:$0xf]
      %v7384 = vld [vmem:[%s5720 + $0x9c] sm:$0xf]
      %v7385 = vld [vmem:[%s5720 + $0xa0] sm:$0xf]
      %v7386 = vld [vmem:[%s5720 + $0xa8] sm:$0xf]
      %v7387 = vld [vmem:[%s5720 + $0xac] sm:$0xf]
      %v7388 = vld [vmem:[%s5720 + $0xb4] sm:$0xf]
      %v7389 = vld [vmem:[%s5720 + $0xb8] sm:$0xf]
      %v7390 = vld [vmem:[%s2 + $0xc0] sm:$0xf]
      %v7391 = vld [vmem:[%s2 + $0xc4] sm:$0xf]
      %v7392 = vld [vmem:[%s2 + $0xc8] sm:$0xf]
      %v7393 = vld [vmem:[%s2 + $0xcc] sm:$0xf]
      %v7394 = vld [vmem:[%s2 + $0xd0] sm:$0xf]
      %v7395 = vld [vmem:[%s2 + $0xd4] sm:$0xf]
      %v7396 = vld [vmem:[%s2 + $0xd8] sm:$0xf]
      %v7397 = vld [vmem:[%s2 + $0xdc] sm:$0xf]
      %v7398 = vld [vmem:[%s2 + $0xe0] sm:$0xf]
      %v7399 = vld [vmem:[%s2 + $0xe4] sm:$0xf]
      %v7400 = vld [vmem:[%s2 + $0xe8] sm:$0xf]
      %v7401 = vld [vmem:[%s2 + $0xec] sm:$0xf]
      %v7402 = vld [vmem:[%s2 + $0xf0] sm:$0xf]
      %v7403 = vld [vmem:[%s2 + $0xf4] sm:$0xf]
      %v7404 = vld [vmem:[%s2 + $0xf8] sm:$0xf]
      %v7405 = vld [vmem:[%s2 + $0xfc] sm:$0xf]
      %v7438 = vunpack.c.l.b16 %v7358
      %v7439 = vunpack.c.l.b16 %v7359
      %v7440 = vunpack.c.l.b16 %v7360
      %v7441 = vunpack.c.l.b16 %v7361
      %v7442 = vunpack.c.l.b16 %v7362
      %v7443 = vunpack.c.l.b16 %v7363
      %v7444 = vunpack.c.l.b16 %v7364
      %v7445 = vunpack.c.l.b16 %v7365
      %v7446 = vunpack.c.l.b16 %v7366
      %v7447 = vunpack.c.l.b16 %v7367
      %v7448 = vunpack.c.l.b16 %v7368
      %v7449 = vunpack.c.l.b16 %v7369
      %v7450 = vunpack.c.l.b16 %v7370
      %v7451 = vunpack.c.l.b16 %v7371
      %v7452 = vunpack.c.l.b16 %v7372
      %v7453 = vunpack.c.l.b16 %v7373
      %v7454 = vunpack.c.l.b16 %v7374
      %v7455 = vunpack.c.l.b16 %v7375
      %v7456 = vunpack.c.l.b16 %v7376
      %v7457 = vunpack.c.l.b16 %v7377
      %v7458 = vunpack.c.l.b16 %v7378
      %v7459 = vunpack.c.l.b16 %v7379
      %v7460 = vunpack.c.l.b16 %v7380
      %v7461 = vunpack.c.l.b16 %v7381
      %v7462 = vunpack.c.l.b16 %v7382
      %v7463 = vunpack.c.l.b16 %v7383
      %v7464 = vunpack.c.l.b16 %v7384
      %v7465 = vunpack.c.l.b16 %v7385
      %v7466 = vunpack.c.l.b16 %v7386
      %v7467 = vunpack.c.l.b16 %v7387
      %v7468 = vunpack.c.l.b16 %v7388
      %v7469 = vunpack.c.l.b16 %v7389
      %v7470 = vpack.c.b16 %v7439, %v7438
      %v7471 = vpack.c.b16 %v7441, %v7440
      %v7472 = vpack.c.b16 %v7443, %v7442
      %v7473 = vpack.c.b16 %v7445, %v7444
      %v7474 = vpack.c.b16 %v7447, %v7446
      %v7475 = vpack.c.b16 %v7449, %v7448
      %v7476 = vpack.c.b16 %v7451, %v7450
      %v7477 = vpack.c.b16 %v7453, %v7452
      %v7478 = vpack.c.b16 %v7455, %v7454
      %v7479 = vpack.c.b16 %v7457, %v7456
      %v7480 = vpack.c.b16 %v7459, %v7458
      %v7481 = vpack.c.b16 %v7461, %v7460
      %v7482 = vpack.c.b16 %v7463, %v7462
      %v7483 = vpack.c.b16 %v7465, %v7464
      %v7484 = vpack.c.b16 %v7467, %v7466
      %v7485 = vpack.c.b16 %v7469, %v7468
      %v7518 = vunpack.c.l.b16 %v7390
      %v7519 = vunpack.c.l.b16 %v7391
      %v7520 = vunpack.c.l.b16 %v7392
      %v7521 = vunpack.c.l.b16 %v7393
      %v7522 = vunpack.c.l.b16 %v7394
      %v7523 = vunpack.c.l.b16 %v7395
      %v7524 = vunpack.c.l.b16 %v7396
      %v7525 = vunpack.c.l.b16 %v7397
      %v7526 = vunpack.c.l.b16 %v7398
      %v7527 = vunpack.c.l.b16 %v7399
      %v7528 = vunpack.c.l.b16 %v7400
      %v7529 = vunpack.c.l.b16 %v7401
      %v7530 = vunpack.c.l.b16 %v7402
      %v7531 = vunpack.c.l.b16 %v7403
      %v7532 = vunpack.c.l.b16 %v7404
      %v7533 = vunpack.c.l.b16 %v7405
      %v7534 = vpack.c.b16 %v7519, %v7518
      %v7535 = vpack.c.b16 %v7521, %v7520
      %v7536 = vpack.c.b16 %v7523, %v7522
      %v7537 = vpack.c.b16 %v7525, %v7524
      %v7538 = vpack.c.b16 %v7527, %v7526
      %v7539 = vpack.c.b16 %v7529, %v7528
      %v7540 = vpack.c.b16 %v7531, %v7530
      %v7541 = vpack.c.b16 %v7533, %v7532
      %7550 = vmatprep.subr.bf16.mxu0 0
      %7551 = vmatpush1.bf16.msra.mxu0 %v7534
      %7552 = vmatprep.subr.bf16.mxu0 0
      %7553 = vmatpush1.bf16.msra.mxu0 %v7535
      %7554 = vmatprep.subr.bf16.mxu0 0
      %7555 = vmatpush1.bf16.msra.mxu0 %v7536
      %7556 = vmatprep.subr.bf16.mxu0 0
      %7557 = vmatpush1.bf16.msra.mxu0 %v7537
      %7558 = vmatprep.subr.bf16.mxu0 0
      %7559 = vmatpush1.bf16.msra.mxu0 %v7538
      %7560 = vmatprep.subr.bf16.mxu0 0
      %7561 = vmatpush1.bf16.msra.mxu0 %v7539
      %7562 = vmatprep.subr.bf16.mxu0 0
      %7563 = vmatpush1.bf16.msra.mxu0 %v7540
      %7564 = vmatprep.subr.bf16.mxu0 0
      %7565 = vmatpush1.bf16.msra.mxu0 %v7541
      %7566 = vmatprep.subr.bf16.mxu0 0
      %7567 = vmatpush1.bf16.msra.mxu0 0
      %7568 = vmatprep.subr.bf16.mxu0 0
      %7569 = vmatpush1.bf16.msra.mxu0 0
      %7570 = vmatprep.subr.bf16.mxu0 0
      %7571 = vmatpush1.bf16.msra.mxu0 0
      %7572 = vmatprep.subr.bf16.mxu0 0
      %7573 = vmatpush1.bf16.msra.mxu0 0
      %7574 = vmatprep.subr.bf16.mxu0 0
      %7575 = vmatpush1.bf16.msra.mxu0 0
      %7576 = vmatprep.subr.bf16.mxu0 0
      %7577 = vmatpush1.bf16.msra.mxu0 0
      %7578 = vmatprep.subr.bf16.mxu0 0
      %7579 = vmatpush1.bf16.msra.mxu0 0
      %7580 = vmatprep.subr.bf16.mxu0 0
      %7581 = vmatpush1.bf16.msra.mxu0 0
      %7582 = vmatprep.mubr.bf16.mxu0 0
      %7583 = vmatmul.mubr.bf16.gmra.mrb[0].mxu0 %v7470
      %v7584 = vpop.f32.mrb[0].mxu0
      %v7585 = vadd.f32 0.0, %v7584
      %v7586 = vpop.f32.mrb[0].mxu0
      %v7587 = vpop.f32.mrb[0].mxu0
      %v7588 = vadd.f32 0.0, %v7587
      %v7589 = vpop.f32.mrb[0].mxu0
      %7590 = vmatprep.mubr.bf16.mxu0 0
      %7591 = vmatmul.mubr.bf16.gmra.mrb[0].mxu0 %v7471
      %v7592 = vpop.f32.mrb[0].mxu0
      %v7593 = vadd.f32 0.0, %v7592
      %v7594 = vpop.f32.mrb[0].mxu0
      %v7595 = vpop.f32.mrb[0].mxu0
      %v7596 = vadd.f32 0.0, %v7595
      %v7597 = vpop.f32.mrb[0].mxu0
      %7598 = vmatprep.mubr.bf16.mxu0 0
      %7599 = vmatmul.mubr.bf16.gmra.mrb[0].mxu0 %v7472
      %v7600 = vpop.f32.mrb[0].mxu0
      %v7601 = vadd.f32 0.0, %v7600
      %v7602 = vpop.f32.mrb[0].mxu0
      %v7603 = vpop.f32.mrb[0].mxu0
      %v7604 = vadd.f32 0.0, %v7603
      %v7605 = vpop.f32.mrb[0].mxu0
      %7606 = vmatprep.mubr.bf16.mxu0 0
      %7607 = vmatmul.mubr.bf16.gmra.mrb[0].mxu0 %v7473
      %v7608 = vpop.f32.mrb[0].mxu0
      %v7609 = vadd.f32 0.0, %v7608
      %v7610 = vpop.f32.mrb[0].mxu0
      %v7611 = vpop.f32.mrb[0].mxu0
      %v7612 = vadd.f32 0.0, %v7611
      %v7613 = vpop.f32.mrb[0].mxu0
      %7614 = vmatprep.mubr.bf16.mxu0 0
      %7615 = vmatmul.mubr.bf16.gmra.mrb[0].mxu0 %v7474
      %v7616 = vpop.f32.mrb[0].mxu0
      %v7617 = vadd.f32 0.0, %v7616
      %v7618 = vpop.f32.mrb[0].mxu0
      %v7619 = vpop.f32.mrb[0].mxu0
      %v7620 = vadd.f32 0.0, %v7619
      %v7621 = vpop.f32.mrb[0].mxu0
      %7622 = vmatprep.mubr.bf16.mxu0 0
      %7623 = vmatmul.mubr.bf16.gmra.mrb[0].mxu0 %v7475
      %v7624 = vpop.f32.mrb[0].mxu0
      %v7625 = vadd.f32 0.0, %v7624
      %v7626 = vpop.f32.mrb[0].mxu0
      %v7627 = vpop.f32.mrb[0].mxu0
      %v7628 = vadd.f32 0.0, %v7627
      %v7629 = vpop.f32.mrb[0].mxu0
      %7630 = vmatprep.mubr.bf16.mxu0 0
      %7631 = vmatmul.mubr.bf16.gmra.mrb[0].mxu0 %v7476
      %v7632 = vpop.f32.mrb[0].mxu0
      %v7633 = vadd.f32 0.0, %v7632
      %v7634 = vpop.f32.mrb[0].mxu0
      %v7635 = vpop.f32.mrb[0].mxu0
      %v7636 = vadd.f32 0.0, %v7635
      %v7637 = vpop.f32.mrb[0].mxu0
      %7638 = vmatprep.mubr.bf16.mxu0 0
      %7639 = vmatmul.mubr.bf16.gmra.mrb[0].mxu0 %v7477
      %v7640 = vpop.f32.mrb[0].mxu0
      %v7641 = vadd.f32 0.0, %v7640
      %v7642 = vpop.f32.mrb[0].mxu0
      %v7643 = vpop.f32.mrb[0].mxu0
      %v7644 = vadd.f32 0.0, %v7643
      %v7645 = vpop.f32.mrb[0].mxu0
      %7646 = vmatprep.mubr.bf16.mxu0 0
      %7647 = vmatmul.mubr.bf16.gmra.mrb[0].mxu0 %v7478
      %v7648 = vpop.f32.mrb[0].mxu0
      %v7649 = vadd.f32 0.0, %v7648
      %v7650 = vpop.f32.mrb[0].mxu0
      %v7651 = vpop.f32.mrb[0].mxu0
      %v7652 = vadd.f32 0.0, %v7651
      %v7653 = vpop.f32.mrb[0].mxu0
      %7654 = vmatprep.mubr.bf16.mxu0 0
      %7655 = vmatmul.mubr.bf16.gmra.mrb[0].mxu0 %v7479
      %v7656 = vpop.f32.mrb[0].mxu0
      %v7657 = vadd.f32 0.0, %v7656
      %v7658 = vpop.f32.mrb[0].mxu0
      %v7659 = vpop.f32.mrb[0].mxu0
      %v7660 = vadd.f32 0.0, %v7659
      %v7661 = vpop.f32.mrb[0].mxu0
      %7662 = vmatprep.mubr.bf16.mxu0 0
      %7663 = vmatmul.mubr.bf16.gmra.mrb[0].mxu0 %v7480
      %v7664 = vpop.f32.mrb[0].mxu0
      %v7665 = vadd.f32 0.0, %v7664
      %v7666 = vpop.f32.mrb[0].mxu0
      %v7667 = vpop.f32.mrb[0].mxu0
      %v7668 = vadd.f32 0.0, %v7667
      %v7669 = vpop.f32.mrb[0].mxu0
      %7670 = vmatprep.mubr.bf16.mxu0 0
      %7671 = vmatmul.mubr.bf16.gmra.mrb[0].mxu0 %v7481
      %v7672 = vpop.f32.mrb[0].mxu0
      %v7673 = vadd.f32 0.0, %v7672
      %v7674 = vpop.f32.mrb[0].mxu0
      %v7675 = vpop.f32.mrb[0].mxu0
      %v7676 = vadd.f32 0.0, %v7675
      %v7677 = vpop.f32.mrb[0].mxu0
      %7678 = vmatprep.mubr.bf16.mxu0 0
      %7679 = vmatmul.mubr.bf16.gmra.mrb[0].mxu0 %v7482
      %v7680 = vpop.f32.mrb[0].mxu0
      %v7681 = vadd.f32 0.0, %v7680
      %v7682 = vpop.f32.mrb[0].mxu0
      %v7683 = vpop.f32.mrb[0].mxu0
      %v7684 = vadd.f32 0.0, %v7683
      %v7685 = vpop.f32.mrb[0].mxu0
      %7686 = vmatprep.mubr.bf16.mxu0 0
      %7687 = vmatmul.mubr.bf16.gmra.mrb[0].mxu0 %v7483
      %v7688 = vpop.f32.mrb[0].mxu0
      %v7689 = vadd.f32 0.0, %v7688
      %v7690 = vpop.f32.mrb[0].mxu0
      %v7691 = vpop.f32.mrb[0].mxu0
      %v7692 = vadd.f32 0.0, %v7691
      %v7693 = vpop.f32.mrb[0].mxu0
      %7694 = vmatprep.mubr.bf16.mxu0 0
      %7695 = vmatmul.mubr.bf16.gmra.mrb[0].mxu0 %v7484
      %v7696 = vpop.f32.mrb[0].mxu0
      %v7697 = vadd.f32 0.0, %v7696
      %v7698 = vpop.f32.mrb[0].mxu0
      %v7699 = vpop.f32.mrb[0].mxu0
      %v7700 = vadd.f32 0.0, %v7699
      %v7701 = vpop.f32.mrb[0].mxu0
      %7702 = vmatprep.mubr.bf16.mxu0 0
      %7703 = vmatmul.mubr.bf16.gmra.mrb[0].mxu0 %v7485
      %v7704 = vpop.f32.mrb[0].mxu0
      %v7705 = vadd.f32 0.0, %v7704
      %v7706 = vpop.f32.mrb[0].mxu0
      %v7707 = vpop.f32.mrb[0].mxu0
      %v7708 = vadd.f32 0.0, %v7707
      %v7709 = vpop.f32.mrb[0].mxu0
      %7710 = vdwg.mxu0
      %v7711 = vadd.f32 %v7326, %v7585
      %v7712 = vadd.f32 %v7327, %v7588
      %v7713 = vadd.f32 %v7328, %v7593
      %v7714 = vadd.f32 %v7329, %v7596
      %v7715 = vadd.f32 %v7330, %v7601
      %v7716 = vadd.f32 %v7331, %v7604
      %v7717 = vadd.f32 %v7332, %v7609
      %v7718 = vadd.f32 %v7333, %v7612
      %v7719 = vadd.f32 %v7334, %v7617
      %v7720 = vadd.f32 %v7335, %v7620
      %v7721 = vadd.f32 %v7336, %v7625
      %v7722 = vadd.f32 %v7337, %v7628
      %v7723 = vadd.f32 %v7338, %v7633
      %v7724 = vadd.f32 %v7339, %v7636
      %v7725 = vadd.f32 %v7340, %v7641
      %v7726 = vadd.f32 %v7341, %v7644
      %v7727 = vadd.f32 %v7342, %v7649
      %v7728 = vadd.f32 %v7343, %v7652
      %v7729 = vadd.f32 %v7344, %v7657
      %v7730 = vadd.f32 %v7345, %v7660
      %v7731 = vadd.f32 %v7346, %v7665
      %v7732 = vadd.f32 %v7347, %v7668
      %v7733 = vadd.f32 %v7348, %v7673
      %v7734 = vadd.f32 %v7349, %v7676
      %v7735 = vadd.f32 %v7350, %v7681
      %v7736 = vadd.f32 %v7351, %v7684
      %v7737 = vadd.f32 %v7352, %v7689
      %v7738 = vadd.f32 %v7353, %v7692
      %v7739 = vadd.f32 %v7354, %v7697
      %v7740 = vadd.f32 %v7355, %v7700
      %v7741 = vadd.f32 %v7356, %v7705
      %v7742 = vadd.f32 %v7357, %v7708
      %v7743 = vld [vmem:[%s5720] sm:$0xf]
      %v7744 = vld [vmem:[%s5720 + $0x4] sm:$0xf]
      %v7745 = vld [vmem:[%s5720 + $0x8] sm:$0x1]
      %v7746 = vld [vmem:[%s5720 + $0xc] sm:$0xf]
      %v7747 = vld [vmem:[%s5720 + $0x10] sm:$0xf]
      %v7748 = vld [vmem:[%s5720 + $0x14] sm:$0x1]
      %v7749 = vld [vmem:[%s5720 + $0x18] sm:$0xf]
      %v7750 = vld [vmem:[%s5720 + $0x1c] sm:$0xf]
      %v7751 = vld [vmem:[%s5720 + $0x20] sm:$0x1]
      %v7752 = vld [vmem:[%s5720 + $0x24] sm:$0xf]
      %v7753 = vld [vmem:[%s5720 + $0x28] sm:$0xf]
      %v7754 = vld [vmem:[%s5720 + $0x2c] sm:$0x1]
      %v7755 = vld [vmem:[%s5720 + $0x30] sm:$0xf]
      %v7756 = vld [vmem:[%s5720 + $0x34] sm:$0xf]
      %v7757 = vld [vmem:[%s5720 + $0x38] sm:$0x1]
      %v7758 = vld [vmem:[%s5720 + $0x3c] sm:$0xf]
      %v7759 = vld [vmem:[%s5720 + $0x40] sm:$0xf]
      %v7760 = vld [vmem:[%s5720 + $0x44] sm:$0x1]
      %v7761 = vld [vmem:[%s5720 + $0x48] sm:$0xf]
      %v7762 = vld [vmem:[%s5720 + $0x4c] sm:$0xf]
      %v7763 = vld [vmem:[%s5720 + $0x50] sm:$0x1]
      %v7764 = vld [vmem:[%s5720 + $0x54] sm:$0xf]
      %v7765 = vld [vmem:[%s5720 + $0x58] sm:$0xf]
      %v7766 = vld [vmem:[%s5720 + $0x5c] sm:$0x1]
      %v7767 = vld [vmem:[%s5720 + $0x60] sm:$0xf]
      %v7768 = vld [vmem:[%s5720 + $0x64] sm:$0xf]
      %v7769 = vld [vmem:[%s5720 + $0x68] sm:$0x1]
      %v7770 = vld [vmem:[%s5720 + $0x6c] sm:$0xf]
      %v7771 = vld [vmem:[%s5720 + $0x70] sm:$0xf]
      %v7772 = vld [vmem:[%s5720 + $0x74] sm:$0x1]
      %v7773 = vld [vmem:[%s5720 + $0x78] sm:$0xf]
      %v7774 = vld [vmem:[%s5720 + $0x7c] sm:$0xf]
      %v7775 = vld [vmem:[%s5720 + $0x80] sm:$0x1]
      %v7776 = vld [vmem:[%s5720 + $0x84] sm:$0xf]
      %v7777 = vld [vmem:[%s5720 + $0x88] sm:$0xf]
      %v7778 = vld [vmem:[%s5720 + $0x8c] sm:$0x1]
      %v7779 = vld [vmem:[%s5720 + $0x90] sm:$0xf]
      %v7780 = vld [vmem:[%s5720 + $0x94] sm:$0xf]
      %v7781 = vld [vmem:[%s5720 + $0x98] sm:$0x1]
      %v7782 = vld [vmem:[%s5720 + $0x9c] sm:$0xf]
      %v7783 = vld [vmem:[%s5720 + $0xa0] sm:$0xf]
      %v7784 = vld [vmem:[%s5720 + $0xa4] sm:$0x1]
      %v7785 = vld [vmem:[%s5720 + $0xa8] sm:$0xf]
      %v7786 = vld [vmem:[%s5720 + $0xac] sm:$0xf]
      %v7787 = vld [vmem:[%s5720 + $0xb0] sm:$0x1]
      %v7788 = vld [vmem:[%s5720 + $0xb4] sm:$0xf]
      %v7789 = vld [vmem:[%s5720 + $0xb8] sm:$0xf]
      %v7790 = vld [vmem:[%s5720 + $0xbc] sm:$0x1]
      %v7792 = vshrl.u32 %v7743, 16
      %v7794 = vrot.slane %v7792, 4
      %v7795 = vshll.u32 %v7743, 16
      %v7797 = vrot.slane %v7795, 5
      %v7798 = vor.u32 %v7794, %v7797
      %v7799 = vrot.slane %v7798, 4
      %v7801 = vshll.u32 %v7744, 16
      %v7803 = vrot.slane %v7801, 5
      %v7804 = vsel %vm238, %v7799, %v7803
      %v7805 = vshrl.u32 %v7744, 16
      %v7807 = vrot.slane %v7805, 4
      %v7808 = vor.u32 %v7807, %v7803
      %v7809 = vrot.slane %v7808, 4
      %v7811 = vshll.u32 %v7745, 16
      %v7813 = vrot.slane %v7811, 5
      %v7814 = vsel %vm238, %v7809, %v7813
      %v7816 = vshrl.u32 %v7746, 16
      %v7818 = vrot.slane %v7816, 4
      %v7819 = vshll.u32 %v7746, 16
      %v7821 = vrot.slane %v7819, 5
      %v7822 = vor.u32 %v7818, %v7821
      %v7823 = vrot.slane %v7822, 4
      %v7825 = vshll.u32 %v7747, 16
      %v7827 = vrot.slane %v7825, 5
      %v7828 = vsel %vm238, %v7823, %v7827
      %v7829 = vshrl.u32 %v7747, 16
      %v7831 = vrot.slane %v7829, 4
      %v7832 = vor.u32 %v7831, %v7827
      %v7833 = vrot.slane %v7832, 4
      %v7835 = vshll.u32 %v7748, 16
      %v7837 = vrot.slane %v7835, 5
      %v7838 = vsel %vm238, %v7833, %v7837
      %v7840 = vshrl.u32 %v7749, 16
      %v7842 = vrot.slane %v7840, 4
      %v7843 = vshll.u32 %v7749, 16
      %v7845 = vrot.slane %v7843, 5
      %v7846 = vor.u32 %v7842, %v7845
      %v7847 = vrot.slane %v7846, 4
      %v7849 = vshll.u32 %v7750, 16
      %v7851 = vrot.slane %v7849, 5
      %v7852 = vsel %vm238, %v7847, %v7851
      %v7853 = vshrl.u32 %v7750, 16
      %v7855 = vrot.slane %v7853, 4
      %v7856 = vor.u32 %v7855, %v7851
      %v7857 = vrot.slane %v7856, 4
      %v7859 = vshll.u32 %v7751, 16
      %v7861 = vrot.slane %v7859, 5
      %v7862 = vsel %vm238, %v7857, %v7861
      %v7864 = vshrl.u32 %v7752, 16
      %v7866 = vrot.slane %v7864, 4
      %v7867 = vshll.u32 %v7752, 16
      %v7869 = vrot.slane %v7867, 5
      %v7870 = vor.u32 %v7866, %v7869
      %v7871 = vrot.slane %v7870, 4
      %v7873 = vshll.u32 %v7753, 16
      %v7875 = vrot.slane %v7873, 5
      %v7876 = vsel %vm238, %v7871, %v7875
      %v7877 = vshrl.u32 %v7753, 16
      %v7879 = vrot.slane %v7877, 4
      %v7880 = vor.u32 %v7879, %v7875
      %v7881 = vrot.slane %v7880, 4
      %v7883 = vshll.u32 %v7754, 16
      %v7885 = vrot.slane %v7883, 5
      %v7886 = vsel %vm238, %v7881, %v7885
      %v7888 = vshrl.u32 %v7755, 16
      %v7890 = vrot.slane %v7888, 4
      %v7891 = vshll.u32 %v7755, 16
      %v7893 = vrot.slane %v7891, 5
      %v7894 = vor.u32 %v7890, %v7893
      %v7895 = vrot.slane %v7894, 4
      %v7897 = vshll.u32 %v7756, 16
      %v7899 = vrot.slane %v7897, 5
      %v7900 = vsel %vm238, %v7895, %v7899
      %v7901 = vshrl.u32 %v7756, 16
      %v7903 = vrot.slane %v7901, 4
      %v7904 = vor.u32 %v7903, %v7899
      %v7905 = vrot.slane %v7904, 4
      %v7907 = vshll.u32 %v7757, 16
      %v7909 = vrot.slane %v7907, 5
      %v7910 = vsel %vm238, %v7905, %v7909
      %v7912 = vshrl.u32 %v7758, 16
      %v7914 = vrot.slane %v7912, 4
      %v7915 = vshll.u32 %v7758, 16
      %v7917 = vrot.slane %v7915, 5
      %v7918 = vor.u32 %v7914, %v7917
      %v7919 = vrot.slane %v7918, 4
      %v7921 = vshll.u32 %v7759, 16
      %v7923 = vrot.slane %v7921, 5
      %v7924 = vsel %vm238, %v7919, %v7923
      %v7925 = vshrl.u32 %v7759, 16
      %v7927 = vrot.slane %v7925, 4
      %v7928 = vor.u32 %v7927, %v7923
      %v7929 = vrot.slane %v7928, 4
      %v7931 = vshll.u32 %v7760, 16
      %v7933 = vrot.slane %v7931, 5
      %v7934 = vsel %vm238, %v7929, %v7933
      %v7936 = vshrl.u32 %v7761, 16
      %v7938 = vrot.slane %v7936, 4
      %v7939 = vshll.u32 %v7761, 16
      %v7941 = vrot.slane %v7939, 5
      %v7942 = vor.u32 %v7938, %v7941
      %v7943 = vrot.slane %v7942, 4
      %v7945 = vshll.u32 %v7762, 16
      %v7947 = vrot.slane %v7945, 5
      %v7948 = vsel %vm238, %v7943, %v7947
      %v7949 = vshrl.u32 %v7762, 16
      %v7951 = vrot.slane %v7949, 4
      %v7952 = vor.u32 %v7951, %v7947
      %v7953 = vrot.slane %v7952, 4
      %v7955 = vshll.u32 %v7763, 16
      %v7957 = vrot.slane %v7955, 5
      %v7958 = vsel %vm238, %v7953, %v7957
      %v7960 = vshrl.u32 %v7764, 16
      %v7962 = vrot.slane %v7960, 4
      %v7963 = vshll.u32 %v7764, 16
      %v7965 = vrot.slane %v7963, 5
      %v7966 = vor.u32 %v7962, %v7965
      %v7967 = vrot.slane %v7966, 4
      %v7969 = vshll.u32 %v7765, 16
      %v7971 = vrot.slane %v7969, 5
      %v7972 = vsel %vm238, %v7967, %v7971
      %v7973 = vshrl.u32 %v7765, 16
      %v7975 = vrot.slane %v7973, 4
      %v7976 = vor.u32 %v7975, %v7971
      %v7977 = vrot.slane %v7976, 4
      %v7979 = vshll.u32 %v7766, 16
      %v7981 = vrot.slane %v7979, 5
      %v7982 = vsel %vm238, %v7977, %v7981
      %v7984 = vshrl.u32 %v7767, 16
      %v7986 = vrot.slane %v7984, 4
      %v7987 = vshll.u32 %v7767, 16
      %v7989 = vrot.slane %v7987, 5
      %v7990 = vor.u32 %v7986, %v7989
      %v7991 = vrot.slane %v7990, 4
      %v7993 = vshll.u32 %v7768, 16
      %v7995 = vrot.slane %v7993, 5
      %v7996 = vsel %vm238, %v7991, %v7995
      %v7997 = vshrl.u32 %v7768, 16
      %v7999 = vrot.slane %v7997, 4
      %v8000 = vor.u32 %v7999, %v7995
      %v8001 = vrot.slane %v8000, 4
      %v8003 = vshll.u32 %v7769, 16
      %v8005 = vrot.slane %v8003, 5
      %v8006 = vsel %vm238, %v8001, %v8005
      %v8008 = vshrl.u32 %v7770, 16
      %v8010 = vrot.slane %v8008, 4
      %v8011 = vshll.u32 %v7770, 16
      %v8013 = vrot.slane %v8011, 5
      %v8014 = vor.u32 %v8010, %v8013
      %v8015 = vrot.slane %v8014, 4
      %v8017 = vshll.u32 %v7771, 16
      %v8019 = vrot.slane %v8017, 5
      %v8020 = vsel %vm238, %v8015, %v8019
      %v8021 = vshrl.u32 %v7771, 16
      %v8023 = vrot.slane %v8021, 4
      %v8024 = vor.u32 %v8023, %v8019
      %v8025 = vrot.slane %v8024, 4
      %v8027 = vshll.u32 %v7772, 16
      %v8029 = vrot.slane %v8027, 5
      %v8030 = vsel %vm238, %v8025, %v8029
      %v8032 = vshrl.u32 %v7773, 16
      %v8034 = vrot.slane %v8032, 4
      %v8035 = vshll.u32 %v7773, 16
      %v8037 = vrot.slane %v8035, 5
      %v8038 = vor.u32 %v8034, %v8037
      %v8039 = vrot.slane %v8038, 4
      %v8041 = vshll.u32 %v7774, 16
      %v8043 = vrot.slane %v8041, 5
      %v8044 = vsel %vm238, %v8039, %v8043
      %v8045 = vshrl.u32 %v7774, 16
      %v8047 = vrot.slane %v8045, 4
      %v8048 = vor.u32 %v8047, %v8043
      %v8049 = vrot.slane %v8048, 4
      %v8051 = vshll.u32 %v7775, 16
      %v8053 = vrot.slane %v8051, 5
      %v8054 = vsel %vm238, %v8049, %v8053
      %v8056 = vshrl.u32 %v7776, 16
      %v8058 = vrot.slane %v8056, 4
      %v8059 = vshll.u32 %v7776, 16
      %v8061 = vrot.slane %v8059, 5
      %v8062 = vor.u32 %v8058, %v8061
      %v8063 = vrot.slane %v8062, 4
      %v8065 = vshll.u32 %v7777, 16
      %v8067 = vrot.slane %v8065, 5
      %v8068 = vsel %vm238, %v8063, %v8067
      %v8069 = vshrl.u32 %v7777, 16
      %v8071 = vrot.slane %v8069, 4
      %v8072 = vor.u32 %v8071, %v8067
      %v8073 = vrot.slane %v8072, 4
      %v8075 = vshll.u32 %v7778, 16
      %v8077 = vrot.slane %v8075, 5
      %v8078 = vsel %vm238, %v8073, %v8077
      %v8080 = vshrl.u32 %v7779, 16
      %v8082 = vrot.slane %v8080, 4
      %v8083 = vshll.u32 %v7779, 16
      %v8085 = vrot.slane %v8083, 5
      %v8086 = vor.u32 %v8082, %v8085
      %v8087 = vrot.slane %v8086, 4
      %v8089 = vshll.u32 %v7780, 16
      %v8091 = vrot.slane %v8089, 5
      %v8092 = vsel %vm238, %v8087, %v8091
      %v8093 = vshrl.u32 %v7780, 16
      %v8095 = vrot.slane %v8093, 4
      %v8096 = vor.u32 %v8095, %v8091
      %v8097 = vrot.slane %v8096, 4
      %v8099 = vshll.u32 %v7781, 16
      %v8101 = vrot.slane %v8099, 5
      %v8102 = vsel %vm238, %v8097, %v8101
      %v8104 = vshrl.u32 %v7782, 16
      %v8106 = vrot.slane %v8104, 4
      %v8107 = vshll.u32 %v7782, 16
      %v8109 = vrot.slane %v8107, 5
      %v8110 = vor.u32 %v8106, %v8109
      %v8111 = vrot.slane %v8110, 4
      %v8113 = vshll.u32 %v7783, 16
      %v8115 = vrot.slane %v8113, 5
      %v8116 = vsel %vm238, %v8111, %v8115
      %v8117 = vshrl.u32 %v7783, 16
      %v8119 = vrot.slane %v8117, 4
      %v8120 = vor.u32 %v8119, %v8115
      %v8121 = vrot.slane %v8120, 4
      %v8123 = vshll.u32 %v7784, 16
      %v8125 = vrot.slane %v8123, 5
      %v8126 = vsel %vm238, %v8121, %v8125
      %v8128 = vshrl.u32 %v7785, 16
      %v8130 = vrot.slane %v8128, 4
      %v8131 = vshll.u32 %v7785, 16
      %v8133 = vrot.slane %v8131, 5
      %v8134 = vor.u32 %v8130, %v8133
      %v8135 = vrot.slane %v8134, 4
      %v8137 = vshll.u32 %v7786, 16
      %v8139 = vrot.slane %v8137, 5
      %v8140 = vsel %vm238, %v8135, %v8139
      %v8141 = vshrl.u32 %v7786, 16
      %v8143 = vrot.slane %v8141, 4
      %v8144 = vor.u32 %v8143, %v8139
      %v8145 = vrot.slane %v8144, 4
      %v8147 = vshll.u32 %v7787, 16
      %v8149 = vrot.slane %v8147, 5
      %v8150 = vsel %vm238, %v8145, %v8149
      %v8152 = vshrl.u32 %v7788, 16
      %v8154 = vrot.slane %v8152, 4
      %v8155 = vshll.u32 %v7788, 16
      %v8157 = vrot.slane %v8155, 5
      %v8158 = vor.u32 %v8154, %v8157
      %v8159 = vrot.slane %v8158, 4
      %v8161 = vshll.u32 %v7789, 16
      %v8163 = vrot.slane %v8161, 5
      %v8164 = vsel %vm238, %v8159, %v8163
      %v8165 = vshrl.u32 %v7789, 16
      %v8167 = vrot.slane %v8165, 4
      %v8168 = vor.u32 %v8167, %v8163
      %v8169 = vrot.slane %v8168, 4
      %v8171 = vshll.u32 %v7790, 16
      %v8173 = vrot.slane %v8171, 5
      %v8174 = vsel %vm238, %v8169, %v8173
      %v8175 = vld [vmem:[%s2 + $0x100] sm:$0xf]
      %v8176 = vld [vmem:[%s2 + $0x104] sm:$0xf]
      %v8177 = vld [vmem:[%s2 + $0x108] sm:$0xf]
      %v8178 = vld [vmem:[%s2 + $0x10c] sm:$0xf]
      %v8179 = vld [vmem:[%s2 + $0x110] sm:$0xf]
      %v8180 = vld [vmem:[%s2 + $0x114] sm:$0xf]
      %v8181 = vld [vmem:[%s2 + $0x118] sm:$0xf]
      %v8182 = vld [vmem:[%s2 + $0x11c] sm:$0xf]
      %v8183 = vld [vmem:[%s2 + $0x120] sm:$0xf]
      %v8184 = vld [vmem:[%s2 + $0x124] sm:$0xf]
      %v8185 = vld [vmem:[%s2 + $0x128] sm:$0xf]
      %v8186 = vld [vmem:[%s2 + $0x12c] sm:$0xf]
      %v8187 = vld [vmem:[%s2 + $0x130] sm:$0xf]
      %v8188 = vld [vmem:[%s2 + $0x134] sm:$0xf]
      %v8189 = vld [vmem:[%s2 + $0x138] sm:$0xf]
      %v8190 = vld [vmem:[%s2 + $0x13c] sm:$0xf]
      %v8191 = vunpack.c.l.b16 %v7804
      %v8192 = vunpack.c.l.b16 %v7814
      %v8193 = vunpack.c.l.b16 %v7828
      %v8194 = vunpack.c.l.b16 %v7838
      %v8195 = vunpack.c.l.b16 %v7852
      %v8196 = vunpack.c.l.b16 %v7862
      %v8197 = vunpack.c.l.b16 %v7876
      %v8198 = vunpack.c.l.b16 %v7886
      %v8199 = vunpack.c.l.b16 %v7900
      %v8200 = vunpack.c.l.b16 %v7910
      %v8201 = vunpack.c.l.b16 %v7924
      %v8202 = vunpack.c.l.b16 %v7934
      %v8203 = vunpack.c.l.b16 %v7948
      %v8204 = vunpack.c.l.b16 %v7958
      %v8205 = vunpack.c.l.b16 %v7972
      %v8206 = vunpack.c.l.b16 %v7982
      %v8207 = vunpack.c.l.b16 %v7996
      %v8208 = vunpack.c.l.b16 %v8006
      %v8209 = vunpack.c.l.b16 %v8020
      %v8210 = vunpack.c.l.b16 %v8030
      %v8211 = vunpack.c.l.b16 %v8044
      %v8212 = vunpack.c.l.b16 %v8054
      %v8213 = vunpack.c.l.b16 %v8068
      %v8214 = vunpack.c.l.b16 %v8078
      %v8215 = vunpack.c.l.b16 %v8092
      %v8216 = vunpack.c.l.b16 %v8102
      %v8217 = vunpack.c.l.b16 %v8116
      %v8218 = vunpack.c.l.b16 %v8126
      %v8219 = vunpack.c.l.b16 %v8140
      %v8220 = vunpack.c.l.b16 %v8150
      %v8221 = vunpack.c.l.b16 %v8164
      %v8222 = vunpack.c.l.b16 %v8174
      %v8223 = vpack.c.b16 %v8192, %v8191
      %v8224 = vpack.c.b16 %v8194, %v8193
      %v8225 = vpack.c.b16 %v8196, %v8195
      %v8226 = vpack.c.b16 %v8198, %v8197
      %v8227 = vpack.c.b16 %v8200, %v8199
      %v8228 = vpack.c.b16 %v8202, %v8201
      %v8229 = vpack.c.b16 %v8204, %v8203
      %v8230 = vpack.c.b16 %v8206, %v8205
      %v8231 = vpack.c.b16 %v8208, %v8207
      %v8232 = vpack.c.b16 %v8210, %v8209
      %v8233 = vpack.c.b16 %v8212, %v8211
      %v8234 = vpack.c.b16 %v8214, %v8213
      %v8235 = vpack.c.b16 %v8216, %v8215
      %v8236 = vpack.c.b16 %v8218, %v8217
      %v8237 = vpack.c.b16 %v8220, %v8219
      %v8238 = vpack.c.b16 %v8222, %v8221
      %v8271 = vunpack.c.l.b16 %v8175
      %v8272 = vunpack.c.l.b16 %v8176
      %v8273 = vunpack.c.l.b16 %v8177
      %v8274 = vunpack.c.l.b16 %v8178
      %v8275 = vunpack.c.l.b16 %v8179
      %v8276 = vunpack.c.l.b16 %v8180
      %v8277 = vunpack.c.l.b16 %v8181
      %v8278 = vunpack.c.l.b16 %v8182
      %v8279 = vunpack.c.l.b16 %v8183
      %v8280 = vunpack.c.l.b16 %v8184
      %v8281 = vunpack.c.l.b16 %v8185
      %v8282 = vunpack.c.l.b16 %v8186
      %v8283 = vunpack.c.l.b16 %v8187
      %v8284 = vunpack.c.l.b16 %v8188
      %v8285 = vunpack.c.l.b16 %v8189
      %v8286 = vunpack.c.l.b16 %v8190
      %v8287 = vpack.c.b16 %v8272, %v8271
      %v8288 = vpack.c.b16 %v8274, %v8273
      %v8289 = vpack.c.b16 %v8276, %v8275
      %v8290 = vpack.c.b16 %v8278, %v8277
      %v8291 = vpack.c.b16 %v8280, %v8279
      %v8292 = vpack.c.b16 %v8282, %v8281
      %v8293 = vpack.c.b16 %v8284, %v8283
      %v8294 = vpack.c.b16 %v8286, %v8285
      %8303 = vmatprep.subr.bf16.mxu0 0
      %8304 = vmatpush1.bf16.msra.mxu0 %v8287
      %8305 = vmatprep.subr.bf16.mxu0 0
      %8306 = vmatpush1.bf16.msra.mxu0 %v8288
      %8307 = vmatprep.subr.bf16.mxu0 0
      %8308 = vmatpush1.bf16.msra.mxu0 %v8289
      %8309 = vmatprep.subr.bf16.mxu0 0
      %8310 = vmatpush1.bf16.msra.mxu0 %v8290
      %8311 = vmatprep.subr.bf16.mxu0 0
      %8312 = vmatpush1.bf16.msra.mxu0 %v8291
      %8313 = vmatprep.subr.bf16.mxu0 0
      %8314 = vmatpush1.bf16.msra.mxu0 %v8292
      %8315 = vmatprep.subr.bf16.mxu0 0
      %8316 = vmatpush1.bf16.msra.mxu0 %v8293
      %8317 = vmatprep.subr.bf16.mxu0 0
      %8318 = vmatpush1.bf16.msra.mxu0 %v8294
      %8319 = vmatprep.subr.bf16.mxu0 0
      %8320 = vmatpush1.bf16.msra.mxu0 0
      %8321 = vmatprep.subr.bf16.mxu0 0
      %8322 = vmatpush1.bf16.msra.mxu0 0
      %8323 = vmatprep.subr.bf16.mxu0 0
      %8324 = vmatpush1.bf16.msra.mxu0 0
      %8325 = vmatprep.subr.bf16.mxu0 0
      %8326 = vmatpush1.bf16.msra.mxu0 0
      %8327 = vmatprep.subr.bf16.mxu0 0
      %8328 = vmatpush1.bf16.msra.mxu0 0
      %8329 = vmatprep.subr.bf16.mxu0 0
      %8330 = vmatpush1.bf16.msra.mxu0 0
      %8331 = vmatprep.subr.bf16.mxu0 0
      %8332 = vmatpush1.bf16.msra.mxu0 0
      %8333 = vmatprep.subr.bf16.mxu0 0
      %8334 = vmatpush1.bf16.msra.mxu0 0
      %8335 = vmatprep.mubr.bf16.mxu0 0
      %8336 = vmatmul.mubr.bf16.gmra.mrb[0].mxu0 %v8223
      %v8337 = vpop.f32.mrb[0].mxu0
      %v8338 = vadd.f32 0.0, %v8337
      %v8339 = vpop.f32.mrb[0].mxu0
      %v8340 = vpop.f32.mrb[0].mxu0
      %v8341 = vadd.f32 0.0, %v8340
      %v8342 = vpop.f32.mrb[0].mxu0
      %8343 = vmatprep.mubr.bf16.mxu0 0
      %8344 = vmatmul.mubr.bf16.gmra.mrb[0].mxu0 %v8224
      %v8345 = vpop.f32.mrb[0].mxu0
      %v8346 = vadd.f32 0.0, %v8345
      %v8347 = vpop.f32.mrb[0].mxu0
      %v8348 = vpop.f32.mrb[0].mxu0
      %v8349 = vadd.f32 0.0, %v8348
      %v8350 = vpop.f32.mrb[0].mxu0
      %8351 = vmatprep.mubr.bf16.mxu0 0
      %8352 = vmatmul.mubr.bf16.gmra.mrb[0].mxu0 %v8225
      %v8353 = vpop.f32.mrb[0].mxu0
      %v8354 = vadd.f32 0.0, %v8353
      %v8355 = vpop.f32.mrb[0].mxu0
      %v8356 = vpop.f32.mrb[0].mxu0
      %v8357 = vadd.f32 0.0, %v8356
      %v8358 = vpop.f32.mrb[0].mxu0
      %8359 = vmatprep.mubr.bf16.mxu0 0
      %8360 = vmatmul.mubr.bf16.gmra.mrb[0].mxu0 %v8226
      %v8361 = vpop.f32.mrb[0].mxu0
      %v8362 = vadd.f32 0.0, %v8361
      %v8363 = vpop.f32.mrb[0].mxu0
      %v8364 = vpop.f32.mrb[0].mxu0
      %v8365 = vadd.f32 0.0, %v8364
      %v8366 = vpop.f32.mrb[0].mxu0
      %8367 = vmatprep.mubr.bf16.mxu0 0
      %8368 = vmatmul.mubr.bf16.gmra.mrb[0].mxu0 %v8227
      %v8369 = vpop.f32.mrb[0].mxu0
      %v8370 = vadd.f32 0.0, %v8369
      %v8371 = vpop.f32.mrb[0].mxu0
      %v8372 = vpop.f32.mrb[0].mxu0
      %v8373 = vadd.f32 0.0, %v8372
      %v8374 = vpop.f32.mrb[0].mxu0
      %8375 = vmatprep.mubr.bf16.mxu0 0
      %8376 = vmatmul.mubr.bf16.gmra.mrb[0].mxu0 %v8228
      %v8377 = vpop.f32.mrb[0].mxu0
      %v8378 = vadd.f32 0.0, %v8377
      %v8379 = vpop.f32.mrb[0].mxu0
      %v8380 = vpop.f32.mrb[0].mxu0
      %v8381 = vadd.f32 0.0, %v8380
      %v8382 = vpop.f32.mrb[0].mxu0
      %8383 = vmatprep.mubr.bf16.mxu0 0
      %8384 = vmatmul.mubr.bf16.gmra.mrb[0].mxu0 %v8229
      %v8385 = vpop.f32.mrb[0].mxu0
      %v8386 = vadd.f32 0.0, %v8385
      %v8387 = vpop.f32.mrb[0].mxu0
      %v8388 = vpop.f32.mrb[0].mxu0
      %v8389 = vadd.f32 0.0, %v8388
      %v8390 = vpop.f32.mrb[0].mxu0
      %8391 = vmatprep.mubr.bf16.mxu0 0
      %8392 = vmatmul.mubr.bf16.gmra.mrb[0].mxu0 %v8230
      %v8393 = vpop.f32.mrb[0].mxu0
      %v8394 = vadd.f32 0.0, %v8393
      %v8395 = vpop.f32.mrb[0].mxu0
      %v8396 = vpop.f32.mrb[0].mxu0
      %v8397 = vadd.f32 0.0, %v8396
      %v8398 = vpop.f32.mrb[0].mxu0
      %8399 = vmatprep.mubr.bf16.mxu0 0
      %8400 = vmatmul.mubr.bf16.gmra.mrb[0].mxu0 %v8231
      %v8401 = vpop.f32.mrb[0].mxu0
      %v8402 = vadd.f32 0.0, %v8401
      %v8403 = vpop.f32.mrb[0].mxu0
      %v8404 = vpop.f32.mrb[0].mxu0
      %v8405 = vadd.f32 0.0, %v8404
      %v8406 = vpop.f32.mrb[0].mxu0
      %8407 = vmatprep.mubr.bf16.mxu0 0
      %8408 = vmatmul.mubr.bf16.gmra.mrb[0].mxu0 %v8232
      %v8409 = vpop.f32.mrb[0].mxu0
      %v8410 = vadd.f32 0.0, %v8409
      %v8411 = vpop.f32.mrb[0].mxu0
      %v8412 = vpop.f32.mrb[0].mxu0
      %v8413 = vadd.f32 0.0, %v8412
      %v8414 = vpop.f32.mrb[0].mxu0
      %8415 = vmatprep.mubr.bf16.mxu0 0
      %8416 = vmatmul.mubr.bf16.gmra.mrb[0].mxu0 %v8233
      %v8417 = vpop.f32.mrb[0].mxu0
      %v8418 = vadd.f32 0.0, %v8417
      %v8419 = vpop.f32.mrb[0].mxu0
      %v8420 = vpop.f32.mrb[0].mxu0
      %v8421 = vadd.f32 0.0, %v8420
      %v8422 = vpop.f32.mrb[0].mxu0
      %8423 = vmatprep.mubr.bf16.mxu0 0
      %8424 = vmatmul.mubr.bf16.gmra.mrb[0].mxu0 %v8234
      %v8425 = vpop.f32.mrb[0].mxu0
      %v8426 = vadd.f32 0.0, %v8425
      %v8427 = vpop.f32.mrb[0].mxu0
      %v8428 = vpop.f32.mrb[0].mxu0
      %v8429 = vadd.f32 0.0, %v8428
      %v8430 = vpop.f32.mrb[0].mxu0
      %8431 = vmatprep.mubr.bf16.mxu0 0
      %8432 = vmatmul.mubr.bf16.gmra.mrb[0].mxu0 %v8235
      %v8433 = vpop.f32.mrb[0].mxu0
      %v8434 = vadd.f32 0.0, %v8433
      %v8435 = vpop.f32.mrb[0].mxu0
      %v8436 = vpop.f32.mrb[0].mxu0
      %v8437 = vadd.f32 0.0, %v8436
      %v8438 = vpop.f32.mrb[0].mxu0
      %8439 = vmatprep.mubr.bf16.mxu0 0
      %8440 = vmatmul.mubr.bf16.gmra.mrb[0].mxu0 %v8236
      %v8441 = vpop.f32.mrb[0].mxu0
      %v8442 = vadd.f32 0.0, %v8441
      %v8443 = vpop.f32.mrb[0].mxu0
      %v8444 = vpop.f32.mrb[0].mxu0
      %v8445 = vadd.f32 0.0, %v8444
      %v8446 = vpop.f32.mrb[0].mxu0
      %8447 = vmatprep.mubr.bf16.mxu0 0
      %8448 = vmatmul.mubr.bf16.gmra.mrb[0].mxu0 %v8237
      %v8449 = vpop.f32.mrb[0].mxu0
      %v8450 = vadd.f32 0.0, %v8449
      %v8451 = vpop.f32.mrb[0].mxu0
      %v8452 = vpop.f32.mrb[0].mxu0
      %v8453 = vadd.f32 0.0, %v8452
      %v8454 = vpop.f32.mrb[0].mxu0
      %8455 = vmatprep.mubr.bf16.mxu0 0
      %8456 = vmatmul.mubr.bf16.gmra.mrb[0].mxu0 %v8238
      %v8457 = vpop.f32.mrb[0].mxu0
      %v8458 = vadd.f32 0.0, %v8457
      %v8459 = vpop.f32.mrb[0].mxu0
      %v8460 = vpop.f32.mrb[0].mxu0
      %v8461 = vadd.f32 0.0, %v8460
      %v8462 = vpop.f32.mrb[0].mxu0
      %8463 = vdwg.mxu0
      %v8464 = vadd.f32 %v7711, %v8338
      %v8465 = vadd.f32 %v7712, %v8341
      %v8466 = vadd.f32 %v7713, %v8346
      %v8467 = vadd.f32 %v7714, %v8349
      %v8468 = vadd.f32 %v7715, %v8354
      %v8469 = vadd.f32 %v7716, %v8357
      %v8470 = vadd.f32 %v7717, %v8362
      %v8471 = vadd.f32 %v7718, %v8365
      %v8472 = vadd.f32 %v7719, %v8370
      %v8473 = vadd.f32 %v7720, %v8373
      %v8474 = vadd.f32 %v7721, %v8378
      %v8475 = vadd.f32 %v7722, %v8381
      %v8476 = vadd.f32 %v7723, %v8386
      %v8477 = vadd.f32 %v7724, %v8389
      %v8478 = vadd.f32 %v7725, %v8394
      %v8479 = vadd.f32 %v7726, %v8397
      %v8480 = vadd.f32 %v7727, %v8402
      %v8481 = vadd.f32 %v7728, %v8405
      %v8482 = vadd.f32 %v7729, %v8410
      %v8483 = vadd.f32 %v7730, %v8413
      %v8484 = vadd.f32 %v7731, %v8418
      %v8485 = vadd.f32 %v7732, %v8421
      %v8486 = vadd.f32 %v7733, %v8426
      %v8487 = vadd.f32 %v7734, %v8429
      %v8488 = vadd.f32 %v7735, %v8434
      %v8489 = vadd.f32 %v7736, %v8437
      %v8490 = vadd.f32 %v7737, %v8442
      %v8491 = vadd.f32 %v7738, %v8445
      %v8492 = vadd.f32 %v7739, %v8450
      %v8493 = vadd.f32 %v7740, %v8453
      %v8494 = vadd.f32 %v7741, %v8458
      %v8495 = vadd.f32 %v7742, %v8461
      %v8496 = vld [vmem:[%s5720] sm:$0xe]
      %v8497 = vld [vmem:[%s5720 + $0xc] sm:$0xe]
      %v8498 = vld [vmem:[%s5720 + $0x18] sm:$0xe]
      %v8499 = vld [vmem:[%s5720 + $0x24] sm:$0xe]
      %v8500 = vld [vmem:[%s5720 + $0x30] sm:$0xe]
      %v8501 = vld [vmem:[%s5720 + $0x3c] sm:$0xe]
      %v8502 = vld [vmem:[%s5720 + $0x48] sm:$0xe]
      %v8503 = vld [vmem:[%s5720 + $0x54] sm:$0xe]
      %v8504 = vld [vmem:[%s5720 + $0x60] sm:$0xe]
      %v8505 = vld [vmem:[%s5720 + $0x6c] sm:$0xe]
      %v8506 = vld [vmem:[%s5720 + $0x78] sm:$0xe]
      %v8507 = vld [vmem:[%s5720 + $0x84] sm:$0xe]
      %v8508 = vld [vmem:[%s5720 + $0x90] sm:$0xe]
      %v8509 = vld [vmem:[%s5720 + $0x9c] sm:$0xe]
      %v8510 = vld [vmem:[%s5720 + $0xa8] sm:$0xe]
      %v8511 = vld [vmem:[%s5720 + $0xb4] sm:$0xe]
      %v8560 = vrot.slane %v8496, 5
      %v8561 = vrot.slane %v8560, 4
      %v8562 = vrot.slane %v7744, 5
      %v8563 = vsel %vm1267, %v8561, %v8562
      %v8564 = vrot.slane %v8562, 4
      %v8565 = vrot.slane %v7745, 5
      %v8566 = vsel %vm1267, %v8564, %v8565
      %v8567 = vrot.slane %v8497, 5
      %v8568 = vrot.slane %v8567, 4
      %v8569 = vrot.slane %v7747, 5
      %v8570 = vsel %vm1267, %v8568, %v8569
      %v8571 = vrot.slane %v8569, 4
      %v8572 = vrot.slane %v7748, 5
      %v8573 = vsel %vm1267, %v8571, %v8572
      %v8574 = vrot.slane %v8498, 5
      %v8575 = vrot.slane %v8574, 4
      %v8576 = vrot.slane %v7750, 5
      %v8577 = vsel %vm1267, %v8575, %v8576
      %v8578 = vrot.slane %v8576, 4
      %v8579 = vrot.slane %v7751, 5
      %v8580 = vsel %vm1267, %v8578, %v8579
      %v8581 = vrot.slane %v8499, 5
      %v8582 = vrot.slane %v8581, 4
      %v8583 = vrot.slane %v7753, 5
      %v8584 = vsel %vm1267, %v8582, %v8583
      %v8585 = vrot.slane %v8583, 4
      %v8586 = vrot.slane %v7754, 5
      %v8587 = vsel %vm1267, %v8585, %v8586
      %v8588 = vrot.slane %v8500, 5
      %v8589 = vrot.slane %v8588, 4
      %v8590 = vrot.slane %v7756, 5
      %v8591 = vsel %vm1267, %v8589, %v8590
      %v8592 = vrot.slane %v8590, 4
      %v8593 = vrot.slane %v7757, 5
      %v8594 = vsel %vm1267, %v8592, %v8593
      %v8595 = vrot.slane %v8501, 5
      %v8596 = vrot.slane %v8595, 4
      %v8597 = vrot.slane %v7759, 5
      %v8598 = vsel %vm1267, %v8596, %v8597
      %v8599 = vrot.slane %v8597, 4
      %v8600 = vrot.slane %v7760, 5
      %v8601 = vsel %vm1267, %v8599, %v8600
      %v8602 = vrot.slane %v8502, 5
      %v8603 = vrot.slane %v8602, 4
      %v8604 = vrot.slane %v7762, 5
      %v8605 = vsel %vm1267, %v8603, %v8604
      %v8606 = vrot.slane %v8604, 4
      %v8607 = vrot.slane %v7763, 5
      %v8608 = vsel %vm1267, %v8606, %v8607
      %v8609 = vrot.slane %v8503, 5
      %v8610 = vrot.slane %v8609, 4
      %v8611 = vrot.slane %v7765, 5
      %v8612 = vsel %vm1267, %v8610, %v8611
      %v8613 = vrot.slane %v8611, 4
      %v8614 = vrot.slane %v7766, 5
      %v8615 = vsel %vm1267, %v8613, %v8614
      %v8616 = vrot.slane %v8504, 5
      %v8617 = vrot.slane %v8616, 4
      %v8618 = vrot.slane %v7768, 5
      %v8619 = vsel %vm1267, %v8617, %v8618
      %v8620 = vrot.slane %v8618, 4
      %v8621 = vrot.slane %v7769, 5
      %v8622 = vsel %vm1267, %v8620, %v8621
      %v8623 = vrot.slane %v8505, 5
      %v8624 = vrot.slane %v8623, 4
      %v8625 = vrot.slane %v7771, 5
      %v8626 = vsel %vm1267, %v8624, %v8625
      %v8627 = vrot.slane %v8625, 4
      %v8628 = vrot.slane %v7772, 5
      %v8629 = vsel %vm1267, %v8627, %v8628
      %v8630 = vrot.slane %v8506, 5
      %v8631 = vrot.slane %v8630, 4
      %v8632 = vrot.slane %v7774, 5
      %v8633 = vsel %vm1267, %v8631, %v8632
      %v8634 = vrot.slane %v8632, 4
      %v8635 = vrot.slane %v7775, 5
      %v8636 = vsel %vm1267, %v8634, %v8635
      %v8637 = vrot.slane %v8507, 5
      %v8638 = vrot.slane %v8637, 4
      %v8639 = vrot.slane %v7777, 5
      %v8640 = vsel %vm1267, %v8638, %v8639
      %v8641 = vrot.slane %v8639, 4
      %v8642 = vrot.slane %v7778, 5
      %v8643 = vsel %vm1267, %v8641, %v8642
      %v8644 = vrot.slane %v8508, 5
      %v8645 = vrot.slane %v8644, 4
      %v8646 = vrot.slane %v7780, 5
      %v8647 = vsel %vm1267, %v8645, %v8646
      %v8648 = vrot.slane %v8646, 4
      %v8649 = vrot.slane %v7781, 5
      %v8650 = vsel %vm1267, %v8648, %v8649
      %v8651 = vrot.slane %v8509, 5
      %v8652 = vrot.slane %v8651, 4
      %v8653 = vrot.slane %v7783, 5
      %v8654 = vsel %vm1267, %v8652, %v8653
      %v8655 = vrot.slane %v8653, 4
      %v8656 = vrot.slane %v7784, 5
      %v8657 = vsel %vm1267, %v8655, %v8656
      %v8658 = vrot.slane %v8510, 5
      %v8659 = vrot.slane %v8658, 4
      %v8660 = vrot.slane %v7786, 5
      %v8661 = vsel %vm1267, %v8659, %v8660
      %v8662 = vrot.slane %v8660, 4
      %v8663 = vrot.slane %v7787, 5
      %v8664 = vsel %vm1267, %v8662, %v8663
      %v8665 = vrot.slane %v8511, 5
      %v8666 = vrot.slane %v8665, 4
      %v8667 = vrot.slane %v7789, 5
      %v8668 = vsel %vm1267, %v8666, %v8667
      %v8669 = vrot.slane %v8667, 4
      %v8670 = vrot.slane %v7790, 5
      %v8671 = vsel %vm1267, %v8669, %v8670
      %v8672 = vld [vmem:[%s2 + $0x140] sm:$0xf]
      %v8673 = vld [vmem:[%s2 + $0x144] sm:$0xf]
      %v8674 = vld [vmem:[%s2 + $0x148] sm:$0xf]
      %v8675 = vld [vmem:[%s2 + $0x14c] sm:$0xf]
      %v8676 = vld [vmem:[%s2 + $0x150] sm:$0xf]
      %v8677 = vld [vmem:[%s2 + $0x154] sm:$0xf]
      %v8678 = vld [vmem:[%s2 + $0x158] sm:$0xf]
      %v8679 = vld [vmem:[%s2 + $0x15c] sm:$0xf]
      %v8680 = vld [vmem:[%s2 + $0x160] sm:$0xf]
      %v8681 = vld [vmem:[%s2 + $0x164] sm:$0xf]
      %v8682 = vld [vmem:[%s2 + $0x168] sm:$0xf]
      %v8683 = vld [vmem:[%s2 + $0x16c] sm:$0xf]
      %v8684 = vld [vmem:[%s2 + $0x170] sm:$0xf]
      %v8685 = vld [vmem:[%s2 + $0x174] sm:$0xf]
      %v8686 = vld [vmem:[%s2 + $0x178] sm:$0xf]
      %v8687 = vld [vmem:[%s2 + $0x17c] sm:$0xf]
      %v8688 = vunpack.c.l.b16 %v8563
      %v8689 = vunpack.c.l.b16 %v8566
      %v8690 = vunpack.c.l.b16 %v8570
      %v8691 = vunpack.c.l.b16 %v8573
      %v8692 = vunpack.c.l.b16 %v8577
      %v8693 = vunpack.c.l.b16 %v8580
      %v8694 = vunpack.c.l.b16 %v8584
      %v8695 = vunpack.c.l.b16 %v8587
      %v8696 = vunpack.c.l.b16 %v8591
      %v8697 = vunpack.c.l.b16 %v8594
      %v8698 = vunpack.c.l.b16 %v8598
      %v8699 = vunpack.c.l.b16 %v8601
      %v8700 = vunpack.c.l.b16 %v8605
      %v8701 = vunpack.c.l.b16 %v8608
      %v8702 = vunpack.c.l.b16 %v8612
      %v8703 = vunpack.c.l.b16 %v8615
      %v8704 = vunpack.c.l.b16 %v8619
      %v8705 = vunpack.c.l.b16 %v8622
      %v8706 = vunpack.c.l.b16 %v8626
      %v8707 = vunpack.c.l.b16 %v8629
      %v8708 = vunpack.c.l.b16 %v8633
      %v8709 = vunpack.c.l.b16 %v8636
      %v8710 = vunpack.c.l.b16 %v8640
      %v8711 = vunpack.c.l.b16 %v8643
      %v8712 = vunpack.c.l.b16 %v8647
      %v8713 = vunpack.c.l.b16 %v8650
      %v8714 = vunpack.c.l.b16 %v8654
      %v8715 = vunpack.c.l.b16 %v8657
      %v8716 = vunpack.c.l.b16 %v8661
      %v8717 = vunpack.c.l.b16 %v8664
      %v8718 = vunpack.c.l.b16 %v8668
      %v8719 = vunpack.c.l.b16 %v8671
      %v8720 = vpack.c.b16 %v8689, %v8688
      %v8721 = vpack.c.b16 %v8691, %v8690
      %v8722 = vpack.c.b16 %v8693, %v8692
      %v8723 = vpack.c.b16 %v8695, %v8694
      %v8724 = vpack.c.b16 %v8697, %v8696
      %v8725 = vpack.c.b16 %v8699, %v8698
      %v8726 = vpack.c.b16 %v8701, %v8700
      %v8727 = vpack.c.b16 %v8703, %v8702
      %v8728 = vpack.c.b16 %v8705, %v8704
      %v8729 = vpack.c.b16 %v8707, %v8706
      %v8730 = vpack.c.b16 %v8709, %v8708
      %v8731 = vpack.c.b16 %v8711, %v8710
      %v8732 = vpack.c.b16 %v8713, %v8712
      %v8733 = vpack.c.b16 %v8715, %v8714
      %v8734 = vpack.c.b16 %v8717, %v8716
      %v8735 = vpack.c.b16 %v8719, %v8718
      %v8768 = vunpack.c.l.b16 %v8672
      %v8769 = vunpack.c.l.b16 %v8673
      %v8770 = vunpack.c.l.b16 %v8674
      %v8771 = vunpack.c.l.b16 %v8675
      %v8772 = vunpack.c.l.b16 %v8676
      %v8773 = vunpack.c.l.b16 %v8677
      %v8774 = vunpack.c.l.b16 %v8678
      %v8775 = vunpack.c.l.b16 %v8679
      %v8776 = vunpack.c.l.b16 %v8680
      %v8777 = vunpack.c.l.b16 %v8681
      %v8778 = vunpack.c.l.b16 %v8682
      %v8779 = vunpack.c.l.b16 %v8683
      %v8780 = vunpack.c.l.b16 %v8684
      %v8781 = vunpack.c.l.b16 %v8685
      %v8782 = vunpack.c.l.b16 %v8686
      %v8783 = vunpack.c.l.b16 %v8687
      %v8784 = vpack.c.b16 %v8769, %v8768
      %v8785 = vpack.c.b16 %v8771, %v8770
      %v8786 = vpack.c.b16 %v8773, %v8772
      %v8787 = vpack.c.b16 %v8775, %v8774
      %v8788 = vpack.c.b16 %v8777, %v8776
      %v8789 = vpack.c.b16 %v8779, %v8778
      %v8790 = vpack.c.b16 %v8781, %v8780
      %v8791 = vpack.c.b16 %v8783, %v8782
      %8800 = vmatprep.subr.bf16.mxu0 0
      %8801 = vmatpush1.bf16.msra.mxu0 %v8784
      %8802 = vmatprep.subr.bf16.mxu0 0
      %8803 = vmatpush1.bf16.msra.mxu0 %v8785
      %8804 = vmatprep.subr.bf16.mxu0 0
      %8805 = vmatpush1.bf16.msra.mxu0 %v8786
      %8806 = vmatprep.subr.bf16.mxu0 0
      %8807 = vmatpush1.bf16.msra.mxu0 %v8787
      %8808 = vmatprep.subr.bf16.mxu0 0
      %8809 = vmatpush1.bf16.msra.mxu0 %v8788
      %8810 = vmatprep.subr.bf16.mxu0 0
      %8811 = vmatpush1.bf16.msra.mxu0 %v8789
      %8812 = vmatprep.subr.bf16.mxu0 0
      %8813 = vmatpush1.bf16.msra.mxu0 %v8790
      %8814 = vmatprep.subr.bf16.mxu0 0
      %8815 = vmatpush1.bf16.msra.mxu0 %v8791
      %8816 = vmatprep.subr.bf16.mxu0 0
      %8817 = vmatpush1.bf16.msra.mxu0 0
      %8818 = vmatprep.subr.bf16.mxu0 0
      %8819 = vmatpush1.bf16.msra.mxu0 0
      %8820 = vmatprep.subr.bf16.mxu0 0
      %8821 = vmatpush1.bf16.msra.mxu0 0
      %8822 = vmatprep.subr.bf16.mxu0 0
      %8823 = vmatpush1.bf16.msra.mxu0 0
      %8824 = vmatprep.subr.bf16.mxu0 0
      %8825 = vmatpush1.bf16.msra.mxu0 0
      %8826 = vmatprep.subr.bf16.mxu0 0
      %8827 = vmatpush1.bf16.msra.mxu0 0
      %8828 = vmatprep.subr.bf16.mxu0 0
      %8829 = vmatpush1.bf16.msra.mxu0 0
      %8830 = vmatprep.subr.bf16.mxu0 0
      %8831 = vmatpush1.bf16.msra.mxu0 0
      %8832 = vmatprep.mubr.bf16.mxu0 0
      %8833 = vmatmul.mubr.bf16.gmra.mrb[0].mxu0 %v8720
      %v8834 = vpop.f32.mrb[0].mxu0
      %v8835 = vadd.f32 0.0, %v8834
      %v8836 = vpop.f32.mrb[0].mxu0
      %v8837 = vpop.f32.mrb[0].mxu0
      %v8838 = vadd.f32 0.0, %v8837
      %v8839 = vpop.f32.mrb[0].mxu0
      %8840 = vmatprep.mubr.bf16.mxu0 0
      %8841 = vmatmul.mubr.bf16.gmra.mrb[0].mxu0 %v8721
      %v8842 = vpop.f32.mrb[0].mxu0
      %v8843 = vadd.f32 0.0, %v8842
      %v8844 = vpop.f32.mrb[0].mxu0
      %v8845 = vpop.f32.mrb[0].mxu0
      %v8846 = vadd.f32 0.0, %v8845
      %v8847 = vpop.f32.mrb[0].mxu0
      %8848 = vmatprep.mubr.bf16.mxu0 0
      %8849 = vmatmul.mubr.bf16.gmra.mrb[0].mxu0 %v8722
      %v8850 = vpop.f32.mrb[0].mxu0
      %v8851 = vadd.f32 0.0, %v8850
      %v8852 = vpop.f32.mrb[0].mxu0
      %v8853 = vpop.f32.mrb[0].mxu0
      %v8854 = vadd.f32 0.0, %v8853
      %v8855 = vpop.f32.mrb[0].mxu0
      %8856 = vmatprep.mubr.bf16.mxu0 0
      %8857 = vmatmul.mubr.bf16.gmra.mrb[0].mxu0 %v8723
      %v8858 = vpop.f32.mrb[0].mxu0
      %v8859 = vadd.f32 0.0, %v8858
      %v8860 = vpop.f32.mrb[0].mxu0
      %v8861 = vpop.f32.mrb[0].mxu0
      %v8862 = vadd.f32 0.0, %v8861
      %v8863 = vpop.f32.mrb[0].mxu0
      %8864 = vmatprep.mubr.bf16.mxu0 0
      %8865 = vmatmul.mubr.bf16.gmra.mrb[0].mxu0 %v8724
      %v8866 = vpop.f32.mrb[0].mxu0
      %v8867 = vadd.f32 0.0, %v8866
      %v8868 = vpop.f32.mrb[0].mxu0
      %v8869 = vpop.f32.mrb[0].mxu0
      %v8870 = vadd.f32 0.0, %v8869
      %v8871 = vpop.f32.mrb[0].mxu0
      %8872 = vmatprep.mubr.bf16.mxu0 0
      %8873 = vmatmul.mubr.bf16.gmra.mrb[0].mxu0 %v8725
      %v8874 = vpop.f32.mrb[0].mxu0
      %v8875 = vadd.f32 0.0, %v8874
      %v8876 = vpop.f32.mrb[0].mxu0
      %v8877 = vpop.f32.mrb[0].mxu0
      %v8878 = vadd.f32 0.0, %v8877
      %v8879 = vpop.f32.mrb[0].mxu0
      %8880 = vmatprep.mubr.bf16.mxu0 0
      %8881 = vmatmul.mubr.bf16.gmra.mrb[0].mxu0 %v8726
      %v8882 = vpop.f32.mrb[0].mxu0
      %v8883 = vadd.f32 0.0, %v8882
      %v8884 = vpop.f32.mrb[0].mxu0
      %v8885 = vpop.f32.mrb[0].mxu0
      %v8886 = vadd.f32 0.0, %v8885
      %v8887 = vpop.f32.mrb[0].mxu0
      %8888 = vmatprep.mubr.bf16.mxu0 0
      %8889 = vmatmul.mubr.bf16.gmra.mrb[0].mxu0 %v8727
      %v8890 = vpop.f32.mrb[0].mxu0
      %v8891 = vadd.f32 0.0, %v8890
      %v8892 = vpop.f32.mrb[0].mxu0
      %v8893 = vpop.f32.mrb[0].mxu0
      %v8894 = vadd.f32 0.0, %v8893
      %v8895 = vpop.f32.mrb[0].mxu0
      %8896 = vmatprep.mubr.bf16.mxu0 0
      %8897 = vmatmul.mubr.bf16.gmra.mrb[0].mxu0 %v8728
      %v8898 = vpop.f32.mrb[0].mxu0
      %v8899 = vadd.f32 0.0, %v8898
      %v8900 = vpop.f32.mrb[0].mxu0
      %v8901 = vpop.f32.mrb[0].mxu0
      %v8902 = vadd.f32 0.0, %v8901
      %v8903 = vpop.f32.mrb[0].mxu0
      %8904 = vmatprep.mubr.bf16.mxu0 0
      %8905 = vmatmul.mubr.bf16.gmra.mrb[0].mxu0 %v8729
      %v8906 = vpop.f32.mrb[0].mxu0
      %v8907 = vadd.f32 0.0, %v8906
      %v8908 = vpop.f32.mrb[0].mxu0
      %v8909 = vpop.f32.mrb[0].mxu0
      %v8910 = vadd.f32 0.0, %v8909
      %v8911 = vpop.f32.mrb[0].mxu0
      %8912 = vmatprep.mubr.bf16.mxu0 0
      %8913 = vmatmul.mubr.bf16.gmra.mrb[0].mxu0 %v8730
      %v8914 = vpop.f32.mrb[0].mxu0
      %v8915 = vadd.f32 0.0, %v8914
      %v8916 = vpop.f32.mrb[0].mxu0
      %v8917 = vpop.f32.mrb[0].mxu0
      %v8918 = vadd.f32 0.0, %v8917
      %v8919 = vpop.f32.mrb[0].mxu0
      %8920 = vmatprep.mubr.bf16.mxu0 0
      %8921 = vmatmul.mubr.bf16.gmra.mrb[0].mxu0 %v8731
      %v8922 = vpop.f32.mrb[0].mxu0
      %v8923 = vadd.f32 0.0, %v8922
      %v8924 = vpop.f32.mrb[0].mxu0
      %v8925 = vpop.f32.mrb[0].mxu0
      %v8926 = vadd.f32 0.0, %v8925
      %v8927 = vpop.f32.mrb[0].mxu0
      %8928 = vmatprep.mubr.bf16.mxu0 0
      %8929 = vmatmul.mubr.bf16.gmra.mrb[0].mxu0 %v8732
      %v8930 = vpop.f32.mrb[0].mxu0
      %v8931 = vadd.f32 0.0, %v8930
      %v8932 = vpop.f32.mrb[0].mxu0
      %v8933 = vpop.f32.mrb[0].mxu0
      %v8934 = vadd.f32 0.0, %v8933
      %v8935 = vpop.f32.mrb[0].mxu0
      %8936 = vmatprep.mubr.bf16.mxu0 0
      %8937 = vmatmul.mubr.bf16.gmra.mrb[0].mxu0 %v8733
      %v8938 = vpop.f32.mrb[0].mxu0
      %v8939 = vadd.f32 0.0, %v8938
      %v8940 = vpop.f32.mrb[0].mxu0
      %v8941 = vpop.f32.mrb[0].mxu0
      %v8942 = vadd.f32 0.0, %v8941
      %v8943 = vpop.f32.mrb[0].mxu0
      %8944 = vmatprep.mubr.bf16.mxu0 0
      %8945 = vmatmul.mubr.bf16.gmra.mrb[0].mxu0 %v8734
      %v8946 = vpop.f32.mrb[0].mxu0
      %v8947 = vadd.f32 0.0, %v8946
      %v8948 = vpop.f32.mrb[0].mxu0
      %v8949 = vpop.f32.mrb[0].mxu0
      %v8950 = vadd.f32 0.0, %v8949
      %v8951 = vpop.f32.mrb[0].mxu0
      %8952 = vmatprep.mubr.bf16.mxu0 0
      %8953 = vmatmul.mubr.bf16.gmra.mrb[0].mxu0 %v8735
      %v8954 = vpop.f32.mrb[0].mxu0
      %v8955 = vadd.f32 0.0, %v8954
      %v8956 = vpop.f32.mrb[0].mxu0
      %v8957 = vpop.f32.mrb[0].mxu0
      %v8958 = vadd.f32 0.0, %v8957
      %v8959 = vpop.f32.mrb[0].mxu0
      %8960 = vdwg.mxu0
      %v8961 = vadd.f32 %v8464, %v8835
      %v8962 = vadd.f32 %v8465, %v8838
      %v8963 = vadd.f32 %v8466, %v8843
      %v8964 = vadd.f32 %v8467, %v8846
      %v8965 = vadd.f32 %v8468, %v8851
      %v8966 = vadd.f32 %v8469, %v8854
      %v8967 = vadd.f32 %v8470, %v8859
      %v8968 = vadd.f32 %v8471, %v8862
      %v8969 = vadd.f32 %v8472, %v8867
      %v8970 = vadd.f32 %v8473, %v8870
      %v8971 = vadd.f32 %v8474, %v8875
      %v8972 = vadd.f32 %v8475, %v8878
      %v8973 = vadd.f32 %v8476, %v8883
      %v8974 = vadd.f32 %v8477, %v8886
      %v8975 = vadd.f32 %v8478, %v8891
      %v8976 = vadd.f32 %v8479, %v8894
      %v8977 = vadd.f32 %v8480, %v8899
      %v8978 = vadd.f32 %v8481, %v8902
      %v8979 = vadd.f32 %v8482, %v8907
      %v8980 = vadd.f32 %v8483, %v8910
      %v8981 = vadd.f32 %v8484, %v8915
      %v8982 = vadd.f32 %v8485, %v8918
      %v8983 = vadd.f32 %v8486, %v8923
      %v8984 = vadd.f32 %v8487, %v8926
      %v8985 = vadd.f32 %v8488, %v8931
      %v8986 = vadd.f32 %v8489, %v8934
      %v8987 = vadd.f32 %v8490, %v8939
      %v8988 = vadd.f32 %v8491, %v8942
      %v8989 = vadd.f32 %v8492, %v8947
      %v8990 = vadd.f32 %v8493, %v8950
      %v8991 = vadd.f32 %v8494, %v8955
      %v8992 = vadd.f32 %v8495, %v8958
      %s8993 = scalar_lea.vmem [#allocation2], 24
      %v8994 = vld [vmem:[%s8993] sm:$0xf]
      %v8995 = vld [vmem:[%s8993 + $0x4] sm:$0xf]
      %v8996 = vld [vmem:[%s8993 + $0xc] sm:$0xf]
      %v8997 = vld [vmem:[%s8993 + $0x10] sm:$0xf]
      %v8998 = vld [vmem:[%s8993 + $0x18] sm:$0xf]
      %v8999 = vld [vmem:[%s8993 + $0x1c] sm:$0xf]
      %v9000 = vld [vmem:[%s8993 + $0x24] sm:$0xf]
      %v9001 = vld [vmem:[%s8993 + $0x28] sm:$0xf]
      %v9002 = vld [vmem:[%s8993 + $0x30] sm:$0xf]
      %v9003 = vld [vmem:[%s8993 + $0x34] sm:$0xf]
      %v9004 = vld [vmem:[%s8993 + $0x3c] sm:$0xf]
      %v9005 = vld [vmem:[%s8993 + $0x40] sm:$0xf]
      %v9006 = vld [vmem:[%s8993 + $0x48] sm:$0xf]
      %v9007 = vld [vmem:[%s8993 + $0x4c] sm:$0xf]
      %v9008 = vld [vmem:[%s8993 + $0x54] sm:$0xf]
      %v9009 = vld [vmem:[%s8993 + $0x58] sm:$0xf]
      %v9010 = vld [vmem:[%s8993 + $0x60] sm:$0xf]
      %v9011 = vld [vmem:[%s8993 + $0x64] sm:$0xf]
      %v9012 = vld [vmem:[%s8993 + $0x6c] sm:$0xf]
      %v9013 = vld [vmem:[%s8993 + $0x70] sm:$0xf]
      %v9014 = vld [vmem:[%s8993 + $0x78] sm:$0xf]
      %v9015 = vld [vmem:[%s8993 + $0x7c] sm:$0xf]
      %v9016 = vld [vmem:[%s8993 + $0x84] sm:$0xf]
      %v9017 = vld [vmem:[%s8993 + $0x88] sm:$0xf]
      %v9018 = vld [vmem:[%s8993 + $0x90] sm:$0xf]
      %v9019 = vld [vmem:[%s8993 + $0x94] sm:$0xf]
      %v9020 = vld [vmem:[%s8993 + $0x9c] sm:$0xf]
      %v9021 = vld [vmem:[%s8993 + $0xa0] sm:$0xf]
      %v9022 = vld [vmem:[%s8993 + $0xa8] sm:$0xf]
      %v9023 = vld [vmem:[%s8993 + $0xac] sm:$0xf]
      %v9024 = vld [vmem:[%s8993 + $0xb4] sm:$0xf]
      %v9025 = vld [vmem:[%s8993 + $0xb8] sm:$0xf]
      %v9026 = vld [vmem:[%s2 + $0x180] sm:$0xf]
      %v9027 = vld [vmem:[%s2 + $0x184] sm:$0xf]
      %v9028 = vld [vmem:[%s2 + $0x188] sm:$0xf]
      %v9029 = vld [vmem:[%s2 + $0x18c] sm:$0xf]
      %v9030 = vld [vmem:[%s2 + $0x190] sm:$0xf]
      %v9031 = vld [vmem:[%s2 + $0x194] sm:$0xf]
      %v9032 = vld [vmem:[%s2 + $0x198] sm:$0xf]
      %v9033 = vld [vmem:[%s2 + $0x19c] sm:$0xf]
      %v9034 = vld [vmem:[%s2 + $0x1a0] sm:$0xf]
      %v9035 = vld [vmem:[%s2 + $0x1a4] sm:$0xf]
      %v9036 = vld [vmem:[%s2 + $0x1a8] sm:$0xf]
      %v9037 = vld [vmem:[%s2 + $0x1ac] sm:$0xf]
      %v9038 = vld [vmem:[%s2 + $0x1b0] sm:$0xf]
      %v9039 = vld [vmem:[%s2 + $0x1b4] sm:$0xf]
      %v9040 = vld [vmem:[%s2 + $0x1b8] sm:$0xf]
      %v9041 = vld [vmem:[%s2 + $0x1bc] sm:$0xf]
      %v9074 = vunpack.c.l.b16 %v8994
      %v9075 = vunpack.c.l.b16 %v8995
      %v9076 = vunpack.c.l.b16 %v8996
      %v9077 = vunpack.c.l.b16 %v8997
      %v9078 = vunpack.c.l.b16 %v8998
      %v9079 = vunpack.c.l.b16 %v8999
      %v9080 = vunpack.c.l.b16 %v9000
      %v9081 = vunpack.c.l.b16 %v9001
      %v9082 = vunpack.c.l.b16 %v9002
      %v9083 = vunpack.c.l.b16 %v9003
      %v9084 = vunpack.c.l.b16 %v9004
      %v9085 = vunpack.c.l.b16 %v9005
      %v9086 = vunpack.c.l.b16 %v9006
      %v9087 = vunpack.c.l.b16 %v9007
      %v9088 = vunpack.c.l.b16 %v9008
      %v9089 = vunpack.c.l.b16 %v9009
      %v9090 = vunpack.c.l.b16 %v9010
      %v9091 = vunpack.c.l.b16 %v9011
      %v9092 = vunpack.c.l.b16 %v9012
      %v9093 = vunpack.c.l.b16 %v9013
      %v9094 = vunpack.c.l.b16 %v9014
      %v9095 = vunpack.c.l.b16 %v9015
      %v9096 = vunpack.c.l.b16 %v9016
      %v9097 = vunpack.c.l.b16 %v9017
      %v9098 = vunpack.c.l.b16 %v9018
      %v9099 = vunpack.c.l.b16 %v9019
      %v9100 = vunpack.c.l.b16 %v9020
      %v9101 = vunpack.c.l.b16 %v9021
      %v9102 = vunpack.c.l.b16 %v9022
      %v9103 = vunpack.c.l.b16 %v9023
      %v9104 = vunpack.c.l.b16 %v9024
      %v9105 = vunpack.c.l.b16 %v9025
      %v9106 = vpack.c.b16 %v9075, %v9074
      %v9107 = vpack.c.b16 %v9077, %v9076
      %v9108 = vpack.c.b16 %v9079, %v9078
      %v9109 = vpack.c.b16 %v9081, %v9080
      %v9110 = vpack.c.b16 %v9083, %v9082
      %v9111 = vpack.c.b16 %v9085, %v9084
      %v9112 = vpack.c.b16 %v9087, %v9086
      %v9113 = vpack.c.b16 %v9089, %v9088
      %v9114 = vpack.c.b16 %v9091, %v9090
      %v9115 = vpack.c.b16 %v9093, %v9092
      %v9116 = vpack.c.b16 %v9095, %v9094
      %v9117 = vpack.c.b16 %v9097, %v9096
      %v9118 = vpack.c.b16 %v9099, %v9098
      %v9119 = vpack.c.b16 %v9101, %v9100
      %v9120 = vpack.c.b16 %v9103, %v9102
      %v9121 = vpack.c.b16 %v9105, %v9104
      %v9154 = vunpack.c.l.b16 %v9026
      %v9155 = vunpack.c.l.b16 %v9027
      %v9156 = vunpack.c.l.b16 %v9028
      %v9157 = vunpack.c.l.b16 %v9029
      %v9158 = vunpack.c.l.b16 %v9030
      %v9159 = vunpack.c.l.b16 %v9031
      %v9160 = vunpack.c.l.b16 %v9032
      %v9161 = vunpack.c.l.b16 %v9033
      %v9162 = vunpack.c.l.b16 %v9034
      %v9163 = vunpack.c.l.b16 %v9035
      %v9164 = vunpack.c.l.b16 %v9036
      %v9165 = vunpack.c.l.b16 %v9037
      %v9166 = vunpack.c.l.b16 %v9038
      %v9167 = vunpack.c.l.b16 %v9039
      %v9168 = vunpack.c.l.b16 %v9040
      %v9169 = vunpack.c.l.b16 %v9041
      %v9170 = vpack.c.b16 %v9155, %v9154
      %v9171 = vpack.c.b16 %v9157, %v9156
      %v9172 = vpack.c.b16 %v9159, %v9158
      %v9173 = vpack.c.b16 %v9161, %v9160
      %v9174 = vpack.c.b16 %v9163, %v9162
      %v9175 = vpack.c.b16 %v9165, %v9164
      %v9176 = vpack.c.b16 %v9167, %v9166
      %v9177 = vpack.c.b16 %v9169, %v9168
      %9186 = vmatprep.subr.bf16.mxu0 0
      %9187 = vmatpush1.bf16.msra.mxu0 %v9170
      %9188 = vmatprep.subr.bf16.mxu0 0
      %9189 = vmatpush1.bf16.msra.mxu0 %v9171
      %9190 = vmatprep.subr.bf16.mxu0 0
      %9191 = vmatpush1.bf16.msra.mxu0 %v9172
      %9192 = vmatprep.subr.bf16.mxu0 0
      %9193 = vmatpush1.bf16.msra.mxu0 %v9173
      %9194 = vmatprep.subr.bf16.mxu0 0
      %9195 = vmatpush1.bf16.msra.mxu0 %v9174
      %9196 = vmatprep.subr.bf16.mxu0 0
      %9197 = vmatpush1.bf16.msra.mxu0 %v9175
      %9198 = vmatprep.subr.bf16.mxu0 0
      %9199 = vmatpush1.bf16.msra.mxu0 %v9176
      %9200 = vmatprep.subr.bf16.mxu0 0
      %9201 = vmatpush1.bf16.msra.mxu0 %v9177
      %9202 = vmatprep.subr.bf16.mxu0 0
      %9203 = vmatpush1.bf16.msra.mxu0 0
      %9204 = vmatprep.subr.bf16.mxu0 0
      %9205 = vmatpush1.bf16.msra.mxu0 0
      %9206 = vmatprep.subr.bf16.mxu0 0
      %9207 = vmatpush1.bf16.msra.mxu0 0
      %9208 = vmatprep.subr.bf16.mxu0 0
      %9209 = vmatpush1.bf16.msra.mxu0 0
      %9210 = vmatprep.subr.bf16.mxu0 0
      %9211 = vmatpush1.bf16.msra.mxu0 0
      %9212 = vmatprep.subr.bf16.mxu0 0
      %9213 = vmatpush1.bf16.msra.mxu0 0
      %9214 = vmatprep.subr.bf16.mxu0 0
      %9215 = vmatpush1.bf16.msra.mxu0 0
      %9216 = vmatprep.subr.bf16.mxu0 0
      %9217 = vmatpush1.bf16.msra.mxu0 0
      %9218 = vmatprep.mubr.bf16.mxu0 0
      %9219 = vmatmul.mubr.bf16.gmra.mrb[0].mxu0 %v9106
      %v9220 = vpop.f32.mrb[0].mxu0
      %v9221 = vadd.f32 0.0, %v9220
      %v9222 = vpop.f32.mrb[0].mxu0
      %v9223 = vpop.f32.mrb[0].mxu0
      %v9224 = vadd.f32 0.0, %v9223
      %v9225 = vpop.f32.mrb[0].mxu0
      %9226 = vmatprep.mubr.bf16.mxu0 0
      %9227 = vmatmul.mubr.bf16.gmra.mrb[0].mxu0 %v9107
      %v9228 = vpop.f32.mrb[0].mxu0
      %v9229 = vadd.f32 0.0, %v9228
      %v9230 = vpop.f32.mrb[0].mxu0
      %v9231 = vpop.f32.mrb[0].mxu0
      %v9232 = vadd.f32 0.0, %v9231
      %v9233 = vpop.f32.mrb[0].mxu0
      %9234 = vmatprep.mubr.bf16.mxu0 0
      %9235 = vmatmul.mubr.bf16.gmra.mrb[0].mxu0 %v9108
      %v9236 = vpop.f32.mrb[0].mxu0
      %v9237 = vadd.f32 0.0, %v9236
      %v9238 = vpop.f32.mrb[0].mxu0
      %v9239 = vpop.f32.mrb[0].mxu0
      %v9240 = vadd.f32 0.0, %v9239
      %v9241 = vpop.f32.mrb[0].mxu0
      %9242 = vmatprep.mubr.bf16.mxu0 0
      %9243 = vmatmul.mubr.bf16.gmra.mrb[0].mxu0 %v9109
      %v9244 = vpop.f32.mrb[0].mxu0
      %v9245 = vadd.f32 0.0, %v9244
      %v9246 = vpop.f32.mrb[0].mxu0
      %v9247 = vpop.f32.mrb[0].mxu0
      %v9248 = vadd.f32 0.0, %v9247
      %v9249 = vpop.f32.mrb[0].mxu0
      %9250 = vmatprep.mubr.bf16.mxu0 0
      %9251 = vmatmul.mubr.bf16.gmra.mrb[0].mxu0 %v9110
      %v9252 = vpop.f32.mrb[0].mxu0
      %v9253 = vadd.f32 0.0, %v9252
      %v9254 = vpop.f32.mrb[0].mxu0
      %v9255 = vpop.f32.mrb[0].mxu0
      %v9256 = vadd.f32 0.0, %v9255
      %v9257 = vpop.f32.mrb[0].mxu0
      %9258 = vmatprep.mubr.bf16.mxu0 0
      %9259 = vmatmul.mubr.bf16.gmra.mrb[0].mxu0 %v9111
      %v9260 = vpop.f32.mrb[0].mxu0
      %v9261 = vadd.f32 0.0, %v9260
      %v9262 = vpop.f32.mrb[0].mxu0
      %v9263 = vpop.f32.mrb[0].mxu0
      %v9264 = vadd.f32 0.0, %v9263
      %v9265 = vpop.f32.mrb[0].mxu0
      %9266 = vmatprep.mubr.bf16.mxu0 0
      %9267 = vmatmul.mubr.bf16.gmra.mrb[0].mxu0 %v9112
      %v9268 = vpop.f32.mrb[0].mxu0
      %v9269 = vadd.f32 0.0, %v9268
      %v9270 = vpop.f32.mrb[0].mxu0
      %v9271 = vpop.f32.mrb[0].mxu0
      %v9272 = vadd.f32 0.0, %v9271
      %v9273 = vpop.f32.mrb[0].mxu0
      %9274 = vmatprep.mubr.bf16.mxu0 0
      %9275 = vmatmul.mubr.bf16.gmra.mrb[0].mxu0 %v9113
      %v9276 = vpop.f32.mrb[0].mxu0
      %v9277 = vadd.f32 0.0, %v9276
      %v9278 = vpop.f32.mrb[0].mxu0
      %v9279 = vpop.f32.mrb[0].mxu0
      %v9280 = vadd.f32 0.0, %v9279
      %v9281 = vpop.f32.mrb[0].mxu0
      %9282 = vmatprep.mubr.bf16.mxu0 0
      %9283 = vmatmul.mubr.bf16.gmra.mrb[0].mxu0 %v9114
      %v9284 = vpop.f32.mrb[0].mxu0
      %v9285 = vadd.f32 0.0, %v9284
      %v9286 = vpop.f32.mrb[0].mxu0
      %v9287 = vpop.f32.mrb[0].mxu0
      %v9288 = vadd.f32 0.0, %v9287
      %v9289 = vpop.f32.mrb[0].mxu0
      %9290 = vmatprep.mubr.bf16.mxu0 0
      %9291 = vmatmul.mubr.bf16.gmra.mrb[0].mxu0 %v9115
      %v9292 = vpop.f32.mrb[0].mxu0
      %v9293 = vadd.f32 0.0, %v9292
      %v9294 = vpop.f32.mrb[0].mxu0
      %v9295 = vpop.f32.mrb[0].mxu0
      %v9296 = vadd.f32 0.0, %v9295
      %v9297 = vpop.f32.mrb[0].mxu0
      %9298 = vmatprep.mubr.bf16.mxu0 0
      %9299 = vmatmul.mubr.bf16.gmra.mrb[0].mxu0 %v9116
      %v9300 = vpop.f32.mrb[0].mxu0
      %v9301 = vadd.f32 0.0, %v9300
      %v9302 = vpop.f32.mrb[0].mxu0
      %v9303 = vpop.f32.mrb[0].mxu0
      %v9304 = vadd.f32 0.0, %v9303
      %v9305 = vpop.f32.mrb[0].mxu0
      %9306 = vmatprep.mubr.bf16.mxu0 0
      %9307 = vmatmul.mubr.bf16.gmra.mrb[0].mxu0 %v9117
      %v9308 = vpop.f32.mrb[0].mxu0
      %v9309 = vadd.f32 0.0, %v9308
      %v9310 = vpop.f32.mrb[0].mxu0
      %v9311 = vpop.f32.mrb[0].mxu0
      %v9312 = vadd.f32 0.0, %v9311
      %v9313 = vpop.f32.mrb[0].mxu0
      %9314 = vmatprep.mubr.bf16.mxu0 0
      %9315 = vmatmul.mubr.bf16.gmra.mrb[0].mxu0 %v9118
      %v9316 = vpop.f32.mrb[0].mxu0
      %v9317 = vadd.f32 0.0, %v9316
      %v9318 = vpop.f32.mrb[0].mxu0
      %v9319 = vpop.f32.mrb[0].mxu0
      %v9320 = vadd.f32 0.0, %v9319
      %v9321 = vpop.f32.mrb[0].mxu0
      %9322 = vmatprep.mubr.bf16.mxu0 0
      %9323 = vmatmul.mubr.bf16.gmra.mrb[0].mxu0 %v9119
      %v9324 = vpop.f32.mrb[0].mxu0
      %v9325 = vadd.f32 0.0, %v9324
      %v9326 = vpop.f32.mrb[0].mxu0
      %v9327 = vpop.f32.mrb[0].mxu0
      %v9328 = vadd.f32 0.0, %v9327
      %v9329 = vpop.f32.mrb[0].mxu0
      %9330 = vmatprep.mubr.bf16.mxu0 0
      %9331 = vmatmul.mubr.bf16.gmra.mrb[0].mxu0 %v9120
      %v9332 = vpop.f32.mrb[0].mxu0
      %v9333 = vadd.f32 0.0, %v9332
      %v9334 = vpop.f32.mrb[0].mxu0
      %v9335 = vpop.f32.mrb[0].mxu0
      %v9336 = vadd.f32 0.0, %v9335
      %v9337 = vpop.f32.mrb[0].mxu0
      %9338 = vmatprep.mubr.bf16.mxu0 0
      %9339 = vmatmul.mubr.bf16.gmra.mrb[0].mxu0 %v9121
      %v9340 = vpop.f32.mrb[0].mxu0
      %v9341 = vadd.f32 0.0, %v9340
      %v9342 = vpop.f32.mrb[0].mxu0
      %v9343 = vpop.f32.mrb[0].mxu0
      %v9344 = vadd.f32 0.0, %v9343
      %v9345 = vpop.f32.mrb[0].mxu0
      %9346 = vdwg.mxu0
      %v9347 = vadd.f32 %v8961, %v9221
      %v9348 = vadd.f32 %v8962, %v9224
      %v9349 = vadd.f32 %v8963, %v9229
      %v9350 = vadd.f32 %v8964, %v9232
      %v9351 = vadd.f32 %v8965, %v9237
      %v9352 = vadd.f32 %v8966, %v9240
      %v9353 = vadd.f32 %v8967, %v9245
      %v9354 = vadd.f32 %v8968, %v9248
      %v9355 = vadd.f32 %v8969, %v9253
      %v9356 = vadd.f32 %v8970, %v9256
      %v9357 = vadd.f32 %v8971, %v9261
      %v9358 = vadd.f32 %v8972, %v9264
      %v9359 = vadd.f32 %v8973, %v9269
      %v9360 = vadd.f32 %v8974, %v9272
      %v9361 = vadd.f32 %v8975, %v9277
      %v9362 = vadd.f32 %v8976, %v9280
      %v9363 = vadd.f32 %v8977, %v9285
      %v9364 = vadd.f32 %v8978, %v9288
      %v9365 = vadd.f32 %v8979, %v9293
      %v9366 = vadd.f32 %v8980, %v9296
      %v9367 = vadd.f32 %v8981, %v9301
      %v9368 = vadd.f32 %v8982, %v9304
      %v9369 = vadd.f32 %v8983, %v9309
      %v9370 = vadd.f32 %v8984, %v9312
      %v9371 = vadd.f32 %v8985, %v9317
      %v9372 = vadd.f32 %v8986, %v9320
      %v9373 = vadd.f32 %v8987, %v9325
      %v9374 = vadd.f32 %v8988, %v9328
      %v9375 = vadd.f32 %v8989, %v9333
      %v9376 = vadd.f32 %v8990, %v9336
      %v9377 = vadd.f32 %v8991, %v9341
      %v9378 = vadd.f32 %v8992, %v9344
      %v9379 = vld [vmem:[%s8993] sm:$0xf]
      %v9380 = vld [vmem:[%s8993 + $0x4] sm:$0xf]
      %v9381 = vld [vmem:[%s8993 + $0x8] sm:$0x1]
      %v9382 = vld [vmem:[%s8993 + $0xc] sm:$0xf]
      %v9383 = vld [vmem:[%s8993 + $0x10] sm:$0xf]
      %v9384 = vld [vmem:[%s8993 + $0x14] sm:$0x1]
      %v9385 = vld [vmem:[%s8993 + $0x18] sm:$0xf]
      %v9386 = vld [vmem:[%s8993 + $0x1c] sm:$0xf]
      %v9387 = vld [vmem:[%s8993 + $0x20] sm:$0x1]
      %v9388 = vld [vmem:[%s8993 + $0x24] sm:$0xf]
      %v9389 = vld [vmem:[%s8993 + $0x28] sm:$0xf]
      %v9390 = vld [vmem:[%s8993 + $0x2c] sm:$0x1]
      %v9391 = vld [vmem:[%s8993 + $0x30] sm:$0xf]
      %v9392 = vld [vmem:[%s8993 + $0x34] sm:$0xf]
      %v9393 = vld [vmem:[%s8993 + $0x38] sm:$0x1]
      %v9394 = vld [vmem:[%s8993 + $0x3c] sm:$0xf]
      %v9395 = vld [vmem:[%s8993 + $0x40] sm:$0xf]
      %v9396 = vld [vmem:[%s8993 + $0x44] sm:$0x1]
      %v9397 = vld [vmem:[%s8993 + $0x48] sm:$0xf]
      %v9398 = vld [vmem:[%s8993 + $0x4c] sm:$0xf]
      %v9399 = vld [vmem:[%s8993 + $0x50] sm:$0x1]
      %v9400 = vld [vmem:[%s8993 + $0x54] sm:$0xf]
      %v9401 = vld [vmem:[%s8993 + $0x58] sm:$0xf]
      %v9402 = vld [vmem:[%s8993 + $0x5c] sm:$0x1]
      %v9403 = vld [vmem:[%s8993 + $0x60] sm:$0xf]
      %v9404 = vld [vmem:[%s8993 + $0x64] sm:$0xf]
      %v9405 = vld [vmem:[%s8993 + $0x68] sm:$0x1]
      %v9406 = vld [vmem:[%s8993 + $0x6c] sm:$0xf]
      %v9407 = vld [vmem:[%s8993 + $0x70] sm:$0xf]
      %v9408 = vld [vmem:[%s8993 + $0x74] sm:$0x1]
      %v9409 = vld [vmem:[%s8993 + $0x78] sm:$0xf]
      %v9410 = vld [vmem:[%s8993 + $0x7c] sm:$0xf]
      %v9411 = vld [vmem:[%s8993 + $0x80] sm:$0x1]
      %v9412 = vld [vmem:[%s8993 + $0x84] sm:$0xf]
      %v9413 = vld [vmem:[%s8993 + $0x88] sm:$0xf]
      %v9414 = vld [vmem:[%s8993 + $0x8c] sm:$0x1]
      %v9415 = vld [vmem:[%s8993 + $0x90] sm:$0xf]
      %v9416 = vld [vmem:[%s8993 + $0x94] sm:$0xf]
      %v9417 = vld [vmem:[%s8993 + $0x98] sm:$0x1]
      %v9418 = vld [vmem:[%s8993 + $0x9c] sm:$0xf]
      %v9419 = vld [vmem:[%s8993 + $0xa0] sm:$0xf]
      %v9420 = vld [vmem:[%s8993 + $0xa4] sm:$0x1]
      %v9421 = vld [vmem:[%s8993 + $0xa8] sm:$0xf]
      %v9422 = vld [vmem:[%s8993 + $0xac] sm:$0xf]
      %v9423 = vld [vmem:[%s8993 + $0xb0] sm:$0x1]
      %v9424 = vld [vmem:[%s8993 + $0xb4] sm:$0xf]
      %v9425 = vld [vmem:[%s8993 + $0xb8] sm:$0xf]
      %v9426 = vld [vmem:[%s8993 + $0xbc] sm:$0x1]
      %v9428 = vshrl.u32 %v9379, 16
      %v9430 = vrot.slane %v9428, 4
      %v9431 = vshll.u32 %v9379, 16
      %v9433 = vrot.slane %v9431, 5
      %v9434 = vor.u32 %v9430, %v9433
      %v9435 = vrot.slane %v9434, 4
      %v9437 = vshll.u32 %v9380, 16
      %v9439 = vrot.slane %v9437, 5
      %v9440 = vsel %vm238, %v9435, %v9439
      %v9441 = vshrl.u32 %v9380, 16
      %v9443 = vrot.slane %v9441, 4
      %v9444 = vor.u32 %v9443, %v9439
      %v9445 = vrot.slane %v9444, 4
      %v9447 = vshll.u32 %v9381, 16
      %v9449 = vrot.slane %v9447, 5
      %v9450 = vsel %vm238, %v9445, %v9449
      %v9452 = vshrl.u32 %v9382, 16
      %v9454 = vrot.slane %v9452, 4
      %v9455 = vshll.u32 %v9382, 16
      %v9457 = vrot.slane %v9455, 5
      %v9458 = vor.u32 %v9454, %v9457
      %v9459 = vrot.slane %v9458, 4
      %v9461 = vshll.u32 %v9383, 16
      %v9463 = vrot.slane %v9461, 5
      %v9464 = vsel %vm238, %v9459, %v9463
      %v9465 = vshrl.u32 %v9383, 16
      %v9467 = vrot.slane %v9465, 4
      %v9468 = vor.u32 %v9467, %v9463
      %v9469 = vrot.slane %v9468, 4
      %v9471 = vshll.u32 %v9384, 16
      %v9473 = vrot.slane %v9471, 5
      %v9474 = vsel %vm238, %v9469, %v9473
      %v9476 = vshrl.u32 %v9385, 16
      %v9478 = vrot.slane %v9476, 4
      %v9479 = vshll.u32 %v9385, 16
      %v9481 = vrot.slane %v9479, 5
      %v9482 = vor.u32 %v9478, %v9481
      %v9483 = vrot.slane %v9482, 4
      %v9485 = vshll.u32 %v9386, 16
      %v9487 = vrot.slane %v9485, 5
      %v9488 = vsel %vm238, %v9483, %v9487
      %v9489 = vshrl.u32 %v9386, 16
      %v9491 = vrot.slane %v9489, 4
      %v9492 = vor.u32 %v9491, %v9487
      %v9493 = vrot.slane %v9492, 4
      %v9495 = vshll.u32 %v9387, 16
      %v9497 = vrot.slane %v9495, 5
      %v9498 = vsel %vm238, %v9493, %v9497
      %v9500 = vshrl.u32 %v9388, 16
      %v9502 = vrot.slane %v9500, 4
      %v9503 = vshll.u32 %v9388, 16
      %v9505 = vrot.slane %v9503, 5
      %v9506 = vor.u32 %v9502, %v9505
      %v9507 = vrot.slane %v9506, 4
      %v9509 = vshll.u32 %v9389, 16
      %v9511 = vrot.slane %v9509, 5
      %v9512 = vsel %vm238, %v9507, %v9511
      %v9513 = vshrl.u32 %v9389, 16
      %v9515 = vrot.slane %v9513, 4
      %v9516 = vor.u32 %v9515, %v9511
      %v9517 = vrot.slane %v9516, 4
      %v9519 = vshll.u32 %v9390, 16
      %v9521 = vrot.slane %v9519, 5
      %v9522 = vsel %vm238, %v9517, %v9521
      %v9524 = vshrl.u32 %v9391, 16
      %v9526 = vrot.slane %v9524, 4
      %v9527 = vshll.u32 %v9391, 16
      %v9529 = vrot.slane %v9527, 5
      %v9530 = vor.u32 %v9526, %v9529
      %v9531 = vrot.slane %v9530, 4
      %v9533 = vshll.u32 %v9392, 16
      %v9535 = vrot.slane %v9533, 5
      %v9536 = vsel %vm238, %v9531, %v9535
      %v9537 = vshrl.u32 %v9392, 16
      %v9539 = vrot.slane %v9537, 4
      %v9540 = vor.u32 %v9539, %v9535
      %v9541 = vrot.slane %v9540, 4
      %v9543 = vshll.u32 %v9393, 16
      %v9545 = vrot.slane %v9543, 5
      %v9546 = vsel %vm238, %v9541, %v9545
      %v9548 = vshrl.u32 %v9394, 16
      %v9550 = vrot.slane %v9548, 4
      %v9551 = vshll.u32 %v9394, 16
      %v9553 = vrot.slane %v9551, 5
      %v9554 = vor.u32 %v9550, %v9553
      %v9555 = vrot.slane %v9554, 4
      %v9557 = vshll.u32 %v9395, 16
      %v9559 = vrot.slane %v9557, 5
      %v9560 = vsel %vm238, %v9555, %v9559
      %v9561 = vshrl.u32 %v9395, 16
      %v9563 = vrot.slane %v9561, 4
      %v9564 = vor.u32 %v9563, %v9559
      %v9565 = vrot.slane %v9564, 4
      %v9567 = vshll.u32 %v9396, 16
      %v9569 = vrot.slane %v9567, 5
      %v9570 = vsel %vm238, %v9565, %v9569
      %v9572 = vshrl.u32 %v9397, 16
      %v9574 = vrot.slane %v9572, 4
      %v9575 = vshll.u32 %v9397, 16
      %v9577 = vrot.slane %v9575, 5
      %v9578 = vor.u32 %v9574, %v9577
      %v9579 = vrot.slane %v9578, 4
      %v9581 = vshll.u32 %v9398, 16
      %v9583 = vrot.slane %v9581, 5
      %v9584 = vsel %vm238, %v9579, %v9583
      %v9585 = vshrl.u32 %v9398, 16
      %v9587 = vrot.slane %v9585, 4
      %v9588 = vor.u32 %v9587, %v9583
      %v9589 = vrot.slane %v9588, 4
      %v9591 = vshll.u32 %v9399, 16
      %v9593 = vrot.slane %v9591, 5
      %v9594 = vsel %vm238, %v9589, %v9593
      %v9596 = vshrl.u32 %v9400, 16
      %v9598 = vrot.slane %v9596, 4
      %v9599 = vshll.u32 %v9400, 16
      %v9601 = vrot.slane %v9599, 5
      %v9602 = vor.u32 %v9598, %v9601
      %v9603 = vrot.slane %v9602, 4
      %v9605 = vshll.u32 %v9401, 16
      %v9607 = vrot.slane %v9605, 5
      %v9608 = vsel %vm238, %v9603, %v9607
      %v9609 = vshrl.u32 %v9401, 16
      %v9611 = vrot.slane %v9609, 4
      %v9612 = vor.u32 %v9611, %v9607
      %v9613 = vrot.slane %v9612, 4
      %v9615 = vshll.u32 %v9402, 16
      %v9617 = vrot.slane %v9615, 5
      %v9618 = vsel %vm238, %v9613, %v9617
      %v9620 = vshrl.u32 %v9403, 16
      %v9622 = vrot.slane %v9620, 4
      %v9623 = vshll.u32 %v9403, 16
      %v9625 = vrot.slane %v9623, 5
      %v9626 = vor.u32 %v9622, %v9625
      %v9627 = vrot.slane %v9626, 4
      %v9629 = vshll.u32 %v9404, 16
      %v9631 = vrot.slane %v9629, 5
      %v9632 = vsel %vm238, %v9627, %v9631
      %v9633 = vshrl.u32 %v9404, 16
      %v9635 = vrot.slane %v9633, 4
      %v9636 = vor.u32 %v9635, %v9631
      %v9637 = vrot.slane %v9636, 4
      %v9639 = vshll.u32 %v9405, 16
      %v9641 = vrot.slane %v9639, 5
      %v9642 = vsel %vm238, %v9637, %v9641
      %v9644 = vshrl.u32 %v9406, 16
      %v9646 = vrot.slane %v9644, 4
      %v9647 = vshll.u32 %v9406, 16
      %v9649 = vrot.slane %v9647, 5
      %v9650 = vor.u32 %v9646, %v9649
      %v9651 = vrot.slane %v9650, 4
      %v9653 = vshll.u32 %v9407, 16
      %v9655 = vrot.slane %v9653, 5
      %v9656 = vsel %vm238, %v9651, %v9655
      %v9657 = vshrl.u32 %v9407, 16
      %v9659 = vrot.slane %v9657, 4
      %v9660 = vor.u32 %v9659, %v9655
      %v9661 = vrot.slane %v9660, 4
      %v9663 = vshll.u32 %v9408, 16
      %v9665 = vrot.slane %v9663, 5
      %v9666 = vsel %vm238, %v9661, %v9665
      %v9668 = vshrl.u32 %v9409, 16
      %v9670 = vrot.slane %v9668, 4
      %v9671 = vshll.u32 %v9409, 16
      %v9673 = vrot.slane %v9671, 5
      %v9674 = vor.u32 %v9670, %v9673
      %v9675 = vrot.slane %v9674, 4
      %v9677 = vshll.u32 %v9410, 16
      %v9679 = vrot.slane %v9677, 5
      %v9680 = vsel %vm238, %v9675, %v9679
      %v9681 = vshrl.u32 %v9410, 16
      %v9683 = vrot.slane %v9681, 4
      %v9684 = vor.u32 %v9683, %v9679
      %v9685 = vrot.slane %v9684, 4
      %v9687 = vshll.u32 %v9411, 16
      %v9689 = vrot.slane %v9687, 5
      %v9690 = vsel %vm238, %v9685, %v9689
      %v9692 = vshrl.u32 %v9412, 16
      %v9694 = vrot.slane %v9692, 4
      %v9695 = vshll.u32 %v9412, 16
      %v9697 = vrot.slane %v9695, 5
      %v9698 = vor.u32 %v9694, %v9697
      %v9699 = vrot.slane %v9698, 4
      %v9701 = vshll.u32 %v9413, 16
      %v9703 = vrot.slane %v9701, 5
      %v9704 = vsel %vm238, %v9699, %v9703
      %v9705 = vshrl.u32 %v9413, 16
      %v9707 = vrot.slane %v9705, 4
      %v9708 = vor.u32 %v9707, %v9703
      %v9709 = vrot.slane %v9708, 4
      %v9711 = vshll.u32 %v9414, 16
      %v9713 = vrot.slane %v9711, 5
      %v9714 = vsel %vm238, %v9709, %v9713
      %v9716 = vshrl.u32 %v9415, 16
      %v9718 = vrot.slane %v9716, 4
      %v9719 = vshll.u32 %v9415, 16
      %v9721 = vrot.slane %v9719, 5
      %v9722 = vor.u32 %v9718, %v9721
      %v9723 = vrot.slane %v9722, 4
      %v9725 = vshll.u32 %v9416, 16
      %v9727 = vrot.slane %v9725, 5
      %v9728 = vsel %vm238, %v9723, %v9727
      %v9729 = vshrl.u32 %v9416, 16
      %v9731 = vrot.slane %v9729, 4
      %v9732 = vor.u32 %v9731, %v9727
      %v9733 = vrot.slane %v9732, 4
      %v9735 = vshll.u32 %v9417, 16
      %v9737 = vrot.slane %v9735, 5
      %v9738 = vsel %vm238, %v9733, %v9737
      %v9740 = vshrl.u32 %v9418, 16
      %v9742 = vrot.slane %v9740, 4
      %v9743 = vshll.u32 %v9418, 16
      %v9745 = vrot.slane %v9743, 5
      %v9746 = vor.u32 %v9742, %v9745
      %v9747 = vrot.slane %v9746, 4
      %v9749 = vshll.u32 %v9419, 16
      %v9751 = vrot.slane %v9749, 5
      %v9752 = vsel %vm238, %v9747, %v9751
      %v9753 = vshrl.u32 %v9419, 16
      %v9755 = vrot.slane %v9753, 4
      %v9756 = vor.u32 %v9755, %v9751
      %v9757 = vrot.slane %v9756, 4
      %v9759 = vshll.u32 %v9420, 16
      %v9761 = vrot.slane %v9759, 5
      %v9762 = vsel %vm238, %v9757, %v9761
      %v9764 = vshrl.u32 %v9421, 16
      %v9766 = vrot.slane %v9764, 4
      %v9767 = vshll.u32 %v9421, 16
      %v9769 = vrot.slane %v9767, 5
      %v9770 = vor.u32 %v9766, %v9769
      %v9771 = vrot.slane %v9770, 4
      %v9773 = vshll.u32 %v9422, 16
      %v9775 = vrot.slane %v9773, 5
      %v9776 = vsel %vm238, %v9771, %v9775
      %v9777 = vshrl.u32 %v9422, 16
      %v9779 = vrot.slane %v9777, 4
      %v9780 = vor.u32 %v9779, %v9775
      %v9781 = vrot.slane %v9780, 4
      %v9783 = vshll.u32 %v9423, 16
      %v9785 = vrot.slane %v9783, 5
      %v9786 = vsel %vm238, %v9781, %v9785
      %v9788 = vshrl.u32 %v9424, 16
      %v9790 = vrot.slane %v9788, 4
      %v9791 = vshll.u32 %v9424, 16
      %v9793 = vrot.slane %v9791, 5
      %v9794 = vor.u32 %v9790, %v9793
      %v9795 = vrot.slane %v9794, 4
      %v9797 = vshll.u32 %v9425, 16
      %v9799 = vrot.slane %v9797, 5
      %v9800 = vsel %vm238, %v9795, %v9799
      %v9801 = vshrl.u32 %v9425, 16
      %v9803 = vrot.slane %v9801, 4
      %v9804 = vor.u32 %v9803, %v9799
      %v9805 = vrot.slane %v9804, 4
      %v9807 = vshll.u32 %v9426, 16
      %v9809 = vrot.slane %v9807, 5
      %v9810 = vsel %vm238, %v9805, %v9809
      %v9811 = vld [vmem:[%s2 + $0x1c0] sm:$0xf]
      %v9812 = vld [vmem:[%s2 + $0x1c4] sm:$0xf]
      %v9813 = vld [vmem:[%s2 + $0x1c8] sm:$0xf]
      %v9814 = vld [vmem:[%s2 + $0x1cc] sm:$0xf]
      %v9815 = vld [vmem:[%s2 + $0x1d0] sm:$0xf]
      %v9816 = vld [vmem:[%s2 + $0x1d4] sm:$0xf]
      %v9817 = vld [vmem:[%s2 + $0x1d8] sm:$0xf]
      %v9818 = vld [vmem:[%s2 + $0x1dc] sm:$0xf]
      %v9819 = vld [vmem:[%s2 + $0x1e0] sm:$0xf]
      %v9820 = vld [vmem:[%s2 + $0x1e4] sm:$0xf]
      %v9821 = vld [vmem:[%s2 + $0x1e8] sm:$0xf]
      %v9822 = vld [vmem:[%s2 + $0x1ec] sm:$0xf]
      %v9823 = vld [vmem:[%s2 + $0x1f0] sm:$0xf]
      %v9824 = vld [vmem:[%s2 + $0x1f4] sm:$0xf]
      %v9825 = vld [vmem:[%s2 + $0x1f8] sm:$0xf]
      %v9826 = vld [vmem:[%s2 + $0x1fc] sm:$0xf]
      %v9827 = vunpack.c.l.b16 %v9440
      %v9828 = vunpack.c.l.b16 %v9450
      %v9829 = vunpack.c.l.b16 %v9464
      %v9830 = vunpack.c.l.b16 %v9474
      %v9831 = vunpack.c.l.b16 %v9488
      %v9832 = vunpack.c.l.b16 %v9498
      %v9833 = vunpack.c.l.b16 %v9512
      %v9834 = vunpack.c.l.b16 %v9522
      %v9835 = vunpack.c.l.b16 %v9536
      %v9836 = vunpack.c.l.b16 %v9546
      %v9837 = vunpack.c.l.b16 %v9560
      %v9838 = vunpack.c.l.b16 %v9570
      %v9839 = vunpack.c.l.b16 %v9584
      %v9840 = vunpack.c.l.b16 %v9594
      %v9841 = vunpack.c.l.b16 %v9608
      %v9842 = vunpack.c.l.b16 %v9618
      %v9843 = vunpack.c.l.b16 %v9632
      %v9844 = vunpack.c.l.b16 %v9642
      %v9845 = vunpack.c.l.b16 %v9656
      %v9846 = vunpack.c.l.b16 %v9666
      %v9847 = vunpack.c.l.b16 %v9680
      %v9848 = vunpack.c.l.b16 %v9690
      %v9849 = vunpack.c.l.b16 %v9704
      %v9850 = vunpack.c.l.b16 %v9714
      %v9851 = vunpack.c.l.b16 %v9728
      %v9852 = vunpack.c.l.b16 %v9738
      %v9853 = vunpack.c.l.b16 %v9752
      %v9854 = vunpack.c.l.b16 %v9762
      %v9855 = vunpack.c.l.b16 %v9776
      %v9856 = vunpack.c.l.b16 %v9786
      %v9857 = vunpack.c.l.b16 %v9800
      %v9858 = vunpack.c.l.b16 %v9810
      %v9859 = vpack.c.b16 %v9828, %v9827
      %v9860 = vpack.c.b16 %v9830, %v9829
      %v9861 = vpack.c.b16 %v9832, %v9831
      %v9862 = vpack.c.b16 %v9834, %v9833
      %v9863 = vpack.c.b16 %v9836, %v9835
      %v9864 = vpack.c.b16 %v9838, %v9837
      %v9865 = vpack.c.b16 %v9840, %v9839
      %v9866 = vpack.c.b16 %v9842, %v9841
      %v9867 = vpack.c.b16 %v9844, %v9843
      %v9868 = vpack.c.b16 %v9846, %v9845
      %v9869 = vpack.c.b16 %v9848, %v9847
      %v9870 = vpack.c.b16 %v9850, %v9849
      %v9871 = vpack.c.b16 %v9852, %v9851
      %v9872 = vpack.c.b16 %v9854, %v9853
      %v9873 = vpack.c.b16 %v9856, %v9855
      %v9874 = vpack.c.b16 %v9858, %v9857
      %v9907 = vunpack.c.l.b16 %v9811
      %v9908 = vunpack.c.l.b16 %v9812
      %v9909 = vunpack.c.l.b16 %v9813
      %v9910 = vunpack.c.l.b16 %v9814
      %v9911 = vunpack.c.l.b16 %v9815
      %v9912 = vunpack.c.l.b16 %v9816
      %v9913 = vunpack.c.l.b16 %v9817
      %v9914 = vunpack.c.l.b16 %v9818
      %v9915 = vunpack.c.l.b16 %v9819
      %v9916 = vunpack.c.l.b16 %v9820
      %v9917 = vunpack.c.l.b16 %v9821
      %v9918 = vunpack.c.l.b16 %v9822
      %v9919 = vunpack.c.l.b16 %v9823
      %v9920 = vunpack.c.l.b16 %v9824
      %v9921 = vunpack.c.l.b16 %v9825
      %v9922 = vunpack.c.l.b16 %v9826
      %v9923 = vpack.c.b16 %v9908, %v9907
      %v9924 = vpack.c.b16 %v9910, %v9909
      %v9925 = vpack.c.b16 %v9912, %v9911
      %v9926 = vpack.c.b16 %v9914, %v9913
      %v9927 = vpack.c.b16 %v9916, %v9915
      %v9928 = vpack.c.b16 %v9918, %v9917
      %v9929 = vpack.c.b16 %v9920, %v9919
      %v9930 = vpack.c.b16 %v9922, %v9921
      %9939 = vmatprep.subr.bf16.mxu0 0
      %9940 = vmatpush1.bf16.msra.mxu0 %v9923
      %9941 = vmatprep.subr.bf16.mxu0 0
      %9942 = vmatpush1.bf16.msra.mxu0 %v9924
      %9943 = vmatprep.subr.bf16.mxu0 0
      %9944 = vmatpush1.bf16.msra.mxu0 %v9925
      %9945 = vmatprep.subr.bf16.mxu0 0
      %9946 = vmatpush1.bf16.msra.mxu0 %v9926
      %9947 = vmatprep.subr.bf16.mxu0 0
      %9948 = vmatpush1.bf16.msra.mxu0 %v9927
      %9949 = vmatprep.subr.bf16.mxu0 0
      %9950 = vmatpush1.bf16.msra.mxu0 %v9928
      %9951 = vmatprep.subr.bf16.mxu0 0
      %9952 = vmatpush1.bf16.msra.mxu0 %v9929
      %9953 = vmatprep.subr.bf16.mxu0 0
      %9954 = vmatpush1.bf16.msra.mxu0 %v9930
      %9955 = vmatprep.subr.bf16.mxu0 0
      %9956 = vmatpush1.bf16.msra.mxu0 0
      %9957 = vmatprep.subr.bf16.mxu0 0
      %9958 = vmatpush1.bf16.msra.mxu0 0
      %9959 = vmatprep.subr.bf16.mxu0 0
      %9960 = vmatpush1.bf16.msra.mxu0 0
      %9961 = vmatprep.subr.bf16.mxu0 0
      %9962 = vmatpush1.bf16.msra.mxu0 0
      %9963 = vmatprep.subr.bf16.mxu0 0
      %9964 = vmatpush1.bf16.msra.mxu0 0
      %9965 = vmatprep.subr.bf16.mxu0 0
      %9966 = vmatpush1.bf16.msra.mxu0 0
      %9967 = vmatprep.subr.bf16.mxu0 0
      %9968 = vmatpush1.bf16.msra.mxu0 0
      %9969 = vmatprep.subr.bf16.mxu0 0
      %9970 = vmatpush1.bf16.msra.mxu0 0
      %9971 = vmatprep.mubr.bf16.mxu0 0
      %9972 = vmatmul.mubr.bf16.gmra.mrb[0].mxu0 %v9859
      %v9973 = vpop.f32.mrb[0].mxu0
      %v9974 = vadd.f32 0.0, %v9973
      %v9975 = vpop.f32.mrb[0].mxu0
      %v9976 = vpop.f32.mrb[0].mxu0
      %v9977 = vadd.f32 0.0, %v9976
      %v9978 = vpop.f32.mrb[0].mxu0
      %9979 = vmatprep.mubr.bf16.mxu0 0
      %9980 = vmatmul.mubr.bf16.gmra.mrb[0].mxu0 %v9860
      %v9981 = vpop.f32.mrb[0].mxu0
      %v9982 = vadd.f32 0.0, %v9981
      %v9983 = vpop.f32.mrb[0].mxu0
      %v9984 = vpop.f32.mrb[0].mxu0
      %v9985 = vadd.f32 0.0, %v9984
      %v9986 = vpop.f32.mrb[0].mxu0
      %9987 = vmatprep.mubr.bf16.mxu0 0
      %9988 = vmatmul.mubr.bf16.gmra.mrb[0].mxu0 %v9861
      %v9989 = vpop.f32.mrb[0].mxu0
      %v9990 = vadd.f32 0.0, %v9989
      %v9991 = vpop.f32.mrb[0].mxu0
      %v9992 = vpop.f32.mrb[0].mxu0
      %v9993 = vadd.f32 0.0, %v9992
      %v9994 = vpop.f32.mrb[0].mxu0
      %9995 = vmatprep.mubr.bf16.mxu0 0
      %9996 = vmatmul.mubr.bf16.gmra.mrb[0].mxu0 %v9862
      %v9997 = vpop.f32.mrb[0].mxu0
      %v9998 = vadd.f32 0.0, %v9997
      %v9999 = vpop.f32.mrb[0].mxu0
      %v10000 = vpop.f32.mrb[0].mxu0
      %v10001 = vadd.f32 0.0, %v10000
      %v10002 = vpop.f32.mrb[0].mxu0
      %10003 = vmatprep.mubr.bf16.mxu0 0
      %10004 = vmatmul.mubr.bf16.gmra.mrb[0].mxu0 %v9863
      %v10005 = vpop.f32.mrb[0].mxu0
      %v10006 = vadd.f32 0.0, %v10005
      %v10007 = vpop.f32.mrb[0].mxu0
      %v10008 = vpop.f32.mrb[0].mxu0
      %v10009 = vadd.f32 0.0, %v10008
      %v10010 = vpop.f32.mrb[0].mxu0
      %10011 = vmatprep.mubr.bf16.mxu0 0
      %10012 = vmatmul.mubr.bf16.gmra.mrb[0].mxu0 %v9864
      %v10013 = vpop.f32.mrb[0].mxu0
      %v10014 = vadd.f32 0.0, %v10013
      %v10015 = vpop.f32.mrb[0].mxu0
      %v10016 = vpop.f32.mrb[0].mxu0
      %v10017 = vadd.f32 0.0, %v10016
      %v10018 = vpop.f32.mrb[0].mxu0
      %10019 = vmatprep.mubr.bf16.mxu0 0
      %10020 = vmatmul.mubr.bf16.gmra.mrb[0].mxu0 %v9865
      %v10021 = vpop.f32.mrb[0].mxu0
      %v10022 = vadd.f32 0.0, %v10021
      %v10023 = vpop.f32.mrb[0].mxu0
      %v10024 = vpop.f32.mrb[0].mxu0
      %v10025 = vadd.f32 0.0, %v10024
      %v10026 = vpop.f32.mrb[0].mxu0
      %10027 = vmatprep.mubr.bf16.mxu0 0
      %10028 = vmatmul.mubr.bf16.gmra.mrb[0].mxu0 %v9866
      %v10029 = vpop.f32.mrb[0].mxu0
      %v10030 = vadd.f32 0.0, %v10029
      %v10031 = vpop.f32.mrb[0].mxu0
      %v10032 = vpop.f32.mrb[0].mxu0
      %v10033 = vadd.f32 0.0, %v10032
      %v10034 = vpop.f32.mrb[0].mxu0
      %10035 = vmatprep.mubr.bf16.mxu0 0
      %10036 = vmatmul.mubr.bf16.gmra.mrb[0].mxu0 %v9867
      %v10037 = vpop.f32.mrb[0].mxu0
      %v10038 = vadd.f32 0.0, %v10037
      %v10039 = vpop.f32.mrb[0].mxu0
      %v10040 = vpop.f32.mrb[0].mxu0
      %v10041 = vadd.f32 0.0, %v10040
      %v10042 = vpop.f32.mrb[0].mxu0
      %10043 = vmatprep.mubr.bf16.mxu0 0
      %10044 = vmatmul.mubr.bf16.gmra.mrb[0].mxu0 %v9868
      %v10045 = vpop.f32.mrb[0].mxu0
      %v10046 = vadd.f32 0.0, %v10045
      %v10047 = vpop.f32.mrb[0].mxu0
      %v10048 = vpop.f32.mrb[0].mxu0
      %v10049 = vadd.f32 0.0, %v10048
      %v10050 = vpop.f32.mrb[0].mxu0
      %10051 = vmatprep.mubr.bf16.mxu0 0
      %10052 = vmatmul.mubr.bf16.gmra.mrb[0].mxu0 %v9869
      %v10053 = vpop.f32.mrb[0].mxu0
      %v10054 = vadd.f32 0.0, %v10053
      %v10055 = vpop.f32.mrb[0].mxu0
      %v10056 = vpop.f32.mrb[0].mxu0
      %v10057 = vadd.f32 0.0, %v10056
      %v10058 = vpop.f32.mrb[0].mxu0
      %10059 = vmatprep.mubr.bf16.mxu0 0
      %10060 = vmatmul.mubr.bf16.gmra.mrb[0].mxu0 %v9870
      %v10061 = vpop.f32.mrb[0].mxu0
      %v10062 = vadd.f32 0.0, %v10061
      %v10063 = vpop.f32.mrb[0].mxu0
      %v10064 = vpop.f32.mrb[0].mxu0
      %v10065 = vadd.f32 0.0, %v10064
      %v10066 = vpop.f32.mrb[0].mxu0
      %10067 = vmatprep.mubr.bf16.mxu0 0
      %10068 = vmatmul.mubr.bf16.gmra.mrb[0].mxu0 %v9871
      %v10069 = vpop.f32.mrb[0].mxu0
      %v10070 = vadd.f32 0.0, %v10069
      %v10071 = vpop.f32.mrb[0].mxu0
      %v10072 = vpop.f32.mrb[0].mxu0
      %v10073 = vadd.f32 0.0, %v10072
      %v10074 = vpop.f32.mrb[0].mxu0
      %10075 = vmatprep.mubr.bf16.mxu0 0
      %10076 = vmatmul.mubr.bf16.gmra.mrb[0].mxu0 %v9872
      %v10077 = vpop.f32.mrb[0].mxu0
      %v10078 = vadd.f32 0.0, %v10077
      %v10079 = vpop.f32.mrb[0].mxu0
      %v10080 = vpop.f32.mrb[0].mxu0
      %v10081 = vadd.f32 0.0, %v10080
      %v10082 = vpop.f32.mrb[0].mxu0
      %10083 = vmatprep.mubr.bf16.mxu0 0
      %10084 = vmatmul.mubr.bf16.gmra.mrb[0].mxu0 %v9873
      %v10085 = vpop.f32.mrb[0].mxu0
      %v10086 = vadd.f32 0.0, %v10085
      %v10087 = vpop.f32.mrb[0].mxu0
      %v10088 = vpop.f32.mrb[0].mxu0
      %v10089 = vadd.f32 0.0, %v10088
      %v10090 = vpop.f32.mrb[0].mxu0
      %10091 = vmatprep.mubr.bf16.mxu0 0
      %10092 = vmatmul.mubr.bf16.gmra.mrb[0].mxu0 %v9874
      %v10093 = vpop.f32.mrb[0].mxu0
      %v10094 = vadd.f32 0.0, %v10093
      %v10095 = vpop.f32.mrb[0].mxu0
      %v10096 = vpop.f32.mrb[0].mxu0
      %v10097 = vadd.f32 0.0, %v10096
      %v10098 = vpop.f32.mrb[0].mxu0
      %10099 = vdwg.mxu0
      %v10100 = vadd.f32 %v9347, %v9974
      %v10101 = vadd.f32 %v9348, %v9977
      %v10102 = vadd.f32 %v9349, %v9982
      %v10103 = vadd.f32 %v9350, %v9985
      %v10104 = vadd.f32 %v9351, %v9990
      %v10105 = vadd.f32 %v9352, %v9993
      %v10106 = vadd.f32 %v9353, %v9998
      %v10107 = vadd.f32 %v9354, %v10001
      %v10108 = vadd.f32 %v9355, %v10006
      %v10109 = vadd.f32 %v9356, %v10009
      %v10110 = vadd.f32 %v9357, %v10014
      %v10111 = vadd.f32 %v9358, %v10017
      %v10112 = vadd.f32 %v9359, %v10022
      %v10113 = vadd.f32 %v9360, %v10025
      %v10114 = vadd.f32 %v9361, %v10030
      %v10115 = vadd.f32 %v9362, %v10033
      %v10116 = vadd.f32 %v9363, %v10038
      %v10117 = vadd.f32 %v9364, %v10041
      %v10118 = vadd.f32 %v9365, %v10046
      %v10119 = vadd.f32 %v9366, %v10049
      %v10120 = vadd.f32 %v9367, %v10054
      %v10121 = vadd.f32 %v9368, %v10057
      %v10122 = vadd.f32 %v9369, %v10062
      %v10123 = vadd.f32 %v9370, %v10065
      %v10124 = vadd.f32 %v9371, %v10070
      %v10125 = vadd.f32 %v9372, %v10073
      %v10126 = vadd.f32 %v9373, %v10078
      %v10127 = vadd.f32 %v9374, %v10081
      %v10128 = vadd.f32 %v9375, %v10086
      %v10129 = vadd.f32 %v9376, %v10089
      %v10130 = vadd.f32 %v9377, %v10094
      %v10131 = vadd.f32 %v9378, %v10097
      %v10132 = vld [vmem:[%s8993] sm:$0xe]
      %v10133 = vld [vmem:[%s8993 + $0xc] sm:$0xe]
      %v10134 = vld [vmem:[%s8993 + $0x18] sm:$0xe]
      %v10135 = vld [vmem:[%s8993 + $0x24] sm:$0xe]
      %v10136 = vld [vmem:[%s8993 + $0x30] sm:$0xe]
      %v10137 = vld [vmem:[%s8993 + $0x3c] sm:$0xe]
      %v10138 = vld [vmem:[%s8993 + $0x48] sm:$0xe]
      %v10139 = vld [vmem:[%s8993 + $0x54] sm:$0xe]
      %v10140 = vld [vmem:[%s8993 + $0x60] sm:$0xe]
      %v10141 = vld [vmem:[%s8993 + $0x6c] sm:$0xe]
      %v10142 = vld [vmem:[%s8993 + $0x78] sm:$0xe]
      %v10143 = vld [vmem:[%s8993 + $0x84] sm:$0xe]
      %v10144 = vld [vmem:[%s8993 + $0x90] sm:$0xe]
      %v10145 = vld [vmem:[%s8993 + $0x9c] sm:$0xe]
      %v10146 = vld [vmem:[%s8993 + $0xa8] sm:$0xe]
      %v10147 = vld [vmem:[%s8993 + $0xb4] sm:$0xe]
      %v10196 = vrot.slane %v10132, 5
      %v10197 = vrot.slane %v10196, 4
      %v10198 = vrot.slane %v9380, 5
      %v10199 = vsel %vm1267, %v10197, %v10198
      %v10200 = vrot.slane %v10198, 4
      %v10201 = vrot.slane %v9381, 5
      %v10202 = vsel %vm1267, %v10200, %v10201
      %v10203 = vrot.slane %v10133, 5
      %v10204 = vrot.slane %v10203, 4
      %v10205 = vrot.slane %v9383, 5
      %v10206 = vsel %vm1267, %v10204, %v10205
      %v10207 = vrot.slane %v10205, 4
      %v10208 = vrot.slane %v9384, 5
      %v10209 = vsel %vm1267, %v10207, %v10208
      %v10210 = vrot.slane %v10134, 5
      %v10211 = vrot.slane %v10210, 4
      %v10212 = vrot.slane %v9386, 5
      %v10213 = vsel %vm1267, %v10211, %v10212
      %v10214 = vrot.slane %v10212, 4
      %v10215 = vrot.slane %v9387, 5
      %v10216 = vsel %vm1267, %v10214, %v10215
      %v10217 = vrot.slane %v10135, 5
      %v10218 = vrot.slane %v10217, 4
      %v10219 = vrot.slane %v9389, 5
      %v10220 = vsel %vm1267, %v10218, %v10219
      %v10221 = vrot.slane %v10219, 4
      %v10222 = vrot.slane %v9390, 5
      %v10223 = vsel %vm1267, %v10221, %v10222
      %v10224 = vrot.slane %v10136, 5
      %v10225 = vrot.slane %v10224, 4
      %v10226 = vrot.slane %v9392, 5
      %v10227 = vsel %vm1267, %v10225, %v10226
      %v10228 = vrot.slane %v10226, 4
      %v10229 = vrot.slane %v9393, 5
      %v10230 = vsel %vm1267, %v10228, %v10229
      %v10231 = vrot.slane %v10137, 5
      %v10232 = vrot.slane %v10231, 4
      %v10233 = vrot.slane %v9395, 5
      %v10234 = vsel %vm1267, %v10232, %v10233
      %v10235 = vrot.slane %v10233, 4
      %v10236 = vrot.slane %v9396, 5
      %v10237 = vsel %vm1267, %v10235, %v10236
      %v10238 = vrot.slane %v10138, 5
      %v10239 = vrot.slane %v10238, 4
      %v10240 = vrot.slane %v9398, 5
      %v10241 = vsel %vm1267, %v10239, %v10240
      %v10242 = vrot.slane %v10240, 4
      %v10243 = vrot.slane %v9399, 5
      %v10244 = vsel %vm1267, %v10242, %v10243
      %v10245 = vrot.slane %v10139, 5
      %v10246 = vrot.slane %v10245, 4
      %v10247 = vrot.slane %v9401, 5
      %v10248 = vsel %vm1267, %v10246, %v10247
      %v10249 = vrot.slane %v10247, 4
      %v10250 = vrot.slane %v9402, 5
      %v10251 = vsel %vm1267, %v10249, %v10250
      %v10252 = vrot.slane %v10140, 5
      %v10253 = vrot.slane %v10252, 4
      %v10254 = vrot.slane %v9404, 5
      %v10255 = vsel %vm1267, %v10253, %v10254
      %v10256 = vrot.slane %v10254, 4
      %v10257 = vrot.slane %v9405, 5
      %v10258 = vsel %vm1267, %v10256, %v10257
      %v10259 = vrot.slane %v10141, 5
      %v10260 = vrot.slane %v10259, 4
      %v10261 = vrot.slane %v9407, 5
      %v10262 = vsel %vm1267, %v10260, %v10261
      %v10263 = vrot.slane %v10261, 4
      %v10264 = vrot.slane %v9408, 5
      %v10265 = vsel %vm1267, %v10263, %v10264
      %v10266 = vrot.slane %v10142, 5
      %v10267 = vrot.slane %v10266, 4
      %v10268 = vrot.slane %v9410, 5
      %v10269 = vsel %vm1267, %v10267, %v10268
      %v10270 = vrot.slane %v10268, 4
      %v10271 = vrot.slane %v9411, 5
      %v10272 = vsel %vm1267, %v10270, %v10271
      %v10273 = vrot.slane %v10143, 5
      %v10274 = vrot.slane %v10273, 4
      %v10275 = vrot.slane %v9413, 5
      %v10276 = vsel %vm1267, %v10274, %v10275
      %v10277 = vrot.slane %v10275, 4
      %v10278 = vrot.slane %v9414, 5
      %v10279 = vsel %vm1267, %v10277, %v10278
      %v10280 = vrot.slane %v10144, 5
      %v10281 = vrot.slane %v10280, 4
      %v10282 = vrot.slane %v9416, 5
      %v10283 = vsel %vm1267, %v10281, %v10282
      %v10284 = vrot.slane %v10282, 4
      %v10285 = vrot.slane %v9417, 5
      %v10286 = vsel %vm1267, %v10284, %v10285
      %v10287 = vrot.slane %v10145, 5
      %v10288 = vrot.slane %v10287, 4
      %v10289 = vrot.slane %v9419, 5
      %v10290 = vsel %vm1267, %v10288, %v10289
      %v10291 = vrot.slane %v10289, 4
      %v10292 = vrot.slane %v9420, 5
      %v10293 = vsel %vm1267, %v10291, %v10292
      %v10294 = vrot.slane %v10146, 5
      %v10295 = vrot.slane %v10294, 4
      %v10296 = vrot.slane %v9422, 5
      %v10297 = vsel %vm1267, %v10295, %v10296
      %v10298 = vrot.slane %v10296, 4
      %v10299 = vrot.slane %v9423, 5
      %v10300 = vsel %vm1267, %v10298, %v10299
      %v10301 = vrot.slane %v10147, 5
      %v10302 = vrot.slane %v10301, 4
      %v10303 = vrot.slane %v9425, 5
      %v10304 = vsel %vm1267, %v10302, %v10303
      %v10305 = vrot.slane %v10303, 4
      %v10306 = vrot.slane %v9426, 5
      %v10307 = vsel %vm1267, %v10305, %v10306
      %v10308 = vld [vmem:[%s2 + $0x200] sm:$0xf]
      %v10309 = vld [vmem:[%s2 + $0x204] sm:$0xf]
      %v10310 = vld [vmem:[%s2 + $0x208] sm:$0xf]
      %v10311 = vld [vmem:[%s2 + $0x20c] sm:$0xf]
      %v10312 = vld [vmem:[%s2 + $0x210] sm:$0xf]
      %v10313 = vld [vmem:[%s2 + $0x214] sm:$0xf]
      %v10314 = vld [vmem:[%s2 + $0x218] sm:$0xf]
      %v10315 = vld [vmem:[%s2 + $0x21c] sm:$0xf]
      %v10316 = vld [vmem:[%s2 + $0x220] sm:$0xf]
      %v10317 = vld [vmem:[%s2 + $0x224] sm:$0xf]
      %v10318 = vld [vmem:[%s2 + $0x228] sm:$0xf]
      %v10319 = vld [vmem:[%s2 + $0x22c] sm:$0xf]
      %v10320 = vld [vmem:[%s2 + $0x230] sm:$0xf]
      %v10321 = vld [vmem:[%s2 + $0x234] sm:$0xf]
      %v10322 = vld [vmem:[%s2 + $0x238] sm:$0xf]
      %v10323 = vld [vmem:[%s2 + $0x23c] sm:$0xf]
      %v10324 = vunpack.c.l.b16 %v10199
      %v10325 = vunpack.c.l.b16 %v10202
      %v10326 = vunpack.c.l.b16 %v10206
      %v10327 = vunpack.c.l.b16 %v10209
      %v10328 = vunpack.c.l.b16 %v10213
      %v10329 = vunpack.c.l.b16 %v10216
      %v10330 = vunpack.c.l.b16 %v10220
      %v10331 = vunpack.c.l.b16 %v10223
      %v10332 = vunpack.c.l.b16 %v10227
      %v10333 = vunpack.c.l.b16 %v10230
      %v10334 = vunpack.c.l.b16 %v10234
      %v10335 = vunpack.c.l.b16 %v10237
      %v10336 = vunpack.c.l.b16 %v10241
      %v10337 = vunpack.c.l.b16 %v10244
      %v10338 = vunpack.c.l.b16 %v10248
      %v10339 = vunpack.c.l.b16 %v10251
      %v10340 = vunpack.c.l.b16 %v10255
      %v10341 = vunpack.c.l.b16 %v10258
      %v10342 = vunpack.c.l.b16 %v10262
      %v10343 = vunpack.c.l.b16 %v10265
      %v10344 = vunpack.c.l.b16 %v10269
      %v10345 = vunpack.c.l.b16 %v10272
      %v10346 = vunpack.c.l.b16 %v10276
      %v10347 = vunpack.c.l.b16 %v10279
      %v10348 = vunpack.c.l.b16 %v10283
      %v10349 = vunpack.c.l.b16 %v10286
      %v10350 = vunpack.c.l.b16 %v10290
      %v10351 = vunpack.c.l.b16 %v10293
      %v10352 = vunpack.c.l.b16 %v10297
      %v10353 = vunpack.c.l.b16 %v10300
      %v10354 = vunpack.c.l.b16 %v10304
      %v10355 = vunpack.c.l.b16 %v10307
      %v10356 = vpack.c.b16 %v10325, %v10324
      %v10357 = vpack.c.b16 %v10327, %v10326
      %v10358 = vpack.c.b16 %v10329, %v10328
      %v10359 = vpack.c.b16 %v10331, %v10330
      %v10360 = vpack.c.b16 %v10333, %v10332
      %v10361 = vpack.c.b16 %v10335, %v10334
      %v10362 = vpack.c.b16 %v10337, %v10336
      %v10363 = vpack.c.b16 %v10339, %v10338
      %v10364 = vpack.c.b16 %v10341, %v10340
      %v10365 = vpack.c.b16 %v10343, %v10342
      %v10366 = vpack.c.b16 %v10345, %v10344
      %v10367 = vpack.c.b16 %v10347, %v10346
      %v10368 = vpack.c.b16 %v10349, %v10348
      %v10369 = vpack.c.b16 %v10351, %v10350
      %v10370 = vpack.c.b16 %v10353, %v10352
      %v10371 = vpack.c.b16 %v10355, %v10354
      %v10404 = vunpack.c.l.b16 %v10308
      %v10405 = vunpack.c.l.b16 %v10309
      %v10406 = vunpack.c.l.b16 %v10310
      %v10407 = vunpack.c.l.b16 %v10311
      %v10408 = vunpack.c.l.b16 %v10312
      %v10409 = vunpack.c.l.b16 %v10313
      %v10410 = vunpack.c.l.b16 %v10314
      %v10411 = vunpack.c.l.b16 %v10315
      %v10412 = vunpack.c.l.b16 %v10316
      %v10413 = vunpack.c.l.b16 %v10317
      %v10414 = vunpack.c.l.b16 %v10318
      %v10415 = vunpack.c.l.b16 %v10319
      %v10416 = vunpack.c.l.b16 %v10320
      %v10417 = vunpack.c.l.b16 %v10321
      %v10418 = vunpack.c.l.b16 %v10322
      %v10419 = vunpack.c.l.b16 %v10323
      %v10420 = vpack.c.b16 %v10405, %v10404
      %v10421 = vpack.c.b16 %v10407, %v10406
      %v10422 = vpack.c.b16 %v10409, %v10408
      %v10423 = vpack.c.b16 %v10411, %v10410
      %v10424 = vpack.c.b16 %v10413, %v10412
      %v10425 = vpack.c.b16 %v10415, %v10414
      %v10426 = vpack.c.b16 %v10417, %v10416
      %v10427 = vpack.c.b16 %v10419, %v10418
      %10436 = vmatprep.subr.bf16.mxu0 0
      %10437 = vmatpush1.bf16.msra.mxu0 %v10420
      %10438 = vmatprep.subr.bf16.mxu0 0
      %10439 = vmatpush1.bf16.msra.mxu0 %v10421
      %10440 = vmatprep.subr.bf16.mxu0 0
      %10441 = vmatpush1.bf16.msra.mxu0 %v10422
      %10442 = vmatprep.subr.bf16.mxu0 0
      %10443 = vmatpush1.bf16.msra.mxu0 %v10423
      %10444 = vmatprep.subr.bf16.mxu0 0
      %10445 = vmatpush1.bf16.msra.mxu0 %v10424
      %10446 = vmatprep.subr.bf16.mxu0 0
      %10447 = vmatpush1.bf16.msra.mxu0 %v10425
      %10448 = vmatprep.subr.bf16.mxu0 0
      %10449 = vmatpush1.bf16.msra.mxu0 %v10426
      %10450 = vmatprep.subr.bf16.mxu0 0
      %10451 = vmatpush1.bf16.msra.mxu0 %v10427
      %10452 = vmatprep.subr.bf16.mxu0 0
      %10453 = vmatpush1.bf16.msra.mxu0 0
      %10454 = vmatprep.subr.bf16.mxu0 0
      %10455 = vmatpush1.bf16.msra.mxu0 0
      %10456 = vmatprep.subr.bf16.mxu0 0
      %10457 = vmatpush1.bf16.msra.mxu0 0
      %10458 = vmatprep.subr.bf16.mxu0 0
      %10459 = vmatpush1.bf16.msra.mxu0 0
      %10460 = vmatprep.subr.bf16.mxu0 0
      %10461 = vmatpush1.bf16.msra.mxu0 0
      %10462 = vmatprep.subr.bf16.mxu0 0
      %10463 = vmatpush1.bf16.msra.mxu0 0
      %10464 = vmatprep.subr.bf16.mxu0 0
      %10465 = vmatpush1.bf16.msra.mxu0 0
      %10466 = vmatprep.subr.bf16.mxu0 0
      %10467 = vmatpush1.bf16.msra.mxu0 0
      %10468 = vmatprep.mubr.bf16.mxu0 0
      %10469 = vmatmul.mubr.bf16.gmra.mrb[0].mxu0 %v10356
      %v10470 = vpop.f32.mrb[0].mxu0
      %v10471 = vadd.f32 0.0, %v10470
      %v10472 = vpop.f32.mrb[0].mxu0
      %v10473 = vpop.f32.mrb[0].mxu0
      %v10474 = vadd.f32 0.0, %v10473
      %v10475 = vpop.f32.mrb[0].mxu0
      %10476 = vmatprep.mubr.bf16.mxu0 0
      %10477 = vmatmul.mubr.bf16.gmra.mrb[0].mxu0 %v10357
      %v10478 = vpop.f32.mrb[0].mxu0
      %v10479 = vadd.f32 0.0, %v10478
      %v10480 = vpop.f32.mrb[0].mxu0
      %v10481 = vpop.f32.mrb[0].mxu0
      %v10482 = vadd.f32 0.0, %v10481
      %v10483 = vpop.f32.mrb[0].mxu0
      %10484 = vmatprep.mubr.bf16.mxu0 0
      %10485 = vmatmul.mubr.bf16.gmra.mrb[0].mxu0 %v10358
      %v10486 = vpop.f32.mrb[0].mxu0
      %v10487 = vadd.f32 0.0, %v10486
      %v10488 = vpop.f32.mrb[0].mxu0
      %v10489 = vpop.f32.mrb[0].mxu0
      %v10490 = vadd.f32 0.0, %v10489
      %v10491 = vpop.f32.mrb[0].mxu0
      %10492 = vmatprep.mubr.bf16.mxu0 0
      %10493 = vmatmul.mubr.bf16.gmra.mrb[0].mxu0 %v10359
      %v10494 = vpop.f32.mrb[0].mxu0
      %v10495 = vadd.f32 0.0, %v10494
      %v10496 = vpop.f32.mrb[0].mxu0
      %v10497 = vpop.f32.mrb[0].mxu0
      %v10498 = vadd.f32 0.0, %v10497
      %v10499 = vpop.f32.mrb[0].mxu0
      %10500 = vmatprep.mubr.bf16.mxu0 0
      %10501 = vmatmul.mubr.bf16.gmra.mrb[0].mxu0 %v10360
      %v10502 = vpop.f32.mrb[0].mxu0
      %v10503 = vadd.f32 0.0, %v10502
      %v10504 = vpop.f32.mrb[0].mxu0
      %v10505 = vpop.f32.mrb[0].mxu0
      %v10506 = vadd.f32 0.0, %v10505
      %v10507 = vpop.f32.mrb[0].mxu0
      %10508 = vmatprep.mubr.bf16.mxu0 0
      %10509 = vmatmul.mubr.bf16.gmra.mrb[0].mxu0 %v10361
      %v10510 = vpop.f32.mrb[0].mxu0
      %v10511 = vadd.f32 0.0, %v10510
      %v10512 = vpop.f32.mrb[0].mxu0
      %v10513 = vpop.f32.mrb[0].mxu0
      %v10514 = vadd.f32 0.0, %v10513
      %v10515 = vpop.f32.mrb[0].mxu0
      %10516 = vmatprep.mubr.bf16.mxu0 0
      %10517 = vmatmul.mubr.bf16.gmra.mrb[0].mxu0 %v10362
      %v10518 = vpop.f32.mrb[0].mxu0
      %v10519 = vadd.f32 0.0, %v10518
      %v10520 = vpop.f32.mrb[0].mxu0
      %v10521 = vpop.f32.mrb[0].mxu0
      %v10522 = vadd.f32 0.0, %v10521
      %v10523 = vpop.f32.mrb[0].mxu0
      %10524 = vmatprep.mubr.bf16.mxu0 0
      %10525 = vmatmul.mubr.bf16.gmra.mrb[0].mxu0 %v10363
      %v10526 = vpop.f32.mrb[0].mxu0
      %v10527 = vadd.f32 0.0, %v10526
      %v10528 = vpop.f32.mrb[0].mxu0
      %v10529 = vpop.f32.mrb[0].mxu0
      %v10530 = vadd.f32 0.0, %v10529
      %v10531 = vpop.f32.mrb[0].mxu0
      %10532 = vmatprep.mubr.bf16.mxu0 0
      %10533 = vmatmul.mubr.bf16.gmra.mrb[0].mxu0 %v10364
      %v10534 = vpop.f32.mrb[0].mxu0
      %v10535 = vadd.f32 0.0, %v10534
      %v10536 = vpop.f32.mrb[0].mxu0
      %v10537 = vpop.f32.mrb[0].mxu0
      %v10538 = vadd.f32 0.0, %v10537
      %v10539 = vpop.f32.mrb[0].mxu0
      %10540 = vmatprep.mubr.bf16.mxu0 0
      %10541 = vmatmul.mubr.bf16.gmra.mrb[0].mxu0 %v10365
      %v10542 = vpop.f32.mrb[0].mxu0
      %v10543 = vadd.f32 0.0, %v10542
      %v10544 = vpop.f32.mrb[0].mxu0
      %v10545 = vpop.f32.mrb[0].mxu0
      %v10546 = vadd.f32 0.0, %v10545
      %v10547 = vpop.f32.mrb[0].mxu0
      %10548 = vmatprep.mubr.bf16.mxu0 0
      %10549 = vmatmul.mubr.bf16.gmra.mrb[0].mxu0 %v10366
      %v10550 = vpop.f32.mrb[0].mxu0
      %v10551 = vadd.f32 0.0, %v10550
      %v10552 = vpop.f32.mrb[0].mxu0
      %v10553 = vpop.f32.mrb[0].mxu0
      %v10554 = vadd.f32 0.0, %v10553
      %v10555 = vpop.f32.mrb[0].mxu0
      %10556 = vmatprep.mubr.bf16.mxu0 0
      %10557 = vmatmul.mubr.bf16.gmra.mrb[0].mxu0 %v10367
      %v10558 = vpop.f32.mrb[0].mxu0
      %v10559 = vadd.f32 0.0, %v10558
      %v10560 = vpop.f32.mrb[0].mxu0
      %v10561 = vpop.f32.mrb[0].mxu0
      %v10562 = vadd.f32 0.0, %v10561
      %v10563 = vpop.f32.mrb[0].mxu0
      %10564 = vmatprep.mubr.bf16.mxu0 0
      %10565 = vmatmul.mubr.bf16.gmra.mrb[0].mxu0 %v10368
      %v10566 = vpop.f32.mrb[0].mxu0
      %v10567 = vadd.f32 0.0, %v10566
      %v10568 = vpop.f32.mrb[0].mxu0
      %v10569 = vpop.f32.mrb[0].mxu0
      %v10570 = vadd.f32 0.0, %v10569
      %v10571 = vpop.f32.mrb[0].mxu0
      %10572 = vmatprep.mubr.bf16.mxu0 0
      %10573 = vmatmul.mubr.bf16.gmra.mrb[0].mxu0 %v10369
      %v10574 = vpop.f32.mrb[0].mxu0
      %v10575 = vadd.f32 0.0, %v10574
      %v10576 = vpop.f32.mrb[0].mxu0
      %v10577 = vpop.f32.mrb[0].mxu0
      %v10578 = vadd.f32 0.0, %v10577
      %v10579 = vpop.f32.mrb[0].mxu0
      %10580 = vmatprep.mubr.bf16.mxu0 0
      %10581 = vmatmul.mubr.bf16.gmra.mrb[0].mxu0 %v10370
      %v10582 = vpop.f32.mrb[0].mxu0
      %v10583 = vadd.f32 0.0, %v10582
      %v10584 = vpop.f32.mrb[0].mxu0
      %v10585 = vpop.f32.mrb[0].mxu0
      %v10586 = vadd.f32 0.0, %v10585
      %v10587 = vpop.f32.mrb[0].mxu0
      %10588 = vmatprep.mubr.bf16.mxu0 0
      %10589 = vmatmul.mubr.bf16.gmra.mrb[0].mxu0 %v10371
      %v10590 = vpop.f32.mrb[0].mxu0
      %v10591 = vadd.f32 0.0, %v10590
      %v10592 = vpop.f32.mrb[0].mxu0
      %v10593 = vpop.f32.mrb[0].mxu0
      %v10594 = vadd.f32 0.0, %v10593
      %v10595 = vpop.f32.mrb[0].mxu0
      %10596 = vdwg.mxu0
      %v10597 = vadd.f32 %v10100, %v10471
      %v10598 = vadd.f32 %v10101, %v10474
      %v10599 = vadd.f32 %v10102, %v10479
      %v10600 = vadd.f32 %v10103, %v10482
      %v10601 = vadd.f32 %v10104, %v10487
      %v10602 = vadd.f32 %v10105, %v10490
      %v10603 = vadd.f32 %v10106, %v10495
      %v10604 = vadd.f32 %v10107, %v10498
      %v10605 = vadd.f32 %v10108, %v10503
      %v10606 = vadd.f32 %v10109, %v10506
      %v10607 = vadd.f32 %v10110, %v10511
      %v10608 = vadd.f32 %v10111, %v10514
      %v10609 = vadd.f32 %v10112, %v10519
      %v10610 = vadd.f32 %v10113, %v10522
      %v10611 = vadd.f32 %v10114, %v10527
      %v10612 = vadd.f32 %v10115, %v10530
      %v10613 = vadd.f32 %v10116, %v10535
      %v10614 = vadd.f32 %v10117, %v10538
      %v10615 = vadd.f32 %v10118, %v10543
      %v10616 = vadd.f32 %v10119, %v10546
      %v10617 = vadd.f32 %v10120, %v10551
      %v10618 = vadd.f32 %v10121, %v10554
      %v10619 = vadd.f32 %v10122, %v10559
      %v10620 = vadd.f32 %v10123, %v10562
      %v10621 = vadd.f32 %v10124, %v10567
      %v10622 = vadd.f32 %v10125, %v10570
      %v10623 = vadd.f32 %v10126, %v10575
      %v10624 = vadd.f32 %v10127, %v10578
      %v10625 = vadd.f32 %v10128, %v10583
      %v10626 = vadd.f32 %v10129, %v10586
      %v10627 = vadd.f32 %v10130, %v10591
      %v10628 = vadd.f32 %v10131, %v10594
      %v10629 = vadd.f32 %v10597, %v10598
      %v10630 = vadd.f32 %v10629, %v10599
      %v10631 = vadd.f32 %v10630, %v10600
      %v10632 = vadd.f32 %v10631, %v10601
      %v10633 = vadd.f32 %v10632, %v10602
      %v10634 = vadd.f32 %v10633, %v10603
      %v10635 = vadd.f32 %v10634, %v10604
      %v10636 = vadd.f32 %v10635, %v10605
      %v10637 = vadd.f32 %v10636, %v10606
      %v10638 = vadd.f32 %v10637, %v10607
      %v10639 = vadd.f32 %v10638, %v10608
      %v10640 = vadd.f32 %v10639, %v10609
      %v10641 = vadd.f32 %v10640, %v10610
      %v10642 = vadd.f32 %v10641, %v10611
      %v10643 = vadd.f32 %v10642, %v10612
      %v10644 = vadd.f32 %v10643, %v10613
      %v10645 = vadd.f32 %v10644, %v10614
      %v10646 = vadd.f32 %v10645, %v10615
      %v10647 = vadd.f32 %v10646, %v10616
      %v10648 = vadd.f32 %v10647, %v10617
      %v10649 = vadd.f32 %v10648, %v10618
      %v10650 = vadd.f32 %v10649, %v10619
      %v10651 = vadd.f32 %v10650, %v10620
      %v10652 = vadd.f32 %v10651, %v10621
      %v10653 = vadd.f32 %v10652, %v10622
      %v10654 = vadd.f32 %v10653, %v10623
      %v10655 = vadd.f32 %v10654, %v10624
      %v10656 = vadd.f32 %v10655, %v10625
      %v10657 = vadd.f32 %v10656, %v10626
      %v10658 = vadd.f32 %v10657, %v10627
      %v10659 = vadd.f32 %v10658, %v10628
      %v10660 = vrot.slane %v10659, 4
      %v10661 = vadd.f32 %v10659, %v10660
      %v10662 = vrot.slane %v10661, 2
      %v10663 = vadd.f32 %v10661, %v10662
      %v10664 = vrot.slane %v10663, 1
      %v10665 = vadd.f32 %v10663, %v10664
      %v10666 = vmul.f32 %v10597, %v10597
      %v10667 = vmul.f32 %v10598, %v10598
      %v10668 = vmul.f32 %v10599, %v10599
      %v10669 = vmul.f32 %v10600, %v10600
      %v10670 = vmul.f32 %v10601, %v10601
      %v10671 = vmul.f32 %v10602, %v10602
      %v10672 = vmul.f32 %v10603, %v10603
      %v10673 = vmul.f32 %v10604, %v10604
      %v10674 = vmul.f32 %v10605, %v10605
      %v10675 = vmul.f32 %v10606, %v10606
      %v10676 = vmul.f32 %v10607, %v10607
      %v10677 = vmul.f32 %v10608, %v10608
      %v10678 = vmul.f32 %v10609, %v10609
      %v10679 = vmul.f32 %v10610, %v10610
      %v10680 = vmul.f32 %v10611, %v10611
      %v10681 = vmul.f32 %v10612, %v10612
      %v10682 = vmul.f32 %v10613, %v10613
      %v10683 = vmul.f32 %v10614, %v10614
      %v10684 = vmul.f32 %v10615, %v10615
      %v10685 = vmul.f32 %v10616, %v10616
      %v10686 = vmul.f32 %v10617, %v10617
      %v10687 = vmul.f32 %v10618, %v10618
      %v10688 = vmul.f32 %v10619, %v10619
      %v10689 = vmul.f32 %v10620, %v10620
      %v10690 = vmul.f32 %v10621, %v10621
      %v10691 = vmul.f32 %v10622, %v10622
      %v10692 = vmul.f32 %v10623, %v10623
      %v10693 = vmul.f32 %v10624, %v10624
      %v10694 = vmul.f32 %v10625, %v10625
      %v10695 = vmul.f32 %v10626, %v10626
      %v10696 = vmul.f32 %v10627, %v10627
      %v10697 = vmul.f32 %v10628, %v10628
      %v10698 = vadd.f32 %v10666, %v10667
      %v10699 = vadd.f32 %v10698, %v10668
      %v10700 = vadd.f32 %v10699, %v10669
      %v10701 = vadd.f32 %v10700, %v10670
      %v10702 = vadd.f32 %v10701, %v10671
      %v10703 = vadd.f32 %v10702, %v10672
      %v10704 = vadd.f32 %v10703, %v10673
      %v10705 = vadd.f32 %v10704, %v10674
      %v10706 = vadd.f32 %v10705, %v10675
      %v10707 = vadd.f32 %v10706, %v10676
      %v10708 = vadd.f32 %v10707, %v10677
      %v10709 = vadd.f32 %v10708, %v10678
      %v10710 = vadd.f32 %v10709, %v10679
      %v10711 = vadd.f32 %v10710, %v10680
      %v10712 = vadd.f32 %v10711, %v10681
      %v10713 = vadd.f32 %v10712, %v10682
      %v10714 = vadd.f32 %v10713, %v10683
      %v10715 = vadd.f32 %v10714, %v10684
      %v10716 = vadd.f32 %v10715, %v10685
      %v10717 = vadd.f32 %v10716, %v10686
      %v10718 = vadd.f32 %v10717, %v10687
      %v10719 = vadd.f32 %v10718, %v10688
      %v10720 = vadd.f32 %v10719, %v10689
      %v10721 = vadd.f32 %v10720, %v10690
      %v10722 = vadd.f32 %v10721, %v10691
      %v10723 = vadd.f32 %v10722, %v10692
      %v10724 = vadd.f32 %v10723, %v10693
      %v10725 = vadd.f32 %v10724, %v10694
      %v10726 = vadd.f32 %v10725, %v10695
      %v10727 = vadd.f32 %v10726, %v10696
      %v10728 = vadd.f32 %v10727, %v10697
      %v10729 = vrot.slane %v10728, 4
      %v10730 = vadd.f32 %v10728, %v10729
      %v10731 = vrot.slane %v10730, 2
      %v10732 = vadd.f32 %v10730, %v10731
      %v10733 = vrot.slane %v10732, 1
      %v10734 = vadd.f32 %v10732, %v10733
      %v10735 = vmul.f32 %v10665, 0.00390625
      %v10736 = vmul.f32 %v10734, 0.00390625
      %v10737 = vmul.f32 %v10735, %v10735
      %v10738 = vsub.f32 %v10736, %v10737
      %v10739 = vmax.f32 %v10738, 0.0
      %v10740 = vsub.f32 %v10597, %v10735
      %v10741 = vsub.f32 %v10598, %v10735
      %v10742 = vsub.f32 %v10599, %v10735
      %v10743 = vsub.f32 %v10600, %v10735
      %v10744 = vsub.f32 %v10601, %v10735
      %v10745 = vsub.f32 %v10602, %v10735
      %v10746 = vsub.f32 %v10603, %v10735
      %v10747 = vsub.f32 %v10604, %v10735
      %v10748 = vsub.f32 %v10605, %v10735
      %v10749 = vsub.f32 %v10606, %v10735
      %v10750 = vsub.f32 %v10607, %v10735
      %v10751 = vsub.f32 %v10608, %v10735
      %v10752 = vsub.f32 %v10609, %v10735
      %v10753 = vsub.f32 %v10610, %v10735
      %v10754 = vsub.f32 %v10611, %v10735
      %v10755 = vsub.f32 %v10612, %v10735
      %v10756 = vsub.f32 %v10613, %v10735
      %v10757 = vsub.f32 %v10614, %v10735
      %v10758 = vsub.f32 %v10615, %v10735
      %v10759 = vsub.f32 %v10616, %v10735
      %v10760 = vsub.f32 %v10617, %v10735
      %v10761 = vsub.f32 %v10618, %v10735
      %v10762 = vsub.f32 %v10619, %v10735
      %v10763 = vsub.f32 %v10620, %v10735
      %v10764 = vsub.f32 %v10621, %v10735
      %v10765 = vsub.f32 %v10622, %v10735
      %v10766 = vsub.f32 %v10623, %v10735
      %v10767 = vsub.f32 %v10624, %v10735
      %v10768 = vsub.f32 %v10625, %v10735
      %v10769 = vsub.f32 %v10626, %v10735
      %v10770 = vsub.f32 %v10627, %v10735
      %v10771 = vsub.f32 %v10628, %v10735
      %v10772 = vadd.f32 %v10739, 1e-05
      %v10773 = vrsqrt.pop %v10772
      %v10774 = vmul.f32 %v10740, %v10773
      %v10775 = vmul.f32 %v10741, %v10773
      %v10776 = vmul.f32 %v10742, %v10773
      %v10777 = vmul.f32 %v10743, %v10773
      %v10778 = vmul.f32 %v10744, %v10773
      %v10779 = vmul.f32 %v10745, %v10773
      %v10780 = vmul.f32 %v10746, %v10773
      %v10781 = vmul.f32 %v10747, %v10773
      %v10782 = vmul.f32 %v10748, %v10773
      %v10783 = vmul.f32 %v10749, %v10773
      %v10784 = vmul.f32 %v10750, %v10773
      %v10785 = vmul.f32 %v10751, %v10773
      %v10786 = vmul.f32 %v10752, %v10773
      %v10787 = vmul.f32 %v10753, %v10773
      %v10788 = vmul.f32 %v10754, %v10773
      %v10789 = vmul.f32 %v10755, %v10773
      %v10790 = vmul.f32 %v10756, %v10773
      %v10791 = vmul.f32 %v10757, %v10773
      %v10792 = vmul.f32 %v10758, %v10773
      %v10793 = vmul.f32 %v10759, %v10773
      %v10794 = vmul.f32 %v10760, %v10773
      %v10795 = vmul.f32 %v10761, %v10773
      %v10796 = vmul.f32 %v10762, %v10773
      %v10797 = vmul.f32 %v10763, %v10773
      %v10798 = vmul.f32 %v10764, %v10773
      %v10799 = vmul.f32 %v10765, %v10773
      %v10800 = vmul.f32 %v10766, %v10773
      %v10801 = vmul.f32 %v10767, %v10773
      %v10802 = vmul.f32 %v10768, %v10773
      %v10803 = vmul.f32 %v10769, %v10773
      %v10804 = vmul.f32 %v10770, %v10773
      %v10805 = vmul.f32 %v10771, %v10773
      %v10806 = vld [vmem:[%s1701] sm:$0xf]
      %v10807 = vld [vmem:[%s1701 + $0x4] sm:$0xf]
      %v10808 = vld [vmem:[%s1701 + $0x8] sm:$0x1]
      %v10809 = vld [vmem:[%s1701 + $0xc] sm:$0xf]
      %v10810 = vld [vmem:[%s1701 + $0x10] sm:$0xf]
      %v10811 = vld [vmem:[%s1701 + $0x14] sm:$0x1]
      %v10812 = vld [vmem:[%s1701 + $0x18] sm:$0xf]
      %v10813 = vld [vmem:[%s1701 + $0x1c] sm:$0xf]
      %v10814 = vld [vmem:[%s1701 + $0x20] sm:$0x1]
      %v10815 = vld [vmem:[%s1701 + $0x24] sm:$0xf]
      %v10816 = vld [vmem:[%s1701 + $0x28] sm:$0xf]
      %v10817 = vld [vmem:[%s1701 + $0x2c] sm:$0x1]
      %v10818 = vld [vmem:[%s1701 + $0x30] sm:$0xf]
      %v10819 = vld [vmem:[%s1701 + $0x34] sm:$0xf]
      %v10820 = vld [vmem:[%s1701 + $0x38] sm:$0x1]
      %v10821 = vld [vmem:[%s1701 + $0x3c] sm:$0xf]
      %v10822 = vld [vmem:[%s1701 + $0x40] sm:$0xf]
      %v10823 = vld [vmem:[%s1701 + $0x44] sm:$0x1]
      %v10824 = vld [vmem:[%s1701 + $0x48] sm:$0xf]
      %v10825 = vld [vmem:[%s1701 + $0x4c] sm:$0xf]
      %v10826 = vld [vmem:[%s1701 + $0x50] sm:$0x1]
      %v10827 = vld [vmem:[%s1701 + $0x54] sm:$0xf]
      %v10828 = vld [vmem:[%s1701 + $0x58] sm:$0xf]
      %v10829 = vld [vmem:[%s1701 + $0x5c] sm:$0x1]
      %v10830 = vld [vmem:[%s1701 + $0x60] sm:$0xf]
      %v10831 = vld [vmem:[%s1701 + $0x64] sm:$0xf]
      %v10832 = vld [vmem:[%s1701 + $0x68] sm:$0x1]
      %v10833 = vld [vmem:[%s1701 + $0x6c] sm:$0xf]
      %v10834 = vld [vmem:[%s1701 + $0x70] sm:$0xf]
      %v10835 = vld [vmem:[%s1701 + $0x74] sm:$0x1]
      %v10836 = vld [vmem:[%s1701 + $0x78] sm:$0xf]
      %v10837 = vld [vmem:[%s1701 + $0x7c] sm:$0xf]
      %v10838 = vld [vmem:[%s1701 + $0x80] sm:$0x1]
      %v10839 = vld [vmem:[%s1701 + $0x84] sm:$0xf]
      %v10840 = vld [vmem:[%s1701 + $0x88] sm:$0xf]
      %v10841 = vld [vmem:[%s1701 + $0x8c] sm:$0x1]
      %v10842 = vld [vmem:[%s1701 + $0x90] sm:$0xf]
      %v10843 = vld [vmem:[%s1701 + $0x94] sm:$0xf]
      %v10844 = vld [vmem:[%s1701 + $0x98] sm:$0x1]
      %v10845 = vld [vmem:[%s1701 + $0x9c] sm:$0xf]
      %v10846 = vld [vmem:[%s1701 + $0xa0] sm:$0xf]
      %v10847 = vld [vmem:[%s1701 + $0xa4] sm:$0x1]
      %v10848 = vld [vmem:[%s1701 + $0xa8] sm:$0xf]
      %v10849 = vld [vmem:[%s1701 + $0xac] sm:$0xf]
      %v10850 = vld [vmem:[%s1701 + $0xb0] sm:$0x1]
      %v10851 = vld [vmem:[%s1701 + $0xb4] sm:$0xf]
      %v10852 = vld [vmem:[%s1701 + $0xb8] sm:$0xf]
      %v10853 = vld [vmem:[%s1701 + $0xbc] sm:$0x1]
      %v10854 = vunpack.c.l.bf16 %v10806
      %v10855 = vunpack.c.l.bf16 %v10807
      %v10856 = vunpack.c.l.bf16 %v10808
      %v10857 = vunpack.c.l.bf16 %v10809
      %v10858 = vunpack.c.l.bf16 %v10810
      %v10859 = vunpack.c.l.bf16 %v10811
      %v10860 = vunpack.c.l.bf16 %v10812
      %v10861 = vunpack.c.l.bf16 %v10813
      %v10862 = vunpack.c.l.bf16 %v10814
      %v10863 = vunpack.c.l.bf16 %v10815
      %v10864 = vunpack.c.l.bf16 %v10816
      %v10865 = vunpack.c.l.bf16 %v10817
      %v10866 = vunpack.c.l.bf16 %v10818
      %v10867 = vunpack.c.l.bf16 %v10819
      %v10868 = vunpack.c.l.bf16 %v10820
      %v10869 = vunpack.c.l.bf16 %v10821
      %v10870 = vunpack.c.l.bf16 %v10822
      %v10871 = vunpack.c.l.bf16 %v10823
      %v10872 = vunpack.c.l.bf16 %v10824
      %v10873 = vunpack.c.l.bf16 %v10825
      %v10874 = vunpack.c.l.bf16 %v10826
      %v10875 = vunpack.c.l.bf16 %v10827
      %v10876 = vunpack.c.l.bf16 %v10828
      %v10877 = vunpack.c.l.bf16 %v10829
      %v10878 = vunpack.c.l.bf16 %v10830
      %v10879 = vunpack.c.l.bf16 %v10831
      %v10880 = vunpack.c.l.bf16 %v10832
      %v10881 = vunpack.c.l.bf16 %v10833
      %v10882 = vunpack.c.l.bf16 %v10834
      %v10883 = vunpack.c.l.bf16 %v10835
      %v10884 = vunpack.c.l.bf16 %v10836
      %v10885 = vunpack.c.l.bf16 %v10837
      %v10886 = vunpack.c.l.bf16 %v10838
      %v10887 = vunpack.c.l.bf16 %v10839
      %v10888 = vunpack.c.l.bf16 %v10840
      %v10889 = vunpack.c.l.bf16 %v10841
      %v10890 = vunpack.c.l.bf16 %v10842
      %v10891 = vunpack.c.l.bf16 %v10843
      %v10892 = vunpack.c.l.bf16 %v10844
      %v10893 = vunpack.c.l.bf16 %v10845
      %v10894 = vunpack.c.l.bf16 %v10846
      %v10895 = vunpack.c.l.bf16 %v10847
      %v10896 = vunpack.c.l.bf16 %v10848
      %v10897 = vunpack.c.l.bf16 %v10849
      %v10898 = vunpack.c.l.bf16 %v10850
      %v10899 = vunpack.c.l.bf16 %v10851
      %v10900 = vunpack.c.l.bf16 %v10852
      %v10901 = vunpack.c.l.bf16 %v10853
      %vm10950 = vcmask 1046528
      %v10951 = vrot.slane %v10854, 1
      %v10952 = vrot.slane %v10855, 1
      %v10953 = vsel %vm10950, %v10951, %v10952
      %v10954 = vrot.slane %v10856, 1
      %v10955 = vsel %vm10950, %v10952, %v10954
      %v10956 = vrot.slane %v10857, 1
      %v10957 = vrot.slane %v10858, 1
      %v10958 = vsel %vm10950, %v10956, %v10957
      %v10959 = vrot.slane %v10859, 1
      %v10960 = vsel %vm10950, %v10957, %v10959
      %v10961 = vrot.slane %v10860, 1
      %v10962 = vrot.slane %v10861, 1
      %v10963 = vsel %vm10950, %v10961, %v10962
      %v10964 = vrot.slane %v10862, 1
      %v10965 = vsel %vm10950, %v10962, %v10964
      %v10966 = vrot.slane %v10863, 1
      %v10967 = vrot.slane %v10864, 1
      %v10968 = vsel %vm10950, %v10966, %v10967
      %v10969 = vrot.slane %v10865, 1
      %v10970 = vsel %vm10950, %v10967, %v10969
      %v10971 = vrot.slane %v10866, 1
      %v10972 = vrot.slane %v10867, 1
      %v10973 = vsel %vm10950, %v10971, %v10972
      %v10974 = vrot.slane %v10868, 1
      %v10975 = vsel %vm10950, %v10972, %v10974
      %v10976 = vrot.slane %v10869, 1
      %v10977 = vrot.slane %v10870, 1
      %v10978 = vsel %vm10950, %v10976, %v10977
      %v10979 = vrot.slane %v10871, 1
      %v10980 = vsel %vm10950, %v10977, %v10979
      %v10981 = vrot.slane %v10872, 1
      %v10982 = vrot.slane %v10873, 1
      %v10983 = vsel %vm10950, %v10981, %v10982
      %v10984 = vrot.slane %v10874, 1
      %v10985 = vsel %vm10950, %v10982, %v10984
      %v10986 = vrot.slane %v10875, 1
      %v10987 = vrot.slane %v10876, 1
      %v10988 = vsel %vm10950, %v10986, %v10987
      %v10989 = vrot.slane %v10877, 1
      %v10990 = vsel %vm10950, %v10987, %v10989
      %v10991 = vrot.slane %v10878, 1
      %v10992 = vrot.slane %v10879, 1
      %v10993 = vsel %vm10950, %v10991, %v10992
      %v10994 = vrot.slane %v10880, 1
      %v10995 = vsel %vm10950, %v10992, %v10994
      %v10996 = vrot.slane %v10881, 1
      %v10997 = vrot.slane %v10882, 1
      %v10998 = vsel %vm10950, %v10996, %v10997
      %v10999 = vrot.slane %v10883, 1
      %v11000 = vsel %vm10950, %v10997, %v10999
      %v11001 = vrot.slane %v10884, 1
      %v11002 = vrot.slane %v10885, 1
      %v11003 = vsel %vm10950, %v11001, %v11002
      %v11004 = vrot.slane %v10886, 1
      %v11005 = vsel %vm10950, %v11002, %v11004
      %v11006 = vrot.slane %v10887, 1
      %v11007 = vrot.slane %v10888, 1
      %v11008 = vsel %vm10950, %v11006, %v11007
      %v11009 = vrot.slane %v10889, 1
      %v11010 = vsel %vm10950, %v11007, %v11009
      %v11011 = vrot.slane %v10890, 1
      %v11012 = vrot.slane %v10891, 1
      %v11013 = vsel %vm10950, %v11011, %v11012
      %v11014 = vrot.slane %v10892, 1
      %v11015 = vsel %vm10950, %v11012, %v11014
      %v11016 = vrot.slane %v10893, 1
      %v11017 = vrot.slane %v10894, 1
      %v11018 = vsel %vm10950, %v11016, %v11017
      %v11019 = vrot.slane %v10895, 1
      %v11020 = vsel %vm10950, %v11017, %v11019
      %v11021 = vrot.slane %v10896, 1
      %v11022 = vrot.slane %v10897, 1
      %v11023 = vsel %vm10950, %v11021, %v11022
      %v11024 = vrot.slane %v10898, 1
      %v11025 = vsel %vm10950, %v11022, %v11024
      %v11026 = vrot.slane %v10899, 1
      %v11027 = vrot.slane %v10900, 1
      %v11028 = vsel %vm10950, %v11026, %v11027
      %v11029 = vrot.slane %v10901, 1
      %v11030 = vsel %vm10950, %v11027, %v11029
      %v11063 = vadd.f32 %v10774, %v10953
      %v11064 = vadd.f32 %v10775, %v10955
      %v11065 = vadd.f32 %v10776, %v10958
      %v11066 = vadd.f32 %v10777, %v10960
      %v11067 = vadd.f32 %v10778, %v10963
      %v11068 = vadd.f32 %v10779, %v10965
      %v11069 = vadd.f32 %v10780, %v10968
      %v11070 = vadd.f32 %v10781, %v10970
      %v11071 = vadd.f32 %v10782, %v10973
      %v11072 = vadd.f32 %v10783, %v10975
      %v11073 = vadd.f32 %v10784, %v10978
      %v11074 = vadd.f32 %v10785, %v10980
      %v11075 = vadd.f32 %v10786, %v10983
      %v11076 = vadd.f32 %v10787, %v10985
      %v11077 = vadd.f32 %v10788, %v10988
      %v11078 = vadd.f32 %v10789, %v10990
      %v11079 = vadd.f32 %v10790, %v10993
      %v11080 = vadd.f32 %v10791, %v10995
      %v11081 = vadd.f32 %v10792, %v10998
      %v11082 = vadd.f32 %v10793, %v11000
      %v11083 = vadd.f32 %v10794, %v11003
      %v11084 = vadd.f32 %v10795, %v11005
      %v11085 = vadd.f32 %v10796, %v11008
      %v11086 = vadd.f32 %v10797, %v11010
      %v11087 = vadd.f32 %v10798, %v11013
      %v11088 = vadd.f32 %v10799, %v11015
      %v11089 = vadd.f32 %v10800, %v11018
      %v11090 = vadd.f32 %v10801, %v11020
      %v11091 = vadd.f32 %v10802, %v11023
      %v11092 = vadd.f32 %v10803, %v11025
      %v11093 = vadd.f32 %v10804, %v11028
      %v11094 = vadd.f32 %v10805, %v11030
      %11095 = vst [vmem:[%s170] sm:$0xf] 0
      %11096 = vst [vmem:[%s170 + $0x4] sm:$0xf] 0
      %11097 = vst [vmem:[%s170 + $0x8] sm:$0x1] 0
      %s11098 = scalar_lea.vmem %s170, 204
      %11099 = vst [vmem:[%s11098] sm:$0xf] 0
      %11100 = vst [vmem:[%s11098 + $0x4] sm:$0xf] 0
      %11101 = vst [vmem:[%s11098 + $0x8] sm:$0x1] 0
      %v11102 = vld [vmem:[%s170] sm:$0x1]
      %v11103 = vsel %vm5191, 0, %v11102
      %11104 = vst [vmem:[%s170] sm:$0x1] %v11103
      %v11105 = vld [vmem:[%s170 + $0xc] sm:$0x1]
      %v11106 = vsel %vm5191, 0, %v11105
      %11107 = vst [vmem:[%s170 + $0xc] sm:$0x1] %v11106
      %v11108 = vld [vmem:[%s170 + $0x18] sm:$0x1]
      %v11109 = vsel %vm5191, 0, %v11108
      %11110 = vst [vmem:[%s170 + $0x18] sm:$0x1] %v11109
      %v11111 = vld [vmem:[%s170 + $0x24] sm:$0x1]
      %v11112 = vsel %vm5191, 0, %v11111
      %11113 = vst [vmem:[%s170 + $0x24] sm:$0x1] %v11112
      %v11114 = vld [vmem:[%s170 + $0x30] sm:$0x1]
      %v11115 = vsel %vm5191, 0, %v11114
      %11116 = vst [vmem:[%s170 + $0x30] sm:$0x1] %v11115
      %v11117 = vld [vmem:[%s170 + $0x3c] sm:$0x1]
      %v11118 = vsel %vm5191, 0, %v11117
      %11119 = vst [vmem:[%s170 + $0x3c] sm:$0x1] %v11118
      %v11120 = vld [vmem:[%s170 + $0x48] sm:$0x1]
      %v11121 = vsel %vm5191, 0, %v11120
      %11122 = vst [vmem:[%s170 + $0x48] sm:$0x1] %v11121
      %v11123 = vld [vmem:[%s170 + $0x54] sm:$0x1]
      %v11124 = vsel %vm5191, 0, %v11123
      %11125 = vst [vmem:[%s170 + $0x54] sm:$0x1] %v11124
      %v11126 = vld [vmem:[%s170 + $0x60] sm:$0x1]
      %v11127 = vsel %vm5191, 0, %v11126
      %11128 = vst [vmem:[%s170 + $0x60] sm:$0x1] %v11127
      %v11129 = vld [vmem:[%s170 + $0x6c] sm:$0x1]
      %v11130 = vsel %vm5191, 0, %v11129
      %11131 = vst [vmem:[%s170 + $0x6c] sm:$0x1] %v11130
      %v11132 = vld [vmem:[%s170 + $0x78] sm:$0x1]
      %v11133 = vsel %vm5191, 0, %v11132
      %11134 = vst [vmem:[%s170 + $0x78] sm:$0x1] %v11133
      %v11135 = vld [vmem:[%s170 + $0x84] sm:$0x1]
      %v11136 = vsel %vm5191, 0, %v11135
      %11137 = vst [vmem:[%s170 + $0x84] sm:$0x1] %v11136
      %v11138 = vld [vmem:[%s170 + $0x90] sm:$0x1]
      %v11139 = vsel %vm5191, 0, %v11138
      %11140 = vst [vmem:[%s170 + $0x90] sm:$0x1] %v11139
      %v11141 = vld [vmem:[%s170 + $0x9c] sm:$0x1]
      %v11142 = vsel %vm5191, 0, %v11141
      %11143 = vst [vmem:[%s170 + $0x9c] sm:$0x1] %v11142
      %v11144 = vld [vmem:[%s170 + $0xa8] sm:$0x1]
      %v11145 = vsel %vm5191, 0, %v11144
      %11146 = vst [vmem:[%s170 + $0xa8] sm:$0x1] %v11145
      %v11147 = vld [vmem:[%s170 + $0xb4] sm:$0x1]
      %v11148 = vsel %vm5191, 0, %v11147
      %11149 = vst [vmem:[%s170 + $0xb4] sm:$0x1] %v11148
      %v11150 = vld [vmem:[%s170 + $0xc0] sm:$0x1]
      %v11151 = vsel %vm5191, 0, %v11150
      %11152 = vst [vmem:[%s170 + $0xc0] sm:$0x1] %v11151
      %v11153 = vld [vmem:[%s170 + $0xcc] sm:$0x1]
      %v11154 = vsel %vm5191, 0, %v11153
      %11155 = vst [vmem:[%s170 + $0xcc] sm:$0x1] %v11154
      %v11156 = vld [vmem:[%s170 + $0x8] sm:$0x1]
      %v11157 = vsel %vm5247, 0, %v11156
      %11158 = vst [vmem:[%s170 + $0x8] sm:$0x1] %v11157
      %v11159 = vld [vmem:[%s170 + $0x14] sm:$0x1]
      %v11160 = vsel %vm5247, 0, %v11159
      %11161 = vst [vmem:[%s170 + $0x14] sm:$0x1] %v11160
      %v11162 = vld [vmem:[%s170 + $0x20] sm:$0x1]
      %v11163 = vsel %vm5247, 0, %v11162
      %11164 = vst [vmem:[%s170 + $0x20] sm:$0x1] %v11163
      %v11165 = vld [vmem:[%s170 + $0x2c] sm:$0x1]
      %v11166 = vsel %vm5247, 0, %v11165
      %11167 = vst [vmem:[%s170 + $0x2c] sm:$0x1] %v11166
      %v11168 = vld [vmem:[%s170 + $0x38] sm:$0x1]
      %v11169 = vsel %vm5247, 0, %v11168
      %11170 = vst [vmem:[%s170 + $0x38] sm:$0x1] %v11169
      %v11171 = vld [vmem:[%s170 + $0x44] sm:$0x1]
      %v11172 = vsel %vm5247, 0, %v11171
      %11173 = vst [vmem:[%s170 + $0x44] sm:$0x1] %v11172
      %v11174 = vld [vmem:[%s170 + $0x50] sm:$0x1]
      %v11175 = vsel %vm5247, 0, %v11174
      %11176 = vst [vmem:[%s170 + $0x50] sm:$0x1] %v11175
      %v11177 = vld [vmem:[%s170 + $0x5c] sm:$0x1]
      %v11178 = vsel %vm5247, 0, %v11177
      %11179 = vst [vmem:[%s170 + $0x5c] sm:$0x1] %v11178
      %v11180 = vld [vmem:[%s170 + $0x68] sm:$0x1]
      %v11181 = vsel %vm5247, 0, %v11180
      %11182 = vst [vmem:[%s170 + $0x68] sm:$0x1] %v11181
      %v11183 = vld [vmem:[%s170 + $0x74] sm:$0x1]
      %v11184 = vsel %vm5247, 0, %v11183
      %11185 = vst [vmem:[%s170 + $0x74] sm:$0x1] %v11184
      %v11186 = vld [vmem:[%s170 + $0x80] sm:$0x1]
      %v11187 = vsel %vm5247, 0, %v11186
      %11188 = vst [vmem:[%s170 + $0x80] sm:$0x1] %v11187
      %v11189 = vld [vmem:[%s170 + $0x8c] sm:$0x1]
      %v11190 = vsel %vm5247, 0, %v11189
      %11191 = vst [vmem:[%s170 + $0x8c] sm:$0x1] %v11190
      %v11192 = vld [vmem:[%s170 + $0x98] sm:$0x1]
      %v11193 = vsel %vm5247, 0, %v11192
      %11194 = vst [vmem:[%s170 + $0x98] sm:$0x1] %v11193
      %v11195 = vld [vmem:[%s170 + $0xa4] sm:$0x1]
      %v11196 = vsel %vm5247, 0, %v11195
      %11197 = vst [vmem:[%s170 + $0xa4] sm:$0x1] %v11196
      %v11198 = vld [vmem:[%s170 + $0xb0] sm:$0x1]
      %v11199 = vsel %vm5247, 0, %v11198
      %11200 = vst [vmem:[%s170 + $0xb0] sm:$0x1] %v11199
      %v11201 = vld [vmem:[%s170 + $0xbc] sm:$0x1]
      %v11202 = vsel %vm5247, 0, %v11201
      %11203 = vst [vmem:[%s170 + $0xbc] sm:$0x1] %v11202
      %v11204 = vld [vmem:[%s170 + $0xc8] sm:$0x1]
      %v11205 = vsel %vm5247, 0, %v11204
      %11206 = vst [vmem:[%s170 + $0xc8] sm:$0x1] %v11205
      %v11207 = vld [vmem:[%s170 + $0xd4] sm:$0x1]
      %v11208 = vsel %vm5247, 0, %v11207
      %11209 = vst [vmem:[%s170 + $0xd4] sm:$0x1] %v11208
      %v11210 = vpack.c.bf16 %v11064, %v11063
      %v11211 = vpack.c.bf16 %v11066, %v11065
      %v11212 = vpack.c.bf16 %v11068, %v11067
      %v11213 = vpack.c.bf16 %v11070, %v11069
      %v11214 = vpack.c.bf16 %v11072, %v11071
      %v11215 = vpack.c.bf16 %v11074, %v11073
      %v11216 = vpack.c.bf16 %v11076, %v11075
      %v11217 = vpack.c.bf16 %v11078, %v11077
      %v11218 = vpack.c.bf16 %v11080, %v11079
      %v11219 = vpack.c.bf16 %v11082, %v11081
      %v11220 = vpack.c.bf16 %v11084, %v11083
      %v11221 = vpack.c.bf16 %v11086, %v11085
      %v11222 = vpack.c.bf16 %v11088, %v11087
      %v11223 = vpack.c.bf16 %v11090, %v11089
      %v11224 = vpack.c.bf16 %v11092, %v11091
      %v11225 = vpack.c.bf16 %v11094, %v11093
      %v11242 = vunpack.c.l.b16 %v11210
      %v11243 = vunpack.c.h.b16 %v11210
      %v11244 = vunpack.c.l.b16 %v11211
      %v11245 = vunpack.c.h.b16 %v11211
      %v11246 = vunpack.c.l.b16 %v11212
      %v11247 = vunpack.c.h.b16 %v11212
      %v11248 = vunpack.c.l.b16 %v11213
      %v11249 = vunpack.c.h.b16 %v11213
      %v11250 = vunpack.c.l.b16 %v11214
      %v11251 = vunpack.c.h.b16 %v11214
      %v11252 = vunpack.c.l.b16 %v11215
      %v11253 = vunpack.c.h.b16 %v11215
      %v11254 = vunpack.c.l.b16 %v11216
      %v11255 = vunpack.c.h.b16 %v11216
      %v11256 = vunpack.c.l.b16 %v11217
      %v11257 = vunpack.c.h.b16 %v11217
      %v11258 = vunpack.c.l.b16 %v11218
      %v11259 = vunpack.c.h.b16 %v11218
      %v11260 = vunpack.c.l.b16 %v11219
      %v11261 = vunpack.c.h.b16 %v11219
      %v11262 = vunpack.c.l.b16 %v11220
      %v11263 = vunpack.c.h.b16 %v11220
      %v11264 = vunpack.c.l.b16 %v11221
      %v11265 = vunpack.c.h.b16 %v11221
      %v11266 = vunpack.c.l.b16 %v11222
      %v11267 = vunpack.c.h.b16 %v11222
      %v11268 = vunpack.c.l.b16 %v11223
      %v11269 = vunpack.c.h.b16 %v11223
      %v11270 = vunpack.c.l.b16 %v11224
      %v11271 = vunpack.c.h.b16 %v11224
      %v11272 = vunpack.c.l.b16 %v11225
      %v11273 = vunpack.c.h.b16 %v11225
      %v11274 = vpack.c.b16 %v11242, %v11242
      %v11275 = vpack.c.b16 %v11243, %v11243
      %v11276 = vpack.c.b16 %v11244, %v11244
      %v11277 = vpack.c.b16 %v11245, %v11245
      %v11278 = vpack.c.b16 %v11246, %v11246
      %v11279 = vpack.c.b16 %v11247, %v11247
      %v11280 = vpack.c.b16 %v11248, %v11248
      %v11281 = vpack.c.b16 %v11249, %v11249
      %v11282 = vpack.c.b16 %v11250, %v11250
      %v11283 = vpack.c.b16 %v11251, %v11251
      %v11284 = vpack.c.b16 %v11252, %v11252
      %v11285 = vpack.c.b16 %v11253, %v11253
      %v11286 = vpack.c.b16 %v11254, %v11254
      %v11287 = vpack.c.b16 %v11255, %v11255
      %v11288 = vpack.c.b16 %v11256, %v11256
      %v11289 = vpack.c.b16 %v11257, %v11257
      %v11290 = vpack.c.b16 %v11258, %v11258
      %v11291 = vpack.c.b16 %v11259, %v11259
      %v11292 = vpack.c.b16 %v11260, %v11260
      %v11293 = vpack.c.b16 %v11261, %v11261
      %v11294 = vpack.c.b16 %v11262, %v11262
      %v11295 = vpack.c.b16 %v11263, %v11263
      %v11296 = vpack.c.b16 %v11264, %v11264
      %v11297 = vpack.c.b16 %v11265, %v11265
      %v11298 = vpack.c.b16 %v11266, %v11266
      %v11299 = vpack.c.b16 %v11267, %v11267
      %v11300 = vpack.c.b16 %v11268, %v11268
      %v11301 = vpack.c.b16 %v11269, %v11269
      %v11302 = vpack.c.b16 %v11270, %v11270
      %v11303 = vpack.c.b16 %v11271, %v11271
      %v11304 = vpack.c.b16 %v11272, %v11272
      %v11305 = vpack.c.b16 %v11273, %v11273
      %v11307 = vshrl.u32 %v11274, 16
      %v11309 = vrot.slane %v11307, 7
      %v11310 = vshll.u32 %v11274, 16
      %v11312 = vor.u32 %v11309, %v11310
      %v11313 = vrot.slane %v11309, 4
      %v11315 = vshrl.u32 %v11275, 16
      %v11317 = vrot.slane %v11315, 7
      %v11318 = vshll.u32 %v11275, 16
      %v11320 = vor.u32 %v11317, %v11318
      %v11321 = vsel %vm5399, %v11313, %v11320
      %v11322 = vrot.slane %v11317, 4
      %v11324 = vshrl.u32 %v11276, 16
      %v11326 = vrot.slane %v11324, 7
      %v11327 = vshll.u32 %v11276, 16
      %v11329 = vor.u32 %v11326, %v11327
      %v11330 = vrot.slane %v11326, 4
      %v11332 = vshrl.u32 %v11277, 16
      %v11334 = vrot.slane %v11332, 7
      %v11335 = vshll.u32 %v11277, 16
      %v11337 = vor.u32 %v11334, %v11335
      %v11338 = vsel %vm5399, %v11330, %v11337
      %v11339 = vrot.slane %v11334, 4
      %v11341 = vshrl.u32 %v11278, 16
      %v11343 = vrot.slane %v11341, 7
      %v11344 = vshll.u32 %v11278, 16
      %v11346 = vor.u32 %v11343, %v11344
      %v11347 = vrot.slane %v11343, 4
      %v11349 = vshrl.u32 %v11279, 16
      %v11351 = vrot.slane %v11349, 7
      %v11352 = vshll.u32 %v11279, 16
      %v11354 = vor.u32 %v11351, %v11352
      %v11355 = vsel %vm5399, %v11347, %v11354
      %v11356 = vrot.slane %v11351, 4
      %v11358 = vshrl.u32 %v11280, 16
      %v11360 = vrot.slane %v11358, 7
      %v11361 = vshll.u32 %v11280, 16
      %v11363 = vor.u32 %v11360, %v11361
      %v11364 = vrot.slane %v11360, 4
      %v11366 = vshrl.u32 %v11281, 16
      %v11368 = vrot.slane %v11366, 7
      %v11369 = vshll.u32 %v11281, 16
      %v11371 = vor.u32 %v11368, %v11369
      %v11372 = vsel %vm5399, %v11364, %v11371
      %v11373 = vrot.slane %v11368, 4
      %v11375 = vshrl.u32 %v11282, 16
      %v11377 = vrot.slane %v11375, 7
      %v11378 = vshll.u32 %v11282, 16
      %v11380 = vor.u32 %v11377, %v11378
      %v11381 = vrot.slane %v11377, 4
      %v11383 = vshrl.u32 %v11283, 16
      %v11385 = vrot.slane %v11383, 7
      %v11386 = vshll.u32 %v11283, 16
      %v11388 = vor.u32 %v11385, %v11386
      %v11389 = vsel %vm5399, %v11381, %v11388
      %v11390 = vrot.slane %v11385, 4
      %v11392 = vshrl.u32 %v11284, 16
      %v11394 = vrot.slane %v11392, 7
      %v11395 = vshll.u32 %v11284, 16
      %v11397 = vor.u32 %v11394, %v11395
      %v11398 = vrot.slane %v11394, 4
      %v11400 = vshrl.u32 %v11285, 16
      %v11402 = vrot.slane %v11400, 7
      %v11403 = vshll.u32 %v11285, 16
      %v11405 = vor.u32 %v11402, %v11403
      %v11406 = vsel %vm5399, %v11398, %v11405
      %v11407 = vrot.slane %v11402, 4
      %v11409 = vshrl.u32 %v11286, 16
      %v11411 = vrot.slane %v11409, 7
      %v11412 = vshll.u32 %v11286, 16
      %v11414 = vor.u32 %v11411, %v11412
      %v11415 = vrot.slane %v11411, 4
      %v11417 = vshrl.u32 %v11287, 16
      %v11419 = vrot.slane %v11417, 7
      %v11420 = vshll.u32 %v11287, 16
      %v11422 = vor.u32 %v11419, %v11420
      %v11423 = vsel %vm5399, %v11415, %v11422
      %v11424 = vrot.slane %v11419, 4
      %v11426 = vshrl.u32 %v11288, 16
      %v11428 = vrot.slane %v11426, 7
      %v11429 = vshll.u32 %v11288, 16
      %v11431 = vor.u32 %v11428, %v11429
      %v11432 = vrot.slane %v11428, 4
      %v11434 = vshrl.u32 %v11289, 16
      %v11436 = vrot.slane %v11434, 7
      %v11437 = vshll.u32 %v11289, 16
      %v11439 = vor.u32 %v11436, %v11437
      %v11440 = vsel %vm5399, %v11432, %v11439
      %v11441 = vrot.slane %v11436, 4
      %v11443 = vshrl.u32 %v11290, 16
      %v11445 = vrot.slane %v11443, 7
      %v11446 = vshll.u32 %v11290, 16
      %v11448 = vor.u32 %v11445, %v11446
      %v11449 = vrot.slane %v11445, 4
      %v11451 = vshrl.u32 %v11291, 16
      %v11453 = vrot.slane %v11451, 7
      %v11454 = vshll.u32 %v11291, 16
      %v11456 = vor.u32 %v11453, %v11454
      %v11457 = vsel %vm5399, %v11449, %v11456
      %v11458 = vrot.slane %v11453, 4
      %v11460 = vshrl.u32 %v11292, 16
      %v11462 = vrot.slane %v11460, 7
      %v11463 = vshll.u32 %v11292, 16
      %v11465 = vor.u32 %v11462, %v11463
      %v11466 = vrot.slane %v11462, 4
      %v11468 = vshrl.u32 %v11293, 16
      %v11470 = vrot.slane %v11468, 7
      %v11471 = vshll.u32 %v11293, 16
      %v11473 = vor.u32 %v11470, %v11471
      %v11474 = vsel %vm5399, %v11466, %v11473
      %v11475 = vrot.slane %v11470, 4
      %v11477 = vshrl.u32 %v11294, 16
      %v11479 = vrot.slane %v11477, 7
      %v11480 = vshll.u32 %v11294, 16
      %v11482 = vor.u32 %v11479, %v11480
      %v11483 = vrot.slane %v11479, 4
      %v11485 = vshrl.u32 %v11295, 16
      %v11487 = vrot.slane %v11485, 7
      %v11488 = vshll.u32 %v11295, 16
      %v11490 = vor.u32 %v11487, %v11488
      %v11491 = vsel %vm5399, %v11483, %v11490
      %v11492 = vrot.slane %v11487, 4
      %v11494 = vshrl.u32 %v11296, 16
      %v11496 = vrot.slane %v11494, 7
      %v11497 = vshll.u32 %v11296, 16
      %v11499 = vor.u32 %v11496, %v11497
      %v11500 = vrot.slane %v11496, 4
      %v11502 = vshrl.u32 %v11297, 16
      %v11504 = vrot.slane %v11502, 7
      %v11505 = vshll.u32 %v11297, 16
      %v11507 = vor.u32 %v11504, %v11505
      %v11508 = vsel %vm5399, %v11500, %v11507
      %v11509 = vrot.slane %v11504, 4
      %v11511 = vshrl.u32 %v11298, 16
      %v11513 = vrot.slane %v11511, 7
      %v11514 = vshll.u32 %v11298, 16
      %v11516 = vor.u32 %v11513, %v11514
      %v11517 = vrot.slane %v11513, 4
      %v11519 = vshrl.u32 %v11299, 16
      %v11521 = vrot.slane %v11519, 7
      %v11522 = vshll.u32 %v11299, 16
      %v11524 = vor.u32 %v11521, %v11522
      %v11525 = vsel %vm5399, %v11517, %v11524
      %v11526 = vrot.slane %v11521, 4
      %v11528 = vshrl.u32 %v11300, 16
      %v11530 = vrot.slane %v11528, 7
      %v11531 = vshll.u32 %v11300, 16
      %v11533 = vor.u32 %v11530, %v11531
      %v11534 = vrot.slane %v11530, 4
      %v11536 = vshrl.u32 %v11301, 16
      %v11538 = vrot.slane %v11536, 7
      %v11539 = vshll.u32 %v11301, 16
      %v11541 = vor.u32 %v11538, %v11539
      %v11542 = vsel %vm5399, %v11534, %v11541
      %v11543 = vrot.slane %v11538, 4
      %v11545 = vshrl.u32 %v11302, 16
      %v11547 = vrot.slane %v11545, 7
      %v11548 = vshll.u32 %v11302, 16
      %v11550 = vor.u32 %v11547, %v11548
      %v11551 = vrot.slane %v11547, 4
      %v11553 = vshrl.u32 %v11303, 16
      %v11555 = vrot.slane %v11553, 7
      %v11556 = vshll.u32 %v11303, 16
      %v11558 = vor.u32 %v11555, %v11556
      %v11559 = vsel %vm5399, %v11551, %v11558
      %v11560 = vrot.slane %v11555, 4
      %v11562 = vshrl.u32 %v11304, 16
      %v11564 = vrot.slane %v11562, 7
      %v11565 = vshll.u32 %v11304, 16
      %v11567 = vor.u32 %v11564, %v11565
      %v11568 = vrot.slane %v11564, 4
      %v11570 = vshrl.u32 %v11305, 16
      %v11572 = vrot.slane %v11570, 7
      %v11573 = vshll.u32 %v11305, 16
      %v11575 = vor.u32 %v11572, %v11573
      %v11576 = vsel %vm5399, %v11568, %v11575
      %v11577 = vrot.slane %v11572, 4
      %s11626 = scalar_lea.vmem %s170, 12
      %v11627 = vld [vmem:[%s11626] sm:$0xf]
      %v11628 = vsel %vm5722, %v11312, %v11627
      %11629 = vst [vmem:[%s11626] sm:$0xf] %v11628
      %11630 = vst [vmem:[%s11626 + $0x4] sm:$0xf] %v11321
      %v11631 = vld [vmem:[%s11626 + $0x8] sm:$0x1]
      %v11632 = vsel %vm5191, %v11322, %v11631
      %11633 = vst [vmem:[%s11626 + $0x8] sm:$0x1] %v11632
      %v11634 = vld [vmem:[%s11626 + $0xc] sm:$0xf]
      %v11635 = vsel %vm5722, %v11329, %v11634
      %11636 = vst [vmem:[%s11626 + $0xc] sm:$0xf] %v11635
      %11637 = vst [vmem:[%s11626 + $0x10] sm:$0xf] %v11338
      %v11638 = vld [vmem:[%s11626 + $0x14] sm:$0x1]
      %v11639 = vsel %vm5191, %v11339, %v11638
      %11640 = vst [vmem:[%s11626 + $0x14] sm:$0x1] %v11639
      %v11641 = vld [vmem:[%s11626 + $0x18] sm:$0xf]
      %v11642 = vsel %vm5722, %v11346, %v11641
      %11643 = vst [vmem:[%s11626 + $0x18] sm:$0xf] %v11642
      %11644 = vst [vmem:[%s11626 + $0x1c] sm:$0xf] %v11355
      %v11645 = vld [vmem:[%s11626 + $0x20] sm:$0x1]
      %v11646 = vsel %vm5191, %v11356, %v11645
      %11647 = vst [vmem:[%s11626 + $0x20] sm:$0x1] %v11646
      %v11648 = vld [vmem:[%s11626 + $0x24] sm:$0xf]
      %v11649 = vsel %vm5722, %v11363, %v11648
      %11650 = vst [vmem:[%s11626 + $0x24] sm:$0xf] %v11649
      %11651 = vst [vmem:[%s11626 + $0x28] sm:$0xf] %v11372
      %v11652 = vld [vmem:[%s11626 + $0x2c] sm:$0x1]
      %v11653 = vsel %vm5191, %v11373, %v11652
      %11654 = vst [vmem:[%s11626 + $0x2c] sm:$0x1] %v11653
      %v11655 = vld [vmem:[%s11626 + $0x30] sm:$0xf]
      %v11656 = vsel %vm5722, %v11380, %v11655
      %11657 = vst [vmem:[%s11626 + $0x30] sm:$0xf] %v11656
      %11658 = vst [vmem:[%s11626 + $0x34] sm:$0xf] %v11389
      %v11659 = vld [vmem:[%s11626 + $0x38] sm:$0x1]
      %v11660 = vsel %vm5191, %v11390, %v11659
      %11661 = vst [vmem:[%s11626 + $0x38] sm:$0x1] %v11660
      %v11662 = vld [vmem:[%s11626 + $0x3c] sm:$0xf]
      %v11663 = vsel %vm5722, %v11397, %v11662
      %11664 = vst [vmem:[%s11626 + $0x3c] sm:$0xf] %v11663
      %11665 = vst [vmem:[%s11626 + $0x40] sm:$0xf] %v11406
      %v11666 = vld [vmem:[%s11626 + $0x44] sm:$0x1]
      %v11667 = vsel %vm5191, %v11407, %v11666
      %11668 = vst [vmem:[%s11626 + $0x44] sm:$0x1] %v11667
      %v11669 = vld [vmem:[%s11626 + $0x48] sm:$0xf]
      %v11670 = vsel %vm5722, %v11414, %v11669
      %11671 = vst [vmem:[%s11626 + $0x48] sm:$0xf] %v11670
      %11672 = vst [vmem:[%s11626 + $0x4c] sm:$0xf] %v11423
      %v11673 = vld [vmem:[%s11626 + $0x50] sm:$0x1]
      %v11674 = vsel %vm5191, %v11424, %v11673
      %11675 = vst [vmem:[%s11626 + $0x50] sm:$0x1] %v11674
      %v11676 = vld [vmem:[%s11626 + $0x54] sm:$0xf]
      %v11677 = vsel %vm5722, %v11431, %v11676
      %11678 = vst [vmem:[%s11626 + $0x54] sm:$0xf] %v11677
      %11679 = vst [vmem:[%s11626 + $0x58] sm:$0xf] %v11440
      %v11680 = vld [vmem:[%s11626 + $0x5c] sm:$0x1]
      %v11681 = vsel %vm5191, %v11441, %v11680
      %11682 = vst [vmem:[%s11626 + $0x5c] sm:$0x1] %v11681
      %v11683 = vld [vmem:[%s11626 + $0x60] sm:$0xf]
      %v11684 = vsel %vm5722, %v11448, %v11683
      %11685 = vst [vmem:[%s11626 + $0x60] sm:$0xf] %v11684
      %11686 = vst [vmem:[%s11626 + $0x64] sm:$0xf] %v11457
      %v11687 = vld [vmem:[%s11626 + $0x68] sm:$0x1]
      %v11688 = vsel %vm5191, %v11458, %v11687
      %11689 = vst [vmem:[%s11626 + $0x68] sm:$0x1] %v11688
      %v11690 = vld [vmem:[%s11626 + $0x6c] sm:$0xf]
      %v11691 = vsel %vm5722, %v11465, %v11690
      %11692 = vst [vmem:[%s11626 + $0x6c] sm:$0xf] %v11691
      %11693 = vst [vmem:[%s11626 + $0x70] sm:$0xf] %v11474
      %v11694 = vld [vmem:[%s11626 + $0x74] sm:$0x1]
      %v11695 = vsel %vm5191, %v11475, %v11694
      %11696 = vst [vmem:[%s11626 + $0x74] sm:$0x1] %v11695
      %v11697 = vld [vmem:[%s11626 + $0x78] sm:$0xf]
      %v11698 = vsel %vm5722, %v11482, %v11697
      %11699 = vst [vmem:[%s11626 + $0x78] sm:$0xf] %v11698
      %11700 = vst [vmem:[%s11626 + $0x7c] sm:$0xf] %v11491
      %v11701 = vld [vmem:[%s11626 + $0x80] sm:$0x1]
      %v11702 = vsel %vm5191, %v11492, %v11701
      %11703 = vst [vmem:[%s11626 + $0x80] sm:$0x1] %v11702
      %v11704 = vld [vmem:[%s11626 + $0x84] sm:$0xf]
      %v11705 = vsel %vm5722, %v11499, %v11704
      %11706 = vst [vmem:[%s11626 + $0x84] sm:$0xf] %v11705
      %11707 = vst [vmem:[%s11626 + $0x88] sm:$0xf] %v11508
      %v11708 = vld [vmem:[%s11626 + $0x8c] sm:$0x1]
      %v11709 = vsel %vm5191, %v11509, %v11708
      %11710 = vst [vmem:[%s11626 + $0x8c] sm:$0x1] %v11709
      %v11711 = vld [vmem:[%s11626 + $0x90] sm:$0xf]
      %v11712 = vsel %vm5722, %v11516, %v11711
      %11713 = vst [vmem:[%s11626 + $0x90] sm:$0xf] %v11712
      %11714 = vst [vmem:[%s11626 + $0x94] sm:$0xf] %v11525
      %v11715 = vld [vmem:[%s11626 + $0x98] sm:$0x1]
      %v11716 = vsel %vm5191, %v11526, %v11715
      %11717 = vst [vmem:[%s11626 + $0x98] sm:$0x1] %v11716
      %v11718 = vld [vmem:[%s11626 + $0x9c] sm:$0xf]
      %v11719 = vsel %vm5722, %v11533, %v11718
      %11720 = vst [vmem:[%s11626 + $0x9c] sm:$0xf] %v11719
      %11721 = vst [vmem:[%s11626 + $0xa0] sm:$0xf] %v11542
      %v11722 = vld [vmem:[%s11626 + $0xa4] sm:$0x1]
      %v11723 = vsel %vm5191, %v11543, %v11722
      %11724 = vst [vmem:[%s11626 + $0xa4] sm:$0x1] %v11723
      %v11725 = vld [vmem:[%s11626 + $0xa8] sm:$0xf]
      %v11726 = vsel %vm5722, %v11550, %v11725
      %11727 = vst [vmem:[%s11626 + $0xa8] sm:$0xf] %v11726
      %11728 = vst [vmem:[%s11626 + $0xac] sm:$0xf] %v11559
      %v11729 = vld [vmem:[%s11626 + $0xb0] sm:$0x1]
      %v11730 = vsel %vm5191, %v11560, %v11729
      %11731 = vst [vmem:[%s11626 + $0xb0] sm:$0x1] %v11730
      %v11732 = vld [vmem:[%s11626 + $0xb4] sm:$0xf]
      %v11733 = vsel %vm5722, %v11567, %v11732
      %11734 = vst [vmem:[%s11626 + $0xb4] sm:$0xf] %v11733
      %11735 = vst [vmem:[%s11626 + $0xb8] sm:$0xf] %v11576
      %v11736 = vld [vmem:[%s11626 + $0xbc] sm:$0x1]
      %v11737 = vsel %vm5191, %v11577, %v11736
      %11738 = vst [vmem:[%s11626 + $0xbc] sm:$0x1] %v11737
      %p11739 = scmp.lt.s32.totalorder %s14, 1
      %s11740 = scalar_select %p11739, %s14, 1
      %s11741 = smul.addr %s11740, 54
      %s11742 = smul.addr %s11741, 4
      %s11743 = scalar_lea.vmem %s3, %s11742
      // Predicated region
      $region33: #{res_blocks_forward.2} parent=31 // pred_check
        %p11744 = pneg %p100
      $region34: #{res_blocks_forward.2} parent=31 // pred_check_branch
        %11746 = sbr.rel (%p11744) target = $region36
      $region35: #{res_blocks_forward.2} parent=31 // pred_region
        _
      $region36: #{res_blocks_forward.2} parent=31 // pred_fallthru
        _
    $region32: #{res_blocks_forward.2} parent=5 // pred_fallthru
      _
    %p11747 = scmp.le.s32.totalorder 2, %s9
    // Predicated region
    $region37: #{res_blocks_forward.2} parent=5 // pred_check
      %p11748 = pneg %p11747
    $region38: #{res_blocks_forward.2} parent=5 // pred_check_branch
      %11750 = sbr.rel (%p11748) target = $region40
    $region39: #{res_blocks_forward.2} parent=5 // pred_region
      %s11751 = ssub.s32 %s9, 2
      // Predicated region
      $region41: #{res_blocks_forward.2} parent=39 // pred_check
        %p11752 = pneg %p106
      $region42: #{res_blocks_forward.2} parent=39 // pred_check_branch
        %11754 = sbr.rel (%p11752) target = $region44
      $region43: #{res_blocks_forward.2} parent=39 // pred_region
        %p11755 = scmp.lt.s32.totalorder %s15, 1
        %s11756 = scalar_select %p11755, %s15, 1
        %s11757 = smul.addr %s11756, 54
        %s11758 = smul.addr %s11757, 4
        %s11759 = scalar_lea.vmem %s3, %s11758
      $region44: #{res_blocks_forward.2} parent=39 // pred_fallthru
        _
    $region40: #{res_blocks_forward.2} parent=5 // pred_fallthru
      _
  $region6: #{res_blocks_forward.2} parent=0 // loop_footer
    %s13 = sadd.s32 1, %s9
  $region7: #{res_blocks_forward.2} parent=0 // loop_footer_branch
    %8 = sbr.rel target = $region3
  $region8: #{res_blocks_forward.2} parent=0 // loop_exit
    _

</llo_original>
